<compile_context>
chip_gen: v7x
topology: tpu7x:2x2x1
jax: 0.10.0
libtpu: 0.0.40
codegen_flags: <defaults>
</compile_context>

<pallas_src>
import functools

import jax
import jax.numpy as jnp
import numpy as np
from jax.experimental import pallas as pl
from jax.experimental.pallas import tpu as pltpu


# --------------------------- in-kernel helpers ------------------------------

def _reflect_pad1(x):
    """ReflectionPad2d(1) on an (H, W, C) VMEM value -> (H+2, W+2, C)."""
    x = jnp.concatenate([x[1:2], x, x[-2:-1]], axis=0)          # pad H
    x = jnp.concatenate([x[:, 1:2], x, x[:, -2:-1]], axis=1)    # pad W
    return x


def _im2col3x3(xp, H, W):
    """(H+2, W+2, C) -> (H*W, 9*C); tap order (dy, dx, c) matches
    w.reshape(9*C, Cout) of an HWIO (3, 3, C, Cout) kernel."""
    C = xp.shape[-1]
    cols = [xp[dy:dy + H, dx:dx + W, :].reshape(H * W, C)
            for dy in range(3) for dx in range(3)]
    return jnp.concatenate(cols, axis=-1)


def _conv3x3(x_flat, w_r, b, H, W):
    """Reflection-padded 3x3 conv as one matmul.
    x_flat: (H*W, Cin), w_r: (9*Cin, Cout), b: (1, Cout) -> (H*W, Cout)."""
    C = x_flat.shape[-1]
    col = _im2col3x3(_reflect_pad1(x_flat.reshape(H, W, C)), H, W)
    return jnp.dot(col, w_r, preferred_element_type=jnp.float32) + b


# ------------------------------ fused kernel --------------------------------

def _myblock_kernel(x_ref, w1_ref, b1_ref, lnw_ref, lnb_ref, wgq_ref, wo_ref,
                    wa_ref, ba_ref, wb_ref, bb_ref,
                    sew1_ref, seb1_ref, sew2_ref, seb2_ref,
                    w3_ref, b3_ref, o_ref, *, H, W):
    f32 = jnp.float32

    # Input block is the raw NCHW slab (1, Cin, H*W); bring channels to the
    # lane axis once, in-kernel.
    x = jnp.transpose(x_ref[0].astype(f32))                        # (HW, Cin)

    # ---- conv1: ReflectionPad2d(1) + Conv2d(cin -> gc, 3x3) + bias ----
    x1 = _conv3x3(x, w1_ref[...], b1_ref[...], H, W)               # (HW, gc)

    # ---- ca = GN(gc): per-pixel LayerNorm + gated 1x1 convs + residual ----
    mu = jnp.mean(x1, axis=-1, keepdims=True)
    var = jnp.mean((x1 - mu) ** 2, axis=-1, keepdims=True)         # unbiased=False
    xn = (x1 - mu) / jnp.sqrt(var + 1e-5)
    xn = xn * lnw_ref[...] + lnb_ref[...]
    gq = jnp.dot(xn, wgq_ref[...], preferred_element_type=f32)     # (HW, 4*gc)
    c2 = wo_ref.shape[0]                                           # 2*gc
    g, q = gq[:, :c2], gq[:, c2:]
    # NOTE: the PyTorch module computes q = gelu(g) and immediately overwrites
    # it with q = self.q(x); the GELU result is dead code and skipped here.
    x2 = x1 + jnp.dot(g * q, wo_ref[...], preferred_element_type=f32)

    # ---- conv2 = Res(gc): conv+LeakyReLU(0.2), conv, SE, residual ----
    r = _conv3x3(x2, wa_ref[...], ba_ref[...], H, W)
    r = jnp.where(r >= 0.0, r, 0.2 * r)
    r = _conv3x3(r, wb_ref[...], bb_ref[...], H, W)

    pooled = jnp.mean(r, axis=0, keepdims=True)                    # (1, gc)
    h = jnp.maximum(
        jnp.dot(pooled, sew1_ref[...], preferred_element_type=f32)
        + seb1_ref[...], 0.0)                                      # (1, gc//16)
    m = 1.0 / (1.0 + jnp.exp(-(jnp.dot(h, sew2_ref[...],
                                       preferred_element_type=f32)
                               + seb2_ref[...])))                  # (1, gc)
    x3 = r * m + x2

    # ---- conv3: ReflectionPad2d(1) + Conv2d(gc -> channel_out, 3x3) ----
    y = _conv3x3(x3, w3_ref[...], b3_ref[...], H, W)               # (HW, Cout)
    # Store transposed: (Cout, HW) is lane-dense (HW >= 128) and is already
    # the NCHW layout the wrapper returns.
    o_ref[0] = jnp.transpose(y).astype(o_ref.dtype)


# ------------------------------ forward wrapper ------------------------------

def myblock_forward(x_nchw, p):
    """MyBlock.forward. Input/output are NCHW (PyTorch convention)."""
    B, Cin, H, W = x_nchw.shape
    gc = p["w1"].shape[-1]
    Cout = p["w3"].shape[-1]
    HW = H * W

    # Free reshapes of contiguous arrays; no transposes at the XLA level.
    x2d = x_nchw.reshape(B, Cin, HW)
    w1_r = p["w1"].reshape(9 * Cin, gc)
    wa_r = p["wa"].reshape(9 * gc, gc)
    wb_r = p["wb"].reshape(9 * gc, gc)
    w3_r = p["w3"].reshape(9 * gc, Cout)
    wgq = jnp.concatenate([p["wg"], p["wq"]], axis=-1)             # (gc, 4*gc)
    crs = gc // 16

    kern = functools.partial(_myblock_kernel, H=H, W=W)
    const = lambda b: (0, 0)

    out = pl.pallas_call(
        kern,
        out_shape=jax.ShapeDtypeStruct((B, Cout, HW), x_nchw.dtype),
        grid=(B,),
        in_specs=[
            pl.BlockSpec((1, Cin, HW), lambda b: (b, 0, 0)),        # x (NCHW slab)
            pl.BlockSpec((9 * Cin, gc), const),                     # w1
            pl.BlockSpec((1, gc), const),                           # b1
            pl.BlockSpec((1, gc), const),                           # ln_w
            pl.BlockSpec((1, gc), const),                           # ln_b
            pl.BlockSpec((gc, 4 * gc), const),                      # [wg | wq]
            pl.BlockSpec((2 * gc, gc), const),                      # wo
            pl.BlockSpec((9 * gc, gc), const),                      # wa
            pl.BlockSpec((1, gc), const),                           # ba
            pl.BlockSpec((9 * gc, gc), const),                      # wb
            pl.BlockSpec((1, gc), const),                           # bb
            pl.BlockSpec((gc, crs), const),                         # se_w1
            pl.BlockSpec((1, crs), const),                          # se_b1
            pl.BlockSpec((crs, gc), const),                         # se_w2
            pl.BlockSpec((1, gc), const),                           # se_b2
            pl.BlockSpec((9 * gc, Cout), const),                    # w3
            pl.BlockSpec((1, Cout), const),                         # b3
        ],
        out_specs=pl.BlockSpec((1, Cout, HW), lambda b: (b, 0, 0)),
        compiler_params=pltpu.CompilerParams(
            dimension_semantics=("parallel",)),   # batch is independent -> 2 TCs on v7x
    )(x2d, w1_r, p["b1"].reshape(1, gc), p["ln_w"].reshape(1, gc),
      p["ln_b"].reshape(1, gc), wgq, p["wo"], wa_r, p["ba"].reshape(1, gc),
      wb_r, p["bb"].reshape(1, gc), p["se_w1"], p["se_b1"].reshape(1, crs),
      p["se_w2"], p["se_b2"].reshape(1, gc), w3_r, p["b3"].reshape(1, Cout))

    return out.reshape(B, Cout, H, W)


# --------------------------- params & pure-JAX ref ---------------------------

def init_params(key, channel_in, channel_out, gc, mshape):
    cin = channel_in + mshape
    ks = jax.random.split(key, 16)

    def w(k, shape, fan_in, scale=0.1):
        return jax.random.normal(k, shape, jnp.float32) * (scale / np.sqrt(fan_in))

    def b(k, n):
        return jax.random.normal(k, (n,), jnp.float32) * 0.01

    p = {}
    p["w1"] = w(ks[0], (3, 3, cin, gc), 9 * cin)
    p["b1"] = b(ks[1], gc)
    p["wg"] = w(ks[2], (gc, 2 * gc), gc, scale=1.0)
    p["wq"] = w(ks[3], (gc, 2 * gc), gc, scale=1.0)
    p["wo"] = w(ks[4], (2 * gc, gc), 2 * gc, scale=1.0)
    p["ln_w"] = jnp.ones((gc,), jnp.float32)        # LN init: ones
    p["ln_b"] = jnp.ones((gc,), jnp.float32)        # LN bias init: ones (per module)
    p["wa"] = w(ks[5], (3, 3, gc, gc), 9 * gc)
    p["ba"] = b(ks[6], gc)
    p["wb"] = w(ks[7], (3, 3, gc, gc), 9 * gc)
    p["bb"] = b(ks[8], gc)
    p["se_w1"] = w(ks[9], (gc, gc // 16), gc, scale=1.0)
    p["se_b1"] = b(ks[10], gc // 16)
    p["se_w2"] = w(ks[11], (gc // 16, gc), gc // 16, scale=1.0)
    p["se_b2"] = b(ks[12], gc)
    # NOTE: the original module zero-inits conv3 (initialize_weights(..., 0)),
    # which makes the output trivially zero; deterministic nonzero weights are
    # used instead so the kernel is actually exercised.
    p["w3"] = w(ks[13], (3, 3, gc, channel_out), 9 * gc)
    p["b3"] = b(ks[14], channel_out)
    return p


def ref_forward(x_nchw, p):
    """Pure-JAX reference of the same forward (for correctness check)."""
    HI = jax.lax.Precision.HIGHEST

    def conv(x, w, bias):
        xp = jnp.pad(x, ((0, 0), (1, 1), (1, 1), (0, 0)), mode="reflect")
        y = jax.lax.conv_general_dilated(
            xp, w, (1, 1), "VALID",
            dimension_numbers=("NHWC", "HWIO", "NHWC"), precision=HI)
        return y + bias

    x = jnp.transpose(x_nchw, (0, 2, 3, 1))
    x = conv(x, p["w1"], p["b1"])
    mu = jnp.mean(x, axis=-1, keepdims=True)
    var = jnp.mean((x - mu) ** 2, axis=-1, keepdims=True)
    xn = (x - mu) / jnp.sqrt(var + 1e-5) * p["ln_w"] + p["ln_b"]
    g = jnp.einsum("bhwc,cd->bhwd", xn, p["wg"], precision=HI)
    q = jnp.einsum("bhwc,cd->bhwd", xn, p["wq"], precision=HI)
    x = x + jnp.einsum("bhwd,dc->bhwc", g * q, p["wo"], precision=HI)
    r = conv(x, p["wa"], p["ba"])
    r = jnp.where(r >= 0, r, 0.2 * r)
    r = conv(r, p["wb"], p["bb"])
    pooled = jnp.mean(r, axis=(1, 2), keepdims=True)
    h = jnp.maximum(jnp.einsum("bhwc,cd->bhwd", pooled, p["se_w1"],
                               precision=HI) + p["se_b1"], 0.0)
    m = jax.nn.sigmoid(jnp.einsum("bhwd,dc->bhwc", h, p["se_w2"],
                                  precision=HI) + p["se_b2"])
    x = r * m + x
    x = conv(x, p["w3"], p["b3"])
    return jnp.transpose(x, (0, 3, 1, 2))


# ----------------------------------- main -----------------------------------

if __name__ == "__main__":
    B, channel_in, channel_out, gc, mshape, H, W = 2, 4, 4, 32, 4, 16, 16
    key = jax.random.PRNGKey(0)
    k_x, k_p = jax.random.split(key)
    # Module input already carries channel_in + mshape channels.
    x = jax.random.normal(k_x, (B, channel_in + mshape, H, W), jnp.float32)
    params = init_params(k_p, channel_in, channel_out, gc, mshape)

    fwd = jax.jit(myblock_forward)
    out = jax.block_until_ready(fwd(x, params))
    ref = jax.block_until_ready(ref_forward(x, params))

    assert out.shape == (B, channel_out, H, W), out.shape
    np.testing.assert_allclose(np.asarray(out), np.asarray(ref),
                               rtol=2e-3, atol=2e-3)
    print("KERNEL_OK")
</pallas_src>

<mosaic_0001>
module attributes {stable_mosaic.version = 11 : i64} {
  func.func @_myblock_kernel(%arg0: i32, %arg1: memref<1x8x256xf32, #tpu.memory_space<vmem>>, %arg2: memref<72x32xf32, #tpu.memory_space<vmem>>, %arg3: memref<1x32xf32, #tpu.memory_space<vmem>>, %arg4: memref<1x32xf32, #tpu.memory_space<vmem>>, %arg5: memref<1x32xf32, #tpu.memory_space<vmem>>, %arg6: memref<32x128xf32, #tpu.memory_space<vmem>>, %arg7: memref<64x32xf32, #tpu.memory_space<vmem>>, %arg8: memref<288x32xf32, #tpu.memory_space<vmem>>, %arg9: memref<1x32xf32, #tpu.memory_space<vmem>>, %arg10: memref<288x32xf32, #tpu.memory_space<vmem>>, %arg11: memref<1x32xf32, #tpu.memory_space<vmem>>, %arg12: memref<32x2xf32, #tpu.memory_space<vmem>>, %arg13: memref<1x2xf32, #tpu.memory_space<vmem>>, %arg14: memref<2x32xf32, #tpu.memory_space<vmem>>, %arg15: memref<1x32xf32, #tpu.memory_space<vmem>>, %arg16: memref<288x4xf32, #tpu.memory_space<vmem>>, %arg17: memref<1x4xf32, #tpu.memory_space<vmem>>, %arg18: memref<1x4x256xf32, #tpu.memory_space<vmem>>) attributes {dimension_semantics = [#tpu.dimension_semantics<parallel>], iteration_bounds = array<i64: 2>, scalar_prefetch = 0 : i64, scratch_operands = 0 : i64, tpu.core_type = #tpu.core_type<tc>, window_params = [{transform_indices = @transform_0, window_bounds = array<i64: 1, 8, 256>}, {pipeline_mode = #tpu.pipeline_mode<synchronous>, transform_indices = @transform_1, window_bounds = array<i64: 72, 32>}, {pipeline_mode = #tpu.pipeline_mode<synchronous>, transform_indices = @transform_2, window_bounds = array<i64: 1, 32>}, {pipeline_mode = #tpu.pipeline_mode<synchronous>, transform_indices = @transform_3, window_bounds = array<i64: 1, 32>}, {pipeline_mode = #tpu.pipeline_mode<synchronous>, transform_indices = @transform_4, window_bounds = array<i64: 1, 32>}, {pipeline_mode = #tpu.pipeline_mode<synchronous>, transform_indices = @transform_5, window_bounds = array<i64: 32, 128>}, {pipeline_mode = #tpu.pipeline_mode<synchronous>, transform_indices = @transform_6, window_bounds = array<i64: 64, 32>}, {pipeline_mode = #tpu.pipeline_mode<synchronous>, transform_indices = @transform_7, window_bounds = array<i64: 288, 32>}, {pipeline_mode = #tpu.pipeline_mode<synchronous>, transform_indices = @transform_8, window_bounds = array<i64: 1, 32>}, {pipeline_mode = #tpu.pipeline_mode<synchronous>, transform_indices = @transform_9, window_bounds = array<i64: 288, 32>}, {pipeline_mode = #tpu.pipeline_mode<synchronous>, transform_indices = @transform_10, window_bounds = array<i64: 1, 32>}, {pipeline_mode = #tpu.pipeline_mode<synchronous>, transform_indices = @transform_11, window_bounds = array<i64: 32, 2>}, {pipeline_mode = #tpu.pipeline_mode<synchronous>, transform_indices = @transform_12, window_bounds = array<i64: 1, 2>}, {pipeline_mode = #tpu.pipeline_mode<synchronous>, transform_indices = @transform_13, window_bounds = array<i64: 2, 32>}, {pipeline_mode = #tpu.pipeline_mode<synchronous>, transform_indices = @transform_14, window_bounds = array<i64: 1, 32>}, {pipeline_mode = #tpu.pipeline_mode<synchronous>, transform_indices = @transform_15, window_bounds = array<i64: 288, 4>}, {pipeline_mode = #tpu.pipeline_mode<synchronous>, transform_indices = @transform_16, window_bounds = array<i64: 1, 4>}, {transform_indices = @transform_17, window_bounds = array<i64: 1, 4, 256>}]} {
    %c0 = arith.constant 0 : index
    %c0_0 = arith.constant 0 : index
    %c0_1 = arith.constant 0 : index
    %0 = vector.load %arg1[%c0, %c0_0, %c0_1] : memref<1x8x256xf32, #tpu.memory_space<vmem>>, vector<1x8x256xf32>
    %1 = vector.shape_cast %0 : vector<1x8x256xf32> to vector<8x256xf32>
    %2 = tpu.transpose %1, [1, 0] : vector<8x256xf32> -> vector<256x8xf32>
    %c0_2 = arith.constant 0 : index
    %c0_3 = arith.constant 0 : index
    %3 = vector.load %arg2[%c0_2, %c0_3] : memref<72x32xf32, #tpu.memory_space<vmem>>, vector<72x32xf32>
    %c0_4 = arith.constant 0 : index
    %c0_5 = arith.constant 0 : index
    %4 = vector.load %arg3[%c0_4, %c0_5] : memref<1x32xf32, #tpu.memory_space<vmem>>, vector<1x32xf32>
    %5 = vector.shape_cast %2 : vector<256x8xf32> to vector<16x16x8xf32>
    %6 = vector.extract_strided_slice %5 {offsets = [1, 0, 0], sizes = [1, 16, 8], strides = [1, 1, 1]} : vector<16x16x8xf32> to vector<1x16x8xf32>
    %7 = vector.extract_strided_slice %5 {offsets = [14, 0, 0], sizes = [1, 16, 8], strides = [1, 1, 1]} : vector<16x16x8xf32> to vector<1x16x8xf32>
    %8 = tpu.concatenate %6, %5, %7 in 0 : vector<1x16x8xf32>, vector<16x16x8xf32>, vector<1x16x8xf32> -> vector<18x16x8xf32>
    %9 = vector.extract_strided_slice %8 {offsets = [0, 1, 0], sizes = [18, 1, 8], strides = [1, 1, 1]} : vector<18x16x8xf32> to vector<18x1x8xf32>
    %10 = vector.extract_strided_slice %8 {offsets = [0, 14, 0], sizes = [18, 1, 8], strides = [1, 1, 1]} : vector<18x16x8xf32> to vector<18x1x8xf32>
    %11 = tpu.concatenate %9, %8, %10 in 1 : vector<18x1x8xf32>, vector<18x16x8xf32>, vector<18x1x8xf32> -> vector<18x18x8xf32>
    %12 = vector.extract_strided_slice %11 {offsets = [0, 0, 0], sizes = [16, 16, 8], strides = [1, 1, 1]} : vector<18x18x8xf32> to vector<16x16x8xf32>
    %13 = vector.shape_cast %12 : vector<16x16x8xf32> to vector<256x8xf32>
    %14 = vector.extract_strided_slice %11 {offsets = [0, 1, 0], sizes = [16, 16, 8], strides = [1, 1, 1]} : vector<18x18x8xf32> to vector<16x16x8xf32>
    %15 = vector.shape_cast %14 : vector<16x16x8xf32> to vector<256x8xf32>
    %16 = vector.extract_strided_slice %11 {offsets = [0, 2, 0], sizes = [16, 16, 8], strides = [1, 1, 1]} : vector<18x18x8xf32> to vector<16x16x8xf32>
    %17 = vector.shape_cast %16 : vector<16x16x8xf32> to vector<256x8xf32>
    %18 = vector.extract_strided_slice %11 {offsets = [1, 0, 0], sizes = [16, 16, 8], strides = [1, 1, 1]} : vector<18x18x8xf32> to vector<16x16x8xf32>
    %19 = vector.shape_cast %18 : vector<16x16x8xf32> to vector<256x8xf32>
    %20 = vector.extract_strided_slice %11 {offsets = [1, 1, 0], sizes = [16, 16, 8], strides = [1, 1, 1]} : vector<18x18x8xf32> to vector<16x16x8xf32>
    %21 = vector.shape_cast %20 : vector<16x16x8xf32> to vector<256x8xf32>
    %22 = vector.extract_strided_slice %11 {offsets = [1, 2, 0], sizes = [16, 16, 8], strides = [1, 1, 1]} : vector<18x18x8xf32> to vector<16x16x8xf32>
    %23 = vector.shape_cast %22 : vector<16x16x8xf32> to vector<256x8xf32>
    %24 = vector.extract_strided_slice %11 {offsets = [2, 0, 0], sizes = [16, 16, 8], strides = [1, 1, 1]} : vector<18x18x8xf32> to vector<16x16x8xf32>
    %25 = vector.shape_cast %24 : vector<16x16x8xf32> to vector<256x8xf32>
    %26 = vector.extract_strided_slice %11 {offsets = [2, 1, 0], sizes = [16, 16, 8], strides = [1, 1, 1]} : vector<18x18x8xf32> to vector<16x16x8xf32>
    %27 = vector.shape_cast %26 : vector<16x16x8xf32> to vector<256x8xf32>
    %28 = vector.extract_strided_slice %11 {offsets = [2, 2, 0], sizes = [16, 16, 8], strides = [1, 1, 1]} : vector<18x18x8xf32> to vector<16x16x8xf32>
    %29 = vector.shape_cast %28 : vector<16x16x8xf32> to vector<256x8xf32>
    %30 = tpu.concatenate %13, %15, %17, %19, %21, %23, %25, %27, %29 in 1 : vector<256x8xf32>, vector<256x8xf32>, vector<256x8xf32>, vector<256x8xf32>, vector<256x8xf32>, vector<256x8xf32>, vector<256x8xf32>, vector<256x8xf32>, vector<256x8xf32> -> vector<256x72xf32>
    %cst = arith.constant dense<0.000000e+00> : vector<256x32xf32>
    %31 = tpu.matmul %30, %3, %cst {dimension_numbers = #tpu.dot_dimension_numbers<[1], [0], [0], [1], [0, 0, 1, 1], [], []>} : vector<256x72xf32>, vector<72x32xf32>, vector<256x32xf32> -> vector<256x32xf32>
    %32 = vector.broadcast %4 : vector<1x32xf32> to vector<256x32xf32>
    %33 = arith.addf %31, %32 : vector<256x32xf32>
    %cst_6 = arith.constant dense<0.000000e+00> : vector<256xf32>
    %34 = vector.multi_reduction <add>, %33, %cst_6 [1] : vector<256x32xf32> to vector<256xf32>
    %35 = vector.shape_cast %34 : vector<256xf32> to vector<256x1xf32>
    %cst_7 = arith.constant 3.200000e+01 : f32
    %36 = vector.broadcast %cst_7 : f32 to vector<256x1xf32>
    %37 = arith.divf %35, %36 : vector<256x1xf32>
    %38 = vector.broadcast %37 : vector<256x1xf32> to vector<256x32xf32>
    %39 = arith.subf %33, %38 : vector<256x32xf32>
    %40 = arith.mulf %39, %39 : vector<256x32xf32>
    %cst_8 = arith.constant dense<0.000000e+00> : vector<256xf32>
    %41 = vector.multi_reduction <add>, %40, %cst_8 [1] : vector<256x32xf32> to vector<256xf32>
    %42 = vector.shape_cast %41 : vector<256xf32> to vector<256x1xf32>
    %cst_9 = arith.constant 3.200000e+01 : f32
    %43 = vector.broadcast %cst_9 : f32 to vector<256x1xf32>
    %44 = arith.divf %42, %43 : vector<256x1xf32>
    %45 = vector.broadcast %37 : vector<256x1xf32> to vector<256x32xf32>
    %46 = arith.subf %33, %45 : vector<256x32xf32>
    %cst_10 = arith.constant 9.99999974E-6 : f32
    %47 = vector.broadcast %cst_10 : f32 to vector<256x1xf32>
    %48 = arith.addf %44, %47 : vector<256x1xf32>
    %49 = math.sqrt %48 : vector<256x1xf32>
    %50 = vector.broadcast %49 : vector<256x1xf32> to vector<256x32xf32>
    %51 = arith.divf %46, %50 : vector<256x32xf32>
    %c0_11 = arith.constant 0 : index
    %c0_12 = arith.constant 0 : index
    %52 = vector.load %arg4[%c0_11, %c0_12] : memref<1x32xf32, #tpu.memory_space<vmem>>, vector<1x32xf32>
    %53 = vector.broadcast %52 : vector<1x32xf32> to vector<256x32xf32>
    %54 = arith.mulf %51, %53 : vector<256x32xf32>
    %c0_13 = arith.constant 0 : index
    %c0_14 = arith.constant 0 : index
    %55 = vector.load %arg5[%c0_13, %c0_14] : memref<1x32xf32, #tpu.memory_space<vmem>>, vector<1x32xf32>
    %56 = vector.broadcast %55 : vector<1x32xf32> to vector<256x32xf32>
    %57 = arith.addf %54, %56 : vector<256x32xf32>
    %c0_15 = arith.constant 0 : index
    %c0_16 = arith.constant 0 : index
    %58 = vector.load %arg6[%c0_15, %c0_16] : memref<32x128xf32, #tpu.memory_space<vmem>>, vector<32x128xf32>
    %cst_17 = arith.constant dense<0.000000e+00> : vector<256x128xf32>
    %59 = tpu.matmul %57, %58, %cst_17 {dimension_numbers = #tpu.dot_dimension_numbers<[1], [0], [0], [1], [0, 0, 1, 1], [], []>} : vector<256x32xf32>, vector<32x128xf32>, vector<256x128xf32> -> vector<256x128xf32>
    %60 = vector.extract_strided_slice %59 {offsets = [0, 0], sizes = [256, 64], strides = [1, 1]} : vector<256x128xf32> to vector<256x64xf32>
    %61 = vector.extract_strided_slice %59 {offsets = [0, 64], sizes = [256, 64], strides = [1, 1]} : vector<256x128xf32> to vector<256x64xf32>
    %62 = arith.mulf %60, %61 : vector<256x64xf32>
    %c0_18 = arith.constant 0 : index
    %c0_19 = arith.constant 0 : index
    %63 = vector.load %arg7[%c0_18, %c0_19] : memref<64x32xf32, #tpu.memory_space<vmem>>, vector<64x32xf32>
    %cst_20 = arith.constant dense<0.000000e+00> : vector<256x32xf32>
    %64 = tpu.matmul %62, %63, %cst_20 {dimension_numbers = #tpu.dot_dimension_numbers<[1], [0], [0], [1], [0, 0, 1, 1], [], []>} : vector<256x64xf32>, vector<64x32xf32>, vector<256x32xf32> -> vector<256x32xf32>
    %65 = arith.addf %33, %64 : vector<256x32xf32>
    %c0_21 = arith.constant 0 : index
    %c0_22 = arith.constant 0 : index
    %66 = vector.load %arg8[%c0_21, %c0_22] : memref<288x32xf32, #tpu.memory_space<vmem>>, vector<288x32xf32>
    %c0_23 = arith.constant 0 : index
    %c0_24 = arith.constant 0 : index
    %67 = vector.load %arg9[%c0_23, %c0_24] : memref<1x32xf32, #tpu.memory_space<vmem>>, vector<1x32xf32>
    %68 = vector.shape_cast %65 : vector<256x32xf32> to vector<16x16x32xf32>
    %69 = vector.extract_strided_slice %68 {offsets = [1, 0, 0], sizes = [1, 16, 32], strides = [1, 1, 1]} : vector<16x16x32xf32> to vector<1x16x32xf32>
    %70 = vector.extract_strided_slice %68 {offsets = [14, 0, 0], sizes = [1, 16, 32], strides = [1, 1, 1]} : vector<16x16x32xf32> to vector<1x16x32xf32>
    %71 = tpu.concatenate %69, %68, %70 in 0 : vector<1x16x32xf32>, vector<16x16x32xf32>, vector<1x16x32xf32> -> vector<18x16x32xf32>
    %72 = vector.extract_strided_slice %71 {offsets = [0, 1, 0], sizes = [18, 1, 32], strides = [1, 1, 1]} : vector<18x16x32xf32> to vector<18x1x32xf32>
    %73 = vector.extract_strided_slice %71 {offsets = [0, 14, 0], sizes = [18, 1, 32], strides = [1, 1, 1]} : vector<18x16x32xf32> to vector<18x1x32xf32>
    %74 = tpu.concatenate %72, %71, %73 in 1 : vector<18x1x32xf32>, vector<18x16x32xf32>, vector<18x1x32xf32> -> vector<18x18x32xf32>
    %75 = vector.extract_strided_slice %74 {offsets = [0, 0, 0], sizes = [16, 16, 32], strides = [1, 1, 1]} : vector<18x18x32xf32> to vector<16x16x32xf32>
    %76 = vector.shape_cast %75 : vector<16x16x32xf32> to vector<256x32xf32>
    %77 = vector.extract_strided_slice %74 {offsets = [0, 1, 0], sizes = [16, 16, 32], strides = [1, 1, 1]} : vector<18x18x32xf32> to vector<16x16x32xf32>
    %78 = vector.shape_cast %77 : vector<16x16x32xf32> to vector<256x32xf32>
    %79 = vector.extract_strided_slice %74 {offsets = [0, 2, 0], sizes = [16, 16, 32], strides = [1, 1, 1]} : vector<18x18x32xf32> to vector<16x16x32xf32>
    %80 = vector.shape_cast %79 : vector<16x16x32xf32> to vector<256x32xf32>
    %81 = vector.extract_strided_slice %74 {offsets = [1, 0, 0], sizes = [16, 16, 32], strides = [1, 1, 1]} : vector<18x18x32xf32> to vector<16x16x32xf32>
    %82 = vector.shape_cast %81 : vector<16x16x32xf32> to vector<256x32xf32>
    %83 = vector.extract_strided_slice %74 {offsets = [1, 1, 0], sizes = [16, 16, 32], strides = [1, 1, 1]} : vector<18x18x32xf32> to vector<16x16x32xf32>
    %84 = vector.shape_cast %83 : vector<16x16x32xf32> to vector<256x32xf32>
    %85 = vector.extract_strided_slice %74 {offsets = [1, 2, 0], sizes = [16, 16, 32], strides = [1, 1, 1]} : vector<18x18x32xf32> to vector<16x16x32xf32>
    %86 = vector.shape_cast %85 : vector<16x16x32xf32> to vector<256x32xf32>
    %87 = vector.extract_strided_slice %74 {offsets = [2, 0, 0], sizes = [16, 16, 32], strides = [1, 1, 1]} : vector<18x18x32xf32> to vector<16x16x32xf32>
    %88 = vector.shape_cast %87 : vector<16x16x32xf32> to vector<256x32xf32>
    %89 = vector.extract_strided_slice %74 {offsets = [2, 1, 0], sizes = [16, 16, 32], strides = [1, 1, 1]} : vector<18x18x32xf32> to vector<16x16x32xf32>
    %90 = vector.shape_cast %89 : vector<16x16x32xf32> to vector<256x32xf32>
    %91 = vector.extract_strided_slice %74 {offsets = [2, 2, 0], sizes = [16, 16, 32], strides = [1, 1, 1]} : vector<18x18x32xf32> to vector<16x16x32xf32>
    %92 = vector.shape_cast %91 : vector<16x16x32xf32> to vector<256x32xf32>
    %93 = tpu.concatenate %76, %78, %80, %82, %84, %86, %88, %90, %92 in 1 : vector<256x32xf32>, vector<256x32xf32>, vector<256x32xf32>, vector<256x32xf32>, vector<256x32xf32>, vector<256x32xf32>, vector<256x32xf32>, vector<256x32xf32>, vector<256x32xf32> -> vector<256x288xf32>
    %cst_25 = arith.constant dense<0.000000e+00> : vector<256x32xf32>
    %94 = tpu.matmul %93, %66, %cst_25 {dimension_numbers = #tpu.dot_dimension_numbers<[1], [0], [0], [1], [0, 0, 1, 1], [], []>} : vector<256x288xf32>, vector<288x32xf32>, vector<256x32xf32> -> vector<256x32xf32>
    %95 = vector.broadcast %67 : vector<1x32xf32> to vector<256x32xf32>
    %96 = arith.addf %94, %95 : vector<256x32xf32>
    %cst_26 = arith.constant 0.000000e+00 : f32
    %97 = vector.broadcast %cst_26 : f32 to vector<256x32xf32>
    %98 = arith.cmpf oge, %96, %97 : vector<256x32xf32>
    %cst_27 = arith.constant 2.000000e-01 : f32
    %99 = vector.broadcast %cst_27 : f32 to vector<256x32xf32>
    %100 = arith.mulf %99, %96 : vector<256x32xf32>
    %101 = arith.select %98, %96, %100 : vector<256x32xi1>, vector<256x32xf32>
    %c0_28 = arith.constant 0 : index
    %c0_29 = arith.constant 0 : index
    %102 = vector.load %arg10[%c0_28, %c0_29] : memref<288x32xf32, #tpu.memory_space<vmem>>, vector<288x32xf32>
    %c0_30 = arith.constant 0 : index
    %c0_31 = arith.constant 0 : index
    %103 = vector.load %arg11[%c0_30, %c0_31] : memref<1x32xf32, #tpu.memory_space<vmem>>, vector<1x32xf32>
    %104 = vector.shape_cast %101 : vector<256x32xf32> to vector<16x16x32xf32>
    %105 = vector.extract_strided_slice %104 {offsets = [1, 0, 0], sizes = [1, 16, 32], strides = [1, 1, 1]} : vector<16x16x32xf32> to vector<1x16x32xf32>
    %106 = vector.extract_strided_slice %104 {offsets = [14, 0, 0], sizes = [1, 16, 32], strides = [1, 1, 1]} : vector<16x16x32xf32> to vector<1x16x32xf32>
    %107 = tpu.concatenate %105, %104, %106 in 0 : vector<1x16x32xf32>, vector<16x16x32xf32>, vector<1x16x32xf32> -> vector<18x16x32xf32>
    %108 = vector.extract_strided_slice %107 {offsets = [0, 1, 0], sizes = [18, 1, 32], strides = [1, 1, 1]} : vector<18x16x32xf32> to vector<18x1x32xf32>
    %109 = vector.extract_strided_slice %107 {offsets = [0, 14, 0], sizes = [18, 1, 32], strides = [1, 1, 1]} : vector<18x16x32xf32> to vector<18x1x32xf32>
    %110 = tpu.concatenate %108, %107, %109 in 1 : vector<18x1x32xf32>, vector<18x16x32xf32>, vector<18x1x32xf32> -> vector<18x18x32xf32>
    %111 = vector.extract_strided_slice %110 {offsets = [0, 0, 0], sizes = [16, 16, 32], strides = [1, 1, 1]} : vector<18x18x32xf32> to vector<16x16x32xf32>
    %112 = vector.shape_cast %111 : vector<16x16x32xf32> to vector<256x32xf32>
    %113 = vector.extract_strided_slice %110 {offsets = [0, 1, 0], sizes = [16, 16, 32], strides = [1, 1, 1]} : vector<18x18x32xf32> to vector<16x16x32xf32>
    %114 = vector.shape_cast %113 : vector<16x16x32xf32> to vector<256x32xf32>
    %115 = vector.extract_strided_slice %110 {offsets = [0, 2, 0], sizes = [16, 16, 32], strides = [1, 1, 1]} : vector<18x18x32xf32> to vector<16x16x32xf32>
    %116 = vector.shape_cast %115 : vector<16x16x32xf32> to vector<256x32xf32>
    %117 = vector.extract_strided_slice %110 {offsets = [1, 0, 0], sizes = [16, 16, 32], strides = [1, 1, 1]} : vector<18x18x32xf32> to vector<16x16x32xf32>
    %118 = vector.shape_cast %117 : vector<16x16x32xf32> to vector<256x32xf32>
    %119 = vector.extract_strided_slice %110 {offsets = [1, 1, 0], sizes = [16, 16, 32], strides = [1, 1, 1]} : vector<18x18x32xf32> to vector<16x16x32xf32>
    %120 = vector.shape_cast %119 : vector<16x16x32xf32> to vector<256x32xf32>
    %121 = vector.extract_strided_slice %110 {offsets = [1, 2, 0], sizes = [16, 16, 32], strides = [1, 1, 1]} : vector<18x18x32xf32> to vector<16x16x32xf32>
    %122 = vector.shape_cast %121 : vector<16x16x32xf32> to vector<256x32xf32>
    %123 = vector.extract_strided_slice %110 {offsets = [2, 0, 0], sizes = [16, 16, 32], strides = [1, 1, 1]} : vector<18x18x32xf32> to vector<16x16x32xf32>
    %124 = vector.shape_cast %123 : vector<16x16x32xf32> to vector<256x32xf32>
    %125 = vector.extract_strided_slice %110 {offsets = [2, 1, 0], sizes = [16, 16, 32], strides = [1, 1, 1]} : vector<18x18x32xf32> to vector<16x16x32xf32>
    %126 = vector.shape_cast %125 : vector<16x16x32xf32> to vector<256x32xf32>
    %127 = vector.extract_strided_slice %110 {offsets = [2, 2, 0], sizes = [16, 16, 32], strides = [1, 1, 1]} : vector<18x18x32xf32> to vector<16x16x32xf32>
    %128 = vector.shape_cast %127 : vector<16x16x32xf32> to vector<256x32xf32>
    %129 = tpu.concatenate %112, %114, %116, %118, %120, %122, %124, %126, %128 in 1 : vector<256x32xf32>, vector<256x32xf32>, vector<256x32xf32>, vector<256x32xf32>, vector<256x32xf32>, vector<256x32xf32>, vector<256x32xf32>, vector<256x32xf32>, vector<256x32xf32> -> vector<256x288xf32>
    %cst_32 = arith.constant dense<0.000000e+00> : vector<256x32xf32>
    %130 = tpu.matmul %129, %102, %cst_32 {dimension_numbers = #tpu.dot_dimension_numbers<[1], [0], [0], [1], [0, 0, 1, 1], [], []>} : vector<256x288xf32>, vector<288x32xf32>, vector<256x32xf32> -> vector<256x32xf32>
    %131 = vector.broadcast %103 : vector<1x32xf32> to vector<256x32xf32>
    %132 = arith.addf %130, %131 : vector<256x32xf32>
    %cst_33 = arith.constant dense<0.000000e+00> : vector<32xf32>
    %133 = vector.multi_reduction <add>, %132, %cst_33 [0] : vector<256x32xf32> to vector<32xf32>
    %134 = vector.shape_cast %133 : vector<32xf32> to vector<1x32xf32>
    %cst_34 = arith.constant 2.560000e+02 : f32
    %135 = vector.broadcast %cst_34 : f32 to vector<1x32xf32>
    %136 = arith.divf %134, %135 : vector<1x32xf32>
    %c0_35 = arith.constant 0 : index
    %c0_36 = arith.constant 0 : index
    %137 = vector.load %arg12[%c0_35, %c0_36] : memref<32x2xf32, #tpu.memory_space<vmem>>, vector<32x2xf32>
    %cst_37 = arith.constant dense<0.000000e+00> : vector<1x2xf32>
    %138 = tpu.matmul %136, %137, %cst_37 {dimension_numbers = #tpu.dot_dimension_numbers<[1], [0], [0], [1], [0, 0, 1, 1], [], []>} : vector<1x32xf32>, vector<32x2xf32>, vector<1x2xf32> -> vector<1x2xf32>
    %c0_38 = arith.constant 0 : index
    %c0_39 = arith.constant 0 : index
    %139 = vector.load %arg13[%c0_38, %c0_39] : memref<1x2xf32, #tpu.memory_space<vmem>>, vector<1x2xf32>
    %140 = arith.addf %138, %139 : vector<1x2xf32>
    %cst_40 = arith.constant 0.000000e+00 : f32
    %141 = vector.broadcast %cst_40 : f32 to vector<1x2xf32>
    %142 = arith.maximumf %140, %141 : vector<1x2xf32>
    %c0_41 = arith.constant 0 : index
    %c0_42 = arith.constant 0 : index
    %143 = vector.load %arg14[%c0_41, %c0_42] : memref<2x32xf32, #tpu.memory_space<vmem>>, vector<2x32xf32>
    %cst_43 = arith.constant dense<0.000000e+00> : vector<1x32xf32>
    %144 = tpu.matmul %142, %143, %cst_43 {dimension_numbers = #tpu.dot_dimension_numbers<[1], [0], [0], [1], [0, 0, 1, 1], [], []>} : vector<1x2xf32>, vector<2x32xf32>, vector<1x32xf32> -> vector<1x32xf32>
    %c0_44 = arith.constant 0 : index
    %c0_45 = arith.constant 0 : index
    %145 = vector.load %arg15[%c0_44, %c0_45] : memref<1x32xf32, #tpu.memory_space<vmem>>, vector<1x32xf32>
    %146 = arith.addf %144, %145 : vector<1x32xf32>
    %cst_46 = arith.constant 0.000000e+00 : f32
    %147 = vector.broadcast %cst_46 : f32 to vector<1x32xf32>
    %148 = arith.subf %147, %146 : vector<1x32xf32>
    %149 = math.exp %148 : vector<1x32xf32>
    %cst_47 = arith.constant 1.000000e+00 : f32
    %150 = vector.broadcast %cst_47 : f32 to vector<1x32xf32>
    %151 = arith.addf %150, %149 : vector<1x32xf32>
    %cst_48 = arith.constant 1.000000e+00 : f32
    %152 = vector.broadcast %cst_48 : f32 to vector<1x32xf32>
    %153 = arith.divf %152, %151 : vector<1x32xf32>
    %154 = vector.broadcast %153 : vector<1x32xf32> to vector<256x32xf32>
    %155 = arith.mulf %132, %154 : vector<256x32xf32>
    %156 = arith.addf %155, %65 : vector<256x32xf32>
    %c0_49 = arith.constant 0 : index
    %c0_50 = arith.constant 0 : index
    %157 = vector.load %arg16[%c0_49, %c0_50] : memref<288x4xf32, #tpu.memory_space<vmem>>, vector<288x4xf32>
    %c0_51 = arith.constant 0 : index
    %c0_52 = arith.constant 0 : index
    %158 = vector.load %arg17[%c0_51, %c0_52] : memref<1x4xf32, #tpu.memory_space<vmem>>, vector<1x4xf32>
    %159 = vector.shape_cast %156 : vector<256x32xf32> to vector<16x16x32xf32>
    %160 = vector.extract_strided_slice %159 {offsets = [1, 0, 0], sizes = [1, 16, 32], strides = [1, 1, 1]} : vector<16x16x32xf32> to vector<1x16x32xf32>
    %161 = vector.extract_strided_slice %159 {offsets = [14, 0, 0], sizes = [1, 16, 32], strides = [1, 1, 1]} : vector<16x16x32xf32> to vector<1x16x32xf32>
    %162 = tpu.concatenate %160, %159, %161 in 0 : vector<1x16x32xf32>, vector<16x16x32xf32>, vector<1x16x32xf32> -> vector<18x16x32xf32>
    %163 = vector.extract_strided_slice %162 {offsets = [0, 1, 0], sizes = [18, 1, 32], strides = [1, 1, 1]} : vector<18x16x32xf32> to vector<18x1x32xf32>
    %164 = vector.extract_strided_slice %162 {offsets = [0, 14, 0], sizes = [18, 1, 32], strides = [1, 1, 1]} : vector<18x16x32xf32> to vector<18x1x32xf32>
    %165 = tpu.concatenate %163, %162, %164 in 1 : vector<18x1x32xf32>, vector<18x16x32xf32>, vector<18x1x32xf32> -> vector<18x18x32xf32>
    %166 = vector.extract_strided_slice %165 {offsets = [0, 0, 0], sizes = [16, 16, 32], strides = [1, 1, 1]} : vector<18x18x32xf32> to vector<16x16x32xf32>
    %167 = vector.shape_cast %166 : vector<16x16x32xf32> to vector<256x32xf32>
    %168 = vector.extract_strided_slice %165 {offsets = [0, 1, 0], sizes = [16, 16, 32], strides = [1, 1, 1]} : vector<18x18x32xf32> to vector<16x16x32xf32>
    %169 = vector.shape_cast %168 : vector<16x16x32xf32> to vector<256x32xf32>
    %170 = vector.extract_strided_slice %165 {offsets = [0, 2, 0], sizes = [16, 16, 32], strides = [1, 1, 1]} : vector<18x18x32xf32> to vector<16x16x32xf32>
    %171 = vector.shape_cast %170 : vector<16x16x32xf32> to vector<256x32xf32>
    %172 = vector.extract_strided_slice %165 {offsets = [1, 0, 0], sizes = [16, 16, 32], strides = [1, 1, 1]} : vector<18x18x32xf32> to vector<16x16x32xf32>
    %173 = vector.shape_cast %172 : vector<16x16x32xf32> to vector<256x32xf32>
    %174 = vector.extract_strided_slice %165 {offsets = [1, 1, 0], sizes = [16, 16, 32], strides = [1, 1, 1]} : vector<18x18x32xf32> to vector<16x16x32xf32>
    %175 = vector.shape_cast %174 : vector<16x16x32xf32> to vector<256x32xf32>
    %176 = vector.extract_strided_slice %165 {offsets = [1, 2, 0], sizes = [16, 16, 32], strides = [1, 1, 1]} : vector<18x18x32xf32> to vector<16x16x32xf32>
    %177 = vector.shape_cast %176 : vector<16x16x32xf32> to vector<256x32xf32>
    %178 = vector.extract_strided_slice %165 {offsets = [2, 0, 0], sizes = [16, 16, 32], strides = [1, 1, 1]} : vector<18x18x32xf32> to vector<16x16x32xf32>
    %179 = vector.shape_cast %178 : vector<16x16x32xf32> to vector<256x32xf32>
    %180 = vector.extract_strided_slice %165 {offsets = [2, 1, 0], sizes = [16, 16, 32], strides = [1, 1, 1]} : vector<18x18x32xf32> to vector<16x16x32xf32>
    %181 = vector.shape_cast %180 : vector<16x16x32xf32> to vector<256x32xf32>
    %182 = vector.extract_strided_slice %165 {offsets = [2, 2, 0], sizes = [16, 16, 32], strides = [1, 1, 1]} : vector<18x18x32xf32> to vector<16x16x32xf32>
    %183 = vector.shape_cast %182 : vector<16x16x32xf32> to vector<256x32xf32>
    %184 = tpu.concatenate %167, %169, %171, %173, %175, %177, %179, %181, %183 in 1 : vector<256x32xf32>, vector<256x32xf32>, vector<256x32xf32>, vector<256x32xf32>, vector<256x32xf32>, vector<256x32xf32>, vector<256x32xf32>, vector<256x32xf32>, vector<256x32xf32> -> vector<256x288xf32>
    %cst_53 = arith.constant dense<0.000000e+00> : vector<256x4xf32>
    %185 = tpu.matmul %184, %157, %cst_53 {dimension_numbers = #tpu.dot_dimension_numbers<[1], [0], [0], [1], [0, 0, 1, 1], [], []>} : vector<256x288xf32>, vector<288x4xf32>, vector<256x4xf32> -> vector<256x4xf32>
    %186 = vector.broadcast %158 : vector<1x4xf32> to vector<256x4xf32>
    %187 = arith.addf %185, %186 : vector<256x4xf32>
    %188 = tpu.transpose %187, [1, 0] : vector<256x4xf32> -> vector<4x256xf32>
    %c0_54 = arith.constant 0 : index
    %c0_55 = arith.constant 0 : index
    %c0_56 = arith.constant 0 : index
    %189 = vector.load %arg18[%c0_54, %c0_55, %c0_56] : memref<1x4x256xf32, #tpu.memory_space<vmem>>, vector<1x4x256xf32>
    %190 = vector.shape_cast %189 : vector<1x4x256xf32> to vector<4x256xf32>
    %191 = vector.shape_cast %188 : vector<4x256xf32> to vector<1x4x256xf32>
    tpu.vector_store %arg18[%c0_54, %c0_55, %c0_56], %191 {strides = array<i32>} : memref<1x4x256xf32, #tpu.memory_space<vmem>>, vector<1x4x256xf32>,
    return
  }
  func.func @transform_0(%arg0: i32) -> (i32, i32, i32) {
    %c0_i32 = arith.constant 0 : i32
    %c0_i32_0 = arith.constant 0 : i32
    %c0_i32_1 = arith.constant 0 : i32
    return %arg0, %c0_i32, %c0_i32_0 : i32, i32, i32
  }
  func.func @transform_1(%arg0: i32) -> (i32, i32) {
    %c0_i32 = arith.constant 0 : i32
    %c0_i32_0 = arith.constant 0 : i32
    %c0_i32_1 = arith.constant 0 : i32
    return %c0_i32, %c0_i32_0 : i32, i32
  }
  func.func @transform_2(%arg0: i32) -> (i32, i32) {
    %c0_i32 = arith.constant 0 : i32
    %c0_i32_0 = arith.constant 0 : i32
    %c0_i32_1 = arith.constant 0 : i32
    return %c0_i32, %c0_i32_0 : i32, i32
  }
  func.func @transform_3(%arg0: i32) -> (i32, i32) {
    %c0_i32 = arith.constant 0 : i32
    %c0_i32_0 = arith.constant 0 : i32
    %c0_i32_1 = arith.constant 0 : i32
    return %c0_i32, %c0_i32_0 : i32, i32
  }
  func.func @transform_4(%arg0: i32) -> (i32, i32) {
    %c0_i32 = arith.constant 0 : i32
    %c0_i32_0 = arith.constant 0 : i32
    %c0_i32_1 = arith.constant 0 : i32
    return %c0_i32, %c0_i32_0 : i32, i32
  }
  func.func @transform_5(%arg0: i32) -> (i32, i32) {
    %c0_i32 = arith.constant 0 : i32
    %c0_i32_0 = arith.constant 0 : i32
    %c0_i32_1 = arith.constant 0 : i32
    return %c0_i32, %c0_i32_0 : i32, i32
  }
  func.func @transform_6(%arg0: i32) -> (i32, i32) {
    %c0_i32 = arith.constant 0 : i32
    %c0_i32_0 = arith.constant 0 : i32
    %c0_i32_1 = arith.constant 0 : i32
    return %c0_i32, %c0_i32_0 : i32, i32
  }
  func.func @transform_7(%arg0: i32) -> (i32, i32) {
    %c0_i32 = arith.constant 0 : i32
    %c0_i32_0 = arith.constant 0 : i32
    %c0_i32_1 = arith.constant 0 : i32
    return %c0_i32, %c0_i32_0 : i32, i32
  }
  func.func @transform_8(%arg0: i32) -> (i32, i32) {
    %c0_i32 = arith.constant 0 : i32
    %c0_i32_0 = arith.constant 0 : i32
    %c0_i32_1 = arith.constant 0 : i32
    return %c0_i32, %c0_i32_0 : i32, i32
  }
  func.func @transform_9(%arg0: i32) -> (i32, i32) {
    %c0_i32 = arith.constant 0 : i32
    %c0_i32_0 = arith.constant 0 : i32
    %c0_i32_1 = arith.constant 0 : i32
    return %c0_i32, %c0_i32_0 : i32, i32
  }
  func.func @transform_10(%arg0: i32) -> (i32, i32) {
    %c0_i32 = arith.constant 0 : i32
    %c0_i32_0 = arith.constant 0 : i32
    %c0_i32_1 = arith.constant 0 : i32
    return %c0_i32, %c0_i32_0 : i32, i32
  }
  func.func @transform_11(%arg0: i32) -> (i32, i32) {
    %c0_i32 = arith.constant 0 : i32
    %c0_i32_0 = arith.constant 0 : i32
    %c0_i32_1 = arith.constant 0 : i32
    return %c0_i32, %c0_i32_0 : i32, i32
  }
  func.func @transform_12(%arg0: i32) -> (i32, i32) {
    %c0_i32 = arith.constant 0 : i32
    %c0_i32_0 = arith.constant 0 : i32
    %c0_i32_1 = arith.constant 0 : i32
    return %c0_i32, %c0_i32_0 : i32, i32
  }
  func.func @transform_13(%arg0: i32) -> (i32, i32) {
    %c0_i32 = arith.constant 0 : i32
    %c0_i32_0 = arith.constant 0 : i32
    %c0_i32_1 = arith.constant 0 : i32
    return %c0_i32, %c0_i32_0 : i32, i32
  }
  func.func @transform_14(%arg0: i32) -> (i32, i32) {
    %c0_i32 = arith.constant 0 : i32
    %c0_i32_0 = arith.constant 0 : i32
    %c0_i32_1 = arith.constant 0 : i32
    return %c0_i32, %c0_i32_0 : i32, i32
  }
  func.func @transform_15(%arg0: i32) -> (i32, i32) {
    %c0_i32 = arith.constant 0 : i32
    %c0_i32_0 = arith.constant 0 : i32
    %c0_i32_1 = arith.constant 0 : i32
    return %c0_i32, %c0_i32_0 : i32, i32
  }
  func.func @transform_16(%arg0: i32) -> (i32, i32) {
    %c0_i32 = arith.constant 0 : i32
    %c0_i32_0 = arith.constant 0 : i32
    %c0_i32_1 = arith.constant 0 : i32
    return %c0_i32, %c0_i32_0 : i32, i32
  }
  func.func @transform_17(%arg0: i32) -> (i32, i32, i32) {
    %c0_i32 = arith.constant 0 : i32
    %c0_i32_0 = arith.constant 0 : i32
    %c0_i32_1 = arith.constant 0 : i32
    return %arg0, %c0_i32, %c0_i32_0 : i32, i32, i32
  }
}

</mosaic_0001>

<llo_original>
// kernel: myblock_forward.1
$region0: #{myblock_forward.1}
  #allocation0 [shape = 'u32[]', space=smem, size = 0x4, offset = 0x4, fixed_abs, tag = 'smem constant byte address 0x4 - core index']
  #allocation1 [shape = 'u32[144,128]{1,0:T(1,128)}', space=vmem, size = 0x12000, scoped, tag = 'internal scratch']
  %s0 = inlined_call_operand.vmem [shape: f32[2,8,256], index: 0, kind: input, shape index: {}]
  %s1 = inlined_call_operand.vmem [shape: f32[72,32], index: 1, kind: input, shape index: {}]
  %s2 = inlined_call_operand.vmem [shape: f32[1,32], index: 2, kind: input, shape index: {}]
  %s3 = inlined_call_operand.vmem [shape: f32[1,32], index: 3, kind: input, shape index: {}]
  %s4 = inlined_call_operand.vmem [shape: f32[1,32], index: 4, kind: input, shape index: {}]
  %s5 = inlined_call_operand.vmem [shape: f32[32,128], index: 5, kind: input, shape index: {}]
  %s6 = inlined_call_operand.vmem [shape: f32[64,32], index: 6, kind: input, shape index: {}]
  %s7 = inlined_call_operand.vmem [shape: f32[288,32], index: 7, kind: input, shape index: {}]
  %s8 = inlined_call_operand.vmem [shape: f32[1,32], index: 8, kind: input, shape index: {}]
  %s9 = inlined_call_operand.vmem [shape: f32[288,32], index: 9, kind: input, shape index: {}]
  %s10 = inlined_call_operand.vmem [shape: f32[1,32], index: 10, kind: input, shape index: {}]
  %s11 = inlined_call_operand.vmem [shape: f32[32,2], index: 11, kind: input, shape index: {}]
  %s12 = inlined_call_operand.vmem [shape: f32[1,2], index: 12, kind: input, shape index: {}]
  %s13 = inlined_call_operand.vmem [shape: f32[2,32], index: 13, kind: input, shape index: {}]
  %s14 = inlined_call_operand.vmem [shape: f32[1,32], index: 14, kind: input, shape index: {}]
  %s15 = inlined_call_operand.vmem [shape: f32[288,4], index: 15, kind: input, shape index: {}]
  %s16 = inlined_call_operand.vmem [shape: f32[1,4], index: 16, kind: input, shape index: {}]
  %s17 = inlined_call_operand.vmem [shape: f32[2,4,256], index: 17, kind: output, shape index: {}]
  %s18 = sld [smem:[#allocation0]]
  $region101: #{myblock_forward.1} parent=0
    _
  %s20 = ssub.s32 1, %s18
  %s21 = scalar_select 0, %s20, %s18
  loop: start=0, step=1, limit=4
  $region2: #{myblock_forward.1} parent=0 // loop_pre_header
    _
  $region3: #{myblock_forward.1} parent=0 // loop_header
    %s23 = sphi 0, %s27
    %p24 = scmp.ge.s32.totalorder %s23, 4
    %s33 = sphi 0, %s35
    %s36 = sphi 0, %s33
    %s37 = sphi 0, %s36
    %s53 = sphi 0, %s37
    %s57 = sphi 0, %s57
    %s59 = sphi 0, %s57
    %s60 = sphi 0, %s59
    %s74 = sphi 0, %s60
    %s78 = sphi 0, %s78
    %s80 = sphi 0, %s78
    %s81 = sphi 0, %s80
    %s95 = sphi 0, %s81
    %s99 = sphi 0, %s99
    %s101 = sphi 0, %s99
    %s102 = sphi 0, %s101
    %s116 = sphi 0, %s102
    %s120 = sphi 0, %s120
    %s122 = sphi 0, %s120
    %s123 = sphi 0, %s122
    %s137 = sphi 0, %s123
    %s141 = sphi 0, %s141
    %s143 = sphi 0, %s141
    %s144 = sphi 0, %s143
    %s158 = sphi 0, %s144
    %s162 = sphi 0, %s162
    %s164 = sphi 0, %s162
    %s165 = sphi 0, %s164
    %s179 = sphi 0, %s165
    %s183 = sphi 0, %s183
    %s185 = sphi 0, %s183
    %s186 = sphi 0, %s185
    %s200 = sphi 0, %s186
    %s204 = sphi 0, %s204
    %s206 = sphi 0, %s204
    %s207 = sphi 0, %s206
    %s221 = sphi 0, %s207
    %s225 = sphi 0, %s225
    %s227 = sphi 0, %s225
    %s228 = sphi 0, %s227
    %s242 = sphi 0, %s228
    %s246 = sphi 0, %s246
    %s248 = sphi 0, %s246
    %s249 = sphi 0, %s248
    %s263 = sphi 0, %s249
    %s267 = sphi 0, %s267
    %s269 = sphi 0, %s267
    %s270 = sphi 0, %s269
    %s284 = sphi 0, %s270
    %s288 = sphi 0, %s288
    %s290 = sphi 0, %s288
    %s291 = sphi 0, %s290
    %s305 = sphi 0, %s291
    %s309 = sphi 0, %s309
    %s311 = sphi 0, %s309
    %s312 = sphi 0, %s311
    %s326 = sphi 0, %s312
    %s330 = sphi 0, %s330
    %s332 = sphi 0, %s330
    %s333 = sphi 0, %s332
    %s347 = sphi 0, %s333
    %s351 = sphi 0, %s351
    %s353 = sphi 0, %s351
    %s354 = sphi 0, %s353
    %s368 = sphi 0, %s354
    %s372 = sphi 0, %s372
    %s374 = sphi 0, %s372
    %s375 = sphi 0, %s374
    %s389 = sphi 0, %s375
    %s395 = sphi 0, %s397
    %s398 = sphi 0, %s395
    %s399 = sphi 0, %s398
    %s415 = sphi 0, %s399
  $region4: #{myblock_forward.1} parent=0 // loop_header_branch
    %26 = sbr.rel (%p24) target = $region8
  $region5: #{myblock_forward.1} parent=0 // loop_body
    %s28 = ssub.s32 %s23, 1
    %s29 = ssub.s32 %s23, 2
    %s30 = sadd.s32 %s23, 1
    %s31 = ssub.s32 %s23, %s30
    %p32 = scmp.eq.s32.totalorder %s31, 0
    %s34 = sadd.s32 %s33, 1
    %s35 = scalar_select %p32, %s33, %s34
    %p38 = pneg %p32
    %p39 = scmp.eq.s32.totalorder %s23, 1
    %p40 = por %p38, %p39
    %p41 = scmp.ne.s32.totalorder %s33, %s36
    %p42 = scmp.eq.s32.totalorder %s23, 0
    %p43 = por %p41, %p42
    %p44 = scmp.ne.s32.totalorder %s33, %s36
    %p45 = scmp.eq.s32.totalorder %s28, 1
    %p46 = por %p44, %p45
    %p47 = scmp.ne.s32.totalorder %s36, %s37
    %p48 = scmp.eq.s32.totalorder %s28, 0
    %p49 = por %p47, %p48
    %p50 = scmp.ne.s32.totalorder %s36, %s37
    %p51 = scmp.eq.s32.totalorder %s29, 1
    %p52 = por %p50, %p51
    %p54 = scmp.ne.s32.totalorder %s37, %s53
    %p55 = scmp.eq.s32.totalorder %s29, 0
    %p56 = por %p54, %p55
    %s58 = sadd.s32 %s57, 1
    %p61 = scmp.eq.s32.totalorder %s23, 1
    %p62 = scmp.ne.s32.totalorder %s57, %s59
    %p63 = scmp.eq.s32.totalorder %s23, 0
    %p64 = por %p62, %p63
    %p65 = scmp.ne.s32.totalorder %s57, %s59
    %p66 = scmp.eq.s32.totalorder %s28, 1
    %p67 = por %p65, %p66
    %p68 = scmp.ne.s32.totalorder %s59, %s60
    %p69 = scmp.eq.s32.totalorder %s28, 0
    %p70 = por %p68, %p69
    %p71 = scmp.ne.s32.totalorder %s59, %s60
    %p72 = scmp.eq.s32.totalorder %s29, 1
    %p73 = por %p71, %p72
    %p75 = scmp.ne.s32.totalorder %s60, %s74
    %p76 = scmp.eq.s32.totalorder %s29, 0
    %p77 = por %p75, %p76
    %s79 = sadd.s32 %s78, 1
    %p82 = scmp.eq.s32.totalorder %s23, 1
    %p83 = scmp.ne.s32.totalorder %s78, %s80
    %p84 = scmp.eq.s32.totalorder %s23, 0
    %p85 = por %p83, %p84
    %p86 = scmp.ne.s32.totalorder %s78, %s80
    %p87 = scmp.eq.s32.totalorder %s28, 1
    %p88 = por %p86, %p87
    %p89 = scmp.ne.s32.totalorder %s80, %s81
    %p90 = scmp.eq.s32.totalorder %s28, 0
    %p91 = por %p89, %p90
    %p92 = scmp.ne.s32.totalorder %s80, %s81
    %p93 = scmp.eq.s32.totalorder %s29, 1
    %p94 = por %p92, %p93
    %p96 = scmp.ne.s32.totalorder %s81, %s95
    %p97 = scmp.eq.s32.totalorder %s29, 0
    %p98 = por %p96, %p97
    %s100 = sadd.s32 %s99, 1
    %p103 = scmp.eq.s32.totalorder %s23, 1
    %p104 = scmp.ne.s32.totalorder %s99, %s101
    %p105 = scmp.eq.s32.totalorder %s23, 0
    %p106 = por %p104, %p105
    %p107 = scmp.ne.s32.totalorder %s99, %s101
    %p108 = scmp.eq.s32.totalorder %s28, 1
    %p109 = por %p107, %p108
    %p110 = scmp.ne.s32.totalorder %s101, %s102
    %p111 = scmp.eq.s32.totalorder %s28, 0
    %p112 = por %p110, %p111
    %p113 = scmp.ne.s32.totalorder %s101, %s102
    %p114 = scmp.eq.s32.totalorder %s29, 1
    %p115 = por %p113, %p114
    %p117 = scmp.ne.s32.totalorder %s102, %s116
    %p118 = scmp.eq.s32.totalorder %s29, 0
    %p119 = por %p117, %p118
    %s121 = sadd.s32 %s120, 1
    %p124 = scmp.eq.s32.totalorder %s23, 1
    %p125 = scmp.ne.s32.totalorder %s120, %s122
    %p126 = scmp.eq.s32.totalorder %s23, 0
    %p127 = por %p125, %p126
    %p128 = scmp.ne.s32.totalorder %s120, %s122
    %p129 = scmp.eq.s32.totalorder %s28, 1
    %p130 = por %p128, %p129
    %p131 = scmp.ne.s32.totalorder %s122, %s123
    %p132 = scmp.eq.s32.totalorder %s28, 0
    %p133 = por %p131, %p132
    %p134 = scmp.ne.s32.totalorder %s122, %s123
    %p135 = scmp.eq.s32.totalorder %s29, 1
    %p136 = por %p134, %p135
    %p138 = scmp.ne.s32.totalorder %s123, %s137
    %p139 = scmp.eq.s32.totalorder %s29, 0
    %p140 = por %p138, %p139
    %s142 = sadd.s32 %s141, 1
    %p145 = scmp.eq.s32.totalorder %s23, 1
    %p146 = scmp.ne.s32.totalorder %s141, %s143
    %p147 = scmp.eq.s32.totalorder %s23, 0
    %p148 = por %p146, %p147
    %p149 = scmp.ne.s32.totalorder %s141, %s143
    %p150 = scmp.eq.s32.totalorder %s28, 1
    %p151 = por %p149, %p150
    %p152 = scmp.ne.s32.totalorder %s143, %s144
    %p153 = scmp.eq.s32.totalorder %s28, 0
    %p154 = por %p152, %p153
    %p155 = scmp.ne.s32.totalorder %s143, %s144
    %p156 = scmp.eq.s32.totalorder %s29, 1
    %p157 = por %p155, %p156
    %p159 = scmp.ne.s32.totalorder %s144, %s158
    %p160 = scmp.eq.s32.totalorder %s29, 0
    %p161 = por %p159, %p160
    %s163 = sadd.s32 %s162, 1
    %p166 = scmp.eq.s32.totalorder %s23, 1
    %p167 = scmp.ne.s32.totalorder %s162, %s164
    %p168 = scmp.eq.s32.totalorder %s23, 0
    %p169 = por %p167, %p168
    %p170 = scmp.ne.s32.totalorder %s162, %s164
    %p171 = scmp.eq.s32.totalorder %s28, 1
    %p172 = por %p170, %p171
    %p173 = scmp.ne.s32.totalorder %s164, %s165
    %p174 = scmp.eq.s32.totalorder %s28, 0
    %p175 = por %p173, %p174
    %p176 = scmp.ne.s32.totalorder %s164, %s165
    %p177 = scmp.eq.s32.totalorder %s29, 1
    %p178 = por %p176, %p177
    %p180 = scmp.ne.s32.totalorder %s165, %s179
    %p181 = scmp.eq.s32.totalorder %s29, 0
    %p182 = por %p180, %p181
    %s184 = sadd.s32 %s183, 1
    %p187 = scmp.eq.s32.totalorder %s23, 1
    %p188 = scmp.ne.s32.totalorder %s183, %s185
    %p189 = scmp.eq.s32.totalorder %s23, 0
    %p190 = por %p188, %p189
    %p191 = scmp.ne.s32.totalorder %s183, %s185
    %p192 = scmp.eq.s32.totalorder %s28, 1
    %p193 = por %p191, %p192
    %p194 = scmp.ne.s32.totalorder %s185, %s186
    %p195 = scmp.eq.s32.totalorder %s28, 0
    %p196 = por %p194, %p195
    %p197 = scmp.ne.s32.totalorder %s185, %s186
    %p198 = scmp.eq.s32.totalorder %s29, 1
    %p199 = por %p197, %p198
    %p201 = scmp.ne.s32.totalorder %s186, %s200
    %p202 = scmp.eq.s32.totalorder %s29, 0
    %p203 = por %p201, %p202
    %s205 = sadd.s32 %s204, 1
    %p208 = scmp.eq.s32.totalorder %s23, 1
    %p209 = scmp.ne.s32.totalorder %s204, %s206
    %p210 = scmp.eq.s32.totalorder %s23, 0
    %p211 = por %p209, %p210
    %p212 = scmp.ne.s32.totalorder %s204, %s206
    %p213 = scmp.eq.s32.totalorder %s28, 1
    %p214 = por %p212, %p213
    %p215 = scmp.ne.s32.totalorder %s206, %s207
    %p216 = scmp.eq.s32.totalorder %s28, 0
    %p217 = por %p215, %p216
    %p218 = scmp.ne.s32.totalorder %s206, %s207
    %p219 = scmp.eq.s32.totalorder %s29, 1
    %p220 = por %p218, %p219
    %p222 = scmp.ne.s32.totalorder %s207, %s221
    %p223 = scmp.eq.s32.totalorder %s29, 0
    %p224 = por %p222, %p223
    %s226 = sadd.s32 %s225, 1
    %p229 = scmp.eq.s32.totalorder %s23, 1
    %p230 = scmp.ne.s32.totalorder %s225, %s227
    %p231 = scmp.eq.s32.totalorder %s23, 0
    %p232 = por %p230, %p231
    %p233 = scmp.ne.s32.totalorder %s225, %s227
    %p234 = scmp.eq.s32.totalorder %s28, 1
    %p235 = por %p233, %p234
    %p236 = scmp.ne.s32.totalorder %s227, %s228
    %p237 = scmp.eq.s32.totalorder %s28, 0
    %p238 = por %p236, %p237
    %p239 = scmp.ne.s32.totalorder %s227, %s228
    %p240 = scmp.eq.s32.totalorder %s29, 1
    %p241 = por %p239, %p240
    %p243 = scmp.ne.s32.totalorder %s228, %s242
    %p244 = scmp.eq.s32.totalorder %s29, 0
    %p245 = por %p243, %p244
    %s247 = sadd.s32 %s246, 1
    %p250 = scmp.eq.s32.totalorder %s23, 1
    %p251 = scmp.ne.s32.totalorder %s246, %s248
    %p252 = scmp.eq.s32.totalorder %s23, 0
    %p253 = por %p251, %p252
    %p254 = scmp.ne.s32.totalorder %s246, %s248
    %p255 = scmp.eq.s32.totalorder %s28, 1
    %p256 = por %p254, %p255
    %p257 = scmp.ne.s32.totalorder %s248, %s249
    %p258 = scmp.eq.s32.totalorder %s28, 0
    %p259 = por %p257, %p258
    %p260 = scmp.ne.s32.totalorder %s248, %s249
    %p261 = scmp.eq.s32.totalorder %s29, 1
    %p262 = por %p260, %p261
    %p264 = scmp.ne.s32.totalorder %s249, %s263
    %p265 = scmp.eq.s32.totalorder %s29, 0
    %p266 = por %p264, %p265
    %s268 = sadd.s32 %s267, 1
    %p271 = scmp.eq.s32.totalorder %s23, 1
    %p272 = scmp.ne.s32.totalorder %s267, %s269
    %p273 = scmp.eq.s32.totalorder %s23, 0
    %p274 = por %p272, %p273
    %p275 = scmp.ne.s32.totalorder %s267, %s269
    %p276 = scmp.eq.s32.totalorder %s28, 1
    %p277 = por %p275, %p276
    %p278 = scmp.ne.s32.totalorder %s269, %s270
    %p279 = scmp.eq.s32.totalorder %s28, 0
    %p280 = por %p278, %p279
    %p281 = scmp.ne.s32.totalorder %s269, %s270
    %p282 = scmp.eq.s32.totalorder %s29, 1
    %p283 = por %p281, %p282
    %p285 = scmp.ne.s32.totalorder %s270, %s284
    %p286 = scmp.eq.s32.totalorder %s29, 0
    %p287 = por %p285, %p286
    %s289 = sadd.s32 %s288, 1
    %p292 = scmp.eq.s32.totalorder %s23, 1
    %p293 = scmp.ne.s32.totalorder %s288, %s290
    %p294 = scmp.eq.s32.totalorder %s23, 0
    %p295 = por %p293, %p294
    %p296 = scmp.ne.s32.totalorder %s288, %s290
    %p297 = scmp.eq.s32.totalorder %s28, 1
    %p298 = por %p296, %p297
    %p299 = scmp.ne.s32.totalorder %s290, %s291
    %p300 = scmp.eq.s32.totalorder %s28, 0
    %p301 = por %p299, %p300
    %p302 = scmp.ne.s32.totalorder %s290, %s291
    %p303 = scmp.eq.s32.totalorder %s29, 1
    %p304 = por %p302, %p303
    %p306 = scmp.ne.s32.totalorder %s291, %s305
    %p307 = scmp.eq.s32.totalorder %s29, 0
    %p308 = por %p306, %p307
    %s310 = sadd.s32 %s309, 1
    %p313 = scmp.eq.s32.totalorder %s23, 1
    %p314 = scmp.ne.s32.totalorder %s309, %s311
    %p315 = scmp.eq.s32.totalorder %s23, 0
    %p316 = por %p314, %p315
    %p317 = scmp.ne.s32.totalorder %s309, %s311
    %p318 = scmp.eq.s32.totalorder %s28, 1
    %p319 = por %p317, %p318
    %p320 = scmp.ne.s32.totalorder %s311, %s312
    %p321 = scmp.eq.s32.totalorder %s28, 0
    %p322 = por %p320, %p321
    %p323 = scmp.ne.s32.totalorder %s311, %s312
    %p324 = scmp.eq.s32.totalorder %s29, 1
    %p325 = por %p323, %p324
    %p327 = scmp.ne.s32.totalorder %s312, %s326
    %p328 = scmp.eq.s32.totalorder %s29, 0
    %p329 = por %p327, %p328
    %s331 = sadd.s32 %s330, 1
    %p334 = scmp.eq.s32.totalorder %s23, 1
    %p335 = scmp.ne.s32.totalorder %s330, %s332
    %p336 = scmp.eq.s32.totalorder %s23, 0
    %p337 = por %p335, %p336
    %p338 = scmp.ne.s32.totalorder %s330, %s332
    %p339 = scmp.eq.s32.totalorder %s28, 1
    %p340 = por %p338, %p339
    %p341 = scmp.ne.s32.totalorder %s332, %s333
    %p342 = scmp.eq.s32.totalorder %s28, 0
    %p343 = por %p341, %p342
    %p344 = scmp.ne.s32.totalorder %s332, %s333
    %p345 = scmp.eq.s32.totalorder %s29, 1
    %p346 = por %p344, %p345
    %p348 = scmp.ne.s32.totalorder %s333, %s347
    %p349 = scmp.eq.s32.totalorder %s29, 0
    %p350 = por %p348, %p349
    %s352 = sadd.s32 %s351, 1
    %p355 = scmp.eq.s32.totalorder %s23, 1
    %p356 = scmp.ne.s32.totalorder %s351, %s353
    %p357 = scmp.eq.s32.totalorder %s23, 0
    %p358 = por %p356, %p357
    %p359 = scmp.ne.s32.totalorder %s351, %s353
    %p360 = scmp.eq.s32.totalorder %s28, 1
    %p361 = por %p359, %p360
    %p362 = scmp.ne.s32.totalorder %s353, %s354
    %p363 = scmp.eq.s32.totalorder %s28, 0
    %p364 = por %p362, %p363
    %p365 = scmp.ne.s32.totalorder %s353, %s354
    %p366 = scmp.eq.s32.totalorder %s29, 1
    %p367 = por %p365, %p366
    %p369 = scmp.ne.s32.totalorder %s354, %s368
    %p370 = scmp.eq.s32.totalorder %s29, 0
    %p371 = por %p369, %p370
    %s373 = sadd.s32 %s372, 1
    %p376 = scmp.eq.s32.totalorder %s23, 1
    %p377 = scmp.ne.s32.totalorder %s372, %s374
    %p378 = scmp.eq.s32.totalorder %s23, 0
    %p379 = por %p377, %p378
    %p380 = scmp.ne.s32.totalorder %s372, %s374
    %p381 = scmp.eq.s32.totalorder %s28, 1
    %p382 = por %p380, %p381
    %p383 = scmp.ne.s32.totalorder %s374, %s375
    %p384 = scmp.eq.s32.totalorder %s28, 0
    %p385 = por %p383, %p384
    %p386 = scmp.ne.s32.totalorder %s374, %s375
    %p387 = scmp.eq.s32.totalorder %s29, 1
    %p388 = por %p386, %p387
    %p390 = scmp.ne.s32.totalorder %s375, %s389
    %p391 = scmp.eq.s32.totalorder %s29, 0
    %p392 = por %p390, %p391
    %s393 = ssub.s32 %s23, %s30
    %p394 = scmp.eq.s32.totalorder %s393, 0
    %s396 = sadd.s32 %s395, 1
    %s397 = scalar_select %p394, %s395, %s396
    %p400 = pneg %p394
    %p401 = scmp.eq.s32.totalorder %s23, 1
    %p402 = por %p400, %p401
    %p403 = scmp.ne.s32.totalorder %s395, %s398
    %p404 = scmp.eq.s32.totalorder %s23, 0
    %p405 = por %p403, %p404
    %p406 = scmp.ne.s32.totalorder %s395, %s398
    %p407 = scmp.eq.s32.totalorder %s28, 1
    %p408 = por %p406, %p407
    %p409 = scmp.ne.s32.totalorder %s398, %s399
    %p410 = scmp.eq.s32.totalorder %s28, 0
    %p411 = por %p409, %p410
    %p412 = scmp.ne.s32.totalorder %s398, %s399
    %p413 = scmp.eq.s32.totalorder %s29, 1
    %p414 = por %p412, %p413
    %p416 = scmp.ne.s32.totalorder %s399, %s415
    %p417 = scmp.eq.s32.totalorder %s29, 0
    %p418 = por %p416, %p417
    %p419 = scmp.le.s32.totalorder 1, %s23
    %p420 = scmp.lt.s32.totalorder %s23, 3
    %p421 = pnand %p419, %p420
    %p422 = pneg %p421
    // Predicated region
    $region9: #{myblock_forward.1} parent=5 // pred_check
      _
    $region10: #{myblock_forward.1} parent=5 // pred_check_branch
      %424 = sbr.rel (%p421) target = $region12
    $region11: #{myblock_forward.1} parent=5 // pred_region
      %s425 = ssub.s32 %s23, 1
      // Predicated region
      $region13: #{myblock_forward.1} parent=11 // pred_check
        %p426 = pneg %p70
      $region14: #{myblock_forward.1} parent=11 // pred_check_branch
        %428 = sbr.rel (%p426) target = $region16
      $region15: #{myblock_forward.1} parent=11 // pred_region
        _
      $region16: #{myblock_forward.1} parent=11 // pred_fallthru
        _
      // Predicated region
      $region17: #{myblock_forward.1} parent=11 // pred_check
        %p429 = pneg %p91
      $region18: #{myblock_forward.1} parent=11 // pred_check_branch
        %431 = sbr.rel (%p429) target = $region20
      $region19: #{myblock_forward.1} parent=11 // pred_region
        _
      $region20: #{myblock_forward.1} parent=11 // pred_fallthru
        _
      // Predicated region
      $region21: #{myblock_forward.1} parent=11 // pred_check
        %p432 = pneg %p112
      $region22: #{myblock_forward.1} parent=11 // pred_check_branch
        %434 = sbr.rel (%p432) target = $region24
      $region23: #{myblock_forward.1} parent=11 // pred_region
        _
      $region24: #{myblock_forward.1} parent=11 // pred_fallthru
        _
      // Predicated region
      $region25: #{myblock_forward.1} parent=11 // pred_check
        %p435 = pneg %p133
      $region26: #{myblock_forward.1} parent=11 // pred_check_branch
        %437 = sbr.rel (%p435) target = $region28
      $region27: #{myblock_forward.1} parent=11 // pred_region
        _
      $region28: #{myblock_forward.1} parent=11 // pred_fallthru
        _
      // Predicated region
      $region29: #{myblock_forward.1} parent=11 // pred_check
        %p438 = pneg %p154
      $region30: #{myblock_forward.1} parent=11 // pred_check_branch
        %440 = sbr.rel (%p438) target = $region32
      $region31: #{myblock_forward.1} parent=11 // pred_region
        _
      $region32: #{myblock_forward.1} parent=11 // pred_fallthru
        _
      // Predicated region
      $region33: #{myblock_forward.1} parent=11 // pred_check
        %p441 = pneg %p175
      $region34: #{myblock_forward.1} parent=11 // pred_check_branch
        %443 = sbr.rel (%p441) target = $region36
      $region35: #{myblock_forward.1} parent=11 // pred_region
        _
      $region36: #{myblock_forward.1} parent=11 // pred_fallthru
        _
      // Predicated region
      $region37: #{myblock_forward.1} parent=11 // pred_check
        %p444 = pneg %p196
      $region38: #{myblock_forward.1} parent=11 // pred_check_branch
        %446 = sbr.rel (%p444) target = $region40
      $region39: #{myblock_forward.1} parent=11 // pred_region
        _
      $region40: #{myblock_forward.1} parent=11 // pred_fallthru
        _
      // Predicated region
      $region41: #{myblock_forward.1} parent=11 // pred_check
        %p447 = pneg %p217
      $region42: #{myblock_forward.1} parent=11 // pred_check_branch
        %449 = sbr.rel (%p447) target = $region44
      $region43: #{myblock_forward.1} parent=11 // pred_region
        _
      $region44: #{myblock_forward.1} parent=11 // pred_fallthru
        _
      // Predicated region
      $region45: #{myblock_forward.1} parent=11 // pred_check
        %p450 = pneg %p238
      $region46: #{myblock_forward.1} parent=11 // pred_check_branch
        %452 = sbr.rel (%p450) target = $region48
      $region47: #{myblock_forward.1} parent=11 // pred_region
        _
      $region48: #{myblock_forward.1} parent=11 // pred_fallthru
        _
      // Predicated region
      $region49: #{myblock_forward.1} parent=11 // pred_check
        %p453 = pneg %p259
      $region50: #{myblock_forward.1} parent=11 // pred_check_branch
        %455 = sbr.rel (%p453) target = $region52
      $region51: #{myblock_forward.1} parent=11 // pred_region
        _
      $region52: #{myblock_forward.1} parent=11 // pred_fallthru
        _
      // Predicated region
      $region53: #{myblock_forward.1} parent=11 // pred_check
        %p456 = pneg %p280
      $region54: #{myblock_forward.1} parent=11 // pred_check_branch
        %458 = sbr.rel (%p456) target = $region56
      $region55: #{myblock_forward.1} parent=11 // pred_region
        _
      $region56: #{myblock_forward.1} parent=11 // pred_fallthru
        _
      // Predicated region
      $region57: #{myblock_forward.1} parent=11 // pred_check
        %p459 = pneg %p301
      $region58: #{myblock_forward.1} parent=11 // pred_check_branch
        %461 = sbr.rel (%p459) target = $region60
      $region59: #{myblock_forward.1} parent=11 // pred_region
        _
      $region60: #{myblock_forward.1} parent=11 // pred_fallthru
        _
      // Predicated region
      $region61: #{myblock_forward.1} parent=11 // pred_check
        %p462 = pneg %p322
      $region62: #{myblock_forward.1} parent=11 // pred_check_branch
        %464 = sbr.rel (%p462) target = $region64
      $region63: #{myblock_forward.1} parent=11 // pred_region
        _
      $region64: #{myblock_forward.1} parent=11 // pred_fallthru
        _
      // Predicated region
      $region65: #{myblock_forward.1} parent=11 // pred_check
        %p465 = pneg %p343
      $region66: #{myblock_forward.1} parent=11 // pred_check_branch
        %467 = sbr.rel (%p465) target = $region68
      $region67: #{myblock_forward.1} parent=11 // pred_region
        _
      $region68: #{myblock_forward.1} parent=11 // pred_fallthru
        _
      // Predicated region
      $region69: #{myblock_forward.1} parent=11 // pred_check
        %p468 = pneg %p364
      $region70: #{myblock_forward.1} parent=11 // pred_check_branch
        %470 = sbr.rel (%p468) target = $region72
      $region71: #{myblock_forward.1} parent=11 // pred_region
        _
      $region72: #{myblock_forward.1} parent=11 // pred_fallthru
        _
      // Predicated region
      $region73: #{myblock_forward.1} parent=11 // pred_check
        %p471 = pneg %p385
      $region74: #{myblock_forward.1} parent=11 // pred_check_branch
        %473 = sbr.rel (%p471) target = $region76
      $region75: #{myblock_forward.1} parent=11 // pred_region
        _
      $region76: #{myblock_forward.1} parent=11 // pred_fallthru
        _
    $region12: #{myblock_forward.1} parent=5 // pred_fallthru
      _
    %p474 = scmp.lt.s32.totalorder %s23, 2
    // Predicated region
    $region77: #{myblock_forward.1} parent=5 // pred_check
      %p475 = pneg %p474
    $region78: #{myblock_forward.1} parent=5 // pred_check_branch
      %477 = sbr.rel (%p475) target = $region80
    $region79: #{myblock_forward.1} parent=5 // pred_region
      // Predicated region
      $region81: #{myblock_forward.1} parent=79 // pred_check
        %p478 = pneg %p43
      $region82: #{myblock_forward.1} parent=79 // pred_check_branch
        %480 = sbr.rel (%p478) target = $region84
      $region83: #{myblock_forward.1} parent=79 // pred_region
        %p481 = scmp.lt.s32.totalorder %s23, 1
        %s482 = scalar_select %p481, %s23, 1
        %s483 = smul.addr %s482, 2
        %s484 = smul.addr %s483, 8
        %s485 = scalar_lea.vmem %s0, %s484
      $region84: #{myblock_forward.1} parent=79 // pred_fallthru
        _
    $region80: #{myblock_forward.1} parent=5 // pred_fallthru
      _
    %p486 = scmp.le.s32.totalorder 1, %s23
    %p487 = scmp.lt.s32.totalorder %s23, 3
    %p488 = pnand %p486, %p487
    %p489 = pneg %p488
    // Predicated region
    $region85: #{myblock_forward.1} parent=5 // pred_check
      _
    $region86: #{myblock_forward.1} parent=5 // pred_check_branch
      %491 = sbr.rel (%p488) target = $region88
    $region87: #{myblock_forward.1} parent=5 // pred_region
      %s492 = ssub.s32 %s23, 1
      %p493 = scmp.lt.s32.totalorder %s28, 1
      %s494 = scalar_select %p493, %s28, 1
      %s495 = smul.addr %s494, 2
      %s496 = smul.addr %s495, 8
      %s497 = scalar_lea.vmem %s0, %s496
      %p498 = pneg %p49
      %p499 = pneg %p46
      %p500 = pneg %p70
      %p501 = pneg %p67
      %p502 = pneg %p91
      %p503 = pneg %p88
      %p504 = pneg %p112
      %p505 = pneg %p109
      %p506 = pneg %p133
      %p507 = pneg %p130
      %p508 = pneg %p154
      %p509 = pneg %p151
      %p510 = pneg %p175
      %p511 = pneg %p172
      %p512 = pneg %p196
      %p513 = pneg %p193
      %p514 = pneg %p217
      %p515 = pneg %p214
      %p516 = pneg %p238
      %p517 = pneg %p235
      %p518 = pneg %p259
      %p519 = pneg %p256
      %p520 = pneg %p280
      %p521 = pneg %p277
      %p522 = pneg %p301
      %p523 = pneg %p298
      %p524 = pneg %p322
      %p525 = pneg %p319
      %p526 = pneg %p343
      %p527 = pneg %p340
      %p528 = pneg %p364
      %p529 = pneg %p361
      %p530 = pneg %p385
      %p531 = pneg %p382
      %p532 = pneg %p411
      %p533 = pneg %p408
      %p534 = scmp.lt.s32.totalorder %s28, 1
      %s535 = scalar_select %p534, %s28, 1
      %s536 = smul.addr %s535, 2
      %s537 = smul.addr %s536, 4
      %s538 = scalar_lea.vmem %s17, %s537
      %p539 = scmp.lt.s32.totalorder %s28, 1
      %s540 = scalar_select %p539, %s28, 1
      %s541 = smul.addr %s540, 2
      %s542 = smul.addr %s541, 8
      %s543 = scalar_lea.vmem %s0, %s542
      %p544 = scmp.lt.s32.totalorder %s28, 1
      %s545 = scalar_select %p544, %s28, 1
      %s546 = smul.addr %s545, 2
      %s547 = smul.addr %s546, 4
      %s548 = scalar_lea.vmem %s17, %s547
      %v549 = vld [vmem:[%s543] sm:$0xff]
      %v550 = vld [vmem:[%s543 + $0x8] sm:$0xff]
      %551 = vxpose.xlu0.b32.start [1/16] %v549, 128
      %552 = vxpose.xlu0.b32.cont [2/16] 0.0, 128
      %553 = vxpose.xlu0.b32.cont [3/16] 0.0, 128
      %554 = vxpose.xlu0.b32.cont [4/16] 0.0, 128
      %555 = vxpose.xlu0.b32.cont [5/16] 0.0, 128
      %556 = vxpose.xlu0.b32.cont [6/16] 0.0, 128
      %557 = vxpose.xlu0.b32.cont [7/16] 0.0, 128
      %558 = vxpose.xlu0.b32.cont [8/16] 0.0, 128
      %559 = vxpose.xlu0.b32.cont [9/16] 0.0, 128
      %560 = vxpose.xlu0.b32.cont [10/16] 0.0, 128
      %561 = vxpose.xlu0.b32.cont [11/16] 0.0, 128
      %562 = vxpose.xlu0.b32.cont [12/16] 0.0, 128
      %563 = vxpose.xlu0.b32.cont [13/16] 0.0, 128
      %564 = vxpose.xlu0.b32.cont [14/16] 0.0, 128
      %565 = vxpose.xlu0.b32.cont [15/16] 0.0, 128
      %566 = vxpose.xlu0.b32.end [16/16] 0.0, 128
      %v567 = vpop.trf.xlu0
      %v568 = vpop.trf.xlu0
      %v569 = vpop.trf.xlu0
      %v570 = vpop.trf.xlu0
      %v571 = vpop.trf.xlu0
      %v572 = vpop.trf.xlu0
      %v573 = vpop.trf.xlu0
      %v574 = vpop.trf.xlu0
      %v575 = vpop.trf.xlu0
      %v576 = vpop.trf.xlu0
      %v577 = vpop.trf.xlu0
      %v578 = vpop.trf.xlu0
      %v579 = vpop.trf.xlu0
      %v580 = vpop.trf.xlu0
      %v581 = vpop.trf.xlu0
      %v582 = vpop.trf.xlu0
      %583 = vxpose.xlu0.b32.start [1/16] %v550, 128
      %584 = vxpose.xlu0.b32.cont [2/16] 0.0, 128
      %585 = vxpose.xlu0.b32.cont [3/16] 0.0, 128
      %586 = vxpose.xlu0.b32.cont [4/16] 0.0, 128
      %587 = vxpose.xlu0.b32.cont [5/16] 0.0, 128
      %588 = vxpose.xlu0.b32.cont [6/16] 0.0, 128
      %589 = vxpose.xlu0.b32.cont [7/16] 0.0, 128
      %590 = vxpose.xlu0.b32.cont [8/16] 0.0, 128
      %591 = vxpose.xlu0.b32.cont [9/16] 0.0, 128
      %592 = vxpose.xlu0.b32.cont [10/16] 0.0, 128
      %593 = vxpose.xlu0.b32.cont [11/16] 0.0, 128
      %594 = vxpose.xlu0.b32.cont [12/16] 0.0, 128
      %595 = vxpose.xlu0.b32.cont [13/16] 0.0, 128
      %596 = vxpose.xlu0.b32.cont [14/16] 0.0, 128
      %597 = vxpose.xlu0.b32.cont [15/16] 0.0, 128
      %598 = vxpose.xlu0.b32.end [16/16] 0.0, 128
      %v599 = vpop.trf.xlu0
      %v600 = vpop.trf.xlu0
      %v601 = vpop.trf.xlu0
      %v602 = vpop.trf.xlu0
      %v603 = vpop.trf.xlu0
      %v604 = vpop.trf.xlu0
      %v605 = vpop.trf.xlu0
      %v606 = vpop.trf.xlu0
      %v607 = vpop.trf.xlu0
      %v608 = vpop.trf.xlu0
      %v609 = vpop.trf.xlu0
      %v610 = vpop.trf.xlu0
      %v611 = vpop.trf.xlu0
      %v612 = vpop.trf.xlu0
      %v613 = vpop.trf.xlu0
      %v614 = vpop.trf.xlu0
      %v615 = vld [vmem:[%s1] sm:$0xff]
      %v616 = vld [vmem:[%s1 + $0x8] sm:$0xff]
      %v617 = vld [vmem:[%s1 + $0x10] sm:$0xff]
      %v618 = vld [vmem:[%s1 + $0x18] sm:$0xff]
      %v619 = vld [vmem:[%s1 + $0x20] sm:$0xff]
      %v620 = vld [vmem:[%s1 + $0x28] sm:$0xff]
      %v621 = vld [vmem:[%s1 + $0x30] sm:$0xff]
      %v622 = vld [vmem:[%s1 + $0x38] sm:$0xff]
      %v623 = vld [vmem:[%s1 + $0x40] sm:$0xff]
      %v624 = vld [vmem:[%s2] sm:$0x1]
      %v641 = vrot.slane %v569, 1
      %v642 = vrot.slane %v567, 1
      %v643 = vrot.slane %v571, 1
      %v644 = vrot.slane %v573, 1
      %v645 = vrot.slane %v575, 1
      %v646 = vrot.slane %v577, 1
      %v647 = vrot.slane %v579, 1
      %v648 = vrot.slane %v581, 1
      %v649 = vrot.slane %v599, 1
      %v650 = vrot.slane %v601, 1
      %v651 = vrot.slane %v603, 1
      %v652 = vrot.slane %v605, 1
      %v653 = vrot.slane %v607, 1
      %v654 = vrot.slane %v609, 1
      %v655 = vrot.slane %v611, 1
      %v656 = vrot.slane %v613, 1
      %vm689 = vcmask 1040384
      %v690 = vrot.slane %v569, 7
      %v691 = vrot.slane %v570, 7
      %v692 = vsel %vm689, %v690, %v691
      %v693 = vrot.slane %v567, 7
      %v694 = vrot.slane %v568, 7
      %v695 = vsel %vm689, %v693, %v694
      %v696 = vrot.slane %v571, 7
      %v697 = vrot.slane %v572, 7
      %v698 = vsel %vm689, %v696, %v697
      %v699 = vrot.slane %v573, 7
      %v700 = vrot.slane %v574, 7
      %v701 = vsel %vm689, %v699, %v700
      %v702 = vrot.slane %v575, 7
      %v703 = vrot.slane %v576, 7
      %v704 = vsel %vm689, %v702, %v703
      %v705 = vrot.slane %v577, 7
      %v706 = vrot.slane %v578, 7
      %v707 = vsel %vm689, %v705, %v706
      %v708 = vrot.slane %v579, 7
      %v709 = vrot.slane %v580, 7
      %v710 = vsel %vm689, %v708, %v709
      %v711 = vrot.slane %v581, 7
      %v712 = vrot.slane %v582, 7
      %v713 = vsel %vm689, %v711, %v712
      %v714 = vrot.slane %v599, 7
      %v715 = vrot.slane %v600, 7
      %v716 = vsel %vm689, %v714, %v715
      %v717 = vrot.slane %v601, 7
      %v718 = vrot.slane %v602, 7
      %v719 = vsel %vm689, %v717, %v718
      %v720 = vrot.slane %v603, 7
      %v721 = vrot.slane %v604, 7
      %v722 = vsel %vm689, %v720, %v721
      %v723 = vrot.slane %v605, 7
      %v724 = vrot.slane %v606, 7
      %v725 = vsel %vm689, %v723, %v724
      %v726 = vrot.slane %v607, 7
      %v727 = vrot.slane %v608, 7
      %v728 = vsel %vm689, %v726, %v727
      %v729 = vrot.slane %v609, 7
      %v730 = vrot.slane %v610, 7
      %v731 = vsel %vm689, %v729, %v730
      %v732 = vrot.slane %v611, 7
      %v733 = vrot.slane %v612, 7
      %v734 = vsel %vm689, %v732, %v733
      %v735 = vrot.slane %v613, 7
      %v736 = vrot.slane %v614, 7
      %v737 = vsel %vm689, %v735, %v736
      %v785 = vrot.slane %v570, 5
      %v786 = vrot.slane %v568, 5
      %v787 = vrot.slane %v572, 5
      %v788 = vrot.slane %v574, 5
      %v789 = vrot.slane %v576, 5
      %v790 = vrot.slane %v578, 5
      %v791 = vrot.slane %v580, 5
      %v792 = vrot.slane %v582, 5
      %v793 = vrot.slane %v600, 5
      %v794 = vrot.slane %v602, 5
      %v795 = vrot.slane %v604, 5
      %v796 = vrot.slane %v606, 5
      %v797 = vrot.slane %v608, 5
      %v798 = vrot.slane %v610, 5
      %v799 = vrot.slane %v612, 5
      %v800 = vrot.slane %v614, 5
      %v817 = vsel %vm689, %v641, %v690
      %v818 = vsel %vm689, %v642, %v693
      %v819 = vsel %vm689, %v643, %v696
      %v820 = vsel %vm689, %v644, %v699
      %v821 = vsel %vm689, %v645, %v702
      %v822 = vsel %vm689, %v646, %v705
      %v823 = vsel %vm689, %v647, %v708
      %v824 = vsel %vm689, %v648, %v711
      %v825 = vsel %vm689, %v649, %v714
      %v826 = vsel %vm689, %v650, %v717
      %v827 = vsel %vm689, %v651, %v720
      %v828 = vsel %vm689, %v652, %v723
      %v829 = vsel %vm689, %v653, %v726
      %v830 = vsel %vm689, %v654, %v729
      %v831 = vsel %vm689, %v655, %v732
      %v832 = vsel %vm689, %v656, %v735
      %v833 = vsel %vm689, %v691, %v785
      %v834 = vsel %vm689, %v694, %v786
      %v835 = vsel %vm689, %v697, %v787
      %v836 = vsel %vm689, %v700, %v788
      %v837 = vsel %vm689, %v703, %v789
      %v838 = vsel %vm689, %v706, %v790
      %v839 = vsel %vm689, %v709, %v791
      %v840 = vsel %vm689, %v712, %v792
      %v841 = vsel %vm689, %v715, %v793
      %v842 = vsel %vm689, %v718, %v794
      %v843 = vsel %vm689, %v721, %v795
      %v844 = vsel %vm689, %v724, %v796
      %v845 = vsel %vm689, %v727, %v797
      %v846 = vsel %vm689, %v730, %v798
      %v847 = vsel %vm689, %v733, %v799
      %v848 = vsel %vm689, %v736, %v800
      %vm879 = vcmask 1046528
      %v880 = vrot.slane %v817, 1
      %v881 = vrot.slane %v692, 1
      %v882 = vsel %vm879, %v880, %v881
      %v883 = vrot.slane %v833, 1
      %v884 = vsel %vm879, %v881, %v883
      %v885 = vrot.slane %v818, 1
      %v886 = vrot.slane %v695, 1
      %v887 = vsel %vm879, %v885, %v886
      %v888 = vrot.slane %v834, 1
      %v889 = vsel %vm879, %v886, %v888
      %v890 = vrot.slane %v819, 1
      %v891 = vrot.slane %v698, 1
      %v892 = vsel %vm879, %v890, %v891
      %v893 = vrot.slane %v835, 1
      %v894 = vsel %vm879, %v891, %v893
      %v895 = vrot.slane %v820, 1
      %v896 = vrot.slane %v701, 1
      %v897 = vsel %vm879, %v895, %v896
      %v898 = vrot.slane %v836, 1
      %v899 = vsel %vm879, %v896, %v898
      %v900 = vrot.slane %v821, 1
      %v901 = vrot.slane %v704, 1
      %v902 = vsel %vm879, %v900, %v901
      %v903 = vrot.slane %v837, 1
      %v904 = vsel %vm879, %v901, %v903
      %v905 = vrot.slane %v822, 1
      %v906 = vrot.slane %v707, 1
      %v907 = vsel %vm879, %v905, %v906
      %v908 = vrot.slane %v838, 1
      %v909 = vsel %vm879, %v906, %v908
      %v910 = vrot.slane %v823, 1
      %v911 = vrot.slane %v710, 1
      %v912 = vsel %vm879, %v910, %v911
      %v913 = vrot.slane %v839, 1
      %v914 = vsel %vm879, %v911, %v913
      %v915 = vrot.slane %v824, 1
      %v916 = vrot.slane %v713, 1
      %v917 = vsel %vm879, %v915, %v916
      %v918 = vrot.slane %v840, 1
      %v919 = vsel %vm879, %v916, %v918
      %v920 = vrot.slane %v825, 1
      %v921 = vrot.slane %v716, 1
      %v922 = vsel %vm879, %v920, %v921
      %v923 = vrot.slane %v841, 1
      %v924 = vsel %vm879, %v921, %v923
      %v925 = vrot.slane %v826, 1
      %v926 = vrot.slane %v719, 1
      %v927 = vsel %vm879, %v925, %v926
      %v928 = vrot.slane %v842, 1
      %v929 = vsel %vm879, %v926, %v928
      %v930 = vrot.slane %v827, 1
      %v931 = vrot.slane %v722, 1
      %v932 = vsel %vm879, %v930, %v931
      %v933 = vrot.slane %v843, 1
      %v934 = vsel %vm879, %v931, %v933
      %v935 = vrot.slane %v828, 1
      %v936 = vrot.slane %v725, 1
      %v937 = vsel %vm879, %v935, %v936
      %v938 = vrot.slane %v844, 1
      %v939 = vsel %vm879, %v936, %v938
      %v940 = vrot.slane %v829, 1
      %v941 = vrot.slane %v728, 1
      %v942 = vsel %vm879, %v940, %v941
      %v943 = vrot.slane %v845, 1
      %v944 = vsel %vm879, %v941, %v943
      %v945 = vrot.slane %v830, 1
      %v946 = vrot.slane %v731, 1
      %v947 = vsel %vm879, %v945, %v946
      %v948 = vrot.slane %v846, 1
      %v949 = vsel %vm879, %v946, %v948
      %v950 = vrot.slane %v831, 1
      %v951 = vrot.slane %v734, 1
      %v952 = vsel %vm879, %v950, %v951
      %v953 = vrot.slane %v847, 1
      %v954 = vsel %vm879, %v951, %v953
      %vm955 = vcmask 1045504
      %v956 = vrot.slane %v817, 2
      %v957 = vrot.slane %v692, 2
      %v958 = vsel %vm955, %v956, %v957
      %v959 = vrot.slane %v833, 2
      %v960 = vsel %vm955, %v957, %v959
      %v961 = vrot.slane %v818, 2
      %v962 = vrot.slane %v695, 2
      %v963 = vsel %vm955, %v961, %v962
      %v964 = vrot.slane %v834, 2
      %v965 = vsel %vm955, %v962, %v964
      %v966 = vrot.slane %v819, 2
      %v967 = vrot.slane %v698, 2
      %v968 = vsel %vm955, %v966, %v967
      %v969 = vrot.slane %v835, 2
      %v970 = vsel %vm955, %v967, %v969
      %v971 = vrot.slane %v820, 2
      %v972 = vrot.slane %v701, 2
      %v973 = vsel %vm955, %v971, %v972
      %v974 = vrot.slane %v836, 2
      %v975 = vsel %vm955, %v972, %v974
      %v976 = vrot.slane %v821, 2
      %v977 = vrot.slane %v704, 2
      %v978 = vsel %vm955, %v976, %v977
      %v979 = vrot.slane %v837, 2
      %v980 = vsel %vm955, %v977, %v979
      %v981 = vrot.slane %v822, 2
      %v982 = vrot.slane %v707, 2
      %v983 = vsel %vm955, %v981, %v982
      %v984 = vrot.slane %v838, 2
      %v985 = vsel %vm955, %v982, %v984
      %v986 = vrot.slane %v823, 2
      %v987 = vrot.slane %v710, 2
      %v988 = vsel %vm955, %v986, %v987
      %v989 = vrot.slane %v839, 2
      %v990 = vsel %vm955, %v987, %v989
      %v991 = vrot.slane %v824, 2
      %v992 = vrot.slane %v713, 2
      %v993 = vsel %vm955, %v991, %v992
      %v994 = vrot.slane %v840, 2
      %v995 = vsel %vm955, %v992, %v994
      %v996 = vrot.slane %v825, 2
      %v997 = vrot.slane %v716, 2
      %v998 = vsel %vm955, %v996, %v997
      %v999 = vrot.slane %v841, 2
      %v1000 = vsel %vm955, %v997, %v999
      %v1001 = vrot.slane %v826, 2
      %v1002 = vrot.slane %v719, 2
      %v1003 = vsel %vm955, %v1001, %v1002
      %v1004 = vrot.slane %v842, 2
      %v1005 = vsel %vm955, %v1002, %v1004
      %v1006 = vrot.slane %v827, 2
      %v1007 = vrot.slane %v722, 2
      %v1008 = vsel %vm955, %v1006, %v1007
      %v1009 = vrot.slane %v843, 2
      %v1010 = vsel %vm955, %v1007, %v1009
      %v1011 = vrot.slane %v828, 2
      %v1012 = vrot.slane %v725, 2
      %v1013 = vsel %vm955, %v1011, %v1012
      %v1014 = vrot.slane %v844, 2
      %v1015 = vsel %vm955, %v1012, %v1014
      %v1016 = vrot.slane %v829, 2
      %v1017 = vrot.slane %v728, 2
      %v1018 = vsel %vm955, %v1016, %v1017
      %v1019 = vrot.slane %v845, 2
      %v1020 = vsel %vm955, %v1017, %v1019
      %v1021 = vrot.slane %v830, 2
      %v1022 = vrot.slane %v731, 2
      %v1023 = vsel %vm955, %v1021, %v1022
      %v1024 = vrot.slane %v846, 2
      %v1025 = vsel %vm955, %v1022, %v1024
      %v1026 = vrot.slane %v831, 2
      %v1027 = vrot.slane %v734, 2
      %v1028 = vsel %vm955, %v1026, %v1027
      %v1029 = vrot.slane %v847, 2
      %v1030 = vsel %vm955, %v1027, %v1029
      %v1033 = vrot.slane %v832, 1
      %v1034 = vrot.slane %v737, 1
      %v1035 = vsel %vm879, %v1033, %v1034
      %v1036 = vrot.slane %v848, 1
      %v1037 = vsel %vm879, %v1034, %v1036
      %v1038 = vrot.slane %v832, 2
      %v1039 = vrot.slane %v737, 2
      %v1040 = vsel %vm955, %v1038, %v1039
      %v1041 = vrot.slane %v848, 2
      %v1042 = vsel %vm955, %v1039, %v1041
      %1043 = vrot.lane.b32.xlu0 %v882, 8
      %v1044 = vpop.permute.xlu0 %1043
      %1045 = vrot.lane.b32.xlu0 %v884, 8
      %v1046 = vpop.permute.xlu0 %1045
      %1047 = vrot.lane.b32.xlu0 %v887, 8
      %v1048 = vpop.permute.xlu0 %1047
      %1049 = vrot.lane.b32.xlu0 %v889, 8
      %v1050 = vpop.permute.xlu0 %1049
      %1051 = vrot.lane.b32.xlu0 %v892, 8
      %v1052 = vpop.permute.xlu0 %1051
      %1053 = vrot.lane.b32.xlu0 %v894, 8
      %v1054 = vpop.permute.xlu0 %1053
      %1055 = vrot.lane.b32.xlu0 %v897, 8
      %v1056 = vpop.permute.xlu0 %1055
      %1057 = vrot.lane.b32.xlu0 %v899, 8
      %v1058 = vpop.permute.xlu0 %1057
      %1059 = vrot.lane.b32.xlu0 %v902, 8
      %v1060 = vpop.permute.xlu0 %1059
      %1061 = vrot.lane.b32.xlu0 %v904, 8
      %v1062 = vpop.permute.xlu0 %1061
      %1063 = vrot.lane.b32.xlu0 %v907, 8
      %v1064 = vpop.permute.xlu0 %1063
      %1065 = vrot.lane.b32.xlu0 %v909, 8
      %v1066 = vpop.permute.xlu0 %1065
      %1067 = vrot.lane.b32.xlu0 %v912, 8
      %v1068 = vpop.permute.xlu0 %1067
      %1069 = vrot.lane.b32.xlu0 %v914, 8
      %v1070 = vpop.permute.xlu0 %1069
      %1071 = vrot.lane.b32.xlu0 %v917, 8
      %v1072 = vpop.permute.xlu0 %1071
      %1073 = vrot.lane.b32.xlu0 %v919, 8
      %v1074 = vpop.permute.xlu0 %1073
      %1075 = vrot.lane.b32.xlu0 %v922, 8
      %v1076 = vpop.permute.xlu0 %1075
      %1077 = vrot.lane.b32.xlu0 %v924, 8
      %v1078 = vpop.permute.xlu0 %1077
      %1079 = vrot.lane.b32.xlu0 %v927, 8
      %v1080 = vpop.permute.xlu0 %1079
      %1081 = vrot.lane.b32.xlu0 %v929, 8
      %v1082 = vpop.permute.xlu0 %1081
      %1083 = vrot.lane.b32.xlu0 %v932, 8
      %v1084 = vpop.permute.xlu0 %1083
      %1085 = vrot.lane.b32.xlu0 %v934, 8
      %v1086 = vpop.permute.xlu0 %1085
      %1087 = vrot.lane.b32.xlu0 %v937, 8
      %v1088 = vpop.permute.xlu0 %1087
      %1089 = vrot.lane.b32.xlu0 %v939, 8
      %v1090 = vpop.permute.xlu0 %1089
      %1091 = vrot.lane.b32.xlu0 %v942, 8
      %v1092 = vpop.permute.xlu0 %1091
      %1093 = vrot.lane.b32.xlu0 %v944, 8
      %v1094 = vpop.permute.xlu0 %1093
      %1095 = vrot.lane.b32.xlu0 %v947, 8
      %v1096 = vpop.permute.xlu0 %1095
      %1097 = vrot.lane.b32.xlu0 %v949, 8
      %v1098 = vpop.permute.xlu0 %1097
      %1099 = vrot.lane.b32.xlu0 %v952, 8
      %v1100 = vpop.permute.xlu0 %1099
      %1101 = vrot.lane.b32.xlu0 %v954, 8
      %v1102 = vpop.permute.xlu0 %1101
      %1133 = vrot.lane.b32.xlu0 %v958, 16
      %v1134 = vpop.permute.xlu0 %1133
      %1135 = vrot.lane.b32.xlu0 %v960, 16
      %v1136 = vpop.permute.xlu0 %1135
      %1137 = vrot.lane.b32.xlu0 %v963, 16
      %v1138 = vpop.permute.xlu0 %1137
      %1139 = vrot.lane.b32.xlu0 %v965, 16
      %v1140 = vpop.permute.xlu0 %1139
      %1141 = vrot.lane.b32.xlu0 %v968, 16
      %v1142 = vpop.permute.xlu0 %1141
      %1143 = vrot.lane.b32.xlu0 %v970, 16
      %v1144 = vpop.permute.xlu0 %1143
      %1145 = vrot.lane.b32.xlu0 %v973, 16
      %v1146 = vpop.permute.xlu0 %1145
      %1147 = vrot.lane.b32.xlu0 %v975, 16
      %v1148 = vpop.permute.xlu0 %1147
      %1149 = vrot.lane.b32.xlu0 %v978, 16
      %v1150 = vpop.permute.xlu0 %1149
      %1151 = vrot.lane.b32.xlu0 %v980, 16
      %v1152 = vpop.permute.xlu0 %1151
      %1153 = vrot.lane.b32.xlu0 %v983, 16
      %v1154 = vpop.permute.xlu0 %1153
      %1155 = vrot.lane.b32.xlu0 %v985, 16
      %v1156 = vpop.permute.xlu0 %1155
      %1157 = vrot.lane.b32.xlu0 %v988, 16
      %v1158 = vpop.permute.xlu0 %1157
      %1159 = vrot.lane.b32.xlu0 %v990, 16
      %v1160 = vpop.permute.xlu0 %1159
      %1161 = vrot.lane.b32.xlu0 %v993, 16
      %v1162 = vpop.permute.xlu0 %1161
      %1163 = vrot.lane.b32.xlu0 %v995, 16
      %v1164 = vpop.permute.xlu0 %1163
      %1165 = vrot.lane.b32.xlu0 %v998, 16
      %v1166 = vpop.permute.xlu0 %1165
      %1167 = vrot.lane.b32.xlu0 %v1000, 16
      %v1168 = vpop.permute.xlu0 %1167
      %1169 = vrot.lane.b32.xlu0 %v1003, 16
      %v1170 = vpop.permute.xlu0 %1169
      %1171 = vrot.lane.b32.xlu0 %v1005, 16
      %v1172 = vpop.permute.xlu0 %1171
      %1173 = vrot.lane.b32.xlu0 %v1008, 16
      %v1174 = vpop.permute.xlu0 %1173
      %1175 = vrot.lane.b32.xlu0 %v1010, 16
      %v1176 = vpop.permute.xlu0 %1175
      %1177 = vrot.lane.b32.xlu0 %v1013, 16
      %v1178 = vpop.permute.xlu0 %1177
      %1179 = vrot.lane.b32.xlu0 %v1015, 16
      %v1180 = vpop.permute.xlu0 %1179
      %1181 = vrot.lane.b32.xlu0 %v1018, 16
      %v1182 = vpop.permute.xlu0 %1181
      %1183 = vrot.lane.b32.xlu0 %v1020, 16
      %v1184 = vpop.permute.xlu0 %1183
      %1185 = vrot.lane.b32.xlu0 %v1023, 16
      %v1186 = vpop.permute.xlu0 %1185
      %1187 = vrot.lane.b32.xlu0 %v1025, 16
      %v1188 = vpop.permute.xlu0 %1187
      %1189 = vrot.lane.b32.xlu0 %v1028, 16
      %v1190 = vpop.permute.xlu0 %1189
      %1191 = vrot.lane.b32.xlu0 %v1030, 16
      %v1192 = vpop.permute.xlu0 %1191
      %1223 = vrot.lane.b32.xlu0 %v818, 24
      %v1224 = vpop.permute.xlu0 %1223
      %1225 = vrot.lane.b32.xlu0 %v695, 24
      %v1226 = vpop.permute.xlu0 %1225
      %1227 = vrot.lane.b32.xlu0 %v817, 24
      %v1228 = vpop.permute.xlu0 %1227
      %1229 = vrot.lane.b32.xlu0 %v692, 24
      %v1230 = vpop.permute.xlu0 %1229
      %1231 = vrot.lane.b32.xlu0 %v819, 24
      %v1232 = vpop.permute.xlu0 %1231
      %1233 = vrot.lane.b32.xlu0 %v698, 24
      %v1234 = vpop.permute.xlu0 %1233
      %1235 = vrot.lane.b32.xlu0 %v820, 24
      %v1236 = vpop.permute.xlu0 %1235
      %1237 = vrot.lane.b32.xlu0 %v701, 24
      %v1238 = vpop.permute.xlu0 %1237
      %1239 = vrot.lane.b32.xlu0 %v821, 24
      %v1240 = vpop.permute.xlu0 %1239
      %1241 = vrot.lane.b32.xlu0 %v704, 24
      %v1242 = vpop.permute.xlu0 %1241
      %1243 = vrot.lane.b32.xlu0 %v822, 24
      %v1244 = vpop.permute.xlu0 %1243
      %1245 = vrot.lane.b32.xlu0 %v707, 24
      %v1246 = vpop.permute.xlu0 %1245
      %1247 = vrot.lane.b32.xlu0 %v823, 24
      %v1248 = vpop.permute.xlu0 %1247
      %1249 = vrot.lane.b32.xlu0 %v710, 24
      %v1250 = vpop.permute.xlu0 %1249
      %1251 = vrot.lane.b32.xlu0 %v824, 24
      %v1252 = vpop.permute.xlu0 %1251
      %1253 = vrot.lane.b32.xlu0 %v713, 24
      %v1254 = vpop.permute.xlu0 %1253
      %1255 = vrot.lane.b32.xlu0 %v825, 24
      %v1256 = vpop.permute.xlu0 %1255
      %1257 = vrot.lane.b32.xlu0 %v716, 24
      %v1258 = vpop.permute.xlu0 %1257
      %1259 = vrot.lane.b32.xlu0 %v826, 24
      %v1260 = vpop.permute.xlu0 %1259
      %1261 = vrot.lane.b32.xlu0 %v719, 24
      %v1262 = vpop.permute.xlu0 %1261
      %1263 = vrot.lane.b32.xlu0 %v827, 24
      %v1264 = vpop.permute.xlu0 %1263
      %1265 = vrot.lane.b32.xlu0 %v722, 24
      %v1266 = vpop.permute.xlu0 %1265
      %1267 = vrot.lane.b32.xlu0 %v828, 24
      %v1268 = vpop.permute.xlu0 %1267
      %1269 = vrot.lane.b32.xlu0 %v725, 24
      %v1270 = vpop.permute.xlu0 %1269
      %1271 = vrot.lane.b32.xlu0 %v829, 24
      %v1272 = vpop.permute.xlu0 %1271
      %1273 = vrot.lane.b32.xlu0 %v728, 24
      %v1274 = vpop.permute.xlu0 %1273
      %1275 = vrot.lane.b32.xlu0 %v830, 24
      %v1276 = vpop.permute.xlu0 %1275
      %1277 = vrot.lane.b32.xlu0 %v731, 24
      %v1278 = vpop.permute.xlu0 %1277
      %1279 = vrot.lane.b32.xlu0 %v831, 24
      %v1280 = vpop.permute.xlu0 %1279
      %1281 = vrot.lane.b32.xlu0 %v734, 24
      %v1282 = vpop.permute.xlu0 %1281
      %1283 = vrot.lane.b32.xlu0 %v832, 24
      %v1284 = vpop.permute.xlu0 %1283
      %1285 = vrot.lane.b32.xlu0 %v737, 24
      %v1286 = vpop.permute.xlu0 %1285
      %1319 = vrot.lane.b32.xlu0 %v887, 32
      %v1320 = vpop.permute.xlu0 %1319
      %1321 = vrot.lane.b32.xlu0 %v889, 32
      %v1322 = vpop.permute.xlu0 %1321
      %1323 = vrot.lane.b32.xlu0 %v882, 32
      %v1324 = vpop.permute.xlu0 %1323
      %1325 = vrot.lane.b32.xlu0 %v884, 32
      %v1326 = vpop.permute.xlu0 %1325
      %1327 = vrot.lane.b32.xlu0 %v892, 32
      %v1328 = vpop.permute.xlu0 %1327
      %1329 = vrot.lane.b32.xlu0 %v894, 32
      %v1330 = vpop.permute.xlu0 %1329
      %1331 = vrot.lane.b32.xlu0 %v897, 32
      %v1332 = vpop.permute.xlu0 %1331
      %1333 = vrot.lane.b32.xlu0 %v899, 32
      %v1334 = vpop.permute.xlu0 %1333
      %1335 = vrot.lane.b32.xlu0 %v902, 32
      %v1336 = vpop.permute.xlu0 %1335
      %1337 = vrot.lane.b32.xlu0 %v904, 32
      %v1338 = vpop.permute.xlu0 %1337
      %1339 = vrot.lane.b32.xlu0 %v907, 32
      %v1340 = vpop.permute.xlu0 %1339
      %1341 = vrot.lane.b32.xlu0 %v909, 32
      %v1342 = vpop.permute.xlu0 %1341
      %1343 = vrot.lane.b32.xlu0 %v912, 32
      %v1344 = vpop.permute.xlu0 %1343
      %1345 = vrot.lane.b32.xlu0 %v914, 32
      %v1346 = vpop.permute.xlu0 %1345
      %1347 = vrot.lane.b32.xlu0 %v917, 32
      %v1348 = vpop.permute.xlu0 %1347
      %1349 = vrot.lane.b32.xlu0 %v919, 32
      %v1350 = vpop.permute.xlu0 %1349
      %1351 = vrot.lane.b32.xlu0 %v922, 32
      %v1352 = vpop.permute.xlu0 %1351
      %1353 = vrot.lane.b32.xlu0 %v924, 32
      %v1354 = vpop.permute.xlu0 %1353
      %1355 = vrot.lane.b32.xlu0 %v927, 32
      %v1356 = vpop.permute.xlu0 %1355
      %1357 = vrot.lane.b32.xlu0 %v929, 32
      %v1358 = vpop.permute.xlu0 %1357
      %1359 = vrot.lane.b32.xlu0 %v932, 32
      %v1360 = vpop.permute.xlu0 %1359
      %1361 = vrot.lane.b32.xlu0 %v934, 32
      %v1362 = vpop.permute.xlu0 %1361
      %1363 = vrot.lane.b32.xlu0 %v937, 32
      %v1364 = vpop.permute.xlu0 %1363
      %1365 = vrot.lane.b32.xlu0 %v939, 32
      %v1366 = vpop.permute.xlu0 %1365
      %1367 = vrot.lane.b32.xlu0 %v942, 32
      %v1368 = vpop.permute.xlu0 %1367
      %1369 = vrot.lane.b32.xlu0 %v944, 32
      %v1370 = vpop.permute.xlu0 %1369
      %1371 = vrot.lane.b32.xlu0 %v947, 32
      %v1372 = vpop.permute.xlu0 %1371
      %1373 = vrot.lane.b32.xlu0 %v949, 32
      %v1374 = vpop.permute.xlu0 %1373
      %1375 = vrot.lane.b32.xlu0 %v952, 32
      %v1376 = vpop.permute.xlu0 %1375
      %1377 = vrot.lane.b32.xlu0 %v954, 32
      %v1378 = vpop.permute.xlu0 %1377
      %1379 = vrot.lane.b32.xlu0 %v1035, 32
      %v1380 = vpop.permute.xlu0 %1379
      %1381 = vrot.lane.b32.xlu0 %v1037, 32
      %v1382 = vpop.permute.xlu0 %1381
      %1415 = vrot.lane.b32.xlu0 %v963, 40
      %v1416 = vpop.permute.xlu0 %1415
      %1417 = vrot.lane.b32.xlu0 %v965, 40
      %v1418 = vpop.permute.xlu0 %1417
      %1419 = vrot.lane.b32.xlu0 %v958, 40
      %v1420 = vpop.permute.xlu0 %1419
      %1421 = vrot.lane.b32.xlu0 %v960, 40
      %v1422 = vpop.permute.xlu0 %1421
      %1423 = vrot.lane.b32.xlu0 %v968, 40
      %v1424 = vpop.permute.xlu0 %1423
      %1425 = vrot.lane.b32.xlu0 %v970, 40
      %v1426 = vpop.permute.xlu0 %1425
      %1427 = vrot.lane.b32.xlu0 %v973, 40
      %v1428 = vpop.permute.xlu0 %1427
      %1429 = vrot.lane.b32.xlu0 %v975, 40
      %v1430 = vpop.permute.xlu0 %1429
      %1431 = vrot.lane.b32.xlu0 %v978, 40
      %v1432 = vpop.permute.xlu0 %1431
      %1433 = vrot.lane.b32.xlu0 %v980, 40
      %v1434 = vpop.permute.xlu0 %1433
      %1435 = vrot.lane.b32.xlu0 %v983, 40
      %v1436 = vpop.permute.xlu0 %1435
      %1437 = vrot.lane.b32.xlu0 %v985, 40
      %v1438 = vpop.permute.xlu0 %1437
      %1439 = vrot.lane.b32.xlu0 %v988, 40
      %v1440 = vpop.permute.xlu0 %1439
      %1441 = vrot.lane.b32.xlu0 %v990, 40
      %v1442 = vpop.permute.xlu0 %1441
      %1443 = vrot.lane.b32.xlu0 %v993, 40
      %v1444 = vpop.permute.xlu0 %1443
      %1445 = vrot.lane.b32.xlu0 %v995, 40
      %v1446 = vpop.permute.xlu0 %1445
      %1447 = vrot.lane.b32.xlu0 %v998, 40
      %v1448 = vpop.permute.xlu0 %1447
      %1449 = vrot.lane.b32.xlu0 %v1000, 40
      %v1450 = vpop.permute.xlu0 %1449
      %1451 = vrot.lane.b32.xlu0 %v1003, 40
      %v1452 = vpop.permute.xlu0 %1451
      %1453 = vrot.lane.b32.xlu0 %v1005, 40
      %v1454 = vpop.permute.xlu0 %1453
      %1455 = vrot.lane.b32.xlu0 %v1008, 40
      %v1456 = vpop.permute.xlu0 %1455
      %1457 = vrot.lane.b32.xlu0 %v1010, 40
      %v1458 = vpop.permute.xlu0 %1457
      %1459 = vrot.lane.b32.xlu0 %v1013, 40
      %v1460 = vpop.permute.xlu0 %1459
      %1461 = vrot.lane.b32.xlu0 %v1015, 40
      %v1462 = vpop.permute.xlu0 %1461
      %1463 = vrot.lane.b32.xlu0 %v1018, 40
      %v1464 = vpop.permute.xlu0 %1463
      %1465 = vrot.lane.b32.xlu0 %v1020, 40
      %v1466 = vpop.permute.xlu0 %1465
      %1467 = vrot.lane.b32.xlu0 %v1023, 40
      %v1468 = vpop.permute.xlu0 %1467
      %1469 = vrot.lane.b32.xlu0 %v1025, 40
      %v1470 = vpop.permute.xlu0 %1469
      %1471 = vrot.lane.b32.xlu0 %v1028, 40
      %v1472 = vpop.permute.xlu0 %1471
      %1473 = vrot.lane.b32.xlu0 %v1030, 40
      %v1474 = vpop.permute.xlu0 %1473
      %1475 = vrot.lane.b32.xlu0 %v1040, 40
      %v1476 = vpop.permute.xlu0 %1475
      %1477 = vrot.lane.b32.xlu0 %v1042, 40
      %v1478 = vpop.permute.xlu0 %1477
      %1511 = vrot.lane.b32.xlu0 %v817, 48
      %v1512 = vpop.permute.xlu0 %1511
      %1513 = vrot.lane.b32.xlu0 %v692, 48
      %v1514 = vpop.permute.xlu0 %1513
      %1515 = vrot.lane.b32.xlu0 %v819, 48
      %v1516 = vpop.permute.xlu0 %1515
      %1517 = vrot.lane.b32.xlu0 %v698, 48
      %v1518 = vpop.permute.xlu0 %1517
      %1519 = vrot.lane.b32.xlu0 %v820, 48
      %v1520 = vpop.permute.xlu0 %1519
      %1521 = vrot.lane.b32.xlu0 %v701, 48
      %v1522 = vpop.permute.xlu0 %1521
      %1523 = vrot.lane.b32.xlu0 %v821, 48
      %v1524 = vpop.permute.xlu0 %1523
      %1525 = vrot.lane.b32.xlu0 %v704, 48
      %v1526 = vpop.permute.xlu0 %1525
      %1527 = vrot.lane.b32.xlu0 %v822, 48
      %v1528 = vpop.permute.xlu0 %1527
      %1529 = vrot.lane.b32.xlu0 %v707, 48
      %v1530 = vpop.permute.xlu0 %1529
      %1531 = vrot.lane.b32.xlu0 %v823, 48
      %v1532 = vpop.permute.xlu0 %1531
      %1533 = vrot.lane.b32.xlu0 %v710, 48
      %v1534 = vpop.permute.xlu0 %1533
      %1535 = vrot.lane.b32.xlu0 %v824, 48
      %v1536 = vpop.permute.xlu0 %1535
      %1537 = vrot.lane.b32.xlu0 %v713, 48
      %v1538 = vpop.permute.xlu0 %1537
      %1539 = vrot.lane.b32.xlu0 %v825, 48
      %v1540 = vpop.permute.xlu0 %1539
      %1541 = vrot.lane.b32.xlu0 %v716, 48
      %v1542 = vpop.permute.xlu0 %1541
      %1543 = vrot.lane.b32.xlu0 %v826, 48
      %v1544 = vpop.permute.xlu0 %1543
      %1545 = vrot.lane.b32.xlu0 %v719, 48
      %v1546 = vpop.permute.xlu0 %1545
      %1547 = vrot.lane.b32.xlu0 %v827, 48
      %v1548 = vpop.permute.xlu0 %1547
      %1549 = vrot.lane.b32.xlu0 %v722, 48
      %v1550 = vpop.permute.xlu0 %1549
      %1551 = vrot.lane.b32.xlu0 %v828, 48
      %v1552 = vpop.permute.xlu0 %1551
      %1553 = vrot.lane.b32.xlu0 %v725, 48
      %v1554 = vpop.permute.xlu0 %1553
      %1555 = vrot.lane.b32.xlu0 %v829, 48
      %v1556 = vpop.permute.xlu0 %1555
      %1557 = vrot.lane.b32.xlu0 %v728, 48
      %v1558 = vpop.permute.xlu0 %1557
      %1559 = vrot.lane.b32.xlu0 %v830, 48
      %v1560 = vpop.permute.xlu0 %1559
      %1561 = vrot.lane.b32.xlu0 %v731, 48
      %v1562 = vpop.permute.xlu0 %1561
      %1563 = vrot.lane.b32.xlu0 %v831, 48
      %v1564 = vpop.permute.xlu0 %1563
      %1565 = vrot.lane.b32.xlu0 %v734, 48
      %v1566 = vpop.permute.xlu0 %1565
      %1567 = vrot.lane.b32.xlu0 %v832, 48
      %v1568 = vpop.permute.xlu0 %1567
      %1569 = vrot.lane.b32.xlu0 %v737, 48
      %v1570 = vpop.permute.xlu0 %1569
      %1601 = vrot.lane.b32.xlu0 %v882, 56
      %v1602 = vpop.permute.xlu0 %1601
      %1603 = vrot.lane.b32.xlu0 %v884, 56
      %v1604 = vpop.permute.xlu0 %1603
      %1605 = vrot.lane.b32.xlu0 %v892, 56
      %v1606 = vpop.permute.xlu0 %1605
      %1607 = vrot.lane.b32.xlu0 %v894, 56
      %v1608 = vpop.permute.xlu0 %1607
      %1609 = vrot.lane.b32.xlu0 %v897, 56
      %v1610 = vpop.permute.xlu0 %1609
      %1611 = vrot.lane.b32.xlu0 %v899, 56
      %v1612 = vpop.permute.xlu0 %1611
      %1613 = vrot.lane.b32.xlu0 %v902, 56
      %v1614 = vpop.permute.xlu0 %1613
      %1615 = vrot.lane.b32.xlu0 %v904, 56
      %v1616 = vpop.permute.xlu0 %1615
      %1617 = vrot.lane.b32.xlu0 %v907, 56
      %v1618 = vpop.permute.xlu0 %1617
      %1619 = vrot.lane.b32.xlu0 %v909, 56
      %v1620 = vpop.permute.xlu0 %1619
      %1621 = vrot.lane.b32.xlu0 %v912, 56
      %v1622 = vpop.permute.xlu0 %1621
      %1623 = vrot.lane.b32.xlu0 %v914, 56
      %v1624 = vpop.permute.xlu0 %1623
      %1625 = vrot.lane.b32.xlu0 %v917, 56
      %v1626 = vpop.permute.xlu0 %1625
      %1627 = vrot.lane.b32.xlu0 %v919, 56
      %v1628 = vpop.permute.xlu0 %1627
      %1629 = vrot.lane.b32.xlu0 %v922, 56
      %v1630 = vpop.permute.xlu0 %1629
      %1631 = vrot.lane.b32.xlu0 %v924, 56
      %v1632 = vpop.permute.xlu0 %1631
      %1633 = vrot.lane.b32.xlu0 %v927, 56
      %v1634 = vpop.permute.xlu0 %1633
      %1635 = vrot.lane.b32.xlu0 %v929, 56
      %v1636 = vpop.permute.xlu0 %1635
      %1637 = vrot.lane.b32.xlu0 %v932, 56
      %v1638 = vpop.permute.xlu0 %1637
      %1639 = vrot.lane.b32.xlu0 %v934, 56
      %v1640 = vpop.permute.xlu0 %1639
      %1641 = vrot.lane.b32.xlu0 %v937, 56
      %v1642 = vpop.permute.xlu0 %1641
      %1643 = vrot.lane.b32.xlu0 %v939, 56
      %v1644 = vpop.permute.xlu0 %1643
      %1645 = vrot.lane.b32.xlu0 %v942, 56
      %v1646 = vpop.permute.xlu0 %1645
      %1647 = vrot.lane.b32.xlu0 %v944, 56
      %v1648 = vpop.permute.xlu0 %1647
      %1649 = vrot.lane.b32.xlu0 %v947, 56
      %v1650 = vpop.permute.xlu0 %1649
      %1651 = vrot.lane.b32.xlu0 %v949, 56
      %v1652 = vpop.permute.xlu0 %1651
      %1653 = vrot.lane.b32.xlu0 %v952, 56
      %v1654 = vpop.permute.xlu0 %1653
      %1655 = vrot.lane.b32.xlu0 %v954, 56
      %v1656 = vpop.permute.xlu0 %1655
      %1657 = vrot.lane.b32.xlu0 %v1035, 56
      %v1658 = vpop.permute.xlu0 %1657
      %1659 = vrot.lane.b32.xlu0 %v1037, 56
      %v1660 = vpop.permute.xlu0 %1659
      %1691 = vrot.lane.b32.xlu0 %v958, 64
      %v1692 = vpop.permute.xlu0 %1691
      %1693 = vrot.lane.b32.xlu0 %v960, 64
      %v1694 = vpop.permute.xlu0 %1693
      %1695 = vrot.lane.b32.xlu0 %v968, 64
      %v1696 = vpop.permute.xlu0 %1695
      %1697 = vrot.lane.b32.xlu0 %v970, 64
      %v1698 = vpop.permute.xlu0 %1697
      %1699 = vrot.lane.b32.xlu0 %v973, 64
      %v1700 = vpop.permute.xlu0 %1699
      %1701 = vrot.lane.b32.xlu0 %v975, 64
      %v1702 = vpop.permute.xlu0 %1701
      %1703 = vrot.lane.b32.xlu0 %v978, 64
      %v1704 = vpop.permute.xlu0 %1703
      %1705 = vrot.lane.b32.xlu0 %v980, 64
      %v1706 = vpop.permute.xlu0 %1705
      %1707 = vrot.lane.b32.xlu0 %v983, 64
      %v1708 = vpop.permute.xlu0 %1707
      %1709 = vrot.lane.b32.xlu0 %v985, 64
      %v1710 = vpop.permute.xlu0 %1709
      %1711 = vrot.lane.b32.xlu0 %v988, 64
      %v1712 = vpop.permute.xlu0 %1711
      %1713 = vrot.lane.b32.xlu0 %v990, 64
      %v1714 = vpop.permute.xlu0 %1713
      %1715 = vrot.lane.b32.xlu0 %v993, 64
      %v1716 = vpop.permute.xlu0 %1715
      %1717 = vrot.lane.b32.xlu0 %v995, 64
      %v1718 = vpop.permute.xlu0 %1717
      %1719 = vrot.lane.b32.xlu0 %v998, 64
      %v1720 = vpop.permute.xlu0 %1719
      %1721 = vrot.lane.b32.xlu0 %v1000, 64
      %v1722 = vpop.permute.xlu0 %1721
      %1723 = vrot.lane.b32.xlu0 %v1003, 64
      %v1724 = vpop.permute.xlu0 %1723
      %1725 = vrot.lane.b32.xlu0 %v1005, 64
      %v1726 = vpop.permute.xlu0 %1725
      %1727 = vrot.lane.b32.xlu0 %v1008, 64
      %v1728 = vpop.permute.xlu0 %1727
      %1729 = vrot.lane.b32.xlu0 %v1010, 64
      %v1730 = vpop.permute.xlu0 %1729
      %1731 = vrot.lane.b32.xlu0 %v1013, 64
      %v1732 = vpop.permute.xlu0 %1731
      %1733 = vrot.lane.b32.xlu0 %v1015, 64
      %v1734 = vpop.permute.xlu0 %1733
      %1735 = vrot.lane.b32.xlu0 %v1018, 64
      %v1736 = vpop.permute.xlu0 %1735
      %1737 = vrot.lane.b32.xlu0 %v1020, 64
      %v1738 = vpop.permute.xlu0 %1737
      %1739 = vrot.lane.b32.xlu0 %v1023, 64
      %v1740 = vpop.permute.xlu0 %1739
      %1741 = vrot.lane.b32.xlu0 %v1025, 64
      %v1742 = vpop.permute.xlu0 %1741
      %1743 = vrot.lane.b32.xlu0 %v1028, 64
      %v1744 = vpop.permute.xlu0 %1743
      %1745 = vrot.lane.b32.xlu0 %v1030, 64
      %v1746 = vpop.permute.xlu0 %1745
      %1747 = vrot.lane.b32.xlu0 %v1040, 64
      %v1748 = vpop.permute.xlu0 %1747
      %1749 = vrot.lane.b32.xlu0 %v1042, 64
      %v1750 = vpop.permute.xlu0 %1749
      %vm1781 = vcmask 64512
      %v1782 = vsel %vm1781, %v817, %v1044
      %v1783 = vsel %vm1781, %v692, %v1046
      %v1784 = vsel %vm1781, %v818, %v1048
      %v1785 = vsel %vm1781, %v695, %v1050
      %v1786 = vsel %vm1781, %v819, %v1052
      %v1787 = vsel %vm1781, %v698, %v1054
      %v1788 = vsel %vm1781, %v820, %v1056
      %v1789 = vsel %vm1781, %v701, %v1058
      %v1790 = vsel %vm1781, %v821, %v1060
      %v1791 = vsel %vm1781, %v704, %v1062
      %v1792 = vsel %vm1781, %v822, %v1064
      %v1793 = vsel %vm1781, %v707, %v1066
      %v1794 = vsel %vm1781, %v823, %v1068
      %v1795 = vsel %vm1781, %v710, %v1070
      %v1796 = vsel %vm1781, %v824, %v1072
      %v1797 = vsel %vm1781, %v713, %v1074
      %v1798 = vsel %vm1781, %v825, %v1076
      %v1799 = vsel %vm1781, %v716, %v1078
      %v1800 = vsel %vm1781, %v826, %v1080
      %v1801 = vsel %vm1781, %v719, %v1082
      %v1802 = vsel %vm1781, %v827, %v1084
      %v1803 = vsel %vm1781, %v722, %v1086
      %v1804 = vsel %vm1781, %v828, %v1088
      %v1805 = vsel %vm1781, %v725, %v1090
      %v1806 = vsel %vm1781, %v829, %v1092
      %v1807 = vsel %vm1781, %v728, %v1094
      %v1808 = vsel %vm1781, %v830, %v1096
      %v1809 = vsel %vm1781, %v731, %v1098
      %v1810 = vsel %vm1781, %v831, %v1100
      %v1811 = vsel %vm1781, %v734, %v1102
      %vm1812 = vcmask 130048
      %v1813 = vsel %vm1812, %v1782, %v1134
      %v1814 = vsel %vm1812, %v1783, %v1136
      %v1815 = vsel %vm1812, %v1784, %v1138
      %v1816 = vsel %vm1812, %v1785, %v1140
      %v1817 = vsel %vm1812, %v1786, %v1142
      %v1818 = vsel %vm1812, %v1787, %v1144
      %v1819 = vsel %vm1812, %v1788, %v1146
      %v1820 = vsel %vm1812, %v1789, %v1148
      %v1821 = vsel %vm1812, %v1790, %v1150
      %v1822 = vsel %vm1812, %v1791, %v1152
      %v1823 = vsel %vm1812, %v1792, %v1154
      %v1824 = vsel %vm1812, %v1793, %v1156
      %v1825 = vsel %vm1812, %v1794, %v1158
      %v1826 = vsel %vm1812, %v1795, %v1160
      %v1827 = vsel %vm1812, %v1796, %v1162
      %v1828 = vsel %vm1812, %v1797, %v1164
      %v1829 = vsel %vm1812, %v1798, %v1166
      %v1830 = vsel %vm1812, %v1799, %v1168
      %v1831 = vsel %vm1812, %v1800, %v1170
      %v1832 = vsel %vm1812, %v1801, %v1172
      %v1833 = vsel %vm1812, %v1802, %v1174
      %v1834 = vsel %vm1812, %v1803, %v1176
      %v1835 = vsel %vm1812, %v1804, %v1178
      %v1836 = vsel %vm1812, %v1805, %v1180
      %v1837 = vsel %vm1812, %v1806, %v1182
      %v1838 = vsel %vm1812, %v1807, %v1184
      %v1839 = vsel %vm1812, %v1808, %v1186
      %v1840 = vsel %vm1812, %v1809, %v1188
      %v1841 = vsel %vm1812, %v1810, %v1190
      %v1842 = vsel %vm1812, %v1811, %v1192
      %vm1843 = vcmask 195584
      %v1844 = vsel %vm1843, %v1813, %v1224
      %v1845 = vsel %vm1843, %v1814, %v1226
      %v1846 = vsel %vm1843, %v1815, %v1228
      %v1847 = vsel %vm1843, %v1816, %v1230
      %v1848 = vsel %vm1843, %v1813, %v1232
      %v1849 = vsel %vm1843, %v1814, %v1234
      %v1850 = vsel %vm1843, %v1817, %v1236
      %v1851 = vsel %vm1843, %v1818, %v1238
      %v1852 = vsel %vm1843, %v1819, %v1240
      %v1853 = vsel %vm1843, %v1820, %v1242
      %v1854 = vsel %vm1843, %v1821, %v1244
      %v1855 = vsel %vm1843, %v1822, %v1246
      %v1856 = vsel %vm1843, %v1823, %v1248
      %v1857 = vsel %vm1843, %v1824, %v1250
      %v1858 = vsel %vm1843, %v1825, %v1252
      %v1859 = vsel %vm1843, %v1826, %v1254
      %v1860 = vsel %vm1843, %v1827, %v1256
      %v1861 = vsel %vm1843, %v1828, %v1258
      %v1862 = vsel %vm1843, %v1829, %v1260
      %v1863 = vsel %vm1843, %v1830, %v1262
      %v1864 = vsel %vm1843, %v1831, %v1264
      %v1865 = vsel %vm1843, %v1832, %v1266
      %v1866 = vsel %vm1843, %v1833, %v1268
      %v1867 = vsel %vm1843, %v1834, %v1270
      %v1868 = vsel %vm1843, %v1835, %v1272
      %v1869 = vsel %vm1843, %v1836, %v1274
      %v1870 = vsel %vm1843, %v1837, %v1276
      %v1871 = vsel %vm1843, %v1838, %v1278
      %v1872 = vsel %vm1843, %v1839, %v1280
      %v1873 = vsel %vm1843, %v1840, %v1282
      %v1874 = vsel %vm1843, %v1841, %v1284
      %v1875 = vsel %vm1843, %v1842, %v1286
      %vm1876 = vcmask 261120
      %v1877 = vsel %vm1876, %v1844, %v1320
      %v1878 = vsel %vm1876, %v1845, %v1322
      %v1879 = vsel %vm1876, %v1846, %v1324
      %v1880 = vsel %vm1876, %v1847, %v1326
      %v1881 = vsel %vm1876, %v1848, %v1328
      %v1882 = vsel %vm1876, %v1849, %v1330
      %v1883 = vsel %vm1876, %v1850, %v1332
      %v1884 = vsel %vm1876, %v1851, %v1334
      %v1885 = vsel %vm1876, %v1852, %v1336
      %v1886 = vsel %vm1876, %v1853, %v1338
      %v1887 = vsel %vm1876, %v1854, %v1340
      %v1888 = vsel %vm1876, %v1855, %v1342
      %v1889 = vsel %vm1876, %v1856, %v1344
      %v1890 = vsel %vm1876, %v1857, %v1346
      %v1891 = vsel %vm1876, %v1858, %v1348
      %v1892 = vsel %vm1876, %v1859, %v1350
      %v1893 = vsel %vm1876, %v1860, %v1352
      %v1894 = vsel %vm1876, %v1861, %v1354
      %v1895 = vsel %vm1876, %v1862, %v1356
      %v1896 = vsel %vm1876, %v1863, %v1358
      %v1897 = vsel %vm1876, %v1864, %v1360
      %v1898 = vsel %vm1876, %v1865, %v1362
      %v1899 = vsel %vm1876, %v1866, %v1364
      %v1900 = vsel %vm1876, %v1867, %v1366
      %v1901 = vsel %vm1876, %v1868, %v1368
      %v1902 = vsel %vm1876, %v1869, %v1370
      %v1903 = vsel %vm1876, %v1870, %v1372
      %v1904 = vsel %vm1876, %v1871, %v1374
      %v1905 = vsel %vm1876, %v1872, %v1376
      %v1906 = vsel %vm1876, %v1873, %v1378
      %v1907 = vsel %vm1876, %v1874, %v1380
      %v1908 = vsel %vm1876, %v1875, %v1382
      %vm1909 = vcmask 326656
      %v1910 = vsel %vm1909, %v1877, %v1416
      %v1911 = vsel %vm1909, %v1878, %v1418
      %v1912 = vsel %vm1909, %v1879, %v1420
      %v1913 = vsel %vm1909, %v1880, %v1422
      %v1914 = vsel %vm1909, %v1881, %v1424
      %v1915 = vsel %vm1909, %v1882, %v1426
      %v1916 = vsel %vm1909, %v1883, %v1428
      %v1917 = vsel %vm1909, %v1884, %v1430
      %v1918 = vsel %vm1909, %v1885, %v1432
      %v1919 = vsel %vm1909, %v1886, %v1434
      %v1920 = vsel %vm1909, %v1887, %v1436
      %v1921 = vsel %vm1909, %v1888, %v1438
      %v1922 = vsel %vm1909, %v1889, %v1440
      %v1923 = vsel %vm1909, %v1890, %v1442
      %v1924 = vsel %vm1909, %v1891, %v1444
      %v1925 = vsel %vm1909, %v1892, %v1446
      %v1926 = vsel %vm1909, %v1893, %v1448
      %v1927 = vsel %vm1909, %v1894, %v1450
      %v1928 = vsel %vm1909, %v1895, %v1452
      %v1929 = vsel %vm1909, %v1896, %v1454
      %v1930 = vsel %vm1909, %v1897, %v1456
      %v1931 = vsel %vm1909, %v1898, %v1458
      %v1932 = vsel %vm1909, %v1899, %v1460
      %v1933 = vsel %vm1909, %v1900, %v1462
      %v1934 = vsel %vm1909, %v1901, %v1464
      %v1935 = vsel %vm1909, %v1902, %v1466
      %v1936 = vsel %vm1909, %v1903, %v1468
      %v1937 = vsel %vm1909, %v1904, %v1470
      %v1938 = vsel %vm1909, %v1905, %v1472
      %v1939 = vsel %vm1909, %v1906, %v1474
      %v1940 = vsel %vm1909, %v1907, %v1476
      %v1941 = vsel %vm1909, %v1908, %v1478
      %vm1942 = vcmask 392192
      %v1943 = vsel %vm1942, %v1910, %v1512
      %v1944 = vsel %vm1942, %v1911, %v1514
      %v1945 = vsel %vm1942, %v1912, %v1516
      %v1946 = vsel %vm1942, %v1913, %v1518
      %v1947 = vsel %vm1942, %v1914, %v1520
      %v1948 = vsel %vm1942, %v1915, %v1522
      %v1949 = vsel %vm1942, %v1916, %v1524
      %v1950 = vsel %vm1942, %v1917, %v1526
      %v1951 = vsel %vm1942, %v1918, %v1528
      %v1952 = vsel %vm1942, %v1919, %v1530
      %v1953 = vsel %vm1942, %v1920, %v1532
      %v1954 = vsel %vm1942, %v1921, %v1534
      %v1955 = vsel %vm1942, %v1922, %v1536
      %v1956 = vsel %vm1942, %v1923, %v1538
      %v1957 = vsel %vm1942, %v1924, %v1540
      %v1958 = vsel %vm1942, %v1925, %v1542
      %v1959 = vsel %vm1942, %v1926, %v1544
      %v1960 = vsel %vm1942, %v1927, %v1546
      %v1961 = vsel %vm1942, %v1928, %v1548
      %v1962 = vsel %vm1942, %v1929, %v1550
      %v1963 = vsel %vm1942, %v1930, %v1552
      %v1964 = vsel %vm1942, %v1931, %v1554
      %v1965 = vsel %vm1942, %v1932, %v1556
      %v1966 = vsel %vm1942, %v1933, %v1558
      %v1967 = vsel %vm1942, %v1934, %v1560
      %v1968 = vsel %vm1942, %v1935, %v1562
      %v1969 = vsel %vm1942, %v1936, %v1564
      %v1970 = vsel %vm1942, %v1937, %v1566
      %v1971 = vsel %vm1942, %v1938, %v1568
      %v1972 = vsel %vm1942, %v1939, %v1570
      %v1973 = vsel %vm1942, %v1940, %v1564
      %v1974 = vsel %vm1942, %v1941, %v1566
      %vm1975 = vcmask 457728
      %v1976 = vsel %vm1975, %v1943, %v1602
      %v1977 = vsel %vm1975, %v1944, %v1604
      %v1978 = vsel %vm1975, %v1945, %v1606
      %v1979 = vsel %vm1975, %v1946, %v1608
      %v1980 = vsel %vm1975, %v1947, %v1610
      %v1981 = vsel %vm1975, %v1948, %v1612
      %v1982 = vsel %vm1975, %v1949, %v1614
      %v1983 = vsel %vm1975, %v1950, %v1616
      %v1984 = vsel %vm1975, %v1951, %v1618
      %v1985 = vsel %vm1975, %v1952, %v1620
      %v1986 = vsel %vm1975, %v1953, %v1622
      %v1987 = vsel %vm1975, %v1954, %v1624
      %v1988 = vsel %vm1975, %v1955, %v1626
      %v1989 = vsel %vm1975, %v1956, %v1628
      %v1990 = vsel %vm1975, %v1957, %v1630
      %v1991 = vsel %vm1975, %v1958, %v1632
      %v1992 = vsel %vm1975, %v1959, %v1634
      %v1993 = vsel %vm1975, %v1960, %v1636
      %v1994 = vsel %vm1975, %v1961, %v1638
      %v1995 = vsel %vm1975, %v1962, %v1640
      %v1996 = vsel %vm1975, %v1963, %v1642
      %v1997 = vsel %vm1975, %v1964, %v1644
      %v1998 = vsel %vm1975, %v1965, %v1646
      %v1999 = vsel %vm1975, %v1966, %v1648
      %v2000 = vsel %vm1975, %v1967, %v1650
      %v2001 = vsel %vm1975, %v1968, %v1652
      %v2002 = vsel %vm1975, %v1969, %v1654
      %v2003 = vsel %vm1975, %v1970, %v1656
      %v2004 = vsel %vm1975, %v1971, %v1658
      %v2005 = vsel %vm1975, %v1972, %v1660
      %v2006 = vsel %vm1975, %v1973, %v1654
      %v2007 = vsel %vm1975, %v1974, %v1656
      %vm2008 = vcmask 523264
      %v2009 = vsel %vm2008, %v1976, %v1692
      %v2010 = vsel %vm2008, %v1977, %v1694
      %v2011 = vsel %vm2008, %v1978, %v1696
      %v2012 = vsel %vm2008, %v1979, %v1698
      %v2013 = vsel %vm2008, %v1980, %v1700
      %v2014 = vsel %vm2008, %v1981, %v1702
      %v2015 = vsel %vm2008, %v1982, %v1704
      %v2016 = vsel %vm2008, %v1983, %v1706
      %v2017 = vsel %vm2008, %v1984, %v1708
      %v2018 = vsel %vm2008, %v1985, %v1710
      %v2019 = vsel %vm2008, %v1986, %v1712
      %v2020 = vsel %vm2008, %v1987, %v1714
      %v2021 = vsel %vm2008, %v1988, %v1716
      %v2022 = vsel %vm2008, %v1989, %v1718
      %v2023 = vsel %vm2008, %v1990, %v1720
      %v2024 = vsel %vm2008, %v1991, %v1722
      %v2025 = vsel %vm2008, %v1992, %v1724
      %v2026 = vsel %vm2008, %v1993, %v1726
      %v2027 = vsel %vm2008, %v1994, %v1728
      %v2028 = vsel %vm2008, %v1995, %v1730
      %v2029 = vsel %vm2008, %v1996, %v1732
      %v2030 = vsel %vm2008, %v1997, %v1734
      %v2031 = vsel %vm2008, %v1998, %v1736
      %v2032 = vsel %vm2008, %v1999, %v1738
      %v2033 = vsel %vm2008, %v2000, %v1740
      %v2034 = vsel %vm2008, %v2001, %v1742
      %v2035 = vsel %vm2008, %v2002, %v1744
      %v2036 = vsel %vm2008, %v2003, %v1746
      %v2037 = vsel %vm2008, %v2004, %v1748
      %v2038 = vsel %vm2008, %v2005, %v1750
      %v2039 = vsel %vm2008, %v2006, %v1744
      %v2040 = vsel %vm2008, %v2007, %v1746
      %v2042 = vlaneseq
      %v2043 = vshrl.u32 %v2042, 7
      %v2044 = vsub.s32 0, %v2043
      %v2045 = vrot.slane %v624, %v2044
      %vm2047 = vcmask 588800
      %v2049 = vsel %vm2047, %v2009, 0
      %v2052 = vsel %vm2047, %v2010, 0
      %v2055 = vsel %vm2047, %v2011, 0
      %v2058 = vsel %vm2047, %v2012, 0
      %v2061 = vsel %vm2047, %v2013, 0
      %v2064 = vsel %vm2047, %v2014, 0
      %v2067 = vsel %vm2047, %v2015, 0
      %v2070 = vsel %vm2047, %v2016, 0
      %v2073 = vsel %vm2047, %v2017, 0
      %v2076 = vsel %vm2047, %v2018, 0
      %v2079 = vsel %vm2047, %v2019, 0
      %v2082 = vsel %vm2047, %v2020, 0
      %v2085 = vsel %vm2047, %v2021, 0
      %v2088 = vsel %vm2047, %v2022, 0
      %v2091 = vsel %vm2047, %v2023, 0
      %v2094 = vsel %vm2047, %v2024, 0
      %v2097 = vsel %vm2047, %v2025, 0
      %v2100 = vsel %vm2047, %v2026, 0
      %v2103 = vsel %vm2047, %v2027, 0
      %v2106 = vsel %vm2047, %v2028, 0
      %v2109 = vsel %vm2047, %v2029, 0
      %v2112 = vsel %vm2047, %v2030, 0
      %v2115 = vsel %vm2047, %v2031, 0
      %v2118 = vsel %vm2047, %v2032, 0
      %v2121 = vsel %vm2047, %v2033, 0
      %v2124 = vsel %vm2047, %v2034, 0
      %v2127 = vsel %vm2047, %v2035, 0
      %v2130 = vsel %vm2047, %v2036, 0
      %v2133 = vsel %vm2047, %v2037, 0
      %v2136 = vsel %vm2047, %v2038, 0
      %v2139 = vsel %vm2047, %v2039, 0
      %v2142 = vsel %vm2047, %v2040, 0
      %2144 = vmatprep.subr.mxu0 0.0
      %2145 = vmatpush1.msra.mxu0 %v615
      %2146 = vmatprep.subr.mxu0 0.0
      %2147 = vmatpush1.msra.mxu0 %v616
      %2148 = vmatprep.subr.mxu0 0.0
      %2149 = vmatpush1.msra.mxu0 %v617
      %2150 = vmatprep.subr.mxu0 0.0
      %2151 = vmatpush1.msra.mxu0 %v618
      %2152 = vmatprep.subr.mxu0 0.0
      %2153 = vmatpush1.msra.mxu0 %v619
      %2154 = vmatprep.subr.mxu0 0.0
      %2155 = vmatpush1.msra.mxu0 %v620
      %2156 = vmatprep.subr.mxu0 0.0
      %2157 = vmatpush1.msra.mxu0 %v621
      %2158 = vmatprep.subr.mxu0 0.0
      %2159 = vmatpush1.msra.mxu0 %v622
      %2160 = vmatprep.subr.mxu0 0.0
      %2161 = vmatpush1.msra.mxu0 %v623
      %2162 = vmatprep.subr.mxu0 0.0
      %2163 = vmatpush1.msra.mxu0 0.0
      %2164 = vmatprep.subr.mxu0 0.0
      %2165 = vmatpush1.msra.mxu0 0.0
      %2166 = vmatprep.subr.mxu0 0.0
      %2167 = vmatpush1.msra.mxu0 0.0
      %2168 = vmatprep.subr.mxu0 0.0
      %2169 = vmatpush1.msra.mxu0 0.0
      %2170 = vmatprep.subr.mxu0 0.0
      %2171 = vmatpush1.msra.mxu0 0.0
      %2172 = vmatprep.subr.mxu0 0.0
      %2173 = vmatpush1.msra.mxu0 0.0
      %2174 = vmatprep.subr.mxu0 0.0
      %2175 = vmatpush1.msra.mxu0 0.0
      %2176 = vmatprep.subr.mxu0 0.0
      %2177 = vmatpush1.msra.mxu0 0.0
      %2178 = vmatprep.subr.mxu0 0.0
      %2179 = vmatpush1.msra.mxu0 0.0
      %2180 = vmatprep.subr.mxu0 0.0
      %2181 = vmatpush1.msra.mxu0 0.0
      %2182 = vmatprep.subr.mxu0 0.0
      %2183 = vmatpush1.msra.mxu0 0.0
      %2184 = vmatprep.subr.mxu0 0.0
      %2185 = vmatpush1.msra.mxu0 0.0
      %2186 = vmatprep.subr.mxu0 0.0
      %2187 = vmatpush1.msra.mxu0 0.0
      %2188 = vmatprep.subr.mxu0 0.0
      %2189 = vmatpush1.msra.mxu0 0.0
      %2190 = vmatprep.subr.mxu0 0.0
      %2191 = vmatpush1.msra.mxu0 0.0
      %2192 = vmatprep.subr.mxu0 0.0
      %2193 = vmatpush1.msra.mxu0 0.0
      %2194 = vmatprep.subr.mxu0 0.0
      %2195 = vmatpush1.msra.mxu0 0.0
      %2196 = vmatprep.subr.mxu0 0.0
      %2197 = vmatpush1.msra.mxu0 0.0
      %2198 = vmatprep.subr.mxu0 0.0
      %2199 = vmatpush1.msra.mxu0 0.0
      %2200 = vmatprep.subr.mxu0 0.0
      %2201 = vmatpush1.msra.mxu0 0.0
      %2202 = vmatprep.subr.mxu0 0.0
      %2203 = vmatpush1.msra.mxu0 0.0
      %2204 = vmatprep.subr.mxu0 0.0
      %2205 = vmatpush1.msra.mxu0 0.0
      %2206 = vmatprep.subr.mxu0 0.0
      %2207 = vmatpush1.msra.mxu0 0.0
      %2208 = vmatprep.mubr.f32.mxu0 0.0
      %2209 = vmatmul.mubr.f32.gmra.mrb[0].mxu0 %v2049
      %v2210 = vpop.f32.mrb[0].mxu0
      %v2211 = vadd.f32 %v2045, %v2210
      %v2212 = vpop.f32.mrb[0].mxu0
      %2213 = vmatprep.mubr.f32.mxu0 0.0
      %2214 = vmatmul.mubr.f32.gmra.mrb[0].mxu0 %v2052
      %v2215 = vpop.f32.mrb[0].mxu0
      %v2216 = vadd.f32 %v2045, %v2215
      %v2217 = vpop.f32.mrb[0].mxu0
      %2218 = vmatprep.mubr.f32.mxu0 0.0
      %2219 = vmatmul.mubr.f32.gmra.mrb[0].mxu0 %v2055
      %v2220 = vpop.f32.mrb[0].mxu0
      %v2221 = vadd.f32 %v2045, %v2220
      %v2222 = vpop.f32.mrb[0].mxu0
      %2223 = vmatprep.mubr.f32.mxu0 0.0
      %2224 = vmatmul.mubr.f32.gmra.mrb[0].mxu0 %v2058
      %v2225 = vpop.f32.mrb[0].mxu0
      %v2226 = vadd.f32 %v2045, %v2225
      %v2227 = vpop.f32.mrb[0].mxu0
      %2228 = vmatprep.mubr.f32.mxu0 0.0
      %2229 = vmatmul.mubr.f32.gmra.mrb[0].mxu0 %v2061
      %v2230 = vpop.f32.mrb[0].mxu0
      %v2231 = vadd.f32 %v2045, %v2230
      %v2232 = vpop.f32.mrb[0].mxu0
      %2233 = vmatprep.mubr.f32.mxu0 0.0
      %2234 = vmatmul.mubr.f32.gmra.mrb[0].mxu0 %v2064
      %v2235 = vpop.f32.mrb[0].mxu0
      %v2236 = vadd.f32 %v2045, %v2235
      %v2237 = vpop.f32.mrb[0].mxu0
      %2238 = vmatprep.mubr.f32.mxu0 0.0
      %2239 = vmatmul.mubr.f32.gmra.mrb[0].mxu0 %v2067
      %v2240 = vpop.f32.mrb[0].mxu0
      %v2241 = vadd.f32 %v2045, %v2240
      %v2242 = vpop.f32.mrb[0].mxu0
      %2243 = vmatprep.mubr.f32.mxu0 0.0
      %2244 = vmatmul.mubr.f32.gmra.mrb[0].mxu0 %v2070
      %v2245 = vpop.f32.mrb[0].mxu0
      %v2246 = vadd.f32 %v2045, %v2245
      %v2247 = vpop.f32.mrb[0].mxu0
      %2248 = vmatprep.mubr.f32.mxu0 0.0
      %2249 = vmatmul.mubr.f32.gmra.mrb[0].mxu0 %v2073
      %v2250 = vpop.f32.mrb[0].mxu0
      %v2251 = vadd.f32 %v2045, %v2250
      %v2252 = vpop.f32.mrb[0].mxu0
      %2253 = vmatprep.mubr.f32.mxu0 0.0
      %2254 = vmatmul.mubr.f32.gmra.mrb[0].mxu0 %v2076
      %v2255 = vpop.f32.mrb[0].mxu0
      %v2256 = vadd.f32 %v2045, %v2255
      %v2257 = vpop.f32.mrb[0].mxu0
      %2258 = vmatprep.mubr.f32.mxu0 0.0
      %2259 = vmatmul.mubr.f32.gmra.mrb[0].mxu0 %v2079
      %v2260 = vpop.f32.mrb[0].mxu0
      %v2261 = vadd.f32 %v2045, %v2260
      %v2262 = vpop.f32.mrb[0].mxu0
      %2263 = vmatprep.mubr.f32.mxu0 0.0
      %2264 = vmatmul.mubr.f32.gmra.mrb[0].mxu0 %v2082
      %v2265 = vpop.f32.mrb[0].mxu0
      %v2266 = vadd.f32 %v2045, %v2265
      %v2267 = vpop.f32.mrb[0].mxu0
      %2268 = vmatprep.mubr.f32.mxu0 0.0
      %2269 = vmatmul.mubr.f32.gmra.mrb[0].mxu0 %v2085
      %v2270 = vpop.f32.mrb[0].mxu0
      %v2271 = vadd.f32 %v2045, %v2270
      %v2272 = vpop.f32.mrb[0].mxu0
      %2273 = vmatprep.mubr.f32.mxu0 0.0
      %2274 = vmatmul.mubr.f32.gmra.mrb[0].mxu0 %v2088
      %v2275 = vpop.f32.mrb[0].mxu0
      %v2276 = vadd.f32 %v2045, %v2275
      %v2277 = vpop.f32.mrb[0].mxu0
      %2278 = vmatprep.mubr.f32.mxu0 0.0
      %2279 = vmatmul.mubr.f32.gmra.mrb[0].mxu0 %v2091
      %v2280 = vpop.f32.mrb[0].mxu0
      %v2281 = vadd.f32 %v2045, %v2280
      %v2282 = vpop.f32.mrb[0].mxu0
      %2283 = vmatprep.mubr.f32.mxu0 0.0
      %2284 = vmatmul.mubr.f32.gmra.mrb[0].mxu0 %v2094
      %v2285 = vpop.f32.mrb[0].mxu0
      %v2286 = vadd.f32 %v2045, %v2285
      %v2287 = vpop.f32.mrb[0].mxu0
      %2288 = vmatprep.mubr.f32.mxu0 0.0
      %2289 = vmatmul.mubr.f32.gmra.mrb[0].mxu0 %v2097
      %v2290 = vpop.f32.mrb[0].mxu0
      %v2291 = vadd.f32 %v2045, %v2290
      %v2292 = vpop.f32.mrb[0].mxu0
      %2293 = vmatprep.mubr.f32.mxu0 0.0
      %2294 = vmatmul.mubr.f32.gmra.mrb[0].mxu0 %v2100
      %v2295 = vpop.f32.mrb[0].mxu0
      %v2296 = vadd.f32 %v2045, %v2295
      %v2297 = vpop.f32.mrb[0].mxu0
      %2298 = vmatprep.mubr.f32.mxu0 0.0
      %2299 = vmatmul.mubr.f32.gmra.mrb[0].mxu0 %v2103
      %v2300 = vpop.f32.mrb[0].mxu0
      %v2301 = vadd.f32 %v2045, %v2300
      %v2302 = vpop.f32.mrb[0].mxu0
      %2303 = vmatprep.mubr.f32.mxu0 0.0
      %2304 = vmatmul.mubr.f32.gmra.mrb[0].mxu0 %v2106
      %v2305 = vpop.f32.mrb[0].mxu0
      %v2306 = vadd.f32 %v2045, %v2305
      %v2307 = vpop.f32.mrb[0].mxu0
      %2308 = vmatprep.mubr.f32.mxu0 0.0
      %2309 = vmatmul.mubr.f32.gmra.mrb[0].mxu0 %v2109
      %v2310 = vpop.f32.mrb[0].mxu0
      %v2311 = vadd.f32 %v2045, %v2310
      %v2312 = vpop.f32.mrb[0].mxu0
      %2313 = vmatprep.mubr.f32.mxu0 0.0
      %2314 = vmatmul.mubr.f32.gmra.mrb[0].mxu0 %v2112
      %v2315 = vpop.f32.mrb[0].mxu0
      %v2316 = vadd.f32 %v2045, %v2315
      %v2317 = vpop.f32.mrb[0].mxu0
      %2318 = vmatprep.mubr.f32.mxu0 0.0
      %2319 = vmatmul.mubr.f32.gmra.mrb[0].mxu0 %v2115
      %v2320 = vpop.f32.mrb[0].mxu0
      %v2321 = vadd.f32 %v2045, %v2320
      %v2322 = vpop.f32.mrb[0].mxu0
      %2323 = vmatprep.mubr.f32.mxu0 0.0
      %2324 = vmatmul.mubr.f32.gmra.mrb[0].mxu0 %v2118
      %v2325 = vpop.f32.mrb[0].mxu0
      %v2326 = vadd.f32 %v2045, %v2325
      %v2327 = vpop.f32.mrb[0].mxu0
      %2328 = vmatprep.mubr.f32.mxu0 0.0
      %2329 = vmatmul.mubr.f32.gmra.mrb[0].mxu0 %v2121
      %v2330 = vpop.f32.mrb[0].mxu0
      %v2331 = vadd.f32 %v2045, %v2330
      %v2332 = vpop.f32.mrb[0].mxu0
      %2333 = vmatprep.mubr.f32.mxu0 0.0
      %2334 = vmatmul.mubr.f32.gmra.mrb[0].mxu0 %v2124
      %v2335 = vpop.f32.mrb[0].mxu0
      %v2336 = vadd.f32 %v2045, %v2335
      %v2337 = vpop.f32.mrb[0].mxu0
      %2338 = vmatprep.mubr.f32.mxu0 0.0
      %2339 = vmatmul.mubr.f32.gmra.mrb[0].mxu0 %v2127
      %v2340 = vpop.f32.mrb[0].mxu0
      %v2341 = vadd.f32 %v2045, %v2340
      %v2342 = vpop.f32.mrb[0].mxu0
      %2343 = vmatprep.mubr.f32.mxu0 0.0
      %2344 = vmatmul.mubr.f32.gmra.mrb[0].mxu0 %v2130
      %v2345 = vpop.f32.mrb[0].mxu0
      %v2346 = vadd.f32 %v2045, %v2345
      %v2347 = vpop.f32.mrb[0].mxu0
      %2348 = vmatprep.mubr.f32.mxu0 0.0
      %2349 = vmatmul.mubr.f32.gmra.mrb[0].mxu0 %v2133
      %v2350 = vpop.f32.mrb[0].mxu0
      %v2351 = vadd.f32 %v2045, %v2350
      %v2352 = vpop.f32.mrb[0].mxu0
      %2353 = vmatprep.mubr.f32.mxu0 0.0
      %2354 = vmatmul.mubr.f32.gmra.mrb[0].mxu0 %v2136
      %v2355 = vpop.f32.mrb[0].mxu0
      %v2356 = vadd.f32 %v2045, %v2355
      %v2357 = vpop.f32.mrb[0].mxu0
      %2358 = vmatprep.mubr.f32.mxu0 0.0
      %2359 = vmatmul.mubr.f32.gmra.mrb[0].mxu0 %v2139
      %v2360 = vpop.f32.mrb[0].mxu0
      %v2361 = vadd.f32 %v2045, %v2360
      %v2362 = vpop.f32.mrb[0].mxu0
      %2363 = vmatprep.mubr.f32.mxu0 0.0
      %2364 = vmatmul.mubr.f32.gmra.mrb[0].mxu0 %v2142
      %v2365 = vpop.f32.mrb[0].mxu0
      %v2366 = vadd.f32 %v2045, %v2365
      %v2367 = vpop.f32.mrb[0].mxu0
      %2368 = vdwg.mxu0
      %v2369 = vsel %vm1876, %v2211, 0.0
      %2370 = vadd.xlane.f32.xlu0 %v2369
      %v2371 = vpop.xlane.xlu0 %2370
      %v2372 = vsel %vm1876, %v2216, 0.0
      %2373 = vadd.xlane.f32.xlu0 %v2372
      %v2374 = vpop.xlane.xlu0 %2373
      %v2375 = vsel %vm1876, %v2221, 0.0
      %2376 = vadd.xlane.f32.xlu0 %v2375
      %v2377 = vpop.xlane.xlu0 %2376
      %v2378 = vsel %vm1876, %v2226, 0.0
      %2379 = vadd.xlane.f32.xlu0 %v2378
      %v2380 = vpop.xlane.xlu0 %2379
      %v2381 = vsel %vm1876, %v2231, 0.0
      %2382 = vadd.xlane.f32.xlu0 %v2381
      %v2383 = vpop.xlane.xlu0 %2382
      %v2384 = vsel %vm1876, %v2236, 0.0
      %2385 = vadd.xlane.f32.xlu0 %v2384
      %v2386 = vpop.xlane.xlu0 %2385
      %v2387 = vsel %vm1876, %v2241, 0.0
      %2388 = vadd.xlane.f32.xlu0 %v2387
      %v2389 = vpop.xlane.xlu0 %2388
      %v2390 = vsel %vm1876, %v2246, 0.0
      %2391 = vadd.xlane.f32.xlu0 %v2390
      %v2392 = vpop.xlane.xlu0 %2391
      %v2393 = vsel %vm1876, %v2251, 0.0
      %2394 = vadd.xlane.f32.xlu0 %v2393
      %v2395 = vpop.xlane.xlu0 %2394
      %v2396 = vsel %vm1876, %v2256, 0.0
      %2397 = vadd.xlane.f32.xlu0 %v2396
      %v2398 = vpop.xlane.xlu0 %2397
      %v2399 = vsel %vm1876, %v2261, 0.0
      %2400 = vadd.xlane.f32.xlu0 %v2399
      %v2401 = vpop.xlane.xlu0 %2400
      %v2402 = vsel %vm1876, %v2266, 0.0
      %2403 = vadd.xlane.f32.xlu0 %v2402
      %v2404 = vpop.xlane.xlu0 %2403
      %v2405 = vsel %vm1876, %v2271, 0.0
      %2406 = vadd.xlane.f32.xlu0 %v2405
      %v2407 = vpop.xlane.xlu0 %2406
      %v2408 = vsel %vm1876, %v2276, 0.0
      %2409 = vadd.xlane.f32.xlu0 %v2408
      %v2410 = vpop.xlane.xlu0 %2409
      %v2411 = vsel %vm1876, %v2281, 0.0
      %2412 = vadd.xlane.f32.xlu0 %v2411
      %v2413 = vpop.xlane.xlu0 %2412
      %v2414 = vsel %vm1876, %v2286, 0.0
      %2415 = vadd.xlane.f32.xlu0 %v2414
      %v2416 = vpop.xlane.xlu0 %2415
      %v2417 = vsel %vm1876, %v2291, 0.0
      %2418 = vadd.xlane.f32.xlu0 %v2417
      %v2419 = vpop.xlane.xlu0 %2418
      %v2420 = vsel %vm1876, %v2296, 0.0
      %2421 = vadd.xlane.f32.xlu0 %v2420
      %v2422 = vpop.xlane.xlu0 %2421
      %v2423 = vsel %vm1876, %v2301, 0.0
      %2424 = vadd.xlane.f32.xlu0 %v2423
      %v2425 = vpop.xlane.xlu0 %2424
      %v2426 = vsel %vm1876, %v2306, 0.0
      %2427 = vadd.xlane.f32.xlu0 %v2426
      %v2428 = vpop.xlane.xlu0 %2427
      %v2429 = vsel %vm1876, %v2311, 0.0
      %2430 = vadd.xlane.f32.xlu0 %v2429
      %v2431 = vpop.xlane.xlu0 %2430
      %v2432 = vsel %vm1876, %v2316, 0.0
      %2433 = vadd.xlane.f32.xlu0 %v2432
      %v2434 = vpop.xlane.xlu0 %2433
      %v2435 = vsel %vm1876, %v2321, 0.0
      %2436 = vadd.xlane.f32.xlu0 %v2435
      %v2437 = vpop.xlane.xlu0 %2436
      %v2438 = vsel %vm1876, %v2326, 0.0
      %2439 = vadd.xlane.f32.xlu0 %v2438
      %v2440 = vpop.xlane.xlu0 %2439
      %v2441 = vsel %vm1876, %v2331, 0.0
      %2442 = vadd.xlane.f32.xlu0 %v2441
      %v2443 = vpop.xlane.xlu0 %2442
      %v2444 = vsel %vm1876, %v2336, 0.0
      %2445 = vadd.xlane.f32.xlu0 %v2444
      %v2446 = vpop.xlane.xlu0 %2445
      %v2447 = vsel %vm1876, %v2341, 0.0
      %2448 = vadd.xlane.f32.xlu0 %v2447
      %v2449 = vpop.xlane.xlu0 %2448
      %v2450 = vsel %vm1876, %v2346, 0.0
      %2451 = vadd.xlane.f32.xlu0 %v2450
      %v2452 = vpop.xlane.xlu0 %2451
      %v2453 = vsel %vm1876, %v2351, 0.0
      %2454 = vadd.xlane.f32.xlu0 %v2453
      %v2455 = vpop.xlane.xlu0 %2454
      %v2456 = vsel %vm1876, %v2356, 0.0
      %2457 = vadd.xlane.f32.xlu0 %v2456
      %v2458 = vpop.xlane.xlu0 %2457
      %v2459 = vsel %vm1876, %v2361, 0.0
      %2460 = vadd.xlane.f32.xlu0 %v2459
      %v2461 = vpop.xlane.xlu0 %2460
      %v2462 = vsel %vm1876, %v2366, 0.0
      %2463 = vadd.xlane.f32.xlu0 %v2462
      %v2464 = vpop.xlane.xlu0 %2463
      %v2465 = vrcp.pop 32.0
      %v2466 = vmul.f32 %v2371, %v2465
      %v2467 = vmul.f32 %v2374, %v2465
      %v2468 = vmul.f32 %v2377, %v2465
      %v2469 = vmul.f32 %v2380, %v2465
      %v2470 = vmul.f32 %v2383, %v2465
      %v2471 = vmul.f32 %v2386, %v2465
      %v2472 = vmul.f32 %v2389, %v2465
      %v2473 = vmul.f32 %v2392, %v2465
      %v2474 = vmul.f32 %v2395, %v2465
      %v2475 = vmul.f32 %v2398, %v2465
      %v2476 = vmul.f32 %v2401, %v2465
      %v2477 = vmul.f32 %v2404, %v2465
      %v2478 = vmul.f32 %v2407, %v2465
      %v2479 = vmul.f32 %v2410, %v2465
      %v2480 = vmul.f32 %v2413, %v2465
      %v2481 = vmul.f32 %v2416, %v2465
      %v2482 = vmul.f32 %v2419, %v2465
      %v2483 = vmul.f32 %v2422, %v2465
      %v2484 = vmul.f32 %v2425, %v2465
      %v2485 = vmul.f32 %v2428, %v2465
      %v2486 = vmul.f32 %v2431, %v2465
      %v2487 = vmul.f32 %v2434, %v2465
      %v2488 = vmul.f32 %v2437, %v2465
      %v2489 = vmul.f32 %v2440, %v2465
      %v2490 = vmul.f32 %v2443, %v2465
      %v2491 = vmul.f32 %v2446, %v2465
      %v2492 = vmul.f32 %v2449, %v2465
      %v2493 = vmul.f32 %v2452, %v2465
      %v2494 = vmul.f32 %v2455, %v2465
      %v2495 = vmul.f32 %v2458, %v2465
      %v2496 = vmul.f32 %v2461, %v2465
      %v2497 = vmul.f32 %v2464, %v2465
      %v2498 = vsub.f32 %v2211, %v2466
      %v2499 = vsub.f32 %v2216, %v2467
      %v2500 = vsub.f32 %v2221, %v2468
      %v2501 = vsub.f32 %v2226, %v2469
      %v2502 = vsub.f32 %v2231, %v2470
      %v2503 = vsub.f32 %v2236, %v2471
      %v2504 = vsub.f32 %v2241, %v2472
      %v2505 = vsub.f32 %v2246, %v2473
      %v2506 = vsub.f32 %v2251, %v2474
      %v2507 = vsub.f32 %v2256, %v2475
      %v2508 = vsub.f32 %v2261, %v2476
      %v2509 = vsub.f32 %v2266, %v2477
      %v2510 = vsub.f32 %v2271, %v2478
      %v2511 = vsub.f32 %v2276, %v2479
      %v2512 = vsub.f32 %v2281, %v2480
      %v2513 = vsub.f32 %v2286, %v2481
      %v2514 = vsub.f32 %v2291, %v2482
      %v2515 = vsub.f32 %v2296, %v2483
      %v2516 = vsub.f32 %v2301, %v2484
      %v2517 = vsub.f32 %v2306, %v2485
      %v2518 = vsub.f32 %v2311, %v2486
      %v2519 = vsub.f32 %v2316, %v2487
      %v2520 = vsub.f32 %v2321, %v2488
      %v2521 = vsub.f32 %v2326, %v2489
      %v2522 = vsub.f32 %v2331, %v2490
      %v2523 = vsub.f32 %v2336, %v2491
      %v2524 = vsub.f32 %v2341, %v2492
      %v2525 = vsub.f32 %v2346, %v2493
      %v2526 = vsub.f32 %v2351, %v2494
      %v2527 = vsub.f32 %v2356, %v2495
      %v2528 = vsub.f32 %v2361, %v2496
      %v2529 = vsub.f32 %v2366, %v2497
      %v2530 = vmul.f32 %v2498, %v2498
      %v2531 = vmul.f32 %v2499, %v2499
      %v2532 = vmul.f32 %v2500, %v2500
      %v2533 = vmul.f32 %v2501, %v2501
      %v2534 = vmul.f32 %v2502, %v2502
      %v2535 = vmul.f32 %v2503, %v2503
      %v2536 = vmul.f32 %v2504, %v2504
      %v2537 = vmul.f32 %v2505, %v2505
      %v2538 = vmul.f32 %v2506, %v2506
      %v2539 = vmul.f32 %v2507, %v2507
      %v2540 = vmul.f32 %v2508, %v2508
      %v2541 = vmul.f32 %v2509, %v2509
      %v2542 = vmul.f32 %v2510, %v2510
      %v2543 = vmul.f32 %v2511, %v2511
      %v2544 = vmul.f32 %v2512, %v2512
      %v2545 = vmul.f32 %v2513, %v2513
      %v2546 = vmul.f32 %v2514, %v2514
      %v2547 = vmul.f32 %v2515, %v2515
      %v2548 = vmul.f32 %v2516, %v2516
      %v2549 = vmul.f32 %v2517, %v2517
      %v2550 = vmul.f32 %v2518, %v2518
      %v2551 = vmul.f32 %v2519, %v2519
      %v2552 = vmul.f32 %v2520, %v2520
      %v2553 = vmul.f32 %v2521, %v2521
      %v2554 = vmul.f32 %v2522, %v2522
      %v2555 = vmul.f32 %v2523, %v2523
      %v2556 = vmul.f32 %v2524, %v2524
      %v2557 = vmul.f32 %v2525, %v2525
      %v2558 = vmul.f32 %v2526, %v2526
      %v2559 = vmul.f32 %v2527, %v2527
      %v2560 = vmul.f32 %v2528, %v2528
      %v2561 = vmul.f32 %v2529, %v2529
      %v2562 = vsel %vm1876, %v2530, 0.0
      %2563 = vadd.xlane.f32.xlu0 %v2562
      %v2564 = vpop.xlane.xlu0 %2563
      %v2565 = vsel %vm1876, %v2531, 0.0
      %2566 = vadd.xlane.f32.xlu0 %v2565
      %v2567 = vpop.xlane.xlu0 %2566
      %v2568 = vsel %vm1876, %v2532, 0.0
      %2569 = vadd.xlane.f32.xlu0 %v2568
      %v2570 = vpop.xlane.xlu0 %2569
      %v2571 = vsel %vm1876, %v2533, 0.0
      %2572 = vadd.xlane.f32.xlu0 %v2571
      %v2573 = vpop.xlane.xlu0 %2572
      %v2574 = vsel %vm1876, %v2534, 0.0
      %2575 = vadd.xlane.f32.xlu0 %v2574
      %v2576 = vpop.xlane.xlu0 %2575
      %v2577 = vsel %vm1876, %v2535, 0.0
      %2578 = vadd.xlane.f32.xlu0 %v2577
      %v2579 = vpop.xlane.xlu0 %2578
      %v2580 = vsel %vm1876, %v2536, 0.0
      %2581 = vadd.xlane.f32.xlu0 %v2580
      %v2582 = vpop.xlane.xlu0 %2581
      %v2583 = vsel %vm1876, %v2537, 0.0
      %2584 = vadd.xlane.f32.xlu0 %v2583
      %v2585 = vpop.xlane.xlu0 %2584
      %v2586 = vsel %vm1876, %v2538, 0.0
      %2587 = vadd.xlane.f32.xlu0 %v2586
      %v2588 = vpop.xlane.xlu0 %2587
      %v2589 = vsel %vm1876, %v2539, 0.0
      %2590 = vadd.xlane.f32.xlu0 %v2589
      %v2591 = vpop.xlane.xlu0 %2590
      %v2592 = vsel %vm1876, %v2540, 0.0
      %2593 = vadd.xlane.f32.xlu0 %v2592
      %v2594 = vpop.xlane.xlu0 %2593
      %v2595 = vsel %vm1876, %v2541, 0.0
      %2596 = vadd.xlane.f32.xlu0 %v2595
      %v2597 = vpop.xlane.xlu0 %2596
      %v2598 = vsel %vm1876, %v2542, 0.0
      %2599 = vadd.xlane.f32.xlu0 %v2598
      %v2600 = vpop.xlane.xlu0 %2599
      %v2601 = vsel %vm1876, %v2543, 0.0
      %2602 = vadd.xlane.f32.xlu0 %v2601
      %v2603 = vpop.xlane.xlu0 %2602
      %v2604 = vsel %vm1876, %v2544, 0.0
      %2605 = vadd.xlane.f32.xlu0 %v2604
      %v2606 = vpop.xlane.xlu0 %2605
      %v2607 = vsel %vm1876, %v2545, 0.0
      %2608 = vadd.xlane.f32.xlu0 %v2607
      %v2609 = vpop.xlane.xlu0 %2608
      %v2610 = vsel %vm1876, %v2546, 0.0
      %2611 = vadd.xlane.f32.xlu0 %v2610
      %v2612 = vpop.xlane.xlu0 %2611
      %v2613 = vsel %vm1876, %v2547, 0.0
      %2614 = vadd.xlane.f32.xlu0 %v2613
      %v2615 = vpop.xlane.xlu0 %2614
      %v2616 = vsel %vm1876, %v2548, 0.0
      %2617 = vadd.xlane.f32.xlu0 %v2616
      %v2618 = vpop.xlane.xlu0 %2617
      %v2619 = vsel %vm1876, %v2549, 0.0
      %2620 = vadd.xlane.f32.xlu0 %v2619
      %v2621 = vpop.xlane.xlu0 %2620
      %v2622 = vsel %vm1876, %v2550, 0.0
      %2623 = vadd.xlane.f32.xlu0 %v2622
      %v2624 = vpop.xlane.xlu0 %2623
      %v2625 = vsel %vm1876, %v2551, 0.0
      %2626 = vadd.xlane.f32.xlu0 %v2625
      %v2627 = vpop.xlane.xlu0 %2626
      %v2628 = vsel %vm1876, %v2552, 0.0
      %2629 = vadd.xlane.f32.xlu0 %v2628
      %v2630 = vpop.xlane.xlu0 %2629
      %v2631 = vsel %vm1876, %v2553, 0.0
      %2632 = vadd.xlane.f32.xlu0 %v2631
      %v2633 = vpop.xlane.xlu0 %2632
      %v2634 = vsel %vm1876, %v2554, 0.0
      %2635 = vadd.xlane.f32.xlu0 %v2634
      %v2636 = vpop.xlane.xlu0 %2635
      %v2637 = vsel %vm1876, %v2555, 0.0
      %2638 = vadd.xlane.f32.xlu0 %v2637
      %v2639 = vpop.xlane.xlu0 %2638
      %v2640 = vsel %vm1876, %v2556, 0.0
      %2641 = vadd.xlane.f32.xlu0 %v2640
      %v2642 = vpop.xlane.xlu0 %2641
      %v2643 = vsel %vm1876, %v2557, 0.0
      %2644 = vadd.xlane.f32.xlu0 %v2643
      %v2645 = vpop.xlane.xlu0 %2644
      %v2646 = vsel %vm1876, %v2558, 0.0
      %2647 = vadd.xlane.f32.xlu0 %v2646
      %v2648 = vpop.xlane.xlu0 %2647
      %v2649 = vsel %vm1876, %v2559, 0.0
      %2650 = vadd.xlane.f32.xlu0 %v2649
      %v2651 = vpop.xlane.xlu0 %2650
      %v2652 = vsel %vm1876, %v2560, 0.0
      %2653 = vadd.xlane.f32.xlu0 %v2652
      %v2654 = vpop.xlane.xlu0 %2653
      %v2655 = vsel %vm1876, %v2561, 0.0
      %2656 = vadd.xlane.f32.xlu0 %v2655
      %v2657 = vpop.xlane.xlu0 %2656
      %v2658 = vmul.f32 %v2564, %v2465
      %v2659 = vmul.f32 %v2567, %v2465
      %v2660 = vmul.f32 %v2570, %v2465
      %v2661 = vmul.f32 %v2573, %v2465
      %v2662 = vmul.f32 %v2576, %v2465
      %v2663 = vmul.f32 %v2579, %v2465
      %v2664 = vmul.f32 %v2582, %v2465
      %v2665 = vmul.f32 %v2585, %v2465
      %v2666 = vmul.f32 %v2588, %v2465
      %v2667 = vmul.f32 %v2591, %v2465
      %v2668 = vmul.f32 %v2594, %v2465
      %v2669 = vmul.f32 %v2597, %v2465
      %v2670 = vmul.f32 %v2600, %v2465
      %v2671 = vmul.f32 %v2603, %v2465
      %v2672 = vmul.f32 %v2606, %v2465
      %v2673 = vmul.f32 %v2609, %v2465
      %v2674 = vmul.f32 %v2612, %v2465
      %v2675 = vmul.f32 %v2615, %v2465
      %v2676 = vmul.f32 %v2618, %v2465
      %v2677 = vmul.f32 %v2621, %v2465
      %v2678 = vmul.f32 %v2624, %v2465
      %v2679 = vmul.f32 %v2627, %v2465
      %v2680 = vmul.f32 %v2630, %v2465
      %v2681 = vmul.f32 %v2633, %v2465
      %v2682 = vmul.f32 %v2636, %v2465
      %v2683 = vmul.f32 %v2639, %v2465
      %v2684 = vmul.f32 %v2642, %v2465
      %v2685 = vmul.f32 %v2645, %v2465
      %v2686 = vmul.f32 %v2648, %v2465
      %v2687 = vmul.f32 %v2651, %v2465
      %v2688 = vmul.f32 %v2654, %v2465
      %v2689 = vmul.f32 %v2657, %v2465
      %v2690 = vadd.f32 %v2658, 1e-05
      %v2691 = vadd.f32 %v2659, 1e-05
      %v2692 = vadd.f32 %v2660, 1e-05
      %v2693 = vadd.f32 %v2661, 1e-05
      %v2694 = vadd.f32 %v2662, 1e-05
      %v2695 = vadd.f32 %v2663, 1e-05
      %v2696 = vadd.f32 %v2664, 1e-05
      %v2697 = vadd.f32 %v2665, 1e-05
      %v2698 = vadd.f32 %v2666, 1e-05
      %v2699 = vadd.f32 %v2667, 1e-05
      %v2700 = vadd.f32 %v2668, 1e-05
      %v2701 = vadd.f32 %v2669, 1e-05
      %v2702 = vadd.f32 %v2670, 1e-05
      %v2703 = vadd.f32 %v2671, 1e-05
      %v2704 = vadd.f32 %v2672, 1e-05
      %v2705 = vadd.f32 %v2673, 1e-05
      %v2706 = vadd.f32 %v2674, 1e-05
      %v2707 = vadd.f32 %v2675, 1e-05
      %v2708 = vadd.f32 %v2676, 1e-05
      %v2709 = vadd.f32 %v2677, 1e-05
      %v2710 = vadd.f32 %v2678, 1e-05
      %v2711 = vadd.f32 %v2679, 1e-05
      %v2712 = vadd.f32 %v2680, 1e-05
      %v2713 = vadd.f32 %v2681, 1e-05
      %v2714 = vadd.f32 %v2682, 1e-05
      %v2715 = vadd.f32 %v2683, 1e-05
      %v2716 = vadd.f32 %v2684, 1e-05
      %v2717 = vadd.f32 %v2685, 1e-05
      %v2718 = vadd.f32 %v2686, 1e-05
      %v2719 = vadd.f32 %v2687, 1e-05
      %v2720 = vadd.f32 %v2688, 1e-05
      %v2721 = vadd.f32 %v2689, 1e-05
      %v2722 = vrsqrt.pop %v2690
      %v2723 = vmul.f32 %v2690, %v2722
      %vm2724 = vcmp.eq.f32.partialorder %v2690, inf
      %v2725 = vsel %vm2724, %v2690, %v2723
      %vm2726 = vcmp.eq.f32.partialorder %v2690, 0.0
      %v2727 = vand.u32 %v2690, 2147483648
      %v2728 = vsel %vm2726, %v2727, %v2725
      %v2729 = vrsqrt.pop %v2691
      %v2730 = vmul.f32 %v2691, %v2729
      %vm2731 = vcmp.eq.f32.partialorder %v2691, inf
      %v2732 = vsel %vm2731, %v2691, %v2730
      %vm2733 = vcmp.eq.f32.partialorder %v2691, 0.0
      %v2734 = vand.u32 %v2691, 2147483648
      %v2735 = vsel %vm2733, %v2734, %v2732
      %v2736 = vrsqrt.pop %v2692
      %v2737 = vmul.f32 %v2692, %v2736
      %vm2738 = vcmp.eq.f32.partialorder %v2692, inf
      %v2739 = vsel %vm2738, %v2692, %v2737
      %vm2740 = vcmp.eq.f32.partialorder %v2692, 0.0
      %v2741 = vand.u32 %v2692, 2147483648
      %v2742 = vsel %vm2740, %v2741, %v2739
      %v2743 = vrsqrt.pop %v2693
      %v2744 = vmul.f32 %v2693, %v2743
      %vm2745 = vcmp.eq.f32.partialorder %v2693, inf
      %v2746 = vsel %vm2745, %v2693, %v2744
      %vm2747 = vcmp.eq.f32.partialorder %v2693, 0.0
      %v2748 = vand.u32 %v2693, 2147483648
      %v2749 = vsel %vm2747, %v2748, %v2746
      %v2750 = vrsqrt.pop %v2694
      %v2751 = vmul.f32 %v2694, %v2750
      %vm2752 = vcmp.eq.f32.partialorder %v2694, inf
      %v2753 = vsel %vm2752, %v2694, %v2751
      %vm2754 = vcmp.eq.f32.partialorder %v2694, 0.0
      %v2755 = vand.u32 %v2694, 2147483648
      %v2756 = vsel %vm2754, %v2755, %v2753
      %v2757 = vrsqrt.pop %v2695
      %v2758 = vmul.f32 %v2695, %v2757
      %vm2759 = vcmp.eq.f32.partialorder %v2695, inf
      %v2760 = vsel %vm2759, %v2695, %v2758
      %vm2761 = vcmp.eq.f32.partialorder %v2695, 0.0
      %v2762 = vand.u32 %v2695, 2147483648
      %v2763 = vsel %vm2761, %v2762, %v2760
      %v2764 = vrsqrt.pop %v2696
      %v2765 = vmul.f32 %v2696, %v2764
      %vm2766 = vcmp.eq.f32.partialorder %v2696, inf
      %v2767 = vsel %vm2766, %v2696, %v2765
      %vm2768 = vcmp.eq.f32.partialorder %v2696, 0.0
      %v2769 = vand.u32 %v2696, 2147483648
      %v2770 = vsel %vm2768, %v2769, %v2767
      %v2771 = vrsqrt.pop %v2697
      %v2772 = vmul.f32 %v2697, %v2771
      %vm2773 = vcmp.eq.f32.partialorder %v2697, inf
      %v2774 = vsel %vm2773, %v2697, %v2772
      %vm2775 = vcmp.eq.f32.partialorder %v2697, 0.0
      %v2776 = vand.u32 %v2697, 2147483648
      %v2777 = vsel %vm2775, %v2776, %v2774
      %v2778 = vrsqrt.pop %v2698
      %v2779 = vmul.f32 %v2698, %v2778
      %vm2780 = vcmp.eq.f32.partialorder %v2698, inf
      %v2781 = vsel %vm2780, %v2698, %v2779
      %vm2782 = vcmp.eq.f32.partialorder %v2698, 0.0
      %v2783 = vand.u32 %v2698, 2147483648
      %v2784 = vsel %vm2782, %v2783, %v2781
      %v2785 = vrsqrt.pop %v2699
      %v2786 = vmul.f32 %v2699, %v2785
      %vm2787 = vcmp.eq.f32.partialorder %v2699, inf
      %v2788 = vsel %vm2787, %v2699, %v2786
      %vm2789 = vcmp.eq.f32.partialorder %v2699, 0.0
      %v2790 = vand.u32 %v2699, 2147483648
      %v2791 = vsel %vm2789, %v2790, %v2788
      %v2792 = vrsqrt.pop %v2700
      %v2793 = vmul.f32 %v2700, %v2792
      %vm2794 = vcmp.eq.f32.partialorder %v2700, inf
      %v2795 = vsel %vm2794, %v2700, %v2793
      %vm2796 = vcmp.eq.f32.partialorder %v2700, 0.0
      %v2797 = vand.u32 %v2700, 2147483648
      %v2798 = vsel %vm2796, %v2797, %v2795
      %v2799 = vrsqrt.pop %v2701
      %v2800 = vmul.f32 %v2701, %v2799
      %vm2801 = vcmp.eq.f32.partialorder %v2701, inf
      %v2802 = vsel %vm2801, %v2701, %v2800
      %vm2803 = vcmp.eq.f32.partialorder %v2701, 0.0
      %v2804 = vand.u32 %v2701, 2147483648
      %v2805 = vsel %vm2803, %v2804, %v2802
      %v2806 = vrsqrt.pop %v2702
      %v2807 = vmul.f32 %v2702, %v2806
      %vm2808 = vcmp.eq.f32.partialorder %v2702, inf
      %v2809 = vsel %vm2808, %v2702, %v2807
      %vm2810 = vcmp.eq.f32.partialorder %v2702, 0.0
      %v2811 = vand.u32 %v2702, 2147483648
      %v2812 = vsel %vm2810, %v2811, %v2809
      %v2813 = vrsqrt.pop %v2703
      %v2814 = vmul.f32 %v2703, %v2813
      %vm2815 = vcmp.eq.f32.partialorder %v2703, inf
      %v2816 = vsel %vm2815, %v2703, %v2814
      %vm2817 = vcmp.eq.f32.partialorder %v2703, 0.0
      %v2818 = vand.u32 %v2703, 2147483648
      %v2819 = vsel %vm2817, %v2818, %v2816
      %v2820 = vrsqrt.pop %v2704
      %v2821 = vmul.f32 %v2704, %v2820
      %vm2822 = vcmp.eq.f32.partialorder %v2704, inf
      %v2823 = vsel %vm2822, %v2704, %v2821
      %vm2824 = vcmp.eq.f32.partialorder %v2704, 0.0
      %v2825 = vand.u32 %v2704, 2147483648
      %v2826 = vsel %vm2824, %v2825, %v2823
      %v2827 = vrsqrt.pop %v2705
      %v2828 = vmul.f32 %v2705, %v2827
      %vm2829 = vcmp.eq.f32.partialorder %v2705, inf
      %v2830 = vsel %vm2829, %v2705, %v2828
      %vm2831 = vcmp.eq.f32.partialorder %v2705, 0.0
      %v2832 = vand.u32 %v2705, 2147483648
      %v2833 = vsel %vm2831, %v2832, %v2830
      %v2834 = vrsqrt.pop %v2706
      %v2835 = vmul.f32 %v2706, %v2834
      %vm2836 = vcmp.eq.f32.partialorder %v2706, inf
      %v2837 = vsel %vm2836, %v2706, %v2835
      %vm2838 = vcmp.eq.f32.partialorder %v2706, 0.0
      %v2839 = vand.u32 %v2706, 2147483648
      %v2840 = vsel %vm2838, %v2839, %v2837
      %v2841 = vrsqrt.pop %v2707
      %v2842 = vmul.f32 %v2707, %v2841
      %vm2843 = vcmp.eq.f32.partialorder %v2707, inf
      %v2844 = vsel %vm2843, %v2707, %v2842
      %vm2845 = vcmp.eq.f32.partialorder %v2707, 0.0
      %v2846 = vand.u32 %v2707, 2147483648
      %v2847 = vsel %vm2845, %v2846, %v2844
      %v2848 = vrsqrt.pop %v2708
      %v2849 = vmul.f32 %v2708, %v2848
      %vm2850 = vcmp.eq.f32.partialorder %v2708, inf
      %v2851 = vsel %vm2850, %v2708, %v2849
      %vm2852 = vcmp.eq.f32.partialorder %v2708, 0.0
      %v2853 = vand.u32 %v2708, 2147483648
      %v2854 = vsel %vm2852, %v2853, %v2851
      %v2855 = vrsqrt.pop %v2709
      %v2856 = vmul.f32 %v2709, %v2855
      %vm2857 = vcmp.eq.f32.partialorder %v2709, inf
      %v2858 = vsel %vm2857, %v2709, %v2856
      %vm2859 = vcmp.eq.f32.partialorder %v2709, 0.0
      %v2860 = vand.u32 %v2709, 2147483648
      %v2861 = vsel %vm2859, %v2860, %v2858
      %v2862 = vrsqrt.pop %v2710
      %v2863 = vmul.f32 %v2710, %v2862
      %vm2864 = vcmp.eq.f32.partialorder %v2710, inf
      %v2865 = vsel %vm2864, %v2710, %v2863
      %vm2866 = vcmp.eq.f32.partialorder %v2710, 0.0
      %v2867 = vand.u32 %v2710, 2147483648
      %v2868 = vsel %vm2866, %v2867, %v2865
      %v2869 = vrsqrt.pop %v2711
      %v2870 = vmul.f32 %v2711, %v2869
      %vm2871 = vcmp.eq.f32.partialorder %v2711, inf
      %v2872 = vsel %vm2871, %v2711, %v2870
      %vm2873 = vcmp.eq.f32.partialorder %v2711, 0.0
      %v2874 = vand.u32 %v2711, 2147483648
      %v2875 = vsel %vm2873, %v2874, %v2872
      %v2876 = vrsqrt.pop %v2712
      %v2877 = vmul.f32 %v2712, %v2876
      %vm2878 = vcmp.eq.f32.partialorder %v2712, inf
      %v2879 = vsel %vm2878, %v2712, %v2877
      %vm2880 = vcmp.eq.f32.partialorder %v2712, 0.0
      %v2881 = vand.u32 %v2712, 2147483648
      %v2882 = vsel %vm2880, %v2881, %v2879
      %v2883 = vrsqrt.pop %v2713
      %v2884 = vmul.f32 %v2713, %v2883
      %vm2885 = vcmp.eq.f32.partialorder %v2713, inf
      %v2886 = vsel %vm2885, %v2713, %v2884
      %vm2887 = vcmp.eq.f32.partialorder %v2713, 0.0
      %v2888 = vand.u32 %v2713, 2147483648
      %v2889 = vsel %vm2887, %v2888, %v2886
      %v2890 = vrsqrt.pop %v2714
      %v2891 = vmul.f32 %v2714, %v2890
      %vm2892 = vcmp.eq.f32.partialorder %v2714, inf
      %v2893 = vsel %vm2892, %v2714, %v2891
      %vm2894 = vcmp.eq.f32.partialorder %v2714, 0.0
      %v2895 = vand.u32 %v2714, 2147483648
      %v2896 = vsel %vm2894, %v2895, %v2893
      %v2897 = vrsqrt.pop %v2715
      %v2898 = vmul.f32 %v2715, %v2897
      %vm2899 = vcmp.eq.f32.partialorder %v2715, inf
      %v2900 = vsel %vm2899, %v2715, %v2898
      %vm2901 = vcmp.eq.f32.partialorder %v2715, 0.0
      %v2902 = vand.u32 %v2715, 2147483648
      %v2903 = vsel %vm2901, %v2902, %v2900
      %v2904 = vrsqrt.pop %v2716
      %v2905 = vmul.f32 %v2716, %v2904
      %vm2906 = vcmp.eq.f32.partialorder %v2716, inf
      %v2907 = vsel %vm2906, %v2716, %v2905
      %vm2908 = vcmp.eq.f32.partialorder %v2716, 0.0
      %v2909 = vand.u32 %v2716, 2147483648
      %v2910 = vsel %vm2908, %v2909, %v2907
      %v2911 = vrsqrt.pop %v2717
      %v2912 = vmul.f32 %v2717, %v2911
      %vm2913 = vcmp.eq.f32.partialorder %v2717, inf
      %v2914 = vsel %vm2913, %v2717, %v2912
      %vm2915 = vcmp.eq.f32.partialorder %v2717, 0.0
      %v2916 = vand.u32 %v2717, 2147483648
      %v2917 = vsel %vm2915, %v2916, %v2914
      %v2918 = vrsqrt.pop %v2718
      %v2919 = vmul.f32 %v2718, %v2918
      %vm2920 = vcmp.eq.f32.partialorder %v2718, inf
      %v2921 = vsel %vm2920, %v2718, %v2919
      %vm2922 = vcmp.eq.f32.partialorder %v2718, 0.0
      %v2923 = vand.u32 %v2718, 2147483648
      %v2924 = vsel %vm2922, %v2923, %v2921
      %v2925 = vrsqrt.pop %v2719
      %v2926 = vmul.f32 %v2719, %v2925
      %vm2927 = vcmp.eq.f32.partialorder %v2719, inf
      %v2928 = vsel %vm2927, %v2719, %v2926
      %vm2929 = vcmp.eq.f32.partialorder %v2719, 0.0
      %v2930 = vand.u32 %v2719, 2147483648
      %v2931 = vsel %vm2929, %v2930, %v2928
      %v2932 = vrsqrt.pop %v2720
      %v2933 = vmul.f32 %v2720, %v2932
      %vm2934 = vcmp.eq.f32.partialorder %v2720, inf
      %v2935 = vsel %vm2934, %v2720, %v2933
      %vm2936 = vcmp.eq.f32.partialorder %v2720, 0.0
      %v2937 = vand.u32 %v2720, 2147483648
      %v2938 = vsel %vm2936, %v2937, %v2935
      %v2939 = vrsqrt.pop %v2721
      %v2940 = vmul.f32 %v2721, %v2939
      %vm2941 = vcmp.eq.f32.partialorder %v2721, inf
      %v2942 = vsel %vm2941, %v2721, %v2940
      %vm2943 = vcmp.eq.f32.partialorder %v2721, 0.0
      %v2944 = vand.u32 %v2721, 2147483648
      %v2945 = vsel %vm2943, %v2944, %v2942
      %v2946 = vrcp.pop %v2728
      %v2947 = vmul.f32 %v2498, %v2946
      %v2948 = vrcp.pop %v2735
      %v2949 = vmul.f32 %v2499, %v2948
      %v2950 = vrcp.pop %v2742
      %v2951 = vmul.f32 %v2500, %v2950
      %v2952 = vrcp.pop %v2749
      %v2953 = vmul.f32 %v2501, %v2952
      %v2954 = vrcp.pop %v2756
      %v2955 = vmul.f32 %v2502, %v2954
      %v2956 = vrcp.pop %v2763
      %v2957 = vmul.f32 %v2503, %v2956
      %v2958 = vrcp.pop %v2770
      %v2959 = vmul.f32 %v2504, %v2958
      %v2960 = vrcp.pop %v2777
      %v2961 = vmul.f32 %v2505, %v2960
      %v2962 = vrcp.pop %v2784
      %v2963 = vmul.f32 %v2506, %v2962
      %v2964 = vrcp.pop %v2791
      %v2965 = vmul.f32 %v2507, %v2964
      %v2966 = vrcp.pop %v2798
      %v2967 = vmul.f32 %v2508, %v2966
      %v2968 = vrcp.pop %v2805
      %v2969 = vmul.f32 %v2509, %v2968
      %v2970 = vrcp.pop %v2812
      %v2971 = vmul.f32 %v2510, %v2970
      %v2972 = vrcp.pop %v2819
      %v2973 = vmul.f32 %v2511, %v2972
      %v2974 = vrcp.pop %v2826
      %v2975 = vmul.f32 %v2512, %v2974
      %v2976 = vrcp.pop %v2833
      %v2977 = vmul.f32 %v2513, %v2976
      %v2978 = vrcp.pop %v2840
      %v2979 = vmul.f32 %v2514, %v2978
      %v2980 = vrcp.pop %v2847
      %v2981 = vmul.f32 %v2515, %v2980
      %v2982 = vrcp.pop %v2854
      %v2983 = vmul.f32 %v2516, %v2982
      %v2984 = vrcp.pop %v2861
      %v2985 = vmul.f32 %v2517, %v2984
      %v2986 = vrcp.pop %v2868
      %v2987 = vmul.f32 %v2518, %v2986
      %v2988 = vrcp.pop %v2875
      %v2989 = vmul.f32 %v2519, %v2988
      %v2990 = vrcp.pop %v2882
      %v2991 = vmul.f32 %v2520, %v2990
      %v2992 = vrcp.pop %v2889
      %v2993 = vmul.f32 %v2521, %v2992
      %v2994 = vrcp.pop %v2896
      %v2995 = vmul.f32 %v2522, %v2994
      %v2996 = vrcp.pop %v2903
      %v2997 = vmul.f32 %v2523, %v2996
      %v2998 = vrcp.pop %v2910
      %v2999 = vmul.f32 %v2524, %v2998
      %v3000 = vrcp.pop %v2917
      %v3001 = vmul.f32 %v2525, %v3000
      %v3002 = vrcp.pop %v2924
      %v3003 = vmul.f32 %v2526, %v3002
      %v3004 = vrcp.pop %v2931
      %v3005 = vmul.f32 %v2527, %v3004
      %v3006 = vrcp.pop %v2938
      %v3007 = vmul.f32 %v2528, %v3006
      %v3008 = vrcp.pop %v2945
      %v3009 = vmul.f32 %v2529, %v3008
      %v3010 = vld [vmem:[%s3] sm:$0x1]
      %v3012 = vlaneseq
      %v3013 = vshrl.u32 %v3012, 7
      %v3014 = vsub.s32 0, %v3013
      %v3015 = vrot.slane %v3010, %v3014
      %v3017 = vmul.f32 %v2947, %v3015
      %v3018 = vmul.f32 %v2949, %v3015
      %v3019 = vmul.f32 %v2951, %v3015
      %v3020 = vmul.f32 %v2953, %v3015
      %v3021 = vmul.f32 %v2955, %v3015
      %v3022 = vmul.f32 %v2957, %v3015
      %v3023 = vmul.f32 %v2959, %v3015
      %v3024 = vmul.f32 %v2961, %v3015
      %v3025 = vmul.f32 %v2963, %v3015
      %v3026 = vmul.f32 %v2965, %v3015
      %v3027 = vmul.f32 %v2967, %v3015
      %v3028 = vmul.f32 %v2969, %v3015
      %v3029 = vmul.f32 %v2971, %v3015
      %v3030 = vmul.f32 %v2973, %v3015
      %v3031 = vmul.f32 %v2975, %v3015
      %v3032 = vmul.f32 %v2977, %v3015
      %v3033 = vmul.f32 %v2979, %v3015
      %v3034 = vmul.f32 %v2981, %v3015
      %v3035 = vmul.f32 %v2983, %v3015
      %v3036 = vmul.f32 %v2985, %v3015
      %v3037 = vmul.f32 %v2987, %v3015
      %v3038 = vmul.f32 %v2989, %v3015
      %v3039 = vmul.f32 %v2991, %v3015
      %v3040 = vmul.f32 %v2993, %v3015
      %v3041 = vmul.f32 %v2995, %v3015
      %v3042 = vmul.f32 %v2997, %v3015
      %v3043 = vmul.f32 %v2999, %v3015
      %v3044 = vmul.f32 %v3001, %v3015
      %v3045 = vmul.f32 %v3003, %v3015
      %v3046 = vmul.f32 %v3005, %v3015
      %v3047 = vmul.f32 %v3007, %v3015
      %v3048 = vmul.f32 %v3009, %v3015
      %v3049 = vld [vmem:[%s4] sm:$0x1]
      %v3051 = vlaneseq
      %v3052 = vshrl.u32 %v3051, 7
      %v3053 = vsub.s32 0, %v3052
      %v3054 = vrot.slane %v3049, %v3053
      %v3056 = vadd.f32 %v3017, %v3054
      %v3057 = vadd.f32 %v3018, %v3054
      %v3058 = vadd.f32 %v3019, %v3054
      %v3059 = vadd.f32 %v3020, %v3054
      %v3060 = vadd.f32 %v3021, %v3054
      %v3061 = vadd.f32 %v3022, %v3054
      %v3062 = vadd.f32 %v3023, %v3054
      %v3063 = vadd.f32 %v3024, %v3054
      %v3064 = vadd.f32 %v3025, %v3054
      %v3065 = vadd.f32 %v3026, %v3054
      %v3066 = vadd.f32 %v3027, %v3054
      %v3067 = vadd.f32 %v3028, %v3054
      %v3068 = vadd.f32 %v3029, %v3054
      %v3069 = vadd.f32 %v3030, %v3054
      %v3070 = vadd.f32 %v3031, %v3054
      %v3071 = vadd.f32 %v3032, %v3054
      %v3072 = vadd.f32 %v3033, %v3054
      %v3073 = vadd.f32 %v3034, %v3054
      %v3074 = vadd.f32 %v3035, %v3054
      %v3075 = vadd.f32 %v3036, %v3054
      %v3076 = vadd.f32 %v3037, %v3054
      %v3077 = vadd.f32 %v3038, %v3054
      %v3078 = vadd.f32 %v3039, %v3054
      %v3079 = vadd.f32 %v3040, %v3054
      %v3080 = vadd.f32 %v3041, %v3054
      %v3081 = vadd.f32 %v3042, %v3054
      %v3082 = vadd.f32 %v3043, %v3054
      %v3083 = vadd.f32 %v3044, %v3054
      %v3084 = vadd.f32 %v3045, %v3054
      %v3085 = vadd.f32 %v3046, %v3054
      %v3086 = vadd.f32 %v3047, %v3054
      %v3087 = vadd.f32 %v3048, %v3054
      %v3088 = vld [vmem:[%s5] sm:$0xff]
      %v3089 = vld [vmem:[%s5 + $0x8] sm:$0xff]
      %v3090 = vld [vmem:[%s5 + $0x10] sm:$0xff]
      %v3091 = vld [vmem:[%s5 + $0x18] sm:$0xff]
      %v3093 = vsel %vm1876, %v3056, 0
      %v3096 = vsel %vm1876, %v3057, 0
      %v3099 = vsel %vm1876, %v3058, 0
      %v3102 = vsel %vm1876, %v3059, 0
      %v3105 = vsel %vm1876, %v3060, 0
      %v3108 = vsel %vm1876, %v3061, 0
      %v3111 = vsel %vm1876, %v3062, 0
      %v3114 = vsel %vm1876, %v3063, 0
      %v3117 = vsel %vm1876, %v3064, 0
      %v3120 = vsel %vm1876, %v3065, 0
      %v3123 = vsel %vm1876, %v3066, 0
      %v3126 = vsel %vm1876, %v3067, 0
      %v3129 = vsel %vm1876, %v3068, 0
      %v3132 = vsel %vm1876, %v3069, 0
      %v3135 = vsel %vm1876, %v3070, 0
      %v3138 = vsel %vm1876, %v3071, 0
      %v3141 = vsel %vm1876, %v3072, 0
      %v3144 = vsel %vm1876, %v3073, 0
      %v3147 = vsel %vm1876, %v3074, 0
      %v3150 = vsel %vm1876, %v3075, 0
      %v3153 = vsel %vm1876, %v3076, 0
      %v3156 = vsel %vm1876, %v3077, 0
      %v3159 = vsel %vm1876, %v3078, 0
      %v3162 = vsel %vm1876, %v3079, 0
      %v3165 = vsel %vm1876, %v3080, 0
      %v3168 = vsel %vm1876, %v3081, 0
      %v3171 = vsel %vm1876, %v3082, 0
      %v3174 = vsel %vm1876, %v3083, 0
      %v3177 = vsel %vm1876, %v3084, 0
      %v3180 = vsel %vm1876, %v3085, 0
      %v3183 = vsel %vm1876, %v3086, 0
      %v3186 = vsel %vm1876, %v3087, 0
      %3188 = vmatprep.subr.mxu0 0.0
      %3189 = vmatpush1.msra.mxu0 %v3088
      %3190 = vmatprep.subr.mxu0 0.0
      %3191 = vmatpush1.msra.mxu0 %v3089
      %3192 = vmatprep.subr.mxu0 0.0
      %3193 = vmatpush1.msra.mxu0 %v3090
      %3194 = vmatprep.subr.mxu0 0.0
      %3195 = vmatpush1.msra.mxu0 %v3091
      %3196 = vmatprep.subr.mxu0 0.0
      %3197 = vmatpush1.msra.mxu0 0.0
      %3198 = vmatprep.subr.mxu0 0.0
      %3199 = vmatpush1.msra.mxu0 0.0
      %3200 = vmatprep.subr.mxu0 0.0
      %3201 = vmatpush1.msra.mxu0 0.0
      %3202 = vmatprep.subr.mxu0 0.0
      %3203 = vmatpush1.msra.mxu0 0.0
      %3204 = vmatprep.subr.mxu0 0.0
      %3205 = vmatpush1.msra.mxu0 0.0
      %3206 = vmatprep.subr.mxu0 0.0
      %3207 = vmatpush1.msra.mxu0 0.0
      %3208 = vmatprep.subr.mxu0 0.0
      %3209 = vmatpush1.msra.mxu0 0.0
      %3210 = vmatprep.subr.mxu0 0.0
      %3211 = vmatpush1.msra.mxu0 0.0
      %3212 = vmatprep.subr.mxu0 0.0
      %3213 = vmatpush1.msra.mxu0 0.0
      %3214 = vmatprep.subr.mxu0 0.0
      %3215 = vmatpush1.msra.mxu0 0.0
      %3216 = vmatprep.subr.mxu0 0.0
      %3217 = vmatpush1.msra.mxu0 0.0
      %3218 = vmatprep.subr.mxu0 0.0
      %3219 = vmatpush1.msra.mxu0 0.0
      %3220 = vmatprep.subr.mxu0 0.0
      %3221 = vmatpush1.msra.mxu0 0.0
      %3222 = vmatprep.subr.mxu0 0.0
      %3223 = vmatpush1.msra.mxu0 0.0
      %3224 = vmatprep.subr.mxu0 0.0
      %3225 = vmatpush1.msra.mxu0 0.0
      %3226 = vmatprep.subr.mxu0 0.0
      %3227 = vmatpush1.msra.mxu0 0.0
      %3228 = vmatprep.subr.mxu0 0.0
      %3229 = vmatpush1.msra.mxu0 0.0
      %3230 = vmatprep.subr.mxu0 0.0
      %3231 = vmatpush1.msra.mxu0 0.0
      %3232 = vmatprep.subr.mxu0 0.0
      %3233 = vmatpush1.msra.mxu0 0.0
      %3234 = vmatprep.subr.mxu0 0.0
      %3235 = vmatpush1.msra.mxu0 0.0
      %3236 = vmatprep.subr.mxu0 0.0
      %3237 = vmatpush1.msra.mxu0 0.0
      %3238 = vmatprep.subr.mxu0 0.0
      %3239 = vmatpush1.msra.mxu0 0.0
      %3240 = vmatprep.subr.mxu0 0.0
      %3241 = vmatpush1.msra.mxu0 0.0
      %3242 = vmatprep.subr.mxu0 0.0
      %3243 = vmatpush1.msra.mxu0 0.0
      %3244 = vmatprep.subr.mxu0 0.0
      %3245 = vmatpush1.msra.mxu0 0.0
      %3246 = vmatprep.subr.mxu0 0.0
      %3247 = vmatpush1.msra.mxu0 0.0
      %3248 = vmatprep.subr.mxu0 0.0
      %3249 = vmatpush1.msra.mxu0 0.0
      %3250 = vmatprep.subr.mxu0 0.0
      %3251 = vmatpush1.msra.mxu0 0.0
      %3252 = vmatprep.mubr.f32.mxu0 0.0
      %3253 = vmatmul.mubr.f32.gmra.mrb[0].mxu0 %v3093
      %v3254 = vpop.f32.mrb[0].mxu0
      %v3255 = vadd.f32 0.0, %v3254
      %v3256 = vpop.f32.mrb[0].mxu0
      %3257 = vmatprep.mubr.f32.mxu0 0.0
      %3258 = vmatmul.mubr.f32.gmra.mrb[0].mxu0 %v3096
      %v3259 = vpop.f32.mrb[0].mxu0
      %v3260 = vadd.f32 0.0, %v3259
      %v3261 = vpop.f32.mrb[0].mxu0
      %3262 = vmatprep.mubr.f32.mxu0 0.0
      %3263 = vmatmul.mubr.f32.gmra.mrb[0].mxu0 %v3099
      %v3264 = vpop.f32.mrb[0].mxu0
      %v3265 = vadd.f32 0.0, %v3264
      %v3266 = vpop.f32.mrb[0].mxu0
      %3267 = vmatprep.mubr.f32.mxu0 0.0
      %3268 = vmatmul.mubr.f32.gmra.mrb[0].mxu0 %v3102
      %v3269 = vpop.f32.mrb[0].mxu0
      %v3270 = vadd.f32 0.0, %v3269
      %v3271 = vpop.f32.mrb[0].mxu0
      %3272 = vmatprep.mubr.f32.mxu0 0.0
      %3273 = vmatmul.mubr.f32.gmra.mrb[0].mxu0 %v3105
      %v3274 = vpop.f32.mrb[0].mxu0
      %v3275 = vadd.f32 0.0, %v3274
      %v3276 = vpop.f32.mrb[0].mxu0
      %3277 = vmatprep.mubr.f32.mxu0 0.0
      %3278 = vmatmul.mubr.f32.gmra.mrb[0].mxu0 %v3108
      %v3279 = vpop.f32.mrb[0].mxu0
      %v3280 = vadd.f32 0.0, %v3279
      %v3281 = vpop.f32.mrb[0].mxu0
      %3282 = vmatprep.mubr.f32.mxu0 0.0
      %3283 = vmatmul.mubr.f32.gmra.mrb[0].mxu0 %v3111
      %v3284 = vpop.f32.mrb[0].mxu0
      %v3285 = vadd.f32 0.0, %v3284
      %v3286 = vpop.f32.mrb[0].mxu0
      %3287 = vmatprep.mubr.f32.mxu0 0.0
      %3288 = vmatmul.mubr.f32.gmra.mrb[0].mxu0 %v3114
      %v3289 = vpop.f32.mrb[0].mxu0
      %v3290 = vadd.f32 0.0, %v3289
      %v3291 = vpop.f32.mrb[0].mxu0
      %3292 = vmatprep.mubr.f32.mxu0 0.0
      %3293 = vmatmul.mubr.f32.gmra.mrb[0].mxu0 %v3117
      %v3294 = vpop.f32.mrb[0].mxu0
      %v3295 = vadd.f32 0.0, %v3294
      %v3296 = vpop.f32.mrb[0].mxu0
      %3297 = vmatprep.mubr.f32.mxu0 0.0
      %3298 = vmatmul.mubr.f32.gmra.mrb[0].mxu0 %v3120
      %v3299 = vpop.f32.mrb[0].mxu0
      %v3300 = vadd.f32 0.0, %v3299
      %v3301 = vpop.f32.mrb[0].mxu0
      %3302 = vmatprep.mubr.f32.mxu0 0.0
      %3303 = vmatmul.mubr.f32.gmra.mrb[0].mxu0 %v3123
      %v3304 = vpop.f32.mrb[0].mxu0
      %v3305 = vadd.f32 0.0, %v3304
      %v3306 = vpop.f32.mrb[0].mxu0
      %3307 = vmatprep.mubr.f32.mxu0 0.0
      %3308 = vmatmul.mubr.f32.gmra.mrb[0].mxu0 %v3126
      %v3309 = vpop.f32.mrb[0].mxu0
      %v3310 = vadd.f32 0.0, %v3309
      %v3311 = vpop.f32.mrb[0].mxu0
      %3312 = vmatprep.mubr.f32.mxu0 0.0
      %3313 = vmatmul.mubr.f32.gmra.mrb[0].mxu0 %v3129
      %v3314 = vpop.f32.mrb[0].mxu0
      %v3315 = vadd.f32 0.0, %v3314
      %v3316 = vpop.f32.mrb[0].mxu0
      %3317 = vmatprep.mubr.f32.mxu0 0.0
      %3318 = vmatmul.mubr.f32.gmra.mrb[0].mxu0 %v3132
      %v3319 = vpop.f32.mrb[0].mxu0
      %v3320 = vadd.f32 0.0, %v3319
      %v3321 = vpop.f32.mrb[0].mxu0
      %3322 = vmatprep.mubr.f32.mxu0 0.0
      %3323 = vmatmul.mubr.f32.gmra.mrb[0].mxu0 %v3135
      %v3324 = vpop.f32.mrb[0].mxu0
      %v3325 = vadd.f32 0.0, %v3324
      %v3326 = vpop.f32.mrb[0].mxu0
      %3327 = vmatprep.mubr.f32.mxu0 0.0
      %3328 = vmatmul.mubr.f32.gmra.mrb[0].mxu0 %v3138
      %v3329 = vpop.f32.mrb[0].mxu0
      %v3330 = vadd.f32 0.0, %v3329
      %v3331 = vpop.f32.mrb[0].mxu0
      %3332 = vmatprep.mubr.f32.mxu0 0.0
      %3333 = vmatmul.mubr.f32.gmra.mrb[0].mxu0 %v3141
      %v3334 = vpop.f32.mrb[0].mxu0
      %v3335 = vadd.f32 0.0, %v3334
      %v3336 = vpop.f32.mrb[0].mxu0
      %3337 = vmatprep.mubr.f32.mxu0 0.0
      %3338 = vmatmul.mubr.f32.gmra.mrb[0].mxu0 %v3144
      %v3339 = vpop.f32.mrb[0].mxu0
      %v3340 = vadd.f32 0.0, %v3339
      %v3341 = vpop.f32.mrb[0].mxu0
      %3342 = vmatprep.mubr.f32.mxu0 0.0
      %3343 = vmatmul.mubr.f32.gmra.mrb[0].mxu0 %v3147
      %v3344 = vpop.f32.mrb[0].mxu0
      %v3345 = vadd.f32 0.0, %v3344
      %v3346 = vpop.f32.mrb[0].mxu0
      %3347 = vmatprep.mubr.f32.mxu0 0.0
      %3348 = vmatmul.mubr.f32.gmra.mrb[0].mxu0 %v3150
      %v3349 = vpop.f32.mrb[0].mxu0
      %v3350 = vadd.f32 0.0, %v3349
      %v3351 = vpop.f32.mrb[0].mxu0
      %3352 = vmatprep.mubr.f32.mxu0 0.0
      %3353 = vmatmul.mubr.f32.gmra.mrb[0].mxu0 %v3153
      %v3354 = vpop.f32.mrb[0].mxu0
      %v3355 = vadd.f32 0.0, %v3354
      %v3356 = vpop.f32.mrb[0].mxu0
      %3357 = vmatprep.mubr.f32.mxu0 0.0
      %3358 = vmatmul.mubr.f32.gmra.mrb[0].mxu0 %v3156
      %v3359 = vpop.f32.mrb[0].mxu0
      %v3360 = vadd.f32 0.0, %v3359
      %v3361 = vpop.f32.mrb[0].mxu0
      %3362 = vmatprep.mubr.f32.mxu0 0.0
      %3363 = vmatmul.mubr.f32.gmra.mrb[0].mxu0 %v3159
      %v3364 = vpop.f32.mrb[0].mxu0
      %v3365 = vadd.f32 0.0, %v3364
      %v3366 = vpop.f32.mrb[0].mxu0
      %3367 = vmatprep.mubr.f32.mxu0 0.0
      %3368 = vmatmul.mubr.f32.gmra.mrb[0].mxu0 %v3162
      %v3369 = vpop.f32.mrb[0].mxu0
      %v3370 = vadd.f32 0.0, %v3369
      %v3371 = vpop.f32.mrb[0].mxu0
      %3372 = vmatprep.mubr.f32.mxu0 0.0
      %3373 = vmatmul.mubr.f32.gmra.mrb[0].mxu0 %v3165
      %v3374 = vpop.f32.mrb[0].mxu0
      %v3375 = vadd.f32 0.0, %v3374
      %v3376 = vpop.f32.mrb[0].mxu0
      %3377 = vmatprep.mubr.f32.mxu0 0.0
      %3378 = vmatmul.mubr.f32.gmra.mrb[0].mxu0 %v3168
      %v3379 = vpop.f32.mrb[0].mxu0
      %v3380 = vadd.f32 0.0, %v3379
      %v3381 = vpop.f32.mrb[0].mxu0
      %3382 = vmatprep.mubr.f32.mxu0 0.0
      %3383 = vmatmul.mubr.f32.gmra.mrb[0].mxu0 %v3171
      %v3384 = vpop.f32.mrb[0].mxu0
      %v3385 = vadd.f32 0.0, %v3384
      %v3386 = vpop.f32.mrb[0].mxu0
      %3387 = vmatprep.mubr.f32.mxu0 0.0
      %3388 = vmatmul.mubr.f32.gmra.mrb[0].mxu0 %v3174
      %v3389 = vpop.f32.mrb[0].mxu0
      %v3390 = vadd.f32 0.0, %v3389
      %v3391 = vpop.f32.mrb[0].mxu0
      %3392 = vmatprep.mubr.f32.mxu0 0.0
      %3393 = vmatmul.mubr.f32.gmra.mrb[0].mxu0 %v3177
      %v3394 = vpop.f32.mrb[0].mxu0
      %v3395 = vadd.f32 0.0, %v3394
      %v3396 = vpop.f32.mrb[0].mxu0
      %3397 = vmatprep.mubr.f32.mxu0 0.0
      %3398 = vmatmul.mubr.f32.gmra.mrb[0].mxu0 %v3180
      %v3399 = vpop.f32.mrb[0].mxu0
      %v3400 = vadd.f32 0.0, %v3399
      %v3401 = vpop.f32.mrb[0].mxu0
      %3402 = vmatprep.mubr.f32.mxu0 0.0
      %3403 = vmatmul.mubr.f32.gmra.mrb[0].mxu0 %v3183
      %v3404 = vpop.f32.mrb[0].mxu0
      %v3405 = vadd.f32 0.0, %v3404
      %v3406 = vpop.f32.mrb[0].mxu0
      %3407 = vmatprep.mubr.f32.mxu0 0.0
      %3408 = vmatmul.mubr.f32.gmra.mrb[0].mxu0 %v3186
      %v3409 = vpop.f32.mrb[0].mxu0
      %v3410 = vadd.f32 0.0, %v3409
      %v3411 = vpop.f32.mrb[0].mxu0
      %3412 = vdwg.mxu0
      %3445 = vrot.lane.b32.xlu0 %v3255, 64
      %v3446 = vpop.permute.xlu0 %3445
      %3447 = vrot.lane.b32.xlu0 %v3260, 64
      %v3448 = vpop.permute.xlu0 %3447
      %3449 = vrot.lane.b32.xlu0 %v3265, 64
      %v3450 = vpop.permute.xlu0 %3449
      %3451 = vrot.lane.b32.xlu0 %v3270, 64
      %v3452 = vpop.permute.xlu0 %3451
      %3453 = vrot.lane.b32.xlu0 %v3275, 64
      %v3454 = vpop.permute.xlu0 %3453
      %3455 = vrot.lane.b32.xlu0 %v3280, 64
      %v3456 = vpop.permute.xlu0 %3455
      %3457 = vrot.lane.b32.xlu0 %v3285, 64
      %v3458 = vpop.permute.xlu0 %3457
      %3459 = vrot.lane.b32.xlu0 %v3290, 64
      %v3460 = vpop.permute.xlu0 %3459
      %3461 = vrot.lane.b32.xlu0 %v3295, 64
      %v3462 = vpop.permute.xlu0 %3461
      %3463 = vrot.lane.b32.xlu0 %v3300, 64
      %v3464 = vpop.permute.xlu0 %3463
      %3465 = vrot.lane.b32.xlu0 %v3305, 64
      %v3466 = vpop.permute.xlu0 %3465
      %3467 = vrot.lane.b32.xlu0 %v3310, 64
      %v3468 = vpop.permute.xlu0 %3467
      %3469 = vrot.lane.b32.xlu0 %v3315, 64
      %v3470 = vpop.permute.xlu0 %3469
      %3471 = vrot.lane.b32.xlu0 %v3320, 64
      %v3472 = vpop.permute.xlu0 %3471
      %3473 = vrot.lane.b32.xlu0 %v3325, 64
      %v3474 = vpop.permute.xlu0 %3473
      %3475 = vrot.lane.b32.xlu0 %v3330, 64
      %v3476 = vpop.permute.xlu0 %3475
      %3477 = vrot.lane.b32.xlu0 %v3335, 64
      %v3478 = vpop.permute.xlu0 %3477
      %3479 = vrot.lane.b32.xlu0 %v3340, 64
      %v3480 = vpop.permute.xlu0 %3479
      %3481 = vrot.lane.b32.xlu0 %v3345, 64
      %v3482 = vpop.permute.xlu0 %3481
      %3483 = vrot.lane.b32.xlu0 %v3350, 64
      %v3484 = vpop.permute.xlu0 %3483
      %3485 = vrot.lane.b32.xlu0 %v3355, 64
      %v3486 = vpop.permute.xlu0 %3485
      %3487 = vrot.lane.b32.xlu0 %v3360, 64
      %v3488 = vpop.permute.xlu0 %3487
      %3489 = vrot.lane.b32.xlu0 %v3365, 64
      %v3490 = vpop.permute.xlu0 %3489
      %3491 = vrot.lane.b32.xlu0 %v3370, 64
      %v3492 = vpop.permute.xlu0 %3491
      %3493 = vrot.lane.b32.xlu0 %v3375, 64
      %v3494 = vpop.permute.xlu0 %3493
      %3495 = vrot.lane.b32.xlu0 %v3380, 64
      %v3496 = vpop.permute.xlu0 %3495
      %3497 = vrot.lane.b32.xlu0 %v3385, 64
      %v3498 = vpop.permute.xlu0 %3497
      %3499 = vrot.lane.b32.xlu0 %v3390, 64
      %v3500 = vpop.permute.xlu0 %3499
      %3501 = vrot.lane.b32.xlu0 %v3395, 64
      %v3502 = vpop.permute.xlu0 %3501
      %3503 = vrot.lane.b32.xlu0 %v3400, 64
      %v3504 = vpop.permute.xlu0 %3503
      %3505 = vrot.lane.b32.xlu0 %v3405, 64
      %v3506 = vpop.permute.xlu0 %3505
      %3507 = vrot.lane.b32.xlu0 %v3410, 64
      %v3508 = vpop.permute.xlu0 %3507
      %v3541 = vmul.f32 %v3255, %v3446
      %v3542 = vmul.f32 %v3260, %v3448
      %v3543 = vmul.f32 %v3265, %v3450
      %v3544 = vmul.f32 %v3270, %v3452
      %v3545 = vmul.f32 %v3275, %v3454
      %v3546 = vmul.f32 %v3280, %v3456
      %v3547 = vmul.f32 %v3285, %v3458
      %v3548 = vmul.f32 %v3290, %v3460
      %v3549 = vmul.f32 %v3295, %v3462
      %v3550 = vmul.f32 %v3300, %v3464
      %v3551 = vmul.f32 %v3305, %v3466
      %v3552 = vmul.f32 %v3310, %v3468
      %v3553 = vmul.f32 %v3315, %v3470
      %v3554 = vmul.f32 %v3320, %v3472
      %v3555 = vmul.f32 %v3325, %v3474
      %v3556 = vmul.f32 %v3330, %v3476
      %v3557 = vmul.f32 %v3335, %v3478
      %v3558 = vmul.f32 %v3340, %v3480
      %v3559 = vmul.f32 %v3345, %v3482
      %v3560 = vmul.f32 %v3350, %v3484
      %v3561 = vmul.f32 %v3355, %v3486
      %v3562 = vmul.f32 %v3360, %v3488
      %v3563 = vmul.f32 %v3365, %v3490
      %v3564 = vmul.f32 %v3370, %v3492
      %v3565 = vmul.f32 %v3375, %v3494
      %v3566 = vmul.f32 %v3380, %v3496
      %v3567 = vmul.f32 %v3385, %v3498
      %v3568 = vmul.f32 %v3390, %v3500
      %v3569 = vmul.f32 %v3395, %v3502
      %v3570 = vmul.f32 %v3400, %v3504
      %v3571 = vmul.f32 %v3405, %v3506
      %v3572 = vmul.f32 %v3410, %v3508
      %v3573 = vld [vmem:[%s6] sm:$0xff]
      %v3574 = vld [vmem:[%s6 + $0x8] sm:$0xff]
      %v3575 = vld [vmem:[%s6 + $0x10] sm:$0xff]
      %v3576 = vld [vmem:[%s6 + $0x18] sm:$0xff]
      %v3577 = vld [vmem:[%s6 + $0x20] sm:$0xff]
      %v3578 = vld [vmem:[%s6 + $0x28] sm:$0xff]
      %v3579 = vld [vmem:[%s6 + $0x30] sm:$0xff]
      %v3580 = vld [vmem:[%s6 + $0x38] sm:$0xff]
      %v3582 = vsel %vm2008, %v3541, 0
      %v3585 = vsel %vm2008, %v3542, 0
      %v3588 = vsel %vm2008, %v3543, 0
      %v3591 = vsel %vm2008, %v3544, 0
      %v3594 = vsel %vm2008, %v3545, 0
      %v3597 = vsel %vm2008, %v3546, 0
      %v3600 = vsel %vm2008, %v3547, 0
      %v3603 = vsel %vm2008, %v3548, 0
      %v3606 = vsel %vm2008, %v3549, 0
      %v3609 = vsel %vm2008, %v3550, 0
      %v3612 = vsel %vm2008, %v3551, 0
      %v3615 = vsel %vm2008, %v3552, 0
      %v3618 = vsel %vm2008, %v3553, 0
      %v3621 = vsel %vm2008, %v3554, 0
      %v3624 = vsel %vm2008, %v3555, 0
      %v3627 = vsel %vm2008, %v3556, 0
      %v3630 = vsel %vm2008, %v3557, 0
      %v3633 = vsel %vm2008, %v3558, 0
      %v3636 = vsel %vm2008, %v3559, 0
      %v3639 = vsel %vm2008, %v3560, 0
      %v3642 = vsel %vm2008, %v3561, 0
      %v3645 = vsel %vm2008, %v3562, 0
      %v3648 = vsel %vm2008, %v3563, 0
      %v3651 = vsel %vm2008, %v3564, 0
      %v3654 = vsel %vm2008, %v3565, 0
      %v3657 = vsel %vm2008, %v3566, 0
      %v3660 = vsel %vm2008, %v3567, 0
      %v3663 = vsel %vm2008, %v3568, 0
      %v3666 = vsel %vm2008, %v3569, 0
      %v3669 = vsel %vm2008, %v3570, 0
      %v3672 = vsel %vm2008, %v3571, 0
      %v3675 = vsel %vm2008, %v3572, 0
      %3677 = vmatprep.subr.mxu0 0.0
      %3678 = vmatpush1.msra.mxu0 %v3573
      %3679 = vmatprep.subr.mxu0 0.0
      %3680 = vmatpush1.msra.mxu0 %v3574
      %3681 = vmatprep.subr.mxu0 0.0
      %3682 = vmatpush1.msra.mxu0 %v3575
      %3683 = vmatprep.subr.mxu0 0.0
      %3684 = vmatpush1.msra.mxu0 %v3576
      %3685 = vmatprep.subr.mxu0 0.0
      %3686 = vmatpush1.msra.mxu0 %v3577
      %3687 = vmatprep.subr.mxu0 0.0
      %3688 = vmatpush1.msra.mxu0 %v3578
      %3689 = vmatprep.subr.mxu0 0.0
      %3690 = vmatpush1.msra.mxu0 %v3579
      %3691 = vmatprep.subr.mxu0 0.0
      %3692 = vmatpush1.msra.mxu0 %v3580
      %3693 = vmatprep.subr.mxu0 0.0
      %3694 = vmatpush1.msra.mxu0 0.0
      %3695 = vmatprep.subr.mxu0 0.0
      %3696 = vmatpush1.msra.mxu0 0.0
      %3697 = vmatprep.subr.mxu0 0.0
      %3698 = vmatpush1.msra.mxu0 0.0
      %3699 = vmatprep.subr.mxu0 0.0
      %3700 = vmatpush1.msra.mxu0 0.0
      %3701 = vmatprep.subr.mxu0 0.0
      %3702 = vmatpush1.msra.mxu0 0.0
      %3703 = vmatprep.subr.mxu0 0.0
      %3704 = vmatpush1.msra.mxu0 0.0
      %3705 = vmatprep.subr.mxu0 0.0
      %3706 = vmatpush1.msra.mxu0 0.0
      %3707 = vmatprep.subr.mxu0 0.0
      %3708 = vmatpush1.msra.mxu0 0.0
      %3709 = vmatprep.subr.mxu0 0.0
      %3710 = vmatpush1.msra.mxu0 0.0
      %3711 = vmatprep.subr.mxu0 0.0
      %3712 = vmatpush1.msra.mxu0 0.0
      %3713 = vmatprep.subr.mxu0 0.0
      %3714 = vmatpush1.msra.mxu0 0.0
      %3715 = vmatprep.subr.mxu0 0.0
      %3716 = vmatpush1.msra.mxu0 0.0
      %3717 = vmatprep.subr.mxu0 0.0
      %3718 = vmatpush1.msra.mxu0 0.0
      %3719 = vmatprep.subr.mxu0 0.0
      %3720 = vmatpush1.msra.mxu0 0.0
      %3721 = vmatprep.subr.mxu0 0.0
      %3722 = vmatpush1.msra.mxu0 0.0
      %3723 = vmatprep.subr.mxu0 0.0
      %3724 = vmatpush1.msra.mxu0 0.0
      %3725 = vmatprep.subr.mxu0 0.0
      %3726 = vmatpush1.msra.mxu0 0.0
      %3727 = vmatprep.subr.mxu0 0.0
      %3728 = vmatpush1.msra.mxu0 0.0
      %3729 = vmatprep.subr.mxu0 0.0
      %3730 = vmatpush1.msra.mxu0 0.0
      %3731 = vmatprep.subr.mxu0 0.0
      %3732 = vmatpush1.msra.mxu0 0.0
      %3733 = vmatprep.subr.mxu0 0.0
      %3734 = vmatpush1.msra.mxu0 0.0
      %3735 = vmatprep.subr.mxu0 0.0
      %3736 = vmatpush1.msra.mxu0 0.0
      %3737 = vmatprep.subr.mxu0 0.0
      %3738 = vmatpush1.msra.mxu0 0.0
      %3739 = vmatprep.subr.mxu0 0.0
      %3740 = vmatpush1.msra.mxu0 0.0
      %3741 = vmatprep.mubr.f32.mxu0 0.0
      %3742 = vmatmul.mubr.f32.gmra.mrb[0].mxu0 %v3582
      %v3743 = vpop.f32.mrb[0].mxu0
      %v3744 = vadd.f32 0.0, %v3743
      %v3745 = vpop.f32.mrb[0].mxu0
      %3746 = vmatprep.mubr.f32.mxu0 0.0
      %3747 = vmatmul.mubr.f32.gmra.mrb[0].mxu0 %v3585
      %v3748 = vpop.f32.mrb[0].mxu0
      %v3749 = vadd.f32 0.0, %v3748
      %v3750 = vpop.f32.mrb[0].mxu0
      %3751 = vmatprep.mubr.f32.mxu0 0.0
      %3752 = vmatmul.mubr.f32.gmra.mrb[0].mxu0 %v3588
      %v3753 = vpop.f32.mrb[0].mxu0
      %v3754 = vadd.f32 0.0, %v3753
      %v3755 = vpop.f32.mrb[0].mxu0
      %3756 = vmatprep.mubr.f32.mxu0 0.0
      %3757 = vmatmul.mubr.f32.gmra.mrb[0].mxu0 %v3591
      %v3758 = vpop.f32.mrb[0].mxu0
      %v3759 = vadd.f32 0.0, %v3758
      %v3760 = vpop.f32.mrb[0].mxu0
      %3761 = vmatprep.mubr.f32.mxu0 0.0
      %3762 = vmatmul.mubr.f32.gmra.mrb[0].mxu0 %v3594
      %v3763 = vpop.f32.mrb[0].mxu0
      %v3764 = vadd.f32 0.0, %v3763
      %v3765 = vpop.f32.mrb[0].mxu0
      %3766 = vmatprep.mubr.f32.mxu0 0.0
      %3767 = vmatmul.mubr.f32.gmra.mrb[0].mxu0 %v3597
      %v3768 = vpop.f32.mrb[0].mxu0
      %v3769 = vadd.f32 0.0, %v3768
      %v3770 = vpop.f32.mrb[0].mxu0
      %3771 = vmatprep.mubr.f32.mxu0 0.0
      %3772 = vmatmul.mubr.f32.gmra.mrb[0].mxu0 %v3600
      %v3773 = vpop.f32.mrb[0].mxu0
      %v3774 = vadd.f32 0.0, %v3773
      %v3775 = vpop.f32.mrb[0].mxu0
      %3776 = vmatprep.mubr.f32.mxu0 0.0
      %3777 = vmatmul.mubr.f32.gmra.mrb[0].mxu0 %v3603
      %v3778 = vpop.f32.mrb[0].mxu0
      %v3779 = vadd.f32 0.0, %v3778
      %v3780 = vpop.f32.mrb[0].mxu0
      %3781 = vmatprep.mubr.f32.mxu0 0.0
      %3782 = vmatmul.mubr.f32.gmra.mrb[0].mxu0 %v3606
      %v3783 = vpop.f32.mrb[0].mxu0
      %v3784 = vadd.f32 0.0, %v3783
      %v3785 = vpop.f32.mrb[0].mxu0
      %3786 = vmatprep.mubr.f32.mxu0 0.0
      %3787 = vmatmul.mubr.f32.gmra.mrb[0].mxu0 %v3609
      %v3788 = vpop.f32.mrb[0].mxu0
      %v3789 = vadd.f32 0.0, %v3788
      %v3790 = vpop.f32.mrb[0].mxu0
      %3791 = vmatprep.mubr.f32.mxu0 0.0
      %3792 = vmatmul.mubr.f32.gmra.mrb[0].mxu0 %v3612
      %v3793 = vpop.f32.mrb[0].mxu0
      %v3794 = vadd.f32 0.0, %v3793
      %v3795 = vpop.f32.mrb[0].mxu0
      %3796 = vmatprep.mubr.f32.mxu0 0.0
      %3797 = vmatmul.mubr.f32.gmra.mrb[0].mxu0 %v3615
      %v3798 = vpop.f32.mrb[0].mxu0
      %v3799 = vadd.f32 0.0, %v3798
      %v3800 = vpop.f32.mrb[0].mxu0
      %3801 = vmatprep.mubr.f32.mxu0 0.0
      %3802 = vmatmul.mubr.f32.gmra.mrb[0].mxu0 %v3618
      %v3803 = vpop.f32.mrb[0].mxu0
      %v3804 = vadd.f32 0.0, %v3803
      %v3805 = vpop.f32.mrb[0].mxu0
      %3806 = vmatprep.mubr.f32.mxu0 0.0
      %3807 = vmatmul.mubr.f32.gmra.mrb[0].mxu0 %v3621
      %v3808 = vpop.f32.mrb[0].mxu0
      %v3809 = vadd.f32 0.0, %v3808
      %v3810 = vpop.f32.mrb[0].mxu0
      %3811 = vmatprep.mubr.f32.mxu0 0.0
      %3812 = vmatmul.mubr.f32.gmra.mrb[0].mxu0 %v3624
      %v3813 = vpop.f32.mrb[0].mxu0
      %v3814 = vadd.f32 0.0, %v3813
      %v3815 = vpop.f32.mrb[0].mxu0
      %3816 = vmatprep.mubr.f32.mxu0 0.0
      %3817 = vmatmul.mubr.f32.gmra.mrb[0].mxu0 %v3627
      %v3818 = vpop.f32.mrb[0].mxu0
      %v3819 = vadd.f32 0.0, %v3818
      %v3820 = vpop.f32.mrb[0].mxu0
      %3821 = vmatprep.mubr.f32.mxu0 0.0
      %3822 = vmatmul.mubr.f32.gmra.mrb[0].mxu0 %v3630
      %v3823 = vpop.f32.mrb[0].mxu0
      %v3824 = vadd.f32 0.0, %v3823
      %v3825 = vpop.f32.mrb[0].mxu0
      %3826 = vmatprep.mubr.f32.mxu0 0.0
      %3827 = vmatmul.mubr.f32.gmra.mrb[0].mxu0 %v3633
      %v3828 = vpop.f32.mrb[0].mxu0
      %v3829 = vadd.f32 0.0, %v3828
      %v3830 = vpop.f32.mrb[0].mxu0
      %3831 = vmatprep.mubr.f32.mxu0 0.0
      %3832 = vmatmul.mubr.f32.gmra.mrb[0].mxu0 %v3636
      %v3833 = vpop.f32.mrb[0].mxu0
      %v3834 = vadd.f32 0.0, %v3833
      %v3835 = vpop.f32.mrb[0].mxu0
      %3836 = vmatprep.mubr.f32.mxu0 0.0
      %3837 = vmatmul.mubr.f32.gmra.mrb[0].mxu0 %v3639
      %v3838 = vpop.f32.mrb[0].mxu0
      %v3839 = vadd.f32 0.0, %v3838
      %v3840 = vpop.f32.mrb[0].mxu0
      %3841 = vmatprep.mubr.f32.mxu0 0.0
      %3842 = vmatmul.mubr.f32.gmra.mrb[0].mxu0 %v3642
      %v3843 = vpop.f32.mrb[0].mxu0
      %v3844 = vadd.f32 0.0, %v3843
      %v3845 = vpop.f32.mrb[0].mxu0
      %3846 = vmatprep.mubr.f32.mxu0 0.0
      %3847 = vmatmul.mubr.f32.gmra.mrb[0].mxu0 %v3645
      %v3848 = vpop.f32.mrb[0].mxu0
      %v3849 = vadd.f32 0.0, %v3848
      %v3850 = vpop.f32.mrb[0].mxu0
      %3851 = vmatprep.mubr.f32.mxu0 0.0
      %3852 = vmatmul.mubr.f32.gmra.mrb[0].mxu0 %v3648
      %v3853 = vpop.f32.mrb[0].mxu0
      %v3854 = vadd.f32 0.0, %v3853
      %v3855 = vpop.f32.mrb[0].mxu0
      %3856 = vmatprep.mubr.f32.mxu0 0.0
      %3857 = vmatmul.mubr.f32.gmra.mrb[0].mxu0 %v3651
      %v3858 = vpop.f32.mrb[0].mxu0
      %v3859 = vadd.f32 0.0, %v3858
      %v3860 = vpop.f32.mrb[0].mxu0
      %3861 = vmatprep.mubr.f32.mxu0 0.0
      %3862 = vmatmul.mubr.f32.gmra.mrb[0].mxu0 %v3654
      %v3863 = vpop.f32.mrb[0].mxu0
      %v3864 = vadd.f32 0.0, %v3863
      %v3865 = vpop.f32.mrb[0].mxu0
      %3866 = vmatprep.mubr.f32.mxu0 0.0
      %3867 = vmatmul.mubr.f32.gmra.mrb[0].mxu0 %v3657
      %v3868 = vpop.f32.mrb[0].mxu0
      %v3869 = vadd.f32 0.0, %v3868
      %v3870 = vpop.f32.mrb[0].mxu0
      %3871 = vmatprep.mubr.f32.mxu0 0.0
      %3872 = vmatmul.mubr.f32.gmra.mrb[0].mxu0 %v3660
      %v3873 = vpop.f32.mrb[0].mxu0
      %v3874 = vadd.f32 0.0, %v3873
      %v3875 = vpop.f32.mrb[0].mxu0
      %3876 = vmatprep.mubr.f32.mxu0 0.0
      %3877 = vmatmul.mubr.f32.gmra.mrb[0].mxu0 %v3663
      %v3878 = vpop.f32.mrb[0].mxu0
      %v3879 = vadd.f32 0.0, %v3878
      %v3880 = vpop.f32.mrb[0].mxu0
      %3881 = vmatprep.mubr.f32.mxu0 0.0
      %3882 = vmatmul.mubr.f32.gmra.mrb[0].mxu0 %v3666
      %v3883 = vpop.f32.mrb[0].mxu0
      %v3884 = vadd.f32 0.0, %v3883
      %v3885 = vpop.f32.mrb[0].mxu0
      %3886 = vmatprep.mubr.f32.mxu0 0.0
      %3887 = vmatmul.mubr.f32.gmra.mrb[0].mxu0 %v3669
      %v3888 = vpop.f32.mrb[0].mxu0
      %v3889 = vadd.f32 0.0, %v3888
      %v3890 = vpop.f32.mrb[0].mxu0
      %3891 = vmatprep.mubr.f32.mxu0 0.0
      %3892 = vmatmul.mubr.f32.gmra.mrb[0].mxu0 %v3672
      %v3893 = vpop.f32.mrb[0].mxu0
      %v3894 = vadd.f32 0.0, %v3893
      %v3895 = vpop.f32.mrb[0].mxu0
      %3896 = vmatprep.mubr.f32.mxu0 0.0
      %3897 = vmatmul.mubr.f32.gmra.mrb[0].mxu0 %v3675
      %v3898 = vpop.f32.mrb[0].mxu0
      %v3899 = vadd.f32 0.0, %v3898
      %v3900 = vpop.f32.mrb[0].mxu0
      %3901 = vdwg.mxu0
      %v3902 = vadd.f32 %v2211, %v3744
      %v3903 = vadd.f32 %v2216, %v3749
      %v3904 = vadd.f32 %v2221, %v3754
      %v3905 = vadd.f32 %v2226, %v3759
      %v3906 = vadd.f32 %v2231, %v3764
      %v3907 = vadd.f32 %v2236, %v3769
      %v3908 = vadd.f32 %v2241, %v3774
      %v3909 = vadd.f32 %v2246, %v3779
      %v3910 = vadd.f32 %v2251, %v3784
      %v3911 = vadd.f32 %v2256, %v3789
      %v3912 = vadd.f32 %v2261, %v3794
      %v3913 = vadd.f32 %v2266, %v3799
      %v3914 = vadd.f32 %v2271, %v3804
      %v3915 = vadd.f32 %v2276, %v3809
      %v3916 = vadd.f32 %v2281, %v3814
      %v3917 = vadd.f32 %v2286, %v3819
      %v3918 = vadd.f32 %v2291, %v3824
      %v3919 = vadd.f32 %v2296, %v3829
      %v3920 = vadd.f32 %v2301, %v3834
      %v3921 = vadd.f32 %v2306, %v3839
      %v3922 = vadd.f32 %v2311, %v3844
      %v3923 = vadd.f32 %v2316, %v3849
      %v3924 = vadd.f32 %v2321, %v3854
      %v3925 = vadd.f32 %v2326, %v3859
      %v3926 = vadd.f32 %v2331, %v3864
      %v3927 = vadd.f32 %v2336, %v3869
      %v3928 = vadd.f32 %v2341, %v3874
      %v3929 = vadd.f32 %v2346, %v3879
      %v3930 = vadd.f32 %v2351, %v3884
      %v3931 = vadd.f32 %v2356, %v3889
      %v3932 = vadd.f32 %v2361, %v3894
      %v3933 = vadd.f32 %v2366, %v3899
      %v3934 = vld [vmem:[%s7] sm:$0xff]
      %v3935 = vld [vmem:[%s7 + $0x8] sm:$0xff]
      %v3936 = vld [vmem:[%s7 + $0x10] sm:$0xff]
      %v3937 = vld [vmem:[%s7 + $0x18] sm:$0xff]
      %v3938 = vld [vmem:[%s7 + $0x20] sm:$0xff]
      %v3939 = vld [vmem:[%s7 + $0x28] sm:$0xff]
      %v3940 = vld [vmem:[%s7 + $0x30] sm:$0xff]
      %v3941 = vld [vmem:[%s7 + $0x38] sm:$0xff]
      %v3942 = vld [vmem:[%s7 + $0x40] sm:$0xff]
      %v3943 = vld [vmem:[%s7 + $0x48] sm:$0xff]
      %v3944 = vld [vmem:[%s7 + $0x50] sm:$0xff]
      %v3945 = vld [vmem:[%s7 + $0x58] sm:$0xff]
      %v3946 = vld [vmem:[%s7 + $0x60] sm:$0xff]
      %v3947 = vld [vmem:[%s7 + $0x68] sm:$0xff]
      %v3948 = vld [vmem:[%s7 + $0x70] sm:$0xff]
      %v3949 = vld [vmem:[%s7 + $0x78] sm:$0xff]
      %v3950 = vld [vmem:[%s7 + $0x80] sm:$0xff]
      %v3951 = vld [vmem:[%s7 + $0x88] sm:$0xff]
      %v3952 = vld [vmem:[%s7 + $0x90] sm:$0xff]
      %v3953 = vld [vmem:[%s7 + $0x98] sm:$0xff]
      %v3954 = vld [vmem:[%s7 + $0xa0] sm:$0xff]
      %v3955 = vld [vmem:[%s7 + $0xa8] sm:$0xff]
      %v3956 = vld [vmem:[%s7 + $0xb0] sm:$0xff]
      %v3957 = vld [vmem:[%s7 + $0xb8] sm:$0xff]
      %v3958 = vld [vmem:[%s7 + $0xc0] sm:$0xff]
      %v3959 = vld [vmem:[%s7 + $0xc8] sm:$0xff]
      %v3960 = vld [vmem:[%s7 + $0xd0] sm:$0xff]
      %v3961 = vld [vmem:[%s7 + $0xd8] sm:$0xff]
      %v3962 = vld [vmem:[%s7 + $0xe0] sm:$0xff]
      %v3963 = vld [vmem:[%s7 + $0xe8] sm:$0xff]
      %v3964 = vld [vmem:[%s7 + $0xf0] sm:$0xff]
      %v3965 = vld [vmem:[%s7 + $0xf8] sm:$0xff]
      %v3966 = vld [vmem:[%s7 + $0x100] sm:$0xff]
      %v3967 = vld [vmem:[%s7 + $0x108] sm:$0xff]
      %v3968 = vld [vmem:[%s7 + $0x110] sm:$0xff]
      %v3969 = vld [vmem:[%s7 + $0x118] sm:$0xff]
      %v3970 = vld [vmem:[%s8] sm:$0x1]
      %v3987 = vrot.slane %v3904, 1
      %v3988 = vrot.slane %v3902, 1
      %v3989 = vrot.slane %v3906, 1
      %v3990 = vrot.slane %v3908, 1
      %v3991 = vrot.slane %v3910, 1
      %v3992 = vrot.slane %v3912, 1
      %v3993 = vrot.slane %v3914, 1
      %v3994 = vrot.slane %v3916, 1
      %v3995 = vrot.slane %v3918, 1
      %v3996 = vrot.slane %v3920, 1
      %v3997 = vrot.slane %v3922, 1
      %v3998 = vrot.slane %v3924, 1
      %v3999 = vrot.slane %v3926, 1
      %v4000 = vrot.slane %v3928, 1
      %v4001 = vrot.slane %v3930, 1
      %v4002 = vrot.slane %v3932, 1
      %v4035 = vrot.slane %v3904, 7
      %v4036 = vrot.slane %v3905, 7
      %v4037 = vsel %vm689, %v4035, %v4036
      %v4038 = vrot.slane %v3902, 7
      %v4039 = vrot.slane %v3903, 7
      %v4040 = vsel %vm689, %v4038, %v4039
      %v4041 = vrot.slane %v3906, 7
      %v4042 = vrot.slane %v3907, 7
      %v4043 = vsel %vm689, %v4041, %v4042
      %v4044 = vrot.slane %v3908, 7
      %v4045 = vrot.slane %v3909, 7
      %v4046 = vsel %vm689, %v4044, %v4045
      %v4047 = vrot.slane %v3910, 7
      %v4048 = vrot.slane %v3911, 7
      %v4049 = vsel %vm689, %v4047, %v4048
      %v4050 = vrot.slane %v3912, 7
      %v4051 = vrot.slane %v3913, 7
      %v4052 = vsel %vm689, %v4050, %v4051
      %v4053 = vrot.slane %v3914, 7
      %v4054 = vrot.slane %v3915, 7
      %v4055 = vsel %vm689, %v4053, %v4054
      %v4056 = vrot.slane %v3916, 7
      %v4057 = vrot.slane %v3917, 7
      %v4058 = vsel %vm689, %v4056, %v4057
      %v4059 = vrot.slane %v3918, 7
      %v4060 = vrot.slane %v3919, 7
      %v4061 = vsel %vm689, %v4059, %v4060
      %v4062 = vrot.slane %v3920, 7
      %v4063 = vrot.slane %v3921, 7
      %v4064 = vsel %vm689, %v4062, %v4063
      %v4065 = vrot.slane %v3922, 7
      %v4066 = vrot.slane %v3923, 7
      %v4067 = vsel %vm689, %v4065, %v4066
      %v4068 = vrot.slane %v3924, 7
      %v4069 = vrot.slane %v3925, 7
      %v4070 = vsel %vm689, %v4068, %v4069
      %v4071 = vrot.slane %v3926, 7
      %v4072 = vrot.slane %v3927, 7
      %v4073 = vsel %vm689, %v4071, %v4072
      %v4074 = vrot.slane %v3928, 7
      %v4075 = vrot.slane %v3929, 7
      %v4076 = vsel %vm689, %v4074, %v4075
      %v4077 = vrot.slane %v3930, 7
      %v4078 = vrot.slane %v3931, 7
      %v4079 = vsel %vm689, %v4077, %v4078
      %v4080 = vrot.slane %v3932, 7
      %v4081 = vrot.slane %v3933, 7
      %v4082 = vsel %vm689, %v4080, %v4081
      %v4130 = vrot.slane %v3905, 5
      %v4131 = vrot.slane %v3903, 5
      %v4132 = vrot.slane %v3907, 5
      %v4133 = vrot.slane %v3909, 5
      %v4134 = vrot.slane %v3911, 5
      %v4135 = vrot.slane %v3913, 5
      %v4136 = vrot.slane %v3915, 5
      %v4137 = vrot.slane %v3917, 5
      %v4138 = vrot.slane %v3919, 5
      %v4139 = vrot.slane %v3921, 5
      %v4140 = vrot.slane %v3923, 5
      %v4141 = vrot.slane %v3925, 5
      %v4142 = vrot.slane %v3927, 5
      %v4143 = vrot.slane %v3929, 5
      %v4144 = vrot.slane %v3931, 5
      %v4145 = vrot.slane %v3933, 5
      %v4162 = vsel %vm689, %v3987, %v4035
      %v4163 = vsel %vm689, %v3988, %v4038
      %v4164 = vsel %vm689, %v3989, %v4041
      %v4165 = vsel %vm689, %v3990, %v4044
      %v4166 = vsel %vm689, %v3991, %v4047
      %v4167 = vsel %vm689, %v3992, %v4050
      %v4168 = vsel %vm689, %v3993, %v4053
      %v4169 = vsel %vm689, %v3994, %v4056
      %v4170 = vsel %vm689, %v3995, %v4059
      %v4171 = vsel %vm689, %v3996, %v4062
      %v4172 = vsel %vm689, %v3997, %v4065
      %v4173 = vsel %vm689, %v3998, %v4068
      %v4174 = vsel %vm689, %v3999, %v4071
      %v4175 = vsel %vm689, %v4000, %v4074
      %v4176 = vsel %vm689, %v4001, %v4077
      %v4177 = vsel %vm689, %v4002, %v4080
      %v4178 = vsel %vm689, %v4036, %v4130
      %v4179 = vsel %vm689, %v4039, %v4131
      %v4180 = vsel %vm689, %v4042, %v4132
      %v4181 = vsel %vm689, %v4045, %v4133
      %v4182 = vsel %vm689, %v4048, %v4134
      %v4183 = vsel %vm689, %v4051, %v4135
      %v4184 = vsel %vm689, %v4054, %v4136
      %v4185 = vsel %vm689, %v4057, %v4137
      %v4186 = vsel %vm689, %v4060, %v4138
      %v4187 = vsel %vm689, %v4063, %v4139
      %v4188 = vsel %vm689, %v4066, %v4140
      %v4189 = vsel %vm689, %v4069, %v4141
      %v4190 = vsel %vm689, %v4072, %v4142
      %v4191 = vsel %vm689, %v4075, %v4143
      %v4192 = vsel %vm689, %v4078, %v4144
      %v4193 = vsel %vm689, %v4081, %v4145
      %v4224 = vrot.slane %v4162, 1
      %v4225 = vrot.slane %v4037, 1
      %v4226 = vsel %vm879, %v4224, %v4225
      %v4227 = vrot.slane %v4178, 1
      %v4228 = vsel %vm879, %v4225, %v4227
      %v4229 = vrot.slane %v4163, 1
      %v4230 = vrot.slane %v4040, 1
      %v4231 = vsel %vm879, %v4229, %v4230
      %v4232 = vrot.slane %v4179, 1
      %v4233 = vsel %vm879, %v4230, %v4232
      %v4234 = vrot.slane %v4164, 1
      %v4235 = vrot.slane %v4043, 1
      %v4236 = vsel %vm879, %v4234, %v4235
      %v4237 = vrot.slane %v4180, 1
      %v4238 = vsel %vm879, %v4235, %v4237
      %v4239 = vrot.slane %v4165, 1
      %v4240 = vrot.slane %v4046, 1
      %v4241 = vsel %vm879, %v4239, %v4240
      %v4242 = vrot.slane %v4181, 1
      %v4243 = vsel %vm879, %v4240, %v4242
      %v4244 = vrot.slane %v4166, 1
      %v4245 = vrot.slane %v4049, 1
      %v4246 = vsel %vm879, %v4244, %v4245
      %v4247 = vrot.slane %v4182, 1
      %v4248 = vsel %vm879, %v4245, %v4247
      %v4249 = vrot.slane %v4167, 1
      %v4250 = vrot.slane %v4052, 1
      %v4251 = vsel %vm879, %v4249, %v4250
      %v4252 = vrot.slane %v4183, 1
      %v4253 = vsel %vm879, %v4250, %v4252
      %v4254 = vrot.slane %v4168, 1
      %v4255 = vrot.slane %v4055, 1
      %v4256 = vsel %vm879, %v4254, %v4255
      %v4257 = vrot.slane %v4184, 1
      %v4258 = vsel %vm879, %v4255, %v4257
      %v4259 = vrot.slane %v4169, 1
      %v4260 = vrot.slane %v4058, 1
      %v4261 = vsel %vm879, %v4259, %v4260
      %v4262 = vrot.slane %v4185, 1
      %v4263 = vsel %vm879, %v4260, %v4262
      %v4264 = vrot.slane %v4170, 1
      %v4265 = vrot.slane %v4061, 1
      %v4266 = vsel %vm879, %v4264, %v4265
      %v4267 = vrot.slane %v4186, 1
      %v4268 = vsel %vm879, %v4265, %v4267
      %v4269 = vrot.slane %v4171, 1
      %v4270 = vrot.slane %v4064, 1
      %v4271 = vsel %vm879, %v4269, %v4270
      %v4272 = vrot.slane %v4187, 1
      %v4273 = vsel %vm879, %v4270, %v4272
      %v4274 = vrot.slane %v4172, 1
      %v4275 = vrot.slane %v4067, 1
      %v4276 = vsel %vm879, %v4274, %v4275
      %v4277 = vrot.slane %v4188, 1
      %v4278 = vsel %vm879, %v4275, %v4277
      %v4279 = vrot.slane %v4173, 1
      %v4280 = vrot.slane %v4070, 1
      %v4281 = vsel %vm879, %v4279, %v4280
      %v4282 = vrot.slane %v4189, 1
      %v4283 = vsel %vm879, %v4280, %v4282
      %v4284 = vrot.slane %v4174, 1
      %v4285 = vrot.slane %v4073, 1
      %v4286 = vsel %vm879, %v4284, %v4285
      %v4287 = vrot.slane %v4190, 1
      %v4288 = vsel %vm879, %v4285, %v4287
      %v4289 = vrot.slane %v4175, 1
      %v4290 = vrot.slane %v4076, 1
      %v4291 = vsel %vm879, %v4289, %v4290
      %v4292 = vrot.slane %v4191, 1
      %v4293 = vsel %vm879, %v4290, %v4292
      %v4294 = vrot.slane %v4176, 1
      %v4295 = vrot.slane %v4079, 1
      %v4296 = vsel %vm879, %v4294, %v4295
      %v4297 = vrot.slane %v4192, 1
      %v4298 = vsel %vm879, %v4295, %v4297
      %v4299 = vrot.slane %v4162, 2
      %v4300 = vrot.slane %v4037, 2
      %v4301 = vsel %vm955, %v4299, %v4300
      %v4302 = vrot.slane %v4178, 2
      %v4303 = vsel %vm955, %v4300, %v4302
      %v4304 = vrot.slane %v4163, 2
      %v4305 = vrot.slane %v4040, 2
      %v4306 = vsel %vm955, %v4304, %v4305
      %v4307 = vrot.slane %v4179, 2
      %v4308 = vsel %vm955, %v4305, %v4307
      %v4309 = vrot.slane %v4164, 2
      %v4310 = vrot.slane %v4043, 2
      %v4311 = vsel %vm955, %v4309, %v4310
      %v4312 = vrot.slane %v4180, 2
      %v4313 = vsel %vm955, %v4310, %v4312
      %v4314 = vrot.slane %v4165, 2
      %v4315 = vrot.slane %v4046, 2
      %v4316 = vsel %vm955, %v4314, %v4315
      %v4317 = vrot.slane %v4181, 2
      %v4318 = vsel %vm955, %v4315, %v4317
      %v4319 = vrot.slane %v4166, 2
      %v4320 = vrot.slane %v4049, 2
      %v4321 = vsel %vm955, %v4319, %v4320
      %v4322 = vrot.slane %v4182, 2
      %v4323 = vsel %vm955, %v4320, %v4322
      %v4324 = vrot.slane %v4167, 2
      %v4325 = vrot.slane %v4052, 2
      %v4326 = vsel %vm955, %v4324, %v4325
      %v4327 = vrot.slane %v4183, 2
      %v4328 = vsel %vm955, %v4325, %v4327
      %v4329 = vrot.slane %v4168, 2
      %v4330 = vrot.slane %v4055, 2
      %v4331 = vsel %vm955, %v4329, %v4330
      %v4332 = vrot.slane %v4184, 2
      %v4333 = vsel %vm955, %v4330, %v4332
      %v4334 = vrot.slane %v4169, 2
      %v4335 = vrot.slane %v4058, 2
      %v4336 = vsel %vm955, %v4334, %v4335
      %v4337 = vrot.slane %v4185, 2
      %v4338 = vsel %vm955, %v4335, %v4337
      %v4339 = vrot.slane %v4170, 2
      %v4340 = vrot.slane %v4061, 2
      %v4341 = vsel %vm955, %v4339, %v4340
      %v4342 = vrot.slane %v4186, 2
      %v4343 = vsel %vm955, %v4340, %v4342
      %v4344 = vrot.slane %v4171, 2
      %v4345 = vrot.slane %v4064, 2
      %v4346 = vsel %vm955, %v4344, %v4345
      %v4347 = vrot.slane %v4187, 2
      %v4348 = vsel %vm955, %v4345, %v4347
      %v4349 = vrot.slane %v4172, 2
      %v4350 = vrot.slane %v4067, 2
      %v4351 = vsel %vm955, %v4349, %v4350
      %v4352 = vrot.slane %v4188, 2
      %v4353 = vsel %vm955, %v4350, %v4352
      %v4354 = vrot.slane %v4173, 2
      %v4355 = vrot.slane %v4070, 2
      %v4356 = vsel %vm955, %v4354, %v4355
      %v4357 = vrot.slane %v4189, 2
      %v4358 = vsel %vm955, %v4355, %v4357
      %v4359 = vrot.slane %v4174, 2
      %v4360 = vrot.slane %v4073, 2
      %v4361 = vsel %vm955, %v4359, %v4360
      %v4362 = vrot.slane %v4190, 2
      %v4363 = vsel %vm955, %v4360, %v4362
      %v4364 = vrot.slane %v4175, 2
      %v4365 = vrot.slane %v4076, 2
      %v4366 = vsel %vm955, %v4364, %v4365
      %v4367 = vrot.slane %v4191, 2
      %v4368 = vsel %vm955, %v4365, %v4367
      %v4369 = vrot.slane %v4176, 2
      %v4370 = vrot.slane %v4079, 2
      %v4371 = vsel %vm955, %v4369, %v4370
      %v4372 = vrot.slane %v4192, 2
      %v4373 = vsel %vm955, %v4370, %v4372
      %v4376 = vrot.slane %v4177, 1
      %v4377 = vrot.slane %v4082, 1
      %v4378 = vsel %vm879, %v4376, %v4377
      %v4379 = vrot.slane %v4193, 1
      %v4380 = vsel %vm879, %v4377, %v4379
      %v4413 = vrot.slane %v4177, 2
      %v4414 = vrot.slane %v4082, 2
      %v4415 = vsel %vm955, %v4413, %v4414
      %v4416 = vrot.slane %v4193, 2
      %v4417 = vsel %vm955, %v4414, %v4416
      %4418 = vrot.lane.b32.xlu0 %v4226, 32
      %v4419 = vpop.permute.xlu0 %4418
      %4420 = vrot.lane.b32.xlu0 %v4228, 32
      %v4421 = vpop.permute.xlu0 %4420
      %4422 = vrot.lane.b32.xlu0 %v4231, 32
      %v4423 = vpop.permute.xlu0 %4422
      %4424 = vrot.lane.b32.xlu0 %v4233, 32
      %v4425 = vpop.permute.xlu0 %4424
      %4426 = vrot.lane.b32.xlu0 %v4236, 32
      %v4427 = vpop.permute.xlu0 %4426
      %4428 = vrot.lane.b32.xlu0 %v4238, 32
      %v4429 = vpop.permute.xlu0 %4428
      %4430 = vrot.lane.b32.xlu0 %v4241, 32
      %v4431 = vpop.permute.xlu0 %4430
      %4432 = vrot.lane.b32.xlu0 %v4243, 32
      %v4433 = vpop.permute.xlu0 %4432
      %4434 = vrot.lane.b32.xlu0 %v4246, 32
      %v4435 = vpop.permute.xlu0 %4434
      %4436 = vrot.lane.b32.xlu0 %v4248, 32
      %v4437 = vpop.permute.xlu0 %4436
      %4438 = vrot.lane.b32.xlu0 %v4251, 32
      %v4439 = vpop.permute.xlu0 %4438
      %4440 = vrot.lane.b32.xlu0 %v4253, 32
      %v4441 = vpop.permute.xlu0 %4440
      %4442 = vrot.lane.b32.xlu0 %v4256, 32
      %v4443 = vpop.permute.xlu0 %4442
      %4444 = vrot.lane.b32.xlu0 %v4258, 32
      %v4445 = vpop.permute.xlu0 %4444
      %4446 = vrot.lane.b32.xlu0 %v4261, 32
      %v4447 = vpop.permute.xlu0 %4446
      %4448 = vrot.lane.b32.xlu0 %v4263, 32
      %v4449 = vpop.permute.xlu0 %4448
      %4450 = vrot.lane.b32.xlu0 %v4266, 32
      %v4451 = vpop.permute.xlu0 %4450
      %4452 = vrot.lane.b32.xlu0 %v4268, 32
      %v4453 = vpop.permute.xlu0 %4452
      %4454 = vrot.lane.b32.xlu0 %v4271, 32
      %v4455 = vpop.permute.xlu0 %4454
      %4456 = vrot.lane.b32.xlu0 %v4273, 32
      %v4457 = vpop.permute.xlu0 %4456
      %4458 = vrot.lane.b32.xlu0 %v4276, 32
      %v4459 = vpop.permute.xlu0 %4458
      %4460 = vrot.lane.b32.xlu0 %v4278, 32
      %v4461 = vpop.permute.xlu0 %4460
      %4462 = vrot.lane.b32.xlu0 %v4281, 32
      %v4463 = vpop.permute.xlu0 %4462
      %4464 = vrot.lane.b32.xlu0 %v4283, 32
      %v4465 = vpop.permute.xlu0 %4464
      %4466 = vrot.lane.b32.xlu0 %v4286, 32
      %v4467 = vpop.permute.xlu0 %4466
      %4468 = vrot.lane.b32.xlu0 %v4288, 32
      %v4469 = vpop.permute.xlu0 %4468
      %4470 = vrot.lane.b32.xlu0 %v4291, 32
      %v4471 = vpop.permute.xlu0 %4470
      %4472 = vrot.lane.b32.xlu0 %v4293, 32
      %v4473 = vpop.permute.xlu0 %4472
      %4474 = vrot.lane.b32.xlu0 %v4296, 32
      %v4475 = vpop.permute.xlu0 %4474
      %4476 = vrot.lane.b32.xlu0 %v4298, 32
      %v4477 = vpop.permute.xlu0 %4476
      %4508 = vrot.lane.b32.xlu0 %v4301, 64
      %v4509 = vpop.permute.xlu0 %4508
      %4510 = vrot.lane.b32.xlu0 %v4303, 64
      %v4511 = vpop.permute.xlu0 %4510
      %4512 = vrot.lane.b32.xlu0 %v4306, 64
      %v4513 = vpop.permute.xlu0 %4512
      %4514 = vrot.lane.b32.xlu0 %v4308, 64
      %v4515 = vpop.permute.xlu0 %4514
      %4516 = vrot.lane.b32.xlu0 %v4311, 64
      %v4517 = vpop.permute.xlu0 %4516
      %4518 = vrot.lane.b32.xlu0 %v4313, 64
      %v4519 = vpop.permute.xlu0 %4518
      %4520 = vrot.lane.b32.xlu0 %v4316, 64
      %v4521 = vpop.permute.xlu0 %4520
      %4522 = vrot.lane.b32.xlu0 %v4318, 64
      %v4523 = vpop.permute.xlu0 %4522
      %4524 = vrot.lane.b32.xlu0 %v4321, 64
      %v4525 = vpop.permute.xlu0 %4524
      %4526 = vrot.lane.b32.xlu0 %v4323, 64
      %v4527 = vpop.permute.xlu0 %4526
      %4528 = vrot.lane.b32.xlu0 %v4326, 64
      %v4529 = vpop.permute.xlu0 %4528
      %4530 = vrot.lane.b32.xlu0 %v4328, 64
      %v4531 = vpop.permute.xlu0 %4530
      %4532 = vrot.lane.b32.xlu0 %v4331, 64
      %v4533 = vpop.permute.xlu0 %4532
      %4534 = vrot.lane.b32.xlu0 %v4333, 64
      %v4535 = vpop.permute.xlu0 %4534
      %4536 = vrot.lane.b32.xlu0 %v4336, 64
      %v4537 = vpop.permute.xlu0 %4536
      %4538 = vrot.lane.b32.xlu0 %v4338, 64
      %v4539 = vpop.permute.xlu0 %4538
      %4540 = vrot.lane.b32.xlu0 %v4341, 64
      %v4541 = vpop.permute.xlu0 %4540
      %4542 = vrot.lane.b32.xlu0 %v4343, 64
      %v4543 = vpop.permute.xlu0 %4542
      %4544 = vrot.lane.b32.xlu0 %v4346, 64
      %v4545 = vpop.permute.xlu0 %4544
      %4546 = vrot.lane.b32.xlu0 %v4348, 64
      %v4547 = vpop.permute.xlu0 %4546
      %4548 = vrot.lane.b32.xlu0 %v4351, 64
      %v4549 = vpop.permute.xlu0 %4548
      %4550 = vrot.lane.b32.xlu0 %v4353, 64
      %v4551 = vpop.permute.xlu0 %4550
      %4552 = vrot.lane.b32.xlu0 %v4356, 64
      %v4553 = vpop.permute.xlu0 %4552
      %4554 = vrot.lane.b32.xlu0 %v4358, 64
      %v4555 = vpop.permute.xlu0 %4554
      %4556 = vrot.lane.b32.xlu0 %v4361, 64
      %v4557 = vpop.permute.xlu0 %4556
      %4558 = vrot.lane.b32.xlu0 %v4363, 64
      %v4559 = vpop.permute.xlu0 %4558
      %4560 = vrot.lane.b32.xlu0 %v4366, 64
      %v4561 = vpop.permute.xlu0 %4560
      %4562 = vrot.lane.b32.xlu0 %v4368, 64
      %v4563 = vpop.permute.xlu0 %4562
      %4564 = vrot.lane.b32.xlu0 %v4371, 64
      %v4565 = vpop.permute.xlu0 %4564
      %4566 = vrot.lane.b32.xlu0 %v4373, 64
      %v4567 = vpop.permute.xlu0 %4566
      %4598 = vrot.lane.b32.xlu0 %v4163, 96
      %v4599 = vpop.permute.xlu0 %4598
      %4600 = vrot.lane.b32.xlu0 %v4040, 96
      %v4601 = vpop.permute.xlu0 %4600
      %4602 = vrot.lane.b32.xlu0 %v4162, 96
      %v4603 = vpop.permute.xlu0 %4602
      %4604 = vrot.lane.b32.xlu0 %v4037, 96
      %v4605 = vpop.permute.xlu0 %4604
      %4606 = vrot.lane.b32.xlu0 %v4164, 96
      %v4607 = vpop.permute.xlu0 %4606
      %4608 = vrot.lane.b32.xlu0 %v4043, 96
      %v4609 = vpop.permute.xlu0 %4608
      %4610 = vrot.lane.b32.xlu0 %v4165, 96
      %v4611 = vpop.permute.xlu0 %4610
      %4612 = vrot.lane.b32.xlu0 %v4046, 96
      %v4613 = vpop.permute.xlu0 %4612
      %4614 = vrot.lane.b32.xlu0 %v4166, 96
      %v4615 = vpop.permute.xlu0 %4614
      %4616 = vrot.lane.b32.xlu0 %v4049, 96
      %v4617 = vpop.permute.xlu0 %4616
      %4618 = vrot.lane.b32.xlu0 %v4167, 96
      %v4619 = vpop.permute.xlu0 %4618
      %4620 = vrot.lane.b32.xlu0 %v4052, 96
      %v4621 = vpop.permute.xlu0 %4620
      %4622 = vrot.lane.b32.xlu0 %v4168, 96
      %v4623 = vpop.permute.xlu0 %4622
      %4624 = vrot.lane.b32.xlu0 %v4055, 96
      %v4625 = vpop.permute.xlu0 %4624
      %4626 = vrot.lane.b32.xlu0 %v4169, 96
      %v4627 = vpop.permute.xlu0 %4626
      %4628 = vrot.lane.b32.xlu0 %v4058, 96
      %v4629 = vpop.permute.xlu0 %4628
      %4630 = vrot.lane.b32.xlu0 %v4170, 96
      %v4631 = vpop.permute.xlu0 %4630
      %4632 = vrot.lane.b32.xlu0 %v4061, 96
      %v4633 = vpop.permute.xlu0 %4632
      %4634 = vrot.lane.b32.xlu0 %v4171, 96
      %v4635 = vpop.permute.xlu0 %4634
      %4636 = vrot.lane.b32.xlu0 %v4064, 96
      %v4637 = vpop.permute.xlu0 %4636
      %4638 = vrot.lane.b32.xlu0 %v4172, 96
      %v4639 = vpop.permute.xlu0 %4638
      %4640 = vrot.lane.b32.xlu0 %v4067, 96
      %v4641 = vpop.permute.xlu0 %4640
      %4642 = vrot.lane.b32.xlu0 %v4173, 96
      %v4643 = vpop.permute.xlu0 %4642
      %4644 = vrot.lane.b32.xlu0 %v4070, 96
      %v4645 = vpop.permute.xlu0 %4644
      %4646 = vrot.lane.b32.xlu0 %v4174, 96
      %v4647 = vpop.permute.xlu0 %4646
      %4648 = vrot.lane.b32.xlu0 %v4073, 96
      %v4649 = vpop.permute.xlu0 %4648
      %4650 = vrot.lane.b32.xlu0 %v4175, 96
      %v4651 = vpop.permute.xlu0 %4650
      %4652 = vrot.lane.b32.xlu0 %v4076, 96
      %v4653 = vpop.permute.xlu0 %4652
      %4654 = vrot.lane.b32.xlu0 %v4176, 96
      %v4655 = vpop.permute.xlu0 %4654
      %4656 = vrot.lane.b32.xlu0 %v4079, 96
      %v4657 = vpop.permute.xlu0 %4656
      %4658 = vrot.lane.b32.xlu0 %v4177, 96
      %v4659 = vpop.permute.xlu0 %4658
      %4660 = vrot.lane.b32.xlu0 %v4082, 96
      %v4661 = vpop.permute.xlu0 %4660
      %4694 = vrot.lane.b32.xlu0 %v4306, 32
      %v4695 = vpop.permute.xlu0 %4694
      %4696 = vrot.lane.b32.xlu0 %v4308, 32
      %v4697 = vpop.permute.xlu0 %4696
      %4698 = vrot.lane.b32.xlu0 %v4301, 32
      %v4699 = vpop.permute.xlu0 %4698
      %4700 = vrot.lane.b32.xlu0 %v4303, 32
      %v4701 = vpop.permute.xlu0 %4700
      %4702 = vrot.lane.b32.xlu0 %v4311, 32
      %v4703 = vpop.permute.xlu0 %4702
      %4704 = vrot.lane.b32.xlu0 %v4313, 32
      %v4705 = vpop.permute.xlu0 %4704
      %4706 = vrot.lane.b32.xlu0 %v4316, 32
      %v4707 = vpop.permute.xlu0 %4706
      %4708 = vrot.lane.b32.xlu0 %v4318, 32
      %v4709 = vpop.permute.xlu0 %4708
      %4710 = vrot.lane.b32.xlu0 %v4321, 32
      %v4711 = vpop.permute.xlu0 %4710
      %4712 = vrot.lane.b32.xlu0 %v4323, 32
      %v4713 = vpop.permute.xlu0 %4712
      %4714 = vrot.lane.b32.xlu0 %v4326, 32
      %v4715 = vpop.permute.xlu0 %4714
      %4716 = vrot.lane.b32.xlu0 %v4328, 32
      %v4717 = vpop.permute.xlu0 %4716
      %4718 = vrot.lane.b32.xlu0 %v4331, 32
      %v4719 = vpop.permute.xlu0 %4718
      %4720 = vrot.lane.b32.xlu0 %v4333, 32
      %v4721 = vpop.permute.xlu0 %4720
      %4722 = vrot.lane.b32.xlu0 %v4336, 32
      %v4723 = vpop.permute.xlu0 %4722
      %4724 = vrot.lane.b32.xlu0 %v4338, 32
      %v4725 = vpop.permute.xlu0 %4724
      %4726 = vrot.lane.b32.xlu0 %v4341, 32
      %v4727 = vpop.permute.xlu0 %4726
      %4728 = vrot.lane.b32.xlu0 %v4343, 32
      %v4729 = vpop.permute.xlu0 %4728
      %4730 = vrot.lane.b32.xlu0 %v4346, 32
      %v4731 = vpop.permute.xlu0 %4730
      %4732 = vrot.lane.b32.xlu0 %v4348, 32
      %v4733 = vpop.permute.xlu0 %4732
      %4734 = vrot.lane.b32.xlu0 %v4351, 32
      %v4735 = vpop.permute.xlu0 %4734
      %4736 = vrot.lane.b32.xlu0 %v4353, 32
      %v4737 = vpop.permute.xlu0 %4736
      %4738 = vrot.lane.b32.xlu0 %v4356, 32
      %v4739 = vpop.permute.xlu0 %4738
      %4740 = vrot.lane.b32.xlu0 %v4358, 32
      %v4741 = vpop.permute.xlu0 %4740
      %4742 = vrot.lane.b32.xlu0 %v4361, 32
      %v4743 = vpop.permute.xlu0 %4742
      %4744 = vrot.lane.b32.xlu0 %v4363, 32
      %v4745 = vpop.permute.xlu0 %4744
      %4746 = vrot.lane.b32.xlu0 %v4366, 32
      %v4747 = vpop.permute.xlu0 %4746
      %4748 = vrot.lane.b32.xlu0 %v4368, 32
      %v4749 = vpop.permute.xlu0 %4748
      %4750 = vrot.lane.b32.xlu0 %v4371, 32
      %v4751 = vpop.permute.xlu0 %4750
      %4752 = vrot.lane.b32.xlu0 %v4373, 32
      %v4753 = vpop.permute.xlu0 %4752
      %4754 = vrot.lane.b32.xlu0 %v4415, 32
      %v4755 = vpop.permute.xlu0 %4754
      %4756 = vrot.lane.b32.xlu0 %v4417, 32
      %v4757 = vpop.permute.xlu0 %4756
      %4790 = vrot.lane.b32.xlu0 %v4162, 64
      %v4791 = vpop.permute.xlu0 %4790
      %4792 = vrot.lane.b32.xlu0 %v4037, 64
      %v4793 = vpop.permute.xlu0 %4792
      %4794 = vrot.lane.b32.xlu0 %v4164, 64
      %v4795 = vpop.permute.xlu0 %4794
      %4796 = vrot.lane.b32.xlu0 %v4043, 64
      %v4797 = vpop.permute.xlu0 %4796
      %4798 = vrot.lane.b32.xlu0 %v4165, 64
      %v4799 = vpop.permute.xlu0 %4798
      %4800 = vrot.lane.b32.xlu0 %v4046, 64
      %v4801 = vpop.permute.xlu0 %4800
      %4802 = vrot.lane.b32.xlu0 %v4166, 64
      %v4803 = vpop.permute.xlu0 %4802
      %4804 = vrot.lane.b32.xlu0 %v4049, 64
      %v4805 = vpop.permute.xlu0 %4804
      %4806 = vrot.lane.b32.xlu0 %v4167, 64
      %v4807 = vpop.permute.xlu0 %4806
      %4808 = vrot.lane.b32.xlu0 %v4052, 64
      %v4809 = vpop.permute.xlu0 %4808
      %4810 = vrot.lane.b32.xlu0 %v4168, 64
      %v4811 = vpop.permute.xlu0 %4810
      %4812 = vrot.lane.b32.xlu0 %v4055, 64
      %v4813 = vpop.permute.xlu0 %4812
      %4814 = vrot.lane.b32.xlu0 %v4169, 64
      %v4815 = vpop.permute.xlu0 %4814
      %4816 = vrot.lane.b32.xlu0 %v4058, 64
      %v4817 = vpop.permute.xlu0 %4816
      %4818 = vrot.lane.b32.xlu0 %v4170, 64
      %v4819 = vpop.permute.xlu0 %4818
      %4820 = vrot.lane.b32.xlu0 %v4061, 64
      %v4821 = vpop.permute.xlu0 %4820
      %4822 = vrot.lane.b32.xlu0 %v4171, 64
      %v4823 = vpop.permute.xlu0 %4822
      %4824 = vrot.lane.b32.xlu0 %v4064, 64
      %v4825 = vpop.permute.xlu0 %4824
      %4826 = vrot.lane.b32.xlu0 %v4172, 64
      %v4827 = vpop.permute.xlu0 %4826
      %4828 = vrot.lane.b32.xlu0 %v4067, 64
      %v4829 = vpop.permute.xlu0 %4828
      %4830 = vrot.lane.b32.xlu0 %v4173, 64
      %v4831 = vpop.permute.xlu0 %4830
      %4832 = vrot.lane.b32.xlu0 %v4070, 64
      %v4833 = vpop.permute.xlu0 %4832
      %4834 = vrot.lane.b32.xlu0 %v4174, 64
      %v4835 = vpop.permute.xlu0 %4834
      %4836 = vrot.lane.b32.xlu0 %v4073, 64
      %v4837 = vpop.permute.xlu0 %4836
      %4838 = vrot.lane.b32.xlu0 %v4175, 64
      %v4839 = vpop.permute.xlu0 %4838
      %4840 = vrot.lane.b32.xlu0 %v4076, 64
      %v4841 = vpop.permute.xlu0 %4840
      %4842 = vrot.lane.b32.xlu0 %v4176, 64
      %v4843 = vpop.permute.xlu0 %4842
      %4844 = vrot.lane.b32.xlu0 %v4079, 64
      %v4845 = vpop.permute.xlu0 %4844
      %4846 = vrot.lane.b32.xlu0 %v4177, 64
      %v4847 = vpop.permute.xlu0 %4846
      %4848 = vrot.lane.b32.xlu0 %v4082, 64
      %v4849 = vpop.permute.xlu0 %4848
      %4880 = vrot.lane.b32.xlu0 %v4226, 96
      %v4881 = vpop.permute.xlu0 %4880
      %4882 = vrot.lane.b32.xlu0 %v4228, 96
      %v4883 = vpop.permute.xlu0 %4882
      %4884 = vrot.lane.b32.xlu0 %v4236, 96
      %v4885 = vpop.permute.xlu0 %4884
      %4886 = vrot.lane.b32.xlu0 %v4238, 96
      %v4887 = vpop.permute.xlu0 %4886
      %4888 = vrot.lane.b32.xlu0 %v4241, 96
      %v4889 = vpop.permute.xlu0 %4888
      %4890 = vrot.lane.b32.xlu0 %v4243, 96
      %v4891 = vpop.permute.xlu0 %4890
      %4892 = vrot.lane.b32.xlu0 %v4246, 96
      %v4893 = vpop.permute.xlu0 %4892
      %4894 = vrot.lane.b32.xlu0 %v4248, 96
      %v4895 = vpop.permute.xlu0 %4894
      %4896 = vrot.lane.b32.xlu0 %v4251, 96
      %v4897 = vpop.permute.xlu0 %4896
      %4898 = vrot.lane.b32.xlu0 %v4253, 96
      %v4899 = vpop.permute.xlu0 %4898
      %4900 = vrot.lane.b32.xlu0 %v4256, 96
      %v4901 = vpop.permute.xlu0 %4900
      %4902 = vrot.lane.b32.xlu0 %v4258, 96
      %v4903 = vpop.permute.xlu0 %4902
      %4904 = vrot.lane.b32.xlu0 %v4261, 96
      %v4905 = vpop.permute.xlu0 %4904
      %4906 = vrot.lane.b32.xlu0 %v4263, 96
      %v4907 = vpop.permute.xlu0 %4906
      %4908 = vrot.lane.b32.xlu0 %v4266, 96
      %v4909 = vpop.permute.xlu0 %4908
      %4910 = vrot.lane.b32.xlu0 %v4268, 96
      %v4911 = vpop.permute.xlu0 %4910
      %4912 = vrot.lane.b32.xlu0 %v4271, 96
      %v4913 = vpop.permute.xlu0 %4912
      %4914 = vrot.lane.b32.xlu0 %v4273, 96
      %v4915 = vpop.permute.xlu0 %4914
      %4916 = vrot.lane.b32.xlu0 %v4276, 96
      %v4917 = vpop.permute.xlu0 %4916
      %4918 = vrot.lane.b32.xlu0 %v4278, 96
      %v4919 = vpop.permute.xlu0 %4918
      %4920 = vrot.lane.b32.xlu0 %v4281, 96
      %v4921 = vpop.permute.xlu0 %4920
      %4922 = vrot.lane.b32.xlu0 %v4283, 96
      %v4923 = vpop.permute.xlu0 %4922
      %4924 = vrot.lane.b32.xlu0 %v4286, 96
      %v4925 = vpop.permute.xlu0 %4924
      %4926 = vrot.lane.b32.xlu0 %v4288, 96
      %v4927 = vpop.permute.xlu0 %4926
      %4928 = vrot.lane.b32.xlu0 %v4291, 96
      %v4929 = vpop.permute.xlu0 %4928
      %4930 = vrot.lane.b32.xlu0 %v4293, 96
      %v4931 = vpop.permute.xlu0 %4930
      %4932 = vrot.lane.b32.xlu0 %v4296, 96
      %v4933 = vpop.permute.xlu0 %4932
      %4934 = vrot.lane.b32.xlu0 %v4298, 96
      %v4935 = vpop.permute.xlu0 %4934
      %4936 = vrot.lane.b32.xlu0 %v4378, 96
      %v4937 = vpop.permute.xlu0 %4936
      %4938 = vrot.lane.b32.xlu0 %v4380, 96
      %v4939 = vpop.permute.xlu0 %4938
      %v4970 = vsel %vm1876, %v4162, %v4419
      %v4971 = vsel %vm1876, %v4037, %v4421
      %v4972 = vsel %vm1876, %v4163, %v4423
      %v4973 = vsel %vm1876, %v4040, %v4425
      %v4974 = vsel %vm1876, %v4164, %v4427
      %v4975 = vsel %vm1876, %v4043, %v4429
      %v4976 = vsel %vm1876, %v4165, %v4431
      %v4977 = vsel %vm1876, %v4046, %v4433
      %v4978 = vsel %vm1876, %v4166, %v4435
      %v4979 = vsel %vm1876, %v4049, %v4437
      %v4980 = vsel %vm1876, %v4167, %v4439
      %v4981 = vsel %vm1876, %v4052, %v4441
      %v4982 = vsel %vm1876, %v4168, %v4443
      %v4983 = vsel %vm1876, %v4055, %v4445
      %v4984 = vsel %vm1876, %v4169, %v4447
      %v4985 = vsel %vm1876, %v4058, %v4449
      %v4986 = vsel %vm1876, %v4170, %v4451
      %v4987 = vsel %vm1876, %v4061, %v4453
      %v4988 = vsel %vm1876, %v4171, %v4455
      %v4989 = vsel %vm1876, %v4064, %v4457
      %v4990 = vsel %vm1876, %v4172, %v4459
      %v4991 = vsel %vm1876, %v4067, %v4461
      %v4992 = vsel %vm1876, %v4173, %v4463
      %v4993 = vsel %vm1876, %v4070, %v4465
      %v4994 = vsel %vm1876, %v4174, %v4467
      %v4995 = vsel %vm1876, %v4073, %v4469
      %v4996 = vsel %vm1876, %v4175, %v4471
      %v4997 = vsel %vm1876, %v4076, %v4473
      %v4998 = vsel %vm1876, %v4176, %v4475
      %v4999 = vsel %vm1876, %v4079, %v4477
      %v5000 = vsel %vm2008, %v4970, %v4509
      %v5001 = vsel %vm2008, %v4971, %v4511
      %v5002 = vsel %vm2008, %v4972, %v4513
      %v5003 = vsel %vm2008, %v4973, %v4515
      %v5004 = vsel %vm2008, %v4974, %v4517
      %v5005 = vsel %vm2008, %v4975, %v4519
      %v5006 = vsel %vm2008, %v4976, %v4521
      %v5007 = vsel %vm2008, %v4977, %v4523
      %v5008 = vsel %vm2008, %v4978, %v4525
      %v5009 = vsel %vm2008, %v4979, %v4527
      %v5010 = vsel %vm2008, %v4980, %v4529
      %v5011 = vsel %vm2008, %v4981, %v4531
      %v5012 = vsel %vm2008, %v4982, %v4533
      %v5013 = vsel %vm2008, %v4983, %v4535
      %v5014 = vsel %vm2008, %v4984, %v4537
      %v5015 = vsel %vm2008, %v4985, %v4539
      %v5016 = vsel %vm2008, %v4986, %v4541
      %v5017 = vsel %vm2008, %v4987, %v4543
      %v5018 = vsel %vm2008, %v4988, %v4545
      %v5019 = vsel %vm2008, %v4989, %v4547
      %v5020 = vsel %vm2008, %v4990, %v4549
      %v5021 = vsel %vm2008, %v4991, %v4551
      %v5022 = vsel %vm2008, %v4992, %v4553
      %v5023 = vsel %vm2008, %v4993, %v4555
      %v5024 = vsel %vm2008, %v4994, %v4557
      %v5025 = vsel %vm2008, %v4995, %v4559
      %v5026 = vsel %vm2008, %v4996, %v4561
      %v5027 = vsel %vm2008, %v4997, %v4563
      %v5028 = vsel %vm2008, %v4998, %v4565
      %v5029 = vsel %vm2008, %v4999, %v4567
      %vm5030 = vcmask 785408
      %v5031 = vsel %vm5030, %v5000, %v4599
      %v5032 = vsel %vm5030, %v5001, %v4601
      %v5033 = vsel %vm5030, %v5002, %v4603
      %v5034 = vsel %vm5030, %v5003, %v4605
      %v5035 = vsel %vm5030, %v5000, %v4607
      %v5036 = vsel %vm5030, %v5001, %v4609
      %v5037 = vsel %vm5030, %v5004, %v4611
      %v5038 = vsel %vm5030, %v5005, %v4613
      %v5039 = vsel %vm5030, %v5006, %v4615
      %v5040 = vsel %vm5030, %v5007, %v4617
      %v5041 = vsel %vm5030, %v5008, %v4619
      %v5042 = vsel %vm5030, %v5009, %v4621
      %v5043 = vsel %vm5030, %v5010, %v4623
      %v5044 = vsel %vm5030, %v5011, %v4625
      %v5045 = vsel %vm5030, %v5012, %v4627
      %v5046 = vsel %vm5030, %v5013, %v4629
      %v5047 = vsel %vm5030, %v5014, %v4631
      %v5048 = vsel %vm5030, %v5015, %v4633
      %v5049 = vsel %vm5030, %v5016, %v4635
      %v5050 = vsel %vm5030, %v5017, %v4637
      %v5051 = vsel %vm5030, %v5018, %v4639
      %v5052 = vsel %vm5030, %v5019, %v4641
      %v5053 = vsel %vm5030, %v5020, %v4643
      %v5054 = vsel %vm5030, %v5021, %v4645
      %v5055 = vsel %vm5030, %v5022, %v4647
      %v5056 = vsel %vm5030, %v5023, %v4649
      %v5057 = vsel %vm5030, %v5024, %v4651
      %v5058 = vsel %vm5030, %v5025, %v4653
      %v5059 = vsel %vm5030, %v5026, %v4655
      %v5060 = vsel %vm5030, %v5027, %v4657
      %v5061 = vsel %vm5030, %v5028, %v4659
      %v5062 = vsel %vm5030, %v5029, %v4661
      %v5063 = vsel %vm1876, %v4231, %v4695
      %v5064 = vsel %vm1876, %v4233, %v4697
      %v5065 = vsel %vm1876, %v4226, %v4699
      %v5066 = vsel %vm1876, %v4228, %v4701
      %v5067 = vsel %vm1876, %v4236, %v4703
      %v5068 = vsel %vm1876, %v4238, %v4705
      %v5069 = vsel %vm1876, %v4241, %v4707
      %v5070 = vsel %vm1876, %v4243, %v4709
      %v5071 = vsel %vm1876, %v4246, %v4711
      %v5072 = vsel %vm1876, %v4248, %v4713
      %v5073 = vsel %vm1876, %v4251, %v4715
      %v5074 = vsel %vm1876, %v4253, %v4717
      %v5075 = vsel %vm1876, %v4256, %v4719
      %v5076 = vsel %vm1876, %v4258, %v4721
      %v5077 = vsel %vm1876, %v4261, %v4723
      %v5078 = vsel %vm1876, %v4263, %v4725
      %v5079 = vsel %vm1876, %v4266, %v4727
      %v5080 = vsel %vm1876, %v4268, %v4729
      %v5081 = vsel %vm1876, %v4271, %v4731
      %v5082 = vsel %vm1876, %v4273, %v4733
      %v5083 = vsel %vm1876, %v4276, %v4735
      %v5084 = vsel %vm1876, %v4278, %v4737
      %v5085 = vsel %vm1876, %v4281, %v4739
      %v5086 = vsel %vm1876, %v4283, %v4741
      %v5087 = vsel %vm1876, %v4286, %v4743
      %v5088 = vsel %vm1876, %v4288, %v4745
      %v5089 = vsel %vm1876, %v4291, %v4747
      %v5090 = vsel %vm1876, %v4293, %v4749
      %v5091 = vsel %vm1876, %v4296, %v4751
      %v5092 = vsel %vm1876, %v4298, %v4753
      %v5093 = vsel %vm1876, %v4378, %v4755
      %v5094 = vsel %vm1876, %v4380, %v4757
      %v5095 = vsel %vm2008, %v5063, %v4791
      %v5096 = vsel %vm2008, %v5064, %v4793
      %v5097 = vsel %vm2008, %v5065, %v4795
      %v5098 = vsel %vm2008, %v5066, %v4797
      %v5099 = vsel %vm2008, %v5067, %v4799
      %v5100 = vsel %vm2008, %v5068, %v4801
      %v5101 = vsel %vm2008, %v5069, %v4803
      %v5102 = vsel %vm2008, %v5070, %v4805
      %v5103 = vsel %vm2008, %v5071, %v4807
      %v5104 = vsel %vm2008, %v5072, %v4809
      %v5105 = vsel %vm2008, %v5073, %v4811
      %v5106 = vsel %vm2008, %v5074, %v4813
      %v5107 = vsel %vm2008, %v5075, %v4815
      %v5108 = vsel %vm2008, %v5076, %v4817
      %v5109 = vsel %vm2008, %v5077, %v4819
      %v5110 = vsel %vm2008, %v5078, %v4821
      %v5111 = vsel %vm2008, %v5079, %v4823
      %v5112 = vsel %vm2008, %v5080, %v4825
      %v5113 = vsel %vm2008, %v5081, %v4827
      %v5114 = vsel %vm2008, %v5082, %v4829
      %v5115 = vsel %vm2008, %v5083, %v4831
      %v5116 = vsel %vm2008, %v5084, %v4833
      %v5117 = vsel %vm2008, %v5085, %v4835
      %v5118 = vsel %vm2008, %v5086, %v4837
      %v5119 = vsel %vm2008, %v5087, %v4839
      %v5120 = vsel %vm2008, %v5088, %v4841
      %v5121 = vsel %vm2008, %v5089, %v4843
      %v5122 = vsel %vm2008, %v5090, %v4845
      %v5123 = vsel %vm2008, %v5091, %v4847
      %v5124 = vsel %vm2008, %v5092, %v4849
      %v5125 = vsel %vm2008, %v5093, %v4843
      %v5126 = vsel %vm2008, %v5094, %v4845
      %v5127 = vsel %vm5030, %v5095, %v4881
      %v5128 = vsel %vm5030, %v5096, %v4883
      %v5129 = vsel %vm5030, %v5097, %v4885
      %v5130 = vsel %vm5030, %v5098, %v4887
      %v5131 = vsel %vm5030, %v5099, %v4889
      %v5132 = vsel %vm5030, %v5100, %v4891
      %v5133 = vsel %vm5030, %v5101, %v4893
      %v5134 = vsel %vm5030, %v5102, %v4895
      %v5135 = vsel %vm5030, %v5103, %v4897
      %v5136 = vsel %vm5030, %v5104, %v4899
      %v5137 = vsel %vm5030, %v5105, %v4901
      %v5138 = vsel %vm5030, %v5106, %v4903
      %v5139 = vsel %vm5030, %v5107, %v4905
      %v5140 = vsel %vm5030, %v5108, %v4907
      %v5141 = vsel %vm5030, %v5109, %v4909
      %v5142 = vsel %vm5030, %v5110, %v4911
      %v5143 = vsel %vm5030, %v5111, %v4913
      %v5144 = vsel %vm5030, %v5112, %v4915
      %v5145 = vsel %vm5030, %v5113, %v4917
      %v5146 = vsel %vm5030, %v5114, %v4919
      %v5147 = vsel %vm5030, %v5115, %v4921
      %v5148 = vsel %vm5030, %v5116, %v4923
      %v5149 = vsel %vm5030, %v5117, %v4925
      %v5150 = vsel %vm5030, %v5118, %v4927
      %v5151 = vsel %vm5030, %v5119, %v4929
      %v5152 = vsel %vm5030, %v5120, %v4931
      %v5153 = vsel %vm5030, %v5121, %v4933
      %v5154 = vsel %vm5030, %v5122, %v4935
      %v5155 = vsel %vm5030, %v5123, %v4937
      %v5156 = vsel %vm5030, %v5124, %v4939
      %v5157 = vsel %vm5030, %v5125, %v4933
      %v5158 = vsel %vm5030, %v5126, %v4935
      %v5160 = vlaneseq
      %v5161 = vshrl.u32 %v5160, 7
      %v5162 = vsub.s32 0, %v5161
      %v5163 = vrot.slane %v3970, %v5162
      %v5165 = vsel %vm1876, %v4301, 0
      %v5167 = vsel %vm1876, %v4303, 0
      %v5169 = vsel %vm1876, %v4311, 0
      %v5171 = vsel %vm1876, %v4313, 0
      %v5173 = vsel %vm1876, %v4316, 0
      %v5175 = vsel %vm1876, %v4318, 0
      %v5177 = vsel %vm1876, %v4321, 0
      %v5179 = vsel %vm1876, %v4323, 0
      %v5181 = vsel %vm1876, %v4326, 0
      %v5183 = vsel %vm1876, %v4328, 0
      %v5185 = vsel %vm1876, %v4331, 0
      %v5187 = vsel %vm1876, %v4333, 0
      %v5189 = vsel %vm1876, %v4336, 0
      %v5191 = vsel %vm1876, %v4338, 0
      %v5193 = vsel %vm1876, %v4341, 0
      %v5195 = vsel %vm1876, %v4343, 0
      %v5197 = vsel %vm1876, %v4346, 0
      %v5199 = vsel %vm1876, %v4348, 0
      %v5201 = vsel %vm1876, %v4351, 0
      %v5203 = vsel %vm1876, %v4353, 0
      %v5205 = vsel %vm1876, %v4356, 0
      %v5207 = vsel %vm1876, %v4358, 0
      %v5209 = vsel %vm1876, %v4361, 0
      %v5211 = vsel %vm1876, %v4363, 0
      %v5213 = vsel %vm1876, %v4366, 0
      %v5215 = vsel %vm1876, %v4368, 0
      %v5217 = vsel %vm1876, %v4371, 0
      %v5219 = vsel %vm1876, %v4373, 0
      %v5221 = vsel %vm1876, %v4415, 0
      %v5223 = vsel %vm1876, %v4417, 0
      %5225 = vmatprep.subr.mxu0 0.0
      %5226 = vmatpush1.msra.mxu0 %v3934
      %5227 = vmatprep.subr.mxu0 0.0
      %5228 = vmatpush1.msra.mxu0 %v3935
      %5229 = vmatprep.subr.mxu0 0.0
      %5230 = vmatpush1.msra.mxu0 %v3936
      %5231 = vmatprep.subr.mxu0 0.0
      %5232 = vmatpush1.msra.mxu0 %v3937
      %5233 = vmatprep.subr.mxu0 0.0
      %5234 = vmatpush1.msra.mxu0 %v3938
      %5235 = vmatprep.subr.mxu0 0.0
      %5236 = vmatpush1.msra.mxu0 %v3939
      %5237 = vmatprep.subr.mxu0 0.0
      %5238 = vmatpush1.msra.mxu0 %v3940
      %5239 = vmatprep.subr.mxu0 0.0
      %5240 = vmatpush1.msra.mxu0 %v3941
      %5241 = vmatprep.subr.mxu0 0.0
      %5242 = vmatpush1.msra.mxu0 %v3942
      %5243 = vmatprep.subr.mxu0 0.0
      %5244 = vmatpush1.msra.mxu0 %v3943
      %5245 = vmatprep.subr.mxu0 0.0
      %5246 = vmatpush1.msra.mxu0 %v3944
      %5247 = vmatprep.subr.mxu0 0.0
      %5248 = vmatpush1.msra.mxu0 %v3945
      %5249 = vmatprep.subr.mxu0 0.0
      %5250 = vmatpush1.msra.mxu0 %v3946
      %5251 = vmatprep.subr.mxu0 0.0
      %5252 = vmatpush1.msra.mxu0 %v3947
      %5253 = vmatprep.subr.mxu0 0.0
      %5254 = vmatpush1.msra.mxu0 %v3948
      %5255 = vmatprep.subr.mxu0 0.0
      %5256 = vmatpush1.msra.mxu0 %v3949
      %5257 = vmatprep.subr.mxu0 0.0
      %5258 = vmatpush1.msra.mxu0 %v3950
      %5259 = vmatprep.subr.mxu0 0.0
      %5260 = vmatpush1.msra.mxu0 %v3951
      %5261 = vmatprep.subr.mxu0 0.0
      %5262 = vmatpush1.msra.mxu0 %v3952
      %5263 = vmatprep.subr.mxu0 0.0
      %5264 = vmatpush1.msra.mxu0 %v3953
      %5265 = vmatprep.subr.mxu0 0.0
      %5266 = vmatpush1.msra.mxu0 %v3954
      %5267 = vmatprep.subr.mxu0 0.0
      %5268 = vmatpush1.msra.mxu0 %v3955
      %5269 = vmatprep.subr.mxu0 0.0
      %5270 = vmatpush1.msra.mxu0 %v3956
      %5271 = vmatprep.subr.mxu0 0.0
      %5272 = vmatpush1.msra.mxu0 %v3957
      %5273 = vmatprep.subr.mxu0 0.0
      %5274 = vmatpush1.msra.mxu0 %v3958
      %5275 = vmatprep.subr.mxu0 0.0
      %5276 = vmatpush1.msra.mxu0 %v3959
      %5277 = vmatprep.subr.mxu0 0.0
      %5278 = vmatpush1.msra.mxu0 %v3960
      %5279 = vmatprep.subr.mxu0 0.0
      %5280 = vmatpush1.msra.mxu0 %v3961
      %5281 = vmatprep.subr.mxu0 0.0
      %5282 = vmatpush1.msra.mxu0 %v3962
      %5283 = vmatprep.subr.mxu0 0.0
      %5284 = vmatpush1.msra.mxu0 %v3963
      %5285 = vmatprep.subr.mxu0 0.0
      %5286 = vmatpush1.msra.mxu0 %v3964
      %5287 = vmatprep.subr.mxu0 0.0
      %5288 = vmatpush1.msra.mxu0 %v3965
      %5289 = vmatprep.mubr.f32.mxu0 %v5127
      %5290 = vmatmul.mubr.f32.gmra.mrb[0].mxu0 %v5031
      %v5291 = vpop.f32.mrb[0].mxu0
      %v5292 = vadd.f32 %v5163, %v5291
      %v5293 = vpop.f32.mrb[0].mxu0
      %5294 = vmatprep.mubr.f32.mxu0 %v5128
      %5295 = vmatmul.mubr.f32.gmra.mrb[0].mxu0 %v5032
      %v5296 = vpop.f32.mrb[0].mxu0
      %v5297 = vadd.f32 %v5163, %v5296
      %v5298 = vpop.f32.mrb[0].mxu0
      %5299 = vmatprep.mubr.f32.mxu0 %v5129
      %5300 = vmatmul.mubr.f32.gmra.mrb[0].mxu0 %v5033
      %v5301 = vpop.f32.mrb[0].mxu0
      %v5302 = vadd.f32 %v5163, %v5301
      %v5303 = vpop.f32.mrb[0].mxu0
      %5304 = vmatprep.mubr.f32.mxu0 %v5130
      %5305 = vmatmul.mubr.f32.gmra.mrb[0].mxu0 %v5034
      %v5306 = vpop.f32.mrb[0].mxu0
      %v5307 = vadd.f32 %v5163, %v5306
      %v5308 = vpop.f32.mrb[0].mxu0
      %5309 = vmatprep.mubr.f32.mxu0 %v5131
      %5310 = vmatmul.mubr.f32.gmra.mrb[0].mxu0 %v5035
      %v5311 = vpop.f32.mrb[0].mxu0
      %v5312 = vadd.f32 %v5163, %v5311
      %v5313 = vpop.f32.mrb[0].mxu0
      %5314 = vmatprep.mubr.f32.mxu0 %v5132
      %5315 = vmatmul.mubr.f32.gmra.mrb[0].mxu0 %v5036
      %v5316 = vpop.f32.mrb[0].mxu0
      %v5317 = vadd.f32 %v5163, %v5316
      %v5318 = vpop.f32.mrb[0].mxu0
      %5319 = vmatprep.mubr.f32.mxu0 %v5133
      %5320 = vmatmul.mubr.f32.gmra.mrb[0].mxu0 %v5037
      %v5321 = vpop.f32.mrb[0].mxu0
      %v5322 = vadd.f32 %v5163, %v5321
      %v5323 = vpop.f32.mrb[0].mxu0
      %5324 = vmatprep.mubr.f32.mxu0 %v5134
      %5325 = vmatmul.mubr.f32.gmra.mrb[0].mxu0 %v5038
      %v5326 = vpop.f32.mrb[0].mxu0
      %v5327 = vadd.f32 %v5163, %v5326
      %v5328 = vpop.f32.mrb[0].mxu0
      %5329 = vmatprep.mubr.f32.mxu0 %v5135
      %5330 = vmatmul.mubr.f32.gmra.mrb[0].mxu0 %v5039
      %v5331 = vpop.f32.mrb[0].mxu0
      %v5332 = vadd.f32 %v5163, %v5331
      %v5333 = vpop.f32.mrb[0].mxu0
      %5334 = vmatprep.mubr.f32.mxu0 %v5136
      %5335 = vmatmul.mubr.f32.gmra.mrb[0].mxu0 %v5040
      %v5336 = vpop.f32.mrb[0].mxu0
      %v5337 = vadd.f32 %v5163, %v5336
      %v5338 = vpop.f32.mrb[0].mxu0
      %5339 = vmatprep.mubr.f32.mxu0 %v5137
      %5340 = vmatmul.mubr.f32.gmra.mrb[0].mxu0 %v5041
      %v5341 = vpop.f32.mrb[0].mxu0
      %v5342 = vadd.f32 %v5163, %v5341
      %v5343 = vpop.f32.mrb[0].mxu0
      %5344 = vmatprep.mubr.f32.mxu0 %v5138
      %5345 = vmatmul.mubr.f32.gmra.mrb[0].mxu0 %v5042
      %v5346 = vpop.f32.mrb[0].mxu0
      %v5347 = vadd.f32 %v5163, %v5346
      %v5348 = vpop.f32.mrb[0].mxu0
      %5349 = vmatprep.mubr.f32.mxu0 %v5139
      %5350 = vmatmul.mubr.f32.gmra.mrb[0].mxu0 %v5043
      %v5351 = vpop.f32.mrb[0].mxu0
      %v5352 = vadd.f32 %v5163, %v5351
      %v5353 = vpop.f32.mrb[0].mxu0
      %5354 = vmatprep.mubr.f32.mxu0 %v5140
      %5355 = vmatmul.mubr.f32.gmra.mrb[0].mxu0 %v5044
      %v5356 = vpop.f32.mrb[0].mxu0
      %v5357 = vadd.f32 %v5163, %v5356
      %v5358 = vpop.f32.mrb[0].mxu0
      %5359 = vmatprep.mubr.f32.mxu0 %v5141
      %5360 = vmatmul.mubr.f32.gmra.mrb[0].mxu0 %v5045
      %v5361 = vpop.f32.mrb[0].mxu0
      %v5362 = vadd.f32 %v5163, %v5361
      %v5363 = vpop.f32.mrb[0].mxu0
      %5364 = vmatprep.mubr.f32.mxu0 %v5142
      %5365 = vmatmul.mubr.f32.gmra.mrb[0].mxu0 %v5046
      %v5366 = vpop.f32.mrb[0].mxu0
      %v5367 = vadd.f32 %v5163, %v5366
      %v5368 = vpop.f32.mrb[0].mxu0
      %5369 = vmatprep.mubr.f32.mxu0 %v5143
      %5370 = vmatmul.mubr.f32.gmra.mrb[0].mxu0 %v5047
      %v5371 = vpop.f32.mrb[0].mxu0
      %v5372 = vadd.f32 %v5163, %v5371
      %v5373 = vpop.f32.mrb[0].mxu0
      %5374 = vmatprep.mubr.f32.mxu0 %v5144
      %5375 = vmatmul.mubr.f32.gmra.mrb[0].mxu0 %v5048
      %v5376 = vpop.f32.mrb[0].mxu0
      %v5377 = vadd.f32 %v5163, %v5376
      %v5378 = vpop.f32.mrb[0].mxu0
      %5379 = vmatprep.mubr.f32.mxu0 %v5145
      %5380 = vmatmul.mubr.f32.gmra.mrb[0].mxu0 %v5049
      %v5381 = vpop.f32.mrb[0].mxu0
      %v5382 = vadd.f32 %v5163, %v5381
      %v5383 = vpop.f32.mrb[0].mxu0
      %5384 = vmatprep.mubr.f32.mxu0 %v5146
      %5385 = vmatmul.mubr.f32.gmra.mrb[0].mxu0 %v5050
      %v5386 = vpop.f32.mrb[0].mxu0
      %v5387 = vadd.f32 %v5163, %v5386
      %v5388 = vpop.f32.mrb[0].mxu0
      %5389 = vmatprep.mubr.f32.mxu0 %v5147
      %5390 = vmatmul.mubr.f32.gmra.mrb[0].mxu0 %v5051
      %v5391 = vpop.f32.mrb[0].mxu0
      %v5392 = vadd.f32 %v5163, %v5391
      %v5393 = vpop.f32.mrb[0].mxu0
      %5394 = vmatprep.mubr.f32.mxu0 %v5148
      %5395 = vmatmul.mubr.f32.gmra.mrb[0].mxu0 %v5052
      %v5396 = vpop.f32.mrb[0].mxu0
      %v5397 = vadd.f32 %v5163, %v5396
      %v5398 = vpop.f32.mrb[0].mxu0
      %5399 = vmatprep.mubr.f32.mxu0 %v5149
      %5400 = vmatmul.mubr.f32.gmra.mrb[0].mxu0 %v5053
      %v5401 = vpop.f32.mrb[0].mxu0
      %v5402 = vadd.f32 %v5163, %v5401
      %v5403 = vpop.f32.mrb[0].mxu0
      %5404 = vmatprep.mubr.f32.mxu0 %v5150
      %5405 = vmatmul.mubr.f32.gmra.mrb[0].mxu0 %v5054
      %v5406 = vpop.f32.mrb[0].mxu0
      %v5407 = vadd.f32 %v5163, %v5406
      %v5408 = vpop.f32.mrb[0].mxu0
      %5409 = vmatprep.mubr.f32.mxu0 %v5151
      %5410 = vmatmul.mubr.f32.gmra.mrb[0].mxu0 %v5055
      %v5411 = vpop.f32.mrb[0].mxu0
      %v5412 = vadd.f32 %v5163, %v5411
      %v5413 = vpop.f32.mrb[0].mxu0
      %5414 = vmatprep.mubr.f32.mxu0 %v5152
      %5415 = vmatmul.mubr.f32.gmra.mrb[0].mxu0 %v5056
      %v5416 = vpop.f32.mrb[0].mxu0
      %v5417 = vadd.f32 %v5163, %v5416
      %v5418 = vpop.f32.mrb[0].mxu0
      %5419 = vmatprep.mubr.f32.mxu0 %v5153
      %5420 = vmatmul.mubr.f32.gmra.mrb[0].mxu0 %v5057
      %v5421 = vpop.f32.mrb[0].mxu0
      %v5422 = vadd.f32 %v5163, %v5421
      %v5423 = vpop.f32.mrb[0].mxu0
      %5424 = vmatprep.mubr.f32.mxu0 %v5154
      %5425 = vmatmul.mubr.f32.gmra.mrb[0].mxu0 %v5058
      %v5426 = vpop.f32.mrb[0].mxu0
      %v5427 = vadd.f32 %v5163, %v5426
      %v5428 = vpop.f32.mrb[0].mxu0
      %5429 = vmatprep.mubr.f32.mxu0 %v5155
      %5430 = vmatmul.mubr.f32.gmra.mrb[0].mxu0 %v5059
      %v5431 = vpop.f32.mrb[0].mxu0
      %v5432 = vadd.f32 %v5163, %v5431
      %v5433 = vpop.f32.mrb[0].mxu0
      %5434 = vmatprep.mubr.f32.mxu0 %v5156
      %5435 = vmatmul.mubr.f32.gmra.mrb[0].mxu0 %v5060
      %v5436 = vpop.f32.mrb[0].mxu0
      %v5437 = vadd.f32 %v5163, %v5436
      %v5438 = vpop.f32.mrb[0].mxu0
      %5439 = vmatprep.mubr.f32.mxu0 %v5157
      %5440 = vmatmul.mubr.f32.gmra.mrb[0].mxu0 %v5061
      %v5441 = vpop.f32.mrb[0].mxu0
      %v5442 = vadd.f32 %v5163, %v5441
      %v5443 = vpop.f32.mrb[0].mxu0
      %5444 = vmatprep.mubr.f32.mxu0 %v5158
      %5445 = vmatmul.mubr.f32.gmra.mrb[0].mxu0 %v5062
      %v5446 = vpop.f32.mrb[0].mxu0
      %v5447 = vadd.f32 %v5163, %v5446
      %v5448 = vpop.f32.mrb[0].mxu0
      %5449 = vdwg.mxu0
      %5450 = vmatprep.subr.mxu0 0.0
      %5451 = vmatpush1.msra.mxu0 %v3966
      %5452 = vmatprep.subr.mxu0 0.0
      %5453 = vmatpush1.msra.mxu0 %v3967
      %5454 = vmatprep.subr.mxu0 0.0
      %5455 = vmatpush1.msra.mxu0 %v3968
      %5456 = vmatprep.subr.mxu0 0.0
      %5457 = vmatpush1.msra.mxu0 %v3969
      %5458 = vmatprep.subr.mxu0 0.0
      %5459 = vmatpush1.msra.mxu0 0.0
      %5460 = vmatprep.subr.mxu0 0.0
      %5461 = vmatpush1.msra.mxu0 0.0
      %5462 = vmatprep.subr.mxu0 0.0
      %5463 = vmatpush1.msra.mxu0 0.0
      %5464 = vmatprep.subr.mxu0 0.0
      %5465 = vmatpush1.msra.mxu0 0.0
      %5466 = vmatprep.subr.mxu0 0.0
      %5467 = vmatpush1.msra.mxu0 0.0
      %5468 = vmatprep.subr.mxu0 0.0
      %5469 = vmatpush1.msra.mxu0 0.0
      %5470 = vmatprep.subr.mxu0 0.0
      %5471 = vmatpush1.msra.mxu0 0.0
      %5472 = vmatprep.subr.mxu0 0.0
      %5473 = vmatpush1.msra.mxu0 0.0
      %5474 = vmatprep.subr.mxu0 0.0
      %5475 = vmatpush1.msra.mxu0 0.0
      %5476 = vmatprep.subr.mxu0 0.0
      %5477 = vmatpush1.msra.mxu0 0.0
      %5478 = vmatprep.subr.mxu0 0.0
      %5479 = vmatpush1.msra.mxu0 0.0
      %5480 = vmatprep.subr.mxu0 0.0
      %5481 = vmatpush1.msra.mxu0 0.0
      %5482 = vmatprep.subr.mxu0 0.0
      %5483 = vmatpush1.msra.mxu0 0.0
      %5484 = vmatprep.subr.mxu0 0.0
      %5485 = vmatpush1.msra.mxu0 0.0
      %5486 = vmatprep.subr.mxu0 0.0
      %5487 = vmatpush1.msra.mxu0 0.0
      %5488 = vmatprep.subr.mxu0 0.0
      %5489 = vmatpush1.msra.mxu0 0.0
      %5490 = vmatprep.subr.mxu0 0.0
      %5491 = vmatpush1.msra.mxu0 0.0
      %5492 = vmatprep.subr.mxu0 0.0
      %5493 = vmatpush1.msra.mxu0 0.0
      %5494 = vmatprep.subr.mxu0 0.0
      %5495 = vmatpush1.msra.mxu0 0.0
      %5496 = vmatprep.subr.mxu0 0.0
      %5497 = vmatpush1.msra.mxu0 0.0
      %5498 = vmatprep.subr.mxu0 0.0
      %5499 = vmatpush1.msra.mxu0 0.0
      %5500 = vmatprep.subr.mxu0 0.0
      %5501 = vmatpush1.msra.mxu0 0.0
      %5502 = vmatprep.subr.mxu0 0.0
      %5503 = vmatpush1.msra.mxu0 0.0
      %5504 = vmatprep.subr.mxu0 0.0
      %5505 = vmatpush1.msra.mxu0 0.0
      %5506 = vmatprep.subr.mxu0 0.0
      %5507 = vmatpush1.msra.mxu0 0.0
      %5508 = vmatprep.subr.mxu0 0.0
      %5509 = vmatpush1.msra.mxu0 0.0
      %5510 = vmatprep.subr.mxu0 0.0
      %5511 = vmatpush1.msra.mxu0 0.0
      %5512 = vmatprep.subr.mxu0 0.0
      %5513 = vmatpush1.msra.mxu0 0.0
      %5514 = vmatprep.mubr.f32.mxu0 0.0
      %5515 = vmatmul.mubr.f32.gmra.mrb[0].mxu0 %v5165
      %v5516 = vpop.f32.mrb[0].mxu0
      %v5517 = vadd.f32 %v5292, %v5516
      %v5518 = vpop.f32.mrb[0].mxu0
      %5519 = vmatprep.mubr.f32.mxu0 0.0
      %5520 = vmatmul.mubr.f32.gmra.mrb[0].mxu0 %v5167
      %v5521 = vpop.f32.mrb[0].mxu0
      %v5522 = vadd.f32 %v5297, %v5521
      %v5523 = vpop.f32.mrb[0].mxu0
      %5524 = vmatprep.mubr.f32.mxu0 0.0
      %5525 = vmatmul.mubr.f32.gmra.mrb[0].mxu0 %v5169
      %v5526 = vpop.f32.mrb[0].mxu0
      %v5527 = vadd.f32 %v5302, %v5526
      %v5528 = vpop.f32.mrb[0].mxu0
      %5529 = vmatprep.mubr.f32.mxu0 0.0
      %5530 = vmatmul.mubr.f32.gmra.mrb[0].mxu0 %v5171
      %v5531 = vpop.f32.mrb[0].mxu0
      %v5532 = vadd.f32 %v5307, %v5531
      %v5533 = vpop.f32.mrb[0].mxu0
      %5534 = vmatprep.mubr.f32.mxu0 0.0
      %5535 = vmatmul.mubr.f32.gmra.mrb[0].mxu0 %v5173
      %v5536 = vpop.f32.mrb[0].mxu0
      %v5537 = vadd.f32 %v5312, %v5536
      %v5538 = vpop.f32.mrb[0].mxu0
      %5539 = vmatprep.mubr.f32.mxu0 0.0
      %5540 = vmatmul.mubr.f32.gmra.mrb[0].mxu0 %v5175
      %v5541 = vpop.f32.mrb[0].mxu0
      %v5542 = vadd.f32 %v5317, %v5541
      %v5543 = vpop.f32.mrb[0].mxu0
      %5544 = vmatprep.mubr.f32.mxu0 0.0
      %5545 = vmatmul.mubr.f32.gmra.mrb[0].mxu0 %v5177
      %v5546 = vpop.f32.mrb[0].mxu0
      %v5547 = vadd.f32 %v5322, %v5546
      %v5548 = vpop.f32.mrb[0].mxu0
      %5549 = vmatprep.mubr.f32.mxu0 0.0
      %5550 = vmatmul.mubr.f32.gmra.mrb[0].mxu0 %v5179
      %v5551 = vpop.f32.mrb[0].mxu0
      %v5552 = vadd.f32 %v5327, %v5551
      %v5553 = vpop.f32.mrb[0].mxu0
      %5554 = vmatprep.mubr.f32.mxu0 0.0
      %5555 = vmatmul.mubr.f32.gmra.mrb[0].mxu0 %v5181
      %v5556 = vpop.f32.mrb[0].mxu0
      %v5557 = vadd.f32 %v5332, %v5556
      %v5558 = vpop.f32.mrb[0].mxu0
      %5559 = vmatprep.mubr.f32.mxu0 0.0
      %5560 = vmatmul.mubr.f32.gmra.mrb[0].mxu0 %v5183
      %v5561 = vpop.f32.mrb[0].mxu0
      %v5562 = vadd.f32 %v5337, %v5561
      %v5563 = vpop.f32.mrb[0].mxu0
      %5564 = vmatprep.mubr.f32.mxu0 0.0
      %5565 = vmatmul.mubr.f32.gmra.mrb[0].mxu0 %v5185
      %v5566 = vpop.f32.mrb[0].mxu0
      %v5567 = vadd.f32 %v5342, %v5566
      %v5568 = vpop.f32.mrb[0].mxu0
      %5569 = vmatprep.mubr.f32.mxu0 0.0
      %5570 = vmatmul.mubr.f32.gmra.mrb[0].mxu0 %v5187
      %v5571 = vpop.f32.mrb[0].mxu0
      %v5572 = vadd.f32 %v5347, %v5571
      %v5573 = vpop.f32.mrb[0].mxu0
      %5574 = vmatprep.mubr.f32.mxu0 0.0
      %5575 = vmatmul.mubr.f32.gmra.mrb[0].mxu0 %v5189
      %v5576 = vpop.f32.mrb[0].mxu0
      %v5577 = vadd.f32 %v5352, %v5576
      %v5578 = vpop.f32.mrb[0].mxu0
      %5579 = vmatprep.mubr.f32.mxu0 0.0
      %5580 = vmatmul.mubr.f32.gmra.mrb[0].mxu0 %v5191
      %v5581 = vpop.f32.mrb[0].mxu0
      %v5582 = vadd.f32 %v5357, %v5581
      %v5583 = vpop.f32.mrb[0].mxu0
      %5584 = vmatprep.mubr.f32.mxu0 0.0
      %5585 = vmatmul.mubr.f32.gmra.mrb[0].mxu0 %v5193
      %v5586 = vpop.f32.mrb[0].mxu0
      %v5587 = vadd.f32 %v5362, %v5586
      %v5588 = vpop.f32.mrb[0].mxu0
      %5589 = vmatprep.mubr.f32.mxu0 0.0
      %5590 = vmatmul.mubr.f32.gmra.mrb[0].mxu0 %v5195
      %v5591 = vpop.f32.mrb[0].mxu0
      %v5592 = vadd.f32 %v5367, %v5591
      %v5593 = vpop.f32.mrb[0].mxu0
      %5594 = vmatprep.mubr.f32.mxu0 0.0
      %5595 = vmatmul.mubr.f32.gmra.mrb[0].mxu0 %v5197
      %v5596 = vpop.f32.mrb[0].mxu0
      %v5597 = vadd.f32 %v5372, %v5596
      %v5598 = vpop.f32.mrb[0].mxu0
      %5599 = vmatprep.mubr.f32.mxu0 0.0
      %5600 = vmatmul.mubr.f32.gmra.mrb[0].mxu0 %v5199
      %v5601 = vpop.f32.mrb[0].mxu0
      %v5602 = vadd.f32 %v5377, %v5601
      %v5603 = vpop.f32.mrb[0].mxu0
      %5604 = vmatprep.mubr.f32.mxu0 0.0
      %5605 = vmatmul.mubr.f32.gmra.mrb[0].mxu0 %v5201
      %v5606 = vpop.f32.mrb[0].mxu0
      %v5607 = vadd.f32 %v5382, %v5606
      %v5608 = vpop.f32.mrb[0].mxu0
      %5609 = vmatprep.mubr.f32.mxu0 0.0
      %5610 = vmatmul.mubr.f32.gmra.mrb[0].mxu0 %v5203
      %v5611 = vpop.f32.mrb[0].mxu0
      %v5612 = vadd.f32 %v5387, %v5611
      %v5613 = vpop.f32.mrb[0].mxu0
      %5614 = vmatprep.mubr.f32.mxu0 0.0
      %5615 = vmatmul.mubr.f32.gmra.mrb[0].mxu0 %v5205
      %v5616 = vpop.f32.mrb[0].mxu0
      %v5617 = vadd.f32 %v5392, %v5616
      %v5618 = vpop.f32.mrb[0].mxu0
      %5619 = vmatprep.mubr.f32.mxu0 0.0
      %5620 = vmatmul.mubr.f32.gmra.mrb[0].mxu0 %v5207
      %v5621 = vpop.f32.mrb[0].mxu0
      %v5622 = vadd.f32 %v5397, %v5621
      %v5623 = vpop.f32.mrb[0].mxu0
      %5624 = vmatprep.mubr.f32.mxu0 0.0
      %5625 = vmatmul.mubr.f32.gmra.mrb[0].mxu0 %v5209
      %v5626 = vpop.f32.mrb[0].mxu0
      %v5627 = vadd.f32 %v5402, %v5626
      %v5628 = vpop.f32.mrb[0].mxu0
      %5629 = vmatprep.mubr.f32.mxu0 0.0
      %5630 = vmatmul.mubr.f32.gmra.mrb[0].mxu0 %v5211
      %v5631 = vpop.f32.mrb[0].mxu0
      %v5632 = vadd.f32 %v5407, %v5631
      %v5633 = vpop.f32.mrb[0].mxu0
      %5634 = vmatprep.mubr.f32.mxu0 0.0
      %5635 = vmatmul.mubr.f32.gmra.mrb[0].mxu0 %v5213
      %v5636 = vpop.f32.mrb[0].mxu0
      %v5637 = vadd.f32 %v5412, %v5636
      %v5638 = vpop.f32.mrb[0].mxu0
      %5639 = vmatprep.mubr.f32.mxu0 0.0
      %5640 = vmatmul.mubr.f32.gmra.mrb[0].mxu0 %v5215
      %v5641 = vpop.f32.mrb[0].mxu0
      %v5642 = vadd.f32 %v5417, %v5641
      %v5643 = vpop.f32.mrb[0].mxu0
      %5644 = vmatprep.mubr.f32.mxu0 0.0
      %5645 = vmatmul.mubr.f32.gmra.mrb[0].mxu0 %v5217
      %v5646 = vpop.f32.mrb[0].mxu0
      %v5647 = vadd.f32 %v5422, %v5646
      %v5648 = vpop.f32.mrb[0].mxu0
      %5649 = vmatprep.mubr.f32.mxu0 0.0
      %5650 = vmatmul.mubr.f32.gmra.mrb[0].mxu0 %v5219
      %v5651 = vpop.f32.mrb[0].mxu0
      %v5652 = vadd.f32 %v5427, %v5651
      %v5653 = vpop.f32.mrb[0].mxu0
      %5654 = vmatprep.mubr.f32.mxu0 0.0
      %5655 = vmatmul.mubr.f32.gmra.mrb[0].mxu0 %v5221
      %v5656 = vpop.f32.mrb[0].mxu0
      %v5657 = vadd.f32 %v5432, %v5656
      %v5658 = vpop.f32.mrb[0].mxu0
      %5659 = vmatprep.mubr.f32.mxu0 0.0
      %5660 = vmatmul.mubr.f32.gmra.mrb[0].mxu0 %v5223
      %v5661 = vpop.f32.mrb[0].mxu0
      %v5662 = vadd.f32 %v5437, %v5661
      %v5663 = vpop.f32.mrb[0].mxu0
      %5664 = vmatprep.mubr.f32.mxu0 0.0
      %5665 = vmatmul.mubr.f32.gmra.mrb[0].mxu0 %v5217
      %v5666 = vpop.f32.mrb[0].mxu0
      %v5667 = vadd.f32 %v5442, %v5666
      %v5668 = vpop.f32.mrb[0].mxu0
      %5669 = vmatprep.mubr.f32.mxu0 0.0
      %5670 = vmatmul.mubr.f32.gmra.mrb[0].mxu0 %v5219
      %v5671 = vpop.f32.mrb[0].mxu0
      %v5672 = vadd.f32 %v5447, %v5671
      %v5673 = vpop.f32.mrb[0].mxu0
      %5674 = vdwg.mxu0
      %vm5675 = vcmp.ge.f32.partialorder %v5517, 0.0
      %vm5676 = vcmp.ge.f32.partialorder %v5522, 0.0
      %vm5677 = vcmp.ge.f32.partialorder %v5527, 0.0
      %vm5678 = vcmp.ge.f32.partialorder %v5532, 0.0
      %vm5679 = vcmp.ge.f32.partialorder %v5537, 0.0
      %vm5680 = vcmp.ge.f32.partialorder %v5542, 0.0
      %vm5681 = vcmp.ge.f32.partialorder %v5547, 0.0
      %vm5682 = vcmp.ge.f32.partialorder %v5552, 0.0
      %vm5683 = vcmp.ge.f32.partialorder %v5557, 0.0
      %vm5684 = vcmp.ge.f32.partialorder %v5562, 0.0
      %vm5685 = vcmp.ge.f32.partialorder %v5567, 0.0
      %vm5686 = vcmp.ge.f32.partialorder %v5572, 0.0
      %vm5687 = vcmp.ge.f32.partialorder %v5577, 0.0
      %vm5688 = vcmp.ge.f32.partialorder %v5582, 0.0
      %vm5689 = vcmp.ge.f32.partialorder %v5587, 0.0
      %vm5690 = vcmp.ge.f32.partialorder %v5592, 0.0
      %vm5691 = vcmp.ge.f32.partialorder %v5597, 0.0
      %vm5692 = vcmp.ge.f32.partialorder %v5602, 0.0
      %vm5693 = vcmp.ge.f32.partialorder %v5607, 0.0
      %vm5694 = vcmp.ge.f32.partialorder %v5612, 0.0
      %vm5695 = vcmp.ge.f32.partialorder %v5617, 0.0
      %vm5696 = vcmp.ge.f32.partialorder %v5622, 0.0
      %vm5697 = vcmp.ge.f32.partialorder %v5627, 0.0
      %vm5698 = vcmp.ge.f32.partialorder %v5632, 0.0
      %vm5699 = vcmp.ge.f32.partialorder %v5637, 0.0
      %vm5700 = vcmp.ge.f32.partialorder %v5642, 0.0
      %vm5701 = vcmp.ge.f32.partialorder %v5647, 0.0
      %vm5702 = vcmp.ge.f32.partialorder %v5652, 0.0
      %vm5703 = vcmp.ge.f32.partialorder %v5657, 0.0
      %vm5704 = vcmp.ge.f32.partialorder %v5662, 0.0
      %vm5705 = vcmp.ge.f32.partialorder %v5667, 0.0
      %vm5706 = vcmp.ge.f32.partialorder %v5672, 0.0
      %v5707 = vmul.f32 %v5517, 0.2
      %v5708 = vmul.f32 %v5522, 0.2
      %v5709 = vmul.f32 %v5527, 0.2
      %v5710 = vmul.f32 %v5532, 0.2
      %v5711 = vmul.f32 %v5537, 0.2
      %v5712 = vmul.f32 %v5542, 0.2
      %v5713 = vmul.f32 %v5547, 0.2
      %v5714 = vmul.f32 %v5552, 0.2
      %v5715 = vmul.f32 %v5557, 0.2
      %v5716 = vmul.f32 %v5562, 0.2
      %v5717 = vmul.f32 %v5567, 0.2
      %v5718 = vmul.f32 %v5572, 0.2
      %v5719 = vmul.f32 %v5577, 0.2
      %v5720 = vmul.f32 %v5582, 0.2
      %v5721 = vmul.f32 %v5587, 0.2
      %v5722 = vmul.f32 %v5592, 0.2
      %v5723 = vmul.f32 %v5597, 0.2
      %v5724 = vmul.f32 %v5602, 0.2
      %v5725 = vmul.f32 %v5607, 0.2
      %v5726 = vmul.f32 %v5612, 0.2
      %v5727 = vmul.f32 %v5617, 0.2
      %v5728 = vmul.f32 %v5622, 0.2
      %v5729 = vmul.f32 %v5627, 0.2
      %v5730 = vmul.f32 %v5632, 0.2
      %v5731 = vmul.f32 %v5637, 0.2
      %v5732 = vmul.f32 %v5642, 0.2
      %v5733 = vmul.f32 %v5647, 0.2
      %v5734 = vmul.f32 %v5652, 0.2
      %v5735 = vmul.f32 %v5657, 0.2
      %v5736 = vmul.f32 %v5662, 0.2
      %v5737 = vmul.f32 %v5667, 0.2
      %v5738 = vmul.f32 %v5672, 0.2
      %v5739 = vsel %vm5675, %v5517, %v5707
      %v5740 = vsel %vm5676, %v5522, %v5708
      %v5741 = vsel %vm5677, %v5527, %v5709
      %v5742 = vsel %vm5678, %v5532, %v5710
      %v5743 = vsel %vm5679, %v5537, %v5711
      %v5744 = vsel %vm5680, %v5542, %v5712
      %v5745 = vsel %vm5681, %v5547, %v5713
      %v5746 = vsel %vm5682, %v5552, %v5714
      %v5747 = vsel %vm5683, %v5557, %v5715
      %v5748 = vsel %vm5684, %v5562, %v5716
      %v5749 = vsel %vm5685, %v5567, %v5717
      %v5750 = vsel %vm5686, %v5572, %v5718
      %v5751 = vsel %vm5687, %v5577, %v5719
      %v5752 = vsel %vm5688, %v5582, %v5720
      %v5753 = vsel %vm5689, %v5587, %v5721
      %v5754 = vsel %vm5690, %v5592, %v5722
      %v5755 = vsel %vm5691, %v5597, %v5723
      %v5756 = vsel %vm5692, %v5602, %v5724
      %v5757 = vsel %vm5693, %v5607, %v5725
      %v5758 = vsel %vm5694, %v5612, %v5726
      %v5759 = vsel %vm5695, %v5617, %v5727
      %v5760 = vsel %vm5696, %v5622, %v5728
      %v5761 = vsel %vm5697, %v5627, %v5729
      %v5762 = vsel %vm5698, %v5632, %v5730
      %v5763 = vsel %vm5699, %v5637, %v5731
      %v5764 = vsel %vm5700, %v5642, %v5732
      %v5765 = vsel %vm5701, %v5647, %v5733
      %v5766 = vsel %vm5702, %v5652, %v5734
      %v5767 = vsel %vm5703, %v5657, %v5735
      %v5768 = vsel %vm5704, %v5662, %v5736
      %v5769 = vsel %vm5705, %v5667, %v5737
      %v5770 = vsel %vm5706, %v5672, %v5738
      %v5771 = vld [vmem:[%s9] sm:$0xff]
      %v5772 = vld [vmem:[%s9 + $0x8] sm:$0xff]
      %v5773 = vld [vmem:[%s9 + $0x10] sm:$0xff]
      %v5774 = vld [vmem:[%s9 + $0x18] sm:$0xff]
      %v5775 = vld [vmem:[%s9 + $0x20] sm:$0xff]
      %v5776 = vld [vmem:[%s9 + $0x28] sm:$0xff]
      %v5777 = vld [vmem:[%s9 + $0x30] sm:$0xff]
      %v5778 = vld [vmem:[%s9 + $0x38] sm:$0xff]
      %v5779 = vld [vmem:[%s9 + $0x40] sm:$0xff]
      %v5780 = vld [vmem:[%s9 + $0x48] sm:$0xff]
      %v5781 = vld [vmem:[%s9 + $0x50] sm:$0xff]
      %v5782 = vld [vmem:[%s9 + $0x58] sm:$0xff]
      %v5783 = vld [vmem:[%s9 + $0x60] sm:$0xff]
      %v5784 = vld [vmem:[%s9 + $0x68] sm:$0xff]
      %v5785 = vld [vmem:[%s9 + $0x70] sm:$0xff]
      %v5786 = vld [vmem:[%s9 + $0x78] sm:$0xff]
      %v5787 = vld [vmem:[%s9 + $0x80] sm:$0xff]
      %v5788 = vld [vmem:[%s9 + $0x88] sm:$0xff]
      %v5789 = vld [vmem:[%s9 + $0x90] sm:$0xff]
      %v5790 = vld [vmem:[%s9 + $0x98] sm:$0xff]
      %v5791 = vld [vmem:[%s9 + $0xa0] sm:$0xff]
      %v5792 = vld [vmem:[%s9 + $0xa8] sm:$0xff]
      %v5793 = vld [vmem:[%s9 + $0xb0] sm:$0xff]
      %v5794 = vld [vmem:[%s9 + $0xb8] sm:$0xff]
      %v5795 = vld [vmem:[%s9 + $0xc0] sm:$0xff]
      %v5796 = vld [vmem:[%s9 + $0xc8] sm:$0xff]
      %v5797 = vld [vmem:[%s9 + $0xd0] sm:$0xff]
      %v5798 = vld [vmem:[%s9 + $0xd8] sm:$0xff]
      %v5799 = vld [vmem:[%s9 + $0xe0] sm:$0xff]
      %v5800 = vld [vmem:[%s9 + $0xe8] sm:$0xff]
      %v5801 = vld [vmem:[%s9 + $0xf0] sm:$0xff]
      %v5802 = vld [vmem:[%s9 + $0xf8] sm:$0xff]
      %v5803 = vld [vmem:[%s9 + $0x100] sm:$0xff]
      %v5804 = vld [vmem:[%s9 + $0x108] sm:$0xff]
      %v5805 = vld [vmem:[%s9 + $0x110] sm:$0xff]
      %v5806 = vld [vmem:[%s9 + $0x118] sm:$0xff]
      %v5807 = vld [vmem:[%s10] sm:$0x1]
      %v5824 = vrot.slane %v5741, 1
      %v5825 = vrot.slane %v5739, 1
      %v5826 = vrot.slane %v5743, 1
      %v5827 = vrot.slane %v5745, 1
      %v5828 = vrot.slane %v5747, 1
      %v5829 = vrot.slane %v5749, 1
      %v5830 = vrot.slane %v5751, 1
      %v5831 = vrot.slane %v5753, 1
      %v5832 = vrot.slane %v5755, 1
      %v5833 = vrot.slane %v5757, 1
      %v5834 = vrot.slane %v5759, 1
      %v5835 = vrot.slane %v5761, 1
      %v5836 = vrot.slane %v5763, 1
      %v5837 = vrot.slane %v5765, 1
      %v5838 = vrot.slane %v5767, 1
      %v5839 = vrot.slane %v5769, 1
      %v5872 = vrot.slane %v5741, 7
      %v5873 = vrot.slane %v5742, 7
      %v5874 = vsel %vm689, %v5872, %v5873
      %v5875 = vrot.slane %v5739, 7
      %v5876 = vrot.slane %v5740, 7
      %v5877 = vsel %vm689, %v5875, %v5876
      %v5878 = vrot.slane %v5743, 7
      %v5879 = vrot.slane %v5744, 7
      %v5880 = vsel %vm689, %v5878, %v5879
      %v5881 = vrot.slane %v5745, 7
      %v5882 = vrot.slane %v5746, 7
      %v5883 = vsel %vm689, %v5881, %v5882
      %v5884 = vrot.slane %v5747, 7
      %v5885 = vrot.slane %v5748, 7
      %v5886 = vsel %vm689, %v5884, %v5885
      %v5887 = vrot.slane %v5749, 7
      %v5888 = vrot.slane %v5750, 7
      %v5889 = vsel %vm689, %v5887, %v5888
      %v5890 = vrot.slane %v5751, 7
      %v5891 = vrot.slane %v5752, 7
      %v5892 = vsel %vm689, %v5890, %v5891
      %v5893 = vrot.slane %v5753, 7
      %v5894 = vrot.slane %v5754, 7
      %v5895 = vsel %vm689, %v5893, %v5894
      %v5896 = vrot.slane %v5755, 7
      %v5897 = vrot.slane %v5756, 7
      %v5898 = vsel %vm689, %v5896, %v5897
      %v5899 = vrot.slane %v5757, 7
      %v5900 = vrot.slane %v5758, 7
      %v5901 = vsel %vm689, %v5899, %v5900
      %v5902 = vrot.slane %v5759, 7
      %v5903 = vrot.slane %v5760, 7
      %v5904 = vsel %vm689, %v5902, %v5903
      %v5905 = vrot.slane %v5761, 7
      %v5906 = vrot.slane %v5762, 7
      %v5907 = vsel %vm689, %v5905, %v5906
      %v5908 = vrot.slane %v5763, 7
      %v5909 = vrot.slane %v5764, 7
      %v5910 = vsel %vm689, %v5908, %v5909
      %v5911 = vrot.slane %v5765, 7
      %v5912 = vrot.slane %v5766, 7
      %v5913 = vsel %vm689, %v5911, %v5912
      %v5914 = vrot.slane %v5767, 7
      %v5915 = vrot.slane %v5768, 7
      %v5916 = vsel %vm689, %v5914, %v5915
      %v5917 = vrot.slane %v5769, 7
      %v5918 = vrot.slane %v5770, 7
      %v5919 = vsel %vm689, %v5917, %v5918
      %v5967 = vrot.slane %v5742, 5
      %v5968 = vrot.slane %v5740, 5
      %v5969 = vrot.slane %v5744, 5
      %v5970 = vrot.slane %v5746, 5
      %v5971 = vrot.slane %v5748, 5
      %v5972 = vrot.slane %v5750, 5
      %v5973 = vrot.slane %v5752, 5
      %v5974 = vrot.slane %v5754, 5
      %v5975 = vrot.slane %v5756, 5
      %v5976 = vrot.slane %v5758, 5
      %v5977 = vrot.slane %v5760, 5
      %v5978 = vrot.slane %v5762, 5
      %v5979 = vrot.slane %v5764, 5
      %v5980 = vrot.slane %v5766, 5
      %v5981 = vrot.slane %v5768, 5
      %v5982 = vrot.slane %v5770, 5
      %v5999 = vsel %vm689, %v5824, %v5872
      %v6000 = vsel %vm689, %v5825, %v5875
      %v6001 = vsel %vm689, %v5826, %v5878
      %v6002 = vsel %vm689, %v5827, %v5881
      %v6003 = vsel %vm689, %v5828, %v5884
      %v6004 = vsel %vm689, %v5829, %v5887
      %v6005 = vsel %vm689, %v5830, %v5890
      %v6006 = vsel %vm689, %v5831, %v5893
      %v6007 = vsel %vm689, %v5832, %v5896
      %v6008 = vsel %vm689, %v5833, %v5899
      %v6009 = vsel %vm689, %v5834, %v5902
      %v6010 = vsel %vm689, %v5835, %v5905
      %v6011 = vsel %vm689, %v5836, %v5908
      %v6012 = vsel %vm689, %v5837, %v5911
      %v6013 = vsel %vm689, %v5838, %v5914
      %v6014 = vsel %vm689, %v5839, %v5917
      %v6015 = vsel %vm689, %v5873, %v5967
      %v6016 = vsel %vm689, %v5876, %v5968
      %v6017 = vsel %vm689, %v5879, %v5969
      %v6018 = vsel %vm689, %v5882, %v5970
      %v6019 = vsel %vm689, %v5885, %v5971
      %v6020 = vsel %vm689, %v5888, %v5972
      %v6021 = vsel %vm689, %v5891, %v5973
      %v6022 = vsel %vm689, %v5894, %v5974
      %v6023 = vsel %vm689, %v5897, %v5975
      %v6024 = vsel %vm689, %v5900, %v5976
      %v6025 = vsel %vm689, %v5903, %v5977
      %v6026 = vsel %vm689, %v5906, %v5978
      %v6027 = vsel %vm689, %v5909, %v5979
      %v6028 = vsel %vm689, %v5912, %v5980
      %v6029 = vsel %vm689, %v5915, %v5981
      %v6030 = vsel %vm689, %v5918, %v5982
      %v6061 = vrot.slane %v5999, 1
      %v6062 = vrot.slane %v5874, 1
      %v6063 = vsel %vm879, %v6061, %v6062
      %v6064 = vrot.slane %v6015, 1
      %v6065 = vsel %vm879, %v6062, %v6064
      %v6066 = vrot.slane %v6000, 1
      %v6067 = vrot.slane %v5877, 1
      %v6068 = vsel %vm879, %v6066, %v6067
      %v6069 = vrot.slane %v6016, 1
      %v6070 = vsel %vm879, %v6067, %v6069
      %v6071 = vrot.slane %v6001, 1
      %v6072 = vrot.slane %v5880, 1
      %v6073 = vsel %vm879, %v6071, %v6072
      %v6074 = vrot.slane %v6017, 1
      %v6075 = vsel %vm879, %v6072, %v6074
      %v6076 = vrot.slane %v6002, 1
      %v6077 = vrot.slane %v5883, 1
      %v6078 = vsel %vm879, %v6076, %v6077
      %v6079 = vrot.slane %v6018, 1
      %v6080 = vsel %vm879, %v6077, %v6079
      %v6081 = vrot.slane %v6003, 1
      %v6082 = vrot.slane %v5886, 1
      %v6083 = vsel %vm879, %v6081, %v6082
      %v6084 = vrot.slane %v6019, 1
      %v6085 = vsel %vm879, %v6082, %v6084
      %v6086 = vrot.slane %v6004, 1
      %v6087 = vrot.slane %v5889, 1
      %v6088 = vsel %vm879, %v6086, %v6087
      %v6089 = vrot.slane %v6020, 1
      %v6090 = vsel %vm879, %v6087, %v6089
      %v6091 = vrot.slane %v6005, 1
      %v6092 = vrot.slane %v5892, 1
      %v6093 = vsel %vm879, %v6091, %v6092
      %v6094 = vrot.slane %v6021, 1
      %v6095 = vsel %vm879, %v6092, %v6094
      %v6096 = vrot.slane %v6006, 1
      %v6097 = vrot.slane %v5895, 1
      %v6098 = vsel %vm879, %v6096, %v6097
      %v6099 = vrot.slane %v6022, 1
      %v6100 = vsel %vm879, %v6097, %v6099
      %v6101 = vrot.slane %v6007, 1
      %v6102 = vrot.slane %v5898, 1
      %v6103 = vsel %vm879, %v6101, %v6102
      %v6104 = vrot.slane %v6023, 1
      %v6105 = vsel %vm879, %v6102, %v6104
      %v6106 = vrot.slane %v6008, 1
      %v6107 = vrot.slane %v5901, 1
      %v6108 = vsel %vm879, %v6106, %v6107
      %v6109 = vrot.slane %v6024, 1
      %v6110 = vsel %vm879, %v6107, %v6109
      %v6111 = vrot.slane %v6009, 1
      %v6112 = vrot.slane %v5904, 1
      %v6113 = vsel %vm879, %v6111, %v6112
      %v6114 = vrot.slane %v6025, 1
      %v6115 = vsel %vm879, %v6112, %v6114
      %v6116 = vrot.slane %v6010, 1
      %v6117 = vrot.slane %v5907, 1
      %v6118 = vsel %vm879, %v6116, %v6117
      %v6119 = vrot.slane %v6026, 1
      %v6120 = vsel %vm879, %v6117, %v6119
      %v6121 = vrot.slane %v6011, 1
      %v6122 = vrot.slane %v5910, 1
      %v6123 = vsel %vm879, %v6121, %v6122
      %v6124 = vrot.slane %v6027, 1
      %v6125 = vsel %vm879, %v6122, %v6124
      %v6126 = vrot.slane %v6012, 1
      %v6127 = vrot.slane %v5913, 1
      %v6128 = vsel %vm879, %v6126, %v6127
      %v6129 = vrot.slane %v6028, 1
      %v6130 = vsel %vm879, %v6127, %v6129
      %v6131 = vrot.slane %v6013, 1
      %v6132 = vrot.slane %v5916, 1
      %v6133 = vsel %vm879, %v6131, %v6132
      %v6134 = vrot.slane %v6029, 1
      %v6135 = vsel %vm879, %v6132, %v6134
      %v6136 = vrot.slane %v5999, 2
      %v6137 = vrot.slane %v5874, 2
      %v6138 = vsel %vm955, %v6136, %v6137
      %v6139 = vrot.slane %v6015, 2
      %v6140 = vsel %vm955, %v6137, %v6139
      %v6141 = vrot.slane %v6000, 2
      %v6142 = vrot.slane %v5877, 2
      %v6143 = vsel %vm955, %v6141, %v6142
      %v6144 = vrot.slane %v6016, 2
      %v6145 = vsel %vm955, %v6142, %v6144
      %v6146 = vrot.slane %v6001, 2
      %v6147 = vrot.slane %v5880, 2
      %v6148 = vsel %vm955, %v6146, %v6147
      %v6149 = vrot.slane %v6017, 2
      %v6150 = vsel %vm955, %v6147, %v6149
      %v6151 = vrot.slane %v6002, 2
      %v6152 = vrot.slane %v5883, 2
      %v6153 = vsel %vm955, %v6151, %v6152
      %v6154 = vrot.slane %v6018, 2
      %v6155 = vsel %vm955, %v6152, %v6154
      %v6156 = vrot.slane %v6003, 2
      %v6157 = vrot.slane %v5886, 2
      %v6158 = vsel %vm955, %v6156, %v6157
      %v6159 = vrot.slane %v6019, 2
      %v6160 = vsel %vm955, %v6157, %v6159
      %v6161 = vrot.slane %v6004, 2
      %v6162 = vrot.slane %v5889, 2
      %v6163 = vsel %vm955, %v6161, %v6162
      %v6164 = vrot.slane %v6020, 2
      %v6165 = vsel %vm955, %v6162, %v6164
      %v6166 = vrot.slane %v6005, 2
      %v6167 = vrot.slane %v5892, 2
      %v6168 = vsel %vm955, %v6166, %v6167
      %v6169 = vrot.slane %v6021, 2
      %v6170 = vsel %vm955, %v6167, %v6169
      %v6171 = vrot.slane %v6006, 2
      %v6172 = vrot.slane %v5895, 2
      %v6173 = vsel %vm955, %v6171, %v6172
      %v6174 = vrot.slane %v6022, 2
      %v6175 = vsel %vm955, %v6172, %v6174
      %v6176 = vrot.slane %v6007, 2
      %v6177 = vrot.slane %v5898, 2
      %v6178 = vsel %vm955, %v6176, %v6177
      %v6179 = vrot.slane %v6023, 2
      %v6180 = vsel %vm955, %v6177, %v6179
      %v6181 = vrot.slane %v6008, 2
      %v6182 = vrot.slane %v5901, 2
      %v6183 = vsel %vm955, %v6181, %v6182
      %v6184 = vrot.slane %v6024, 2
      %v6185 = vsel %vm955, %v6182, %v6184
      %v6186 = vrot.slane %v6009, 2
      %v6187 = vrot.slane %v5904, 2
      %v6188 = vsel %vm955, %v6186, %v6187
      %v6189 = vrot.slane %v6025, 2
      %v6190 = vsel %vm955, %v6187, %v6189
      %v6191 = vrot.slane %v6010, 2
      %v6192 = vrot.slane %v5907, 2
      %v6193 = vsel %vm955, %v6191, %v6192
      %v6194 = vrot.slane %v6026, 2
      %v6195 = vsel %vm955, %v6192, %v6194
      %v6196 = vrot.slane %v6011, 2
      %v6197 = vrot.slane %v5910, 2
      %v6198 = vsel %vm955, %v6196, %v6197
      %v6199 = vrot.slane %v6027, 2
      %v6200 = vsel %vm955, %v6197, %v6199
      %v6201 = vrot.slane %v6012, 2
      %v6202 = vrot.slane %v5913, 2
      %v6203 = vsel %vm955, %v6201, %v6202
      %v6204 = vrot.slane %v6028, 2
      %v6205 = vsel %vm955, %v6202, %v6204
      %v6206 = vrot.slane %v6013, 2
      %v6207 = vrot.slane %v5916, 2
      %v6208 = vsel %vm955, %v6206, %v6207
      %v6209 = vrot.slane %v6029, 2
      %v6210 = vsel %vm955, %v6207, %v6209
      %v6213 = vrot.slane %v6014, 1
      %v6214 = vrot.slane %v5919, 1
      %v6215 = vsel %vm879, %v6213, %v6214
      %v6216 = vrot.slane %v6030, 1
      %v6217 = vsel %vm879, %v6214, %v6216
      %v6250 = vrot.slane %v6014, 2
      %v6251 = vrot.slane %v5919, 2
      %v6252 = vsel %vm955, %v6250, %v6251
      %v6253 = vrot.slane %v6030, 2
      %v6254 = vsel %vm955, %v6251, %v6253
      %6255 = vrot.lane.b32.xlu0 %v6063, 32
      %v6256 = vpop.permute.xlu0 %6255
      %6257 = vrot.lane.b32.xlu0 %v6065, 32
      %v6258 = vpop.permute.xlu0 %6257
      %6259 = vrot.lane.b32.xlu0 %v6068, 32
      %v6260 = vpop.permute.xlu0 %6259
      %6261 = vrot.lane.b32.xlu0 %v6070, 32
      %v6262 = vpop.permute.xlu0 %6261
      %6263 = vrot.lane.b32.xlu0 %v6073, 32
      %v6264 = vpop.permute.xlu0 %6263
      %6265 = vrot.lane.b32.xlu0 %v6075, 32
      %v6266 = vpop.permute.xlu0 %6265
      %6267 = vrot.lane.b32.xlu0 %v6078, 32
      %v6268 = vpop.permute.xlu0 %6267
      %6269 = vrot.lane.b32.xlu0 %v6080, 32
      %v6270 = vpop.permute.xlu0 %6269
      %6271 = vrot.lane.b32.xlu0 %v6083, 32
      %v6272 = vpop.permute.xlu0 %6271
      %6273 = vrot.lane.b32.xlu0 %v6085, 32
      %v6274 = vpop.permute.xlu0 %6273
      %6275 = vrot.lane.b32.xlu0 %v6088, 32
      %v6276 = vpop.permute.xlu0 %6275
      %6277 = vrot.lane.b32.xlu0 %v6090, 32
      %v6278 = vpop.permute.xlu0 %6277
      %6279 = vrot.lane.b32.xlu0 %v6093, 32
      %v6280 = vpop.permute.xlu0 %6279
      %6281 = vrot.lane.b32.xlu0 %v6095, 32
      %v6282 = vpop.permute.xlu0 %6281
      %6283 = vrot.lane.b32.xlu0 %v6098, 32
      %v6284 = vpop.permute.xlu0 %6283
      %6285 = vrot.lane.b32.xlu0 %v6100, 32
      %v6286 = vpop.permute.xlu0 %6285
      %6287 = vrot.lane.b32.xlu0 %v6103, 32
      %v6288 = vpop.permute.xlu0 %6287
      %6289 = vrot.lane.b32.xlu0 %v6105, 32
      %v6290 = vpop.permute.xlu0 %6289
      %6291 = vrot.lane.b32.xlu0 %v6108, 32
      %v6292 = vpop.permute.xlu0 %6291
      %6293 = vrot.lane.b32.xlu0 %v6110, 32
      %v6294 = vpop.permute.xlu0 %6293
      %6295 = vrot.lane.b32.xlu0 %v6113, 32
      %v6296 = vpop.permute.xlu0 %6295
      %6297 = vrot.lane.b32.xlu0 %v6115, 32
      %v6298 = vpop.permute.xlu0 %6297
      %6299 = vrot.lane.b32.xlu0 %v6118, 32
      %v6300 = vpop.permute.xlu0 %6299
      %6301 = vrot.lane.b32.xlu0 %v6120, 32
      %v6302 = vpop.permute.xlu0 %6301
      %6303 = vrot.lane.b32.xlu0 %v6123, 32
      %v6304 = vpop.permute.xlu0 %6303
      %6305 = vrot.lane.b32.xlu0 %v6125, 32
      %v6306 = vpop.permute.xlu0 %6305
      %6307 = vrot.lane.b32.xlu0 %v6128, 32
      %v6308 = vpop.permute.xlu0 %6307
      %6309 = vrot.lane.b32.xlu0 %v6130, 32
      %v6310 = vpop.permute.xlu0 %6309
      %6311 = vrot.lane.b32.xlu0 %v6133, 32
      %v6312 = vpop.permute.xlu0 %6311
      %6313 = vrot.lane.b32.xlu0 %v6135, 32
      %v6314 = vpop.permute.xlu0 %6313
      %6345 = vrot.lane.b32.xlu0 %v6138, 64
      %v6346 = vpop.permute.xlu0 %6345
      %6347 = vrot.lane.b32.xlu0 %v6140, 64
      %v6348 = vpop.permute.xlu0 %6347
      %6349 = vrot.lane.b32.xlu0 %v6143, 64
      %v6350 = vpop.permute.xlu0 %6349
      %6351 = vrot.lane.b32.xlu0 %v6145, 64
      %v6352 = vpop.permute.xlu0 %6351
      %6353 = vrot.lane.b32.xlu0 %v6148, 64
      %v6354 = vpop.permute.xlu0 %6353
      %6355 = vrot.lane.b32.xlu0 %v6150, 64
      %v6356 = vpop.permute.xlu0 %6355
      %6357 = vrot.lane.b32.xlu0 %v6153, 64
      %v6358 = vpop.permute.xlu0 %6357
      %6359 = vrot.lane.b32.xlu0 %v6155, 64
      %v6360 = vpop.permute.xlu0 %6359
      %6361 = vrot.lane.b32.xlu0 %v6158, 64
      %v6362 = vpop.permute.xlu0 %6361
      %6363 = vrot.lane.b32.xlu0 %v6160, 64
      %v6364 = vpop.permute.xlu0 %6363
      %6365 = vrot.lane.b32.xlu0 %v6163, 64
      %v6366 = vpop.permute.xlu0 %6365
      %6367 = vrot.lane.b32.xlu0 %v6165, 64
      %v6368 = vpop.permute.xlu0 %6367
      %6369 = vrot.lane.b32.xlu0 %v6168, 64
      %v6370 = vpop.permute.xlu0 %6369
      %6371 = vrot.lane.b32.xlu0 %v6170, 64
      %v6372 = vpop.permute.xlu0 %6371
      %6373 = vrot.lane.b32.xlu0 %v6173, 64
      %v6374 = vpop.permute.xlu0 %6373
      %6375 = vrot.lane.b32.xlu0 %v6175, 64
      %v6376 = vpop.permute.xlu0 %6375
      %6377 = vrot.lane.b32.xlu0 %v6178, 64
      %v6378 = vpop.permute.xlu0 %6377
      %6379 = vrot.lane.b32.xlu0 %v6180, 64
      %v6380 = vpop.permute.xlu0 %6379
      %6381 = vrot.lane.b32.xlu0 %v6183, 64
      %v6382 = vpop.permute.xlu0 %6381
      %6383 = vrot.lane.b32.xlu0 %v6185, 64
      %v6384 = vpop.permute.xlu0 %6383
      %6385 = vrot.lane.b32.xlu0 %v6188, 64
      %v6386 = vpop.permute.xlu0 %6385
      %6387 = vrot.lane.b32.xlu0 %v6190, 64
      %v6388 = vpop.permute.xlu0 %6387
      %6389 = vrot.lane.b32.xlu0 %v6193, 64
      %v6390 = vpop.permute.xlu0 %6389
      %6391 = vrot.lane.b32.xlu0 %v6195, 64
      %v6392 = vpop.permute.xlu0 %6391
      %6393 = vrot.lane.b32.xlu0 %v6198, 64
      %v6394 = vpop.permute.xlu0 %6393
      %6395 = vrot.lane.b32.xlu0 %v6200, 64
      %v6396 = vpop.permute.xlu0 %6395
      %6397 = vrot.lane.b32.xlu0 %v6203, 64
      %v6398 = vpop.permute.xlu0 %6397
      %6399 = vrot.lane.b32.xlu0 %v6205, 64
      %v6400 = vpop.permute.xlu0 %6399
      %6401 = vrot.lane.b32.xlu0 %v6208, 64
      %v6402 = vpop.permute.xlu0 %6401
      %6403 = vrot.lane.b32.xlu0 %v6210, 64
      %v6404 = vpop.permute.xlu0 %6403
      %6435 = vrot.lane.b32.xlu0 %v6000, 96
      %v6436 = vpop.permute.xlu0 %6435
      %6437 = vrot.lane.b32.xlu0 %v5877, 96
      %v6438 = vpop.permute.xlu0 %6437
      %6439 = vrot.lane.b32.xlu0 %v5999, 96
      %v6440 = vpop.permute.xlu0 %6439
      %6441 = vrot.lane.b32.xlu0 %v5874, 96
      %v6442 = vpop.permute.xlu0 %6441
      %6443 = vrot.lane.b32.xlu0 %v6001, 96
      %v6444 = vpop.permute.xlu0 %6443
      %6445 = vrot.lane.b32.xlu0 %v5880, 96
      %v6446 = vpop.permute.xlu0 %6445
      %6447 = vrot.lane.b32.xlu0 %v6002, 96
      %v6448 = vpop.permute.xlu0 %6447
      %6449 = vrot.lane.b32.xlu0 %v5883, 96
      %v6450 = vpop.permute.xlu0 %6449
      %6451 = vrot.lane.b32.xlu0 %v6003, 96
      %v6452 = vpop.permute.xlu0 %6451
      %6453 = vrot.lane.b32.xlu0 %v5886, 96
      %v6454 = vpop.permute.xlu0 %6453
      %6455 = vrot.lane.b32.xlu0 %v6004, 96
      %v6456 = vpop.permute.xlu0 %6455
      %6457 = vrot.lane.b32.xlu0 %v5889, 96
      %v6458 = vpop.permute.xlu0 %6457
      %6459 = vrot.lane.b32.xlu0 %v6005, 96
      %v6460 = vpop.permute.xlu0 %6459
      %6461 = vrot.lane.b32.xlu0 %v5892, 96
      %v6462 = vpop.permute.xlu0 %6461
      %6463 = vrot.lane.b32.xlu0 %v6006, 96
      %v6464 = vpop.permute.xlu0 %6463
      %6465 = vrot.lane.b32.xlu0 %v5895, 96
      %v6466 = vpop.permute.xlu0 %6465
      %6467 = vrot.lane.b32.xlu0 %v6007, 96
      %v6468 = vpop.permute.xlu0 %6467
      %6469 = vrot.lane.b32.xlu0 %v5898, 96
      %v6470 = vpop.permute.xlu0 %6469
      %6471 = vrot.lane.b32.xlu0 %v6008, 96
      %v6472 = vpop.permute.xlu0 %6471
      %6473 = vrot.lane.b32.xlu0 %v5901, 96
      %v6474 = vpop.permute.xlu0 %6473
      %6475 = vrot.lane.b32.xlu0 %v6009, 96
      %v6476 = vpop.permute.xlu0 %6475
      %6477 = vrot.lane.b32.xlu0 %v5904, 96
      %v6478 = vpop.permute.xlu0 %6477
      %6479 = vrot.lane.b32.xlu0 %v6010, 96
      %v6480 = vpop.permute.xlu0 %6479
      %6481 = vrot.lane.b32.xlu0 %v5907, 96
      %v6482 = vpop.permute.xlu0 %6481
      %6483 = vrot.lane.b32.xlu0 %v6011, 96
      %v6484 = vpop.permute.xlu0 %6483
      %6485 = vrot.lane.b32.xlu0 %v5910, 96
      %v6486 = vpop.permute.xlu0 %6485
      %6487 = vrot.lane.b32.xlu0 %v6012, 96
      %v6488 = vpop.permute.xlu0 %6487
      %6489 = vrot.lane.b32.xlu0 %v5913, 96
      %v6490 = vpop.permute.xlu0 %6489
      %6491 = vrot.lane.b32.xlu0 %v6013, 96
      %v6492 = vpop.permute.xlu0 %6491
      %6493 = vrot.lane.b32.xlu0 %v5916, 96
      %v6494 = vpop.permute.xlu0 %6493
      %6495 = vrot.lane.b32.xlu0 %v6014, 96
      %v6496 = vpop.permute.xlu0 %6495
      %6497 = vrot.lane.b32.xlu0 %v5919, 96
      %v6498 = vpop.permute.xlu0 %6497
      %6531 = vrot.lane.b32.xlu0 %v6143, 32
      %v6532 = vpop.permute.xlu0 %6531
      %6533 = vrot.lane.b32.xlu0 %v6145, 32
      %v6534 = vpop.permute.xlu0 %6533
      %6535 = vrot.lane.b32.xlu0 %v6138, 32
      %v6536 = vpop.permute.xlu0 %6535
      %6537 = vrot.lane.b32.xlu0 %v6140, 32
      %v6538 = vpop.permute.xlu0 %6537
      %6539 = vrot.lane.b32.xlu0 %v6148, 32
      %v6540 = vpop.permute.xlu0 %6539
      %6541 = vrot.lane.b32.xlu0 %v6150, 32
      %v6542 = vpop.permute.xlu0 %6541
      %6543 = vrot.lane.b32.xlu0 %v6153, 32
      %v6544 = vpop.permute.xlu0 %6543
      %6545 = vrot.lane.b32.xlu0 %v6155, 32
      %v6546 = vpop.permute.xlu0 %6545
      %6547 = vrot.lane.b32.xlu0 %v6158, 32
      %v6548 = vpop.permute.xlu0 %6547
      %6549 = vrot.lane.b32.xlu0 %v6160, 32
      %v6550 = vpop.permute.xlu0 %6549
      %6551 = vrot.lane.b32.xlu0 %v6163, 32
      %v6552 = vpop.permute.xlu0 %6551
      %6553 = vrot.lane.b32.xlu0 %v6165, 32
      %v6554 = vpop.permute.xlu0 %6553
      %6555 = vrot.lane.b32.xlu0 %v6168, 32
      %v6556 = vpop.permute.xlu0 %6555
      %6557 = vrot.lane.b32.xlu0 %v6170, 32
      %v6558 = vpop.permute.xlu0 %6557
      %6559 = vrot.lane.b32.xlu0 %v6173, 32
      %v6560 = vpop.permute.xlu0 %6559
      %6561 = vrot.lane.b32.xlu0 %v6175, 32
      %v6562 = vpop.permute.xlu0 %6561
      %6563 = vrot.lane.b32.xlu0 %v6178, 32
      %v6564 = vpop.permute.xlu0 %6563
      %6565 = vrot.lane.b32.xlu0 %v6180, 32
      %v6566 = vpop.permute.xlu0 %6565
      %6567 = vrot.lane.b32.xlu0 %v6183, 32
      %v6568 = vpop.permute.xlu0 %6567
      %6569 = vrot.lane.b32.xlu0 %v6185, 32
      %v6570 = vpop.permute.xlu0 %6569
      %6571 = vrot.lane.b32.xlu0 %v6188, 32
      %v6572 = vpop.permute.xlu0 %6571
      %6573 = vrot.lane.b32.xlu0 %v6190, 32
      %v6574 = vpop.permute.xlu0 %6573
      %6575 = vrot.lane.b32.xlu0 %v6193, 32
      %v6576 = vpop.permute.xlu0 %6575
      %6577 = vrot.lane.b32.xlu0 %v6195, 32
      %v6578 = vpop.permute.xlu0 %6577
      %6579 = vrot.lane.b32.xlu0 %v6198, 32
      %v6580 = vpop.permute.xlu0 %6579
      %6581 = vrot.lane.b32.xlu0 %v6200, 32
      %v6582 = vpop.permute.xlu0 %6581
      %6583 = vrot.lane.b32.xlu0 %v6203, 32
      %v6584 = vpop.permute.xlu0 %6583
      %6585 = vrot.lane.b32.xlu0 %v6205, 32
      %v6586 = vpop.permute.xlu0 %6585
      %6587 = vrot.lane.b32.xlu0 %v6208, 32
      %v6588 = vpop.permute.xlu0 %6587
      %6589 = vrot.lane.b32.xlu0 %v6210, 32
      %v6590 = vpop.permute.xlu0 %6589
      %6591 = vrot.lane.b32.xlu0 %v6252, 32
      %v6592 = vpop.permute.xlu0 %6591
      %6593 = vrot.lane.b32.xlu0 %v6254, 32
      %v6594 = vpop.permute.xlu0 %6593
      %6627 = vrot.lane.b32.xlu0 %v5999, 64
      %v6628 = vpop.permute.xlu0 %6627
      %6629 = vrot.lane.b32.xlu0 %v5874, 64
      %v6630 = vpop.permute.xlu0 %6629
      %6631 = vrot.lane.b32.xlu0 %v6001, 64
      %v6632 = vpop.permute.xlu0 %6631
      %6633 = vrot.lane.b32.xlu0 %v5880, 64
      %v6634 = vpop.permute.xlu0 %6633
      %6635 = vrot.lane.b32.xlu0 %v6002, 64
      %v6636 = vpop.permute.xlu0 %6635
      %6637 = vrot.lane.b32.xlu0 %v5883, 64
      %v6638 = vpop.permute.xlu0 %6637
      %6639 = vrot.lane.b32.xlu0 %v6003, 64
      %v6640 = vpop.permute.xlu0 %6639
      %6641 = vrot.lane.b32.xlu0 %v5886, 64
      %v6642 = vpop.permute.xlu0 %6641
      %6643 = vrot.lane.b32.xlu0 %v6004, 64
      %v6644 = vpop.permute.xlu0 %6643
      %6645 = vrot.lane.b32.xlu0 %v5889, 64
      %v6646 = vpop.permute.xlu0 %6645
      %6647 = vrot.lane.b32.xlu0 %v6005, 64
      %v6648 = vpop.permute.xlu0 %6647
      %6649 = vrot.lane.b32.xlu0 %v5892, 64
      %v6650 = vpop.permute.xlu0 %6649
      %6651 = vrot.lane.b32.xlu0 %v6006, 64
      %v6652 = vpop.permute.xlu0 %6651
      %6653 = vrot.lane.b32.xlu0 %v5895, 64
      %v6654 = vpop.permute.xlu0 %6653
      %6655 = vrot.lane.b32.xlu0 %v6007, 64
      %v6656 = vpop.permute.xlu0 %6655
      %6657 = vrot.lane.b32.xlu0 %v5898, 64
      %v6658 = vpop.permute.xlu0 %6657
      %6659 = vrot.lane.b32.xlu0 %v6008, 64
      %v6660 = vpop.permute.xlu0 %6659
      %6661 = vrot.lane.b32.xlu0 %v5901, 64
      %v6662 = vpop.permute.xlu0 %6661
      %6663 = vrot.lane.b32.xlu0 %v6009, 64
      %v6664 = vpop.permute.xlu0 %6663
      %6665 = vrot.lane.b32.xlu0 %v5904, 64
      %v6666 = vpop.permute.xlu0 %6665
      %6667 = vrot.lane.b32.xlu0 %v6010, 64
      %v6668 = vpop.permute.xlu0 %6667
      %6669 = vrot.lane.b32.xlu0 %v5907, 64
      %v6670 = vpop.permute.xlu0 %6669
      %6671 = vrot.lane.b32.xlu0 %v6011, 64
      %v6672 = vpop.permute.xlu0 %6671
      %6673 = vrot.lane.b32.xlu0 %v5910, 64
      %v6674 = vpop.permute.xlu0 %6673
      %6675 = vrot.lane.b32.xlu0 %v6012, 64
      %v6676 = vpop.permute.xlu0 %6675
      %6677 = vrot.lane.b32.xlu0 %v5913, 64
      %v6678 = vpop.permute.xlu0 %6677
      %6679 = vrot.lane.b32.xlu0 %v6013, 64
      %v6680 = vpop.permute.xlu0 %6679
      %6681 = vrot.lane.b32.xlu0 %v5916, 64
      %v6682 = vpop.permute.xlu0 %6681
      %6683 = vrot.lane.b32.xlu0 %v6014, 64
      %v6684 = vpop.permute.xlu0 %6683
      %6685 = vrot.lane.b32.xlu0 %v5919, 64
      %v6686 = vpop.permute.xlu0 %6685
      %6717 = vrot.lane.b32.xlu0 %v6063, 96
      %v6718 = vpop.permute.xlu0 %6717
      %6719 = vrot.lane.b32.xlu0 %v6065, 96
      %v6720 = vpop.permute.xlu0 %6719
      %6721 = vrot.lane.b32.xlu0 %v6073, 96
      %v6722 = vpop.permute.xlu0 %6721
      %6723 = vrot.lane.b32.xlu0 %v6075, 96
      %v6724 = vpop.permute.xlu0 %6723
      %6725 = vrot.lane.b32.xlu0 %v6078, 96
      %v6726 = vpop.permute.xlu0 %6725
      %6727 = vrot.lane.b32.xlu0 %v6080, 96
      %v6728 = vpop.permute.xlu0 %6727
      %6729 = vrot.lane.b32.xlu0 %v6083, 96
      %v6730 = vpop.permute.xlu0 %6729
      %6731 = vrot.lane.b32.xlu0 %v6085, 96
      %v6732 = vpop.permute.xlu0 %6731
      %6733 = vrot.lane.b32.xlu0 %v6088, 96
      %v6734 = vpop.permute.xlu0 %6733
      %6735 = vrot.lane.b32.xlu0 %v6090, 96
      %v6736 = vpop.permute.xlu0 %6735
      %6737 = vrot.lane.b32.xlu0 %v6093, 96
      %v6738 = vpop.permute.xlu0 %6737
      %6739 = vrot.lane.b32.xlu0 %v6095, 96
      %v6740 = vpop.permute.xlu0 %6739
      %6741 = vrot.lane.b32.xlu0 %v6098, 96
      %v6742 = vpop.permute.xlu0 %6741
      %6743 = vrot.lane.b32.xlu0 %v6100, 96
      %v6744 = vpop.permute.xlu0 %6743
      %6745 = vrot.lane.b32.xlu0 %v6103, 96
      %v6746 = vpop.permute.xlu0 %6745
      %6747 = vrot.lane.b32.xlu0 %v6105, 96
      %v6748 = vpop.permute.xlu0 %6747
      %6749 = vrot.lane.b32.xlu0 %v6108, 96
      %v6750 = vpop.permute.xlu0 %6749
      %6751 = vrot.lane.b32.xlu0 %v6110, 96
      %v6752 = vpop.permute.xlu0 %6751
      %6753 = vrot.lane.b32.xlu0 %v6113, 96
      %v6754 = vpop.permute.xlu0 %6753
      %6755 = vrot.lane.b32.xlu0 %v6115, 96
      %v6756 = vpop.permute.xlu0 %6755
      %6757 = vrot.lane.b32.xlu0 %v6118, 96
      %v6758 = vpop.permute.xlu0 %6757
      %6759 = vrot.lane.b32.xlu0 %v6120, 96
      %v6760 = vpop.permute.xlu0 %6759
      %6761 = vrot.lane.b32.xlu0 %v6123, 96
      %v6762 = vpop.permute.xlu0 %6761
      %6763 = vrot.lane.b32.xlu0 %v6125, 96
      %v6764 = vpop.permute.xlu0 %6763
      %6765 = vrot.lane.b32.xlu0 %v6128, 96
      %v6766 = vpop.permute.xlu0 %6765
      %6767 = vrot.lane.b32.xlu0 %v6130, 96
      %v6768 = vpop.permute.xlu0 %6767
      %6769 = vrot.lane.b32.xlu0 %v6133, 96
      %v6770 = vpop.permute.xlu0 %6769
      %6771 = vrot.lane.b32.xlu0 %v6135, 96
      %v6772 = vpop.permute.xlu0 %6771
      %6773 = vrot.lane.b32.xlu0 %v6215, 96
      %v6774 = vpop.permute.xlu0 %6773
      %6775 = vrot.lane.b32.xlu0 %v6217, 96
      %v6776 = vpop.permute.xlu0 %6775
      %v6807 = vsel %vm1876, %v5999, %v6256
      %v6808 = vsel %vm1876, %v5874, %v6258
      %v6809 = vsel %vm1876, %v6000, %v6260
      %v6810 = vsel %vm1876, %v5877, %v6262
      %v6811 = vsel %vm1876, %v6001, %v6264
      %v6812 = vsel %vm1876, %v5880, %v6266
      %v6813 = vsel %vm1876, %v6002, %v6268
      %v6814 = vsel %vm1876, %v5883, %v6270
      %v6815 = vsel %vm1876, %v6003, %v6272
      %v6816 = vsel %vm1876, %v5886, %v6274
      %v6817 = vsel %vm1876, %v6004, %v6276
      %v6818 = vsel %vm1876, %v5889, %v6278
      %v6819 = vsel %vm1876, %v6005, %v6280
      %v6820 = vsel %vm1876, %v5892, %v6282
      %v6821 = vsel %vm1876, %v6006, %v6284
      %v6822 = vsel %vm1876, %v5895, %v6286
      %v6823 = vsel %vm1876, %v6007, %v6288
      %v6824 = vsel %vm1876, %v5898, %v6290
      %v6825 = vsel %vm1876, %v6008, %v6292
      %v6826 = vsel %vm1876, %v5901, %v6294
      %v6827 = vsel %vm1876, %v6009, %v6296
      %v6828 = vsel %vm1876, %v5904, %v6298
      %v6829 = vsel %vm1876, %v6010, %v6300
      %v6830 = vsel %vm1876, %v5907, %v6302
      %v6831 = vsel %vm1876, %v6011, %v6304
      %v6832 = vsel %vm1876, %v5910, %v6306
      %v6833 = vsel %vm1876, %v6012, %v6308
      %v6834 = vsel %vm1876, %v5913, %v6310
      %v6835 = vsel %vm1876, %v6013, %v6312
      %v6836 = vsel %vm1876, %v5916, %v6314
      %v6837 = vsel %vm2008, %v6807, %v6346
      %v6838 = vsel %vm2008, %v6808, %v6348
      %v6839 = vsel %vm2008, %v6809, %v6350
      %v6840 = vsel %vm2008, %v6810, %v6352
      %v6841 = vsel %vm2008, %v6811, %v6354
      %v6842 = vsel %vm2008, %v6812, %v6356
      %v6843 = vsel %vm2008, %v6813, %v6358
      %v6844 = vsel %vm2008, %v6814, %v6360
      %v6845 = vsel %vm2008, %v6815, %v6362
      %v6846 = vsel %vm2008, %v6816, %v6364
      %v6847 = vsel %vm2008, %v6817, %v6366
      %v6848 = vsel %vm2008, %v6818, %v6368
      %v6849 = vsel %vm2008, %v6819, %v6370
      %v6850 = vsel %vm2008, %v6820, %v6372
      %v6851 = vsel %vm2008, %v6821, %v6374
      %v6852 = vsel %vm2008, %v6822, %v6376
      %v6853 = vsel %vm2008, %v6823, %v6378
      %v6854 = vsel %vm2008, %v6824, %v6380
      %v6855 = vsel %vm2008, %v6825, %v6382
      %v6856 = vsel %vm2008, %v6826, %v6384
      %v6857 = vsel %vm2008, %v6827, %v6386
      %v6858 = vsel %vm2008, %v6828, %v6388
      %v6859 = vsel %vm2008, %v6829, %v6390
      %v6860 = vsel %vm2008, %v6830, %v6392
      %v6861 = vsel %vm2008, %v6831, %v6394
      %v6862 = vsel %vm2008, %v6832, %v6396
      %v6863 = vsel %vm2008, %v6833, %v6398
      %v6864 = vsel %vm2008, %v6834, %v6400
      %v6865 = vsel %vm2008, %v6835, %v6402
      %v6866 = vsel %vm2008, %v6836, %v6404
      %v6867 = vsel %vm5030, %v6837, %v6436
      %v6868 = vsel %vm5030, %v6838, %v6438
      %v6869 = vsel %vm5030, %v6839, %v6440
      %v6870 = vsel %vm5030, %v6840, %v6442
      %v6871 = vsel %vm5030, %v6837, %v6444
      %v6872 = vsel %vm5030, %v6838, %v6446
      %v6873 = vsel %vm5030, %v6841, %v6448
      %v6874 = vsel %vm5030, %v6842, %v6450
      %v6875 = vsel %vm5030, %v6843, %v6452
      %v6876 = vsel %vm5030, %v6844, %v6454
      %v6877 = vsel %vm5030, %v6845, %v6456
      %v6878 = vsel %vm5030, %v6846, %v6458
      %v6879 = vsel %vm5030, %v6847, %v6460
      %v6880 = vsel %vm5030, %v6848, %v6462
      %v6881 = vsel %vm5030, %v6849, %v6464
      %v6882 = vsel %vm5030, %v6850, %v6466
      %v6883 = vsel %vm5030, %v6851, %v6468
      %v6884 = vsel %vm5030, %v6852, %v6470
      %v6885 = vsel %vm5030, %v6853, %v6472
      %v6886 = vsel %vm5030, %v6854, %v6474
      %v6887 = vsel %vm5030, %v6855, %v6476
      %v6888 = vsel %vm5030, %v6856, %v6478
      %v6889 = vsel %vm5030, %v6857, %v6480
      %v6890 = vsel %vm5030, %v6858, %v6482
      %v6891 = vsel %vm5030, %v6859, %v6484
      %v6892 = vsel %vm5030, %v6860, %v6486
      %v6893 = vsel %vm5030, %v6861, %v6488
      %v6894 = vsel %vm5030, %v6862, %v6490
      %v6895 = vsel %vm5030, %v6863, %v6492
      %v6896 = vsel %vm5030, %v6864, %v6494
      %v6897 = vsel %vm5030, %v6865, %v6496
      %v6898 = vsel %vm5030, %v6866, %v6498
      %v6899 = vsel %vm1876, %v6068, %v6532
      %v6900 = vsel %vm1876, %v6070, %v6534
      %v6901 = vsel %vm1876, %v6063, %v6536
      %v6902 = vsel %vm1876, %v6065, %v6538
      %v6903 = vsel %vm1876, %v6073, %v6540
      %v6904 = vsel %vm1876, %v6075, %v6542
      %v6905 = vsel %vm1876, %v6078, %v6544
      %v6906 = vsel %vm1876, %v6080, %v6546
      %v6907 = vsel %vm1876, %v6083, %v6548
      %v6908 = vsel %vm1876, %v6085, %v6550
      %v6909 = vsel %vm1876, %v6088, %v6552
      %v6910 = vsel %vm1876, %v6090, %v6554
      %v6911 = vsel %vm1876, %v6093, %v6556
      %v6912 = vsel %vm1876, %v6095, %v6558
      %v6913 = vsel %vm1876, %v6098, %v6560
      %v6914 = vsel %vm1876, %v6100, %v6562
      %v6915 = vsel %vm1876, %v6103, %v6564
      %v6916 = vsel %vm1876, %v6105, %v6566
      %v6917 = vsel %vm1876, %v6108, %v6568
      %v6918 = vsel %vm1876, %v6110, %v6570
      %v6919 = vsel %vm1876, %v6113, %v6572
      %v6920 = vsel %vm1876, %v6115, %v6574
      %v6921 = vsel %vm1876, %v6118, %v6576
      %v6922 = vsel %vm1876, %v6120, %v6578
      %v6923 = vsel %vm1876, %v6123, %v6580
      %v6924 = vsel %vm1876, %v6125, %v6582
      %v6925 = vsel %vm1876, %v6128, %v6584
      %v6926 = vsel %vm1876, %v6130, %v6586
      %v6927 = vsel %vm1876, %v6133, %v6588
      %v6928 = vsel %vm1876, %v6135, %v6590
      %v6929 = vsel %vm1876, %v6215, %v6592
      %v6930 = vsel %vm1876, %v6217, %v6594
      %v6931 = vsel %vm2008, %v6899, %v6628
      %v6932 = vsel %vm2008, %v6900, %v6630
      %v6933 = vsel %vm2008, %v6901, %v6632
      %v6934 = vsel %vm2008, %v6902, %v6634
      %v6935 = vsel %vm2008, %v6903, %v6636
      %v6936 = vsel %vm2008, %v6904, %v6638
      %v6937 = vsel %vm2008, %v6905, %v6640
      %v6938 = vsel %vm2008, %v6906, %v6642
      %v6939 = vsel %vm2008, %v6907, %v6644
      %v6940 = vsel %vm2008, %v6908, %v6646
      %v6941 = vsel %vm2008, %v6909, %v6648
      %v6942 = vsel %vm2008, %v6910, %v6650
      %v6943 = vsel %vm2008, %v6911, %v6652
      %v6944 = vsel %vm2008, %v6912, %v6654
      %v6945 = vsel %vm2008, %v6913, %v6656
      %v6946 = vsel %vm2008, %v6914, %v6658
      %v6947 = vsel %vm2008, %v6915, %v6660
      %v6948 = vsel %vm2008, %v6916, %v6662
      %v6949 = vsel %vm2008, %v6917, %v6664
      %v6950 = vsel %vm2008, %v6918, %v6666
      %v6951 = vsel %vm2008, %v6919, %v6668
      %v6952 = vsel %vm2008, %v6920, %v6670
      %v6953 = vsel %vm2008, %v6921, %v6672
      %v6954 = vsel %vm2008, %v6922, %v6674
      %v6955 = vsel %vm2008, %v6923, %v6676
      %v6956 = vsel %vm2008, %v6924, %v6678
      %v6957 = vsel %vm2008, %v6925, %v6680
      %v6958 = vsel %vm2008, %v6926, %v6682
      %v6959 = vsel %vm2008, %v6927, %v6684
      %v6960 = vsel %vm2008, %v6928, %v6686
      %v6961 = vsel %vm2008, %v6929, %v6680
      %v6962 = vsel %vm2008, %v6930, %v6682
      %v6963 = vsel %vm5030, %v6931, %v6718
      %v6964 = vsel %vm5030, %v6932, %v6720
      %v6965 = vsel %vm5030, %v6933, %v6722
      %v6966 = vsel %vm5030, %v6934, %v6724
      %v6967 = vsel %vm5030, %v6935, %v6726
      %v6968 = vsel %vm5030, %v6936, %v6728
      %v6969 = vsel %vm5030, %v6937, %v6730
      %v6970 = vsel %vm5030, %v6938, %v6732
      %v6971 = vsel %vm5030, %v6939, %v6734
      %v6972 = vsel %vm5030, %v6940, %v6736
      %v6973 = vsel %vm5030, %v6941, %v6738
      %v6974 = vsel %vm5030, %v6942, %v6740
      %v6975 = vsel %vm5030, %v6943, %v6742
      %v6976 = vsel %vm5030, %v6944, %v6744
      %v6977 = vsel %vm5030, %v6945, %v6746
      %v6978 = vsel %vm5030, %v6946, %v6748
      %v6979 = vsel %vm5030, %v6947, %v6750
      %v6980 = vsel %vm5030, %v6948, %v6752
      %v6981 = vsel %vm5030, %v6949, %v6754
      %v6982 = vsel %vm5030, %v6950, %v6756
      %v6983 = vsel %vm5030, %v6951, %v6758
      %v6984 = vsel %vm5030, %v6952, %v6760
      %v6985 = vsel %vm5030, %v6953, %v6762
      %v6986 = vsel %vm5030, %v6954, %v6764
      %v6987 = vsel %vm5030, %v6955, %v6766
      %v6988 = vsel %vm5030, %v6956, %v6768
      %v6989 = vsel %vm5030, %v6957, %v6770
      %v6990 = vsel %vm5030, %v6958, %v6772
      %v6991 = vsel %vm5030, %v6959, %v6774
      %v6992 = vsel %vm5030, %v6960, %v6776
      %v6993 = vsel %vm5030, %v6961, %v6770
      %v6994 = vsel %vm5030, %v6962, %v6772
      %v6996 = vlaneseq
      %v6997 = vshrl.u32 %v6996, 7
      %v6998 = vsub.s32 0, %v6997
      %v6999 = vrot.slane %v5807, %v6998
      %v7001 = vsel %vm1876, %v6138, 0
      %v7003 = vsel %vm1876, %v6140, 0
      %v7005 = vsel %vm1876, %v6148, 0
      %v7007 = vsel %vm1876, %v6150, 0
      %v7009 = vsel %vm1876, %v6153, 0
      %v7011 = vsel %vm1876, %v6155, 0
      %v7013 = vsel %vm1876, %v6158, 0
      %v7015 = vsel %vm1876, %v6160, 0
      %v7017 = vsel %vm1876, %v6163, 0
      %v7019 = vsel %vm1876, %v6165, 0
      %v7021 = vsel %vm1876, %v6168, 0
      %v7023 = vsel %vm1876, %v6170, 0
      %v7025 = vsel %vm1876, %v6173, 0
      %v7027 = vsel %vm1876, %v6175, 0
      %v7029 = vsel %vm1876, %v6178, 0
      %v7031 = vsel %vm1876, %v6180, 0
      %v7033 = vsel %vm1876, %v6183, 0
      %v7035 = vsel %vm1876, %v6185, 0
      %v7037 = vsel %vm1876, %v6188, 0
      %v7039 = vsel %vm1876, %v6190, 0
      %v7041 = vsel %vm1876, %v6193, 0
      %v7043 = vsel %vm1876, %v6195, 0
      %v7045 = vsel %vm1876, %v6198, 0
      %v7047 = vsel %vm1876, %v6200, 0
      %v7049 = vsel %vm1876, %v6203, 0
      %v7051 = vsel %vm1876, %v6205, 0
      %v7053 = vsel %vm1876, %v6208, 0
      %v7055 = vsel %vm1876, %v6210, 0
      %v7057 = vsel %vm1876, %v6252, 0
      %v7059 = vsel %vm1876, %v6254, 0
      %7061 = vmatprep.subr.mxu0 0.0
      %7062 = vmatpush1.msra.mxu0 %v5771
      %7063 = vmatprep.subr.mxu0 0.0
      %7064 = vmatpush1.msra.mxu0 %v5772
      %7065 = vmatprep.subr.mxu0 0.0
      %7066 = vmatpush1.msra.mxu0 %v5773
      %7067 = vmatprep.subr.mxu0 0.0
      %7068 = vmatpush1.msra.mxu0 %v5774
      %7069 = vmatprep.subr.mxu0 0.0
      %7070 = vmatpush1.msra.mxu0 %v5775
      %7071 = vmatprep.subr.mxu0 0.0
      %7072 = vmatpush1.msra.mxu0 %v5776
      %7073 = vmatprep.subr.mxu0 0.0
      %7074 = vmatpush1.msra.mxu0 %v5777
      %7075 = vmatprep.subr.mxu0 0.0
      %7076 = vmatpush1.msra.mxu0 %v5778
      %7077 = vmatprep.subr.mxu0 0.0
      %7078 = vmatpush1.msra.mxu0 %v5779
      %7079 = vmatprep.subr.mxu0 0.0
      %7080 = vmatpush1.msra.mxu0 %v5780
      %7081 = vmatprep.subr.mxu0 0.0
      %7082 = vmatpush1.msra.mxu0 %v5781
      %7083 = vmatprep.subr.mxu0 0.0
      %7084 = vmatpush1.msra.mxu0 %v5782
      %7085 = vmatprep.subr.mxu0 0.0
      %7086 = vmatpush1.msra.mxu0 %v5783
      %7087 = vmatprep.subr.mxu0 0.0
      %7088 = vmatpush1.msra.mxu0 %v5784
      %7089 = vmatprep.subr.mxu0 0.0
      %7090 = vmatpush1.msra.mxu0 %v5785
      %7091 = vmatprep.subr.mxu0 0.0
      %7092 = vmatpush1.msra.mxu0 %v5786
      %7093 = vmatprep.subr.mxu0 0.0
      %7094 = vmatpush1.msra.mxu0 %v5787
      %7095 = vmatprep.subr.mxu0 0.0
      %7096 = vmatpush1.msra.mxu0 %v5788
      %7097 = vmatprep.subr.mxu0 0.0
      %7098 = vmatpush1.msra.mxu0 %v5789
      %7099 = vmatprep.subr.mxu0 0.0
      %7100 = vmatpush1.msra.mxu0 %v5790
      %7101 = vmatprep.subr.mxu0 0.0
      %7102 = vmatpush1.msra.mxu0 %v5791
      %7103 = vmatprep.subr.mxu0 0.0
      %7104 = vmatpush1.msra.mxu0 %v5792
      %7105 = vmatprep.subr.mxu0 0.0
      %7106 = vmatpush1.msra.mxu0 %v5793
      %7107 = vmatprep.subr.mxu0 0.0
      %7108 = vmatpush1.msra.mxu0 %v5794
      %7109 = vmatprep.subr.mxu0 0.0
      %7110 = vmatpush1.msra.mxu0 %v5795
      %7111 = vmatprep.subr.mxu0 0.0
      %7112 = vmatpush1.msra.mxu0 %v5796
      %7113 = vmatprep.subr.mxu0 0.0
      %7114 = vmatpush1.msra.mxu0 %v5797
      %7115 = vmatprep.subr.mxu0 0.0
      %7116 = vmatpush1.msra.mxu0 %v5798
      %7117 = vmatprep.subr.mxu0 0.0
      %7118 = vmatpush1.msra.mxu0 %v5799
      %7119 = vmatprep.subr.mxu0 0.0
      %7120 = vmatpush1.msra.mxu0 %v5800
      %7121 = vmatprep.subr.mxu0 0.0
      %7122 = vmatpush1.msra.mxu0 %v5801
      %7123 = vmatprep.subr.mxu0 0.0
      %7124 = vmatpush1.msra.mxu0 %v5802
      %7125 = vmatprep.mubr.f32.mxu0 %v6963
      %7126 = vmatmul.mubr.f32.gmra.mrb[0].mxu0 %v6867
      %v7127 = vpop.f32.mrb[0].mxu0
      %v7128 = vadd.f32 %v6999, %v7127
      %v7129 = vpop.f32.mrb[0].mxu0
      %7130 = vmatprep.mubr.f32.mxu0 %v6964
      %7131 = vmatmul.mubr.f32.gmra.mrb[0].mxu0 %v6868
      %v7132 = vpop.f32.mrb[0].mxu0
      %v7133 = vadd.f32 %v6999, %v7132
      %v7134 = vpop.f32.mrb[0].mxu0
      %7135 = vmatprep.mubr.f32.mxu0 %v6965
      %7136 = vmatmul.mubr.f32.gmra.mrb[0].mxu0 %v6869
      %v7137 = vpop.f32.mrb[0].mxu0
      %v7138 = vadd.f32 %v6999, %v7137
      %v7139 = vpop.f32.mrb[0].mxu0
      %7140 = vmatprep.mubr.f32.mxu0 %v6966
      %7141 = vmatmul.mubr.f32.gmra.mrb[0].mxu0 %v6870
      %v7142 = vpop.f32.mrb[0].mxu0
      %v7143 = vadd.f32 %v6999, %v7142
      %v7144 = vpop.f32.mrb[0].mxu0
      %7145 = vmatprep.mubr.f32.mxu0 %v6967
      %7146 = vmatmul.mubr.f32.gmra.mrb[0].mxu0 %v6871
      %v7147 = vpop.f32.mrb[0].mxu0
      %v7148 = vadd.f32 %v6999, %v7147
      %v7149 = vpop.f32.mrb[0].mxu0
      %7150 = vmatprep.mubr.f32.mxu0 %v6968
      %7151 = vmatmul.mubr.f32.gmra.mrb[0].mxu0 %v6872
      %v7152 = vpop.f32.mrb[0].mxu0
      %v7153 = vadd.f32 %v6999, %v7152
      %v7154 = vpop.f32.mrb[0].mxu0
      %7155 = vmatprep.mubr.f32.mxu0 %v6969
      %7156 = vmatmul.mubr.f32.gmra.mrb[0].mxu0 %v6873
      %v7157 = vpop.f32.mrb[0].mxu0
      %v7158 = vadd.f32 %v6999, %v7157
      %v7159 = vpop.f32.mrb[0].mxu0
      %7160 = vmatprep.mubr.f32.mxu0 %v6970
      %7161 = vmatmul.mubr.f32.gmra.mrb[0].mxu0 %v6874
      %v7162 = vpop.f32.mrb[0].mxu0
      %v7163 = vadd.f32 %v6999, %v7162
      %v7164 = vpop.f32.mrb[0].mxu0
      %7165 = vmatprep.mubr.f32.mxu0 %v6971
      %7166 = vmatmul.mubr.f32.gmra.mrb[0].mxu0 %v6875
      %v7167 = vpop.f32.mrb[0].mxu0
      %v7168 = vadd.f32 %v6999, %v7167
      %v7169 = vpop.f32.mrb[0].mxu0
      %7170 = vmatprep.mubr.f32.mxu0 %v6972
      %7171 = vmatmul.mubr.f32.gmra.mrb[0].mxu0 %v6876
      %v7172 = vpop.f32.mrb[0].mxu0
      %v7173 = vadd.f32 %v6999, %v7172
      %v7174 = vpop.f32.mrb[0].mxu0
      %7175 = vmatprep.mubr.f32.mxu0 %v6973
      %7176 = vmatmul.mubr.f32.gmra.mrb[0].mxu0 %v6877
      %v7177 = vpop.f32.mrb[0].mxu0
      %v7178 = vadd.f32 %v6999, %v7177
      %v7179 = vpop.f32.mrb[0].mxu0
      %7180 = vmatprep.mubr.f32.mxu0 %v6974
      %7181 = vmatmul.mubr.f32.gmra.mrb[0].mxu0 %v6878
      %v7182 = vpop.f32.mrb[0].mxu0
      %v7183 = vadd.f32 %v6999, %v7182
      %v7184 = vpop.f32.mrb[0].mxu0
      %7185 = vmatprep.mubr.f32.mxu0 %v6975
      %7186 = vmatmul.mubr.f32.gmra.mrb[0].mxu0 %v6879
      %v7187 = vpop.f32.mrb[0].mxu0
      %v7188 = vadd.f32 %v6999, %v7187
      %v7189 = vpop.f32.mrb[0].mxu0
      %7190 = vmatprep.mubr.f32.mxu0 %v6976
      %7191 = vmatmul.mubr.f32.gmra.mrb[0].mxu0 %v6880
      %v7192 = vpop.f32.mrb[0].mxu0
      %v7193 = vadd.f32 %v6999, %v7192
      %v7194 = vpop.f32.mrb[0].mxu0
      %7195 = vmatprep.mubr.f32.mxu0 %v6977
      %7196 = vmatmul.mubr.f32.gmra.mrb[0].mxu0 %v6881
      %v7197 = vpop.f32.mrb[0].mxu0
      %v7198 = vadd.f32 %v6999, %v7197
      %v7199 = vpop.f32.mrb[0].mxu0
      %7200 = vmatprep.mubr.f32.mxu0 %v6978
      %7201 = vmatmul.mubr.f32.gmra.mrb[0].mxu0 %v6882
      %v7202 = vpop.f32.mrb[0].mxu0
      %v7203 = vadd.f32 %v6999, %v7202
      %v7204 = vpop.f32.mrb[0].mxu0
      %7205 = vmatprep.mubr.f32.mxu0 %v6979
      %7206 = vmatmul.mubr.f32.gmra.mrb[0].mxu0 %v6883
      %v7207 = vpop.f32.mrb[0].mxu0
      %v7208 = vadd.f32 %v6999, %v7207
      %v7209 = vpop.f32.mrb[0].mxu0
      %7210 = vmatprep.mubr.f32.mxu0 %v6980
      %7211 = vmatmul.mubr.f32.gmra.mrb[0].mxu0 %v6884
      %v7212 = vpop.f32.mrb[0].mxu0
      %v7213 = vadd.f32 %v6999, %v7212
      %v7214 = vpop.f32.mrb[0].mxu0
      %7215 = vmatprep.mubr.f32.mxu0 %v6981
      %7216 = vmatmul.mubr.f32.gmra.mrb[0].mxu0 %v6885
      %v7217 = vpop.f32.mrb[0].mxu0
      %v7218 = vadd.f32 %v6999, %v7217
      %v7219 = vpop.f32.mrb[0].mxu0
      %7220 = vmatprep.mubr.f32.mxu0 %v6982
      %7221 = vmatmul.mubr.f32.gmra.mrb[0].mxu0 %v6886
      %v7222 = vpop.f32.mrb[0].mxu0
      %v7223 = vadd.f32 %v6999, %v7222
      %v7224 = vpop.f32.mrb[0].mxu0
      %7225 = vmatprep.mubr.f32.mxu0 %v6983
      %7226 = vmatmul.mubr.f32.gmra.mrb[0].mxu0 %v6887
      %v7227 = vpop.f32.mrb[0].mxu0
      %v7228 = vadd.f32 %v6999, %v7227
      %v7229 = vpop.f32.mrb[0].mxu0
      %7230 = vmatprep.mubr.f32.mxu0 %v6984
      %7231 = vmatmul.mubr.f32.gmra.mrb[0].mxu0 %v6888
      %v7232 = vpop.f32.mrb[0].mxu0
      %v7233 = vadd.f32 %v6999, %v7232
      %v7234 = vpop.f32.mrb[0].mxu0
      %7235 = vmatprep.mubr.f32.mxu0 %v6985
      %7236 = vmatmul.mubr.f32.gmra.mrb[0].mxu0 %v6889
      %v7237 = vpop.f32.mrb[0].mxu0
      %v7238 = vadd.f32 %v6999, %v7237
      %v7239 = vpop.f32.mrb[0].mxu0
      %7240 = vmatprep.mubr.f32.mxu0 %v6986
      %7241 = vmatmul.mubr.f32.gmra.mrb[0].mxu0 %v6890
      %v7242 = vpop.f32.mrb[0].mxu0
      %v7243 = vadd.f32 %v6999, %v7242
      %v7244 = vpop.f32.mrb[0].mxu0
      %7245 = vmatprep.mubr.f32.mxu0 %v6987
      %7246 = vmatmul.mubr.f32.gmra.mrb[0].mxu0 %v6891
      %v7247 = vpop.f32.mrb[0].mxu0
      %v7248 = vadd.f32 %v6999, %v7247
      %v7249 = vpop.f32.mrb[0].mxu0
      %7250 = vmatprep.mubr.f32.mxu0 %v6988
      %7251 = vmatmul.mubr.f32.gmra.mrb[0].mxu0 %v6892
      %v7252 = vpop.f32.mrb[0].mxu0
      %v7253 = vadd.f32 %v6999, %v7252
      %v7254 = vpop.f32.mrb[0].mxu0
      %7255 = vmatprep.mubr.f32.mxu0 %v6989
      %7256 = vmatmul.mubr.f32.gmra.mrb[0].mxu0 %v6893
      %v7257 = vpop.f32.mrb[0].mxu0
      %v7258 = vadd.f32 %v6999, %v7257
      %v7259 = vpop.f32.mrb[0].mxu0
      %7260 = vmatprep.mubr.f32.mxu0 %v6990
      %7261 = vmatmul.mubr.f32.gmra.mrb[0].mxu0 %v6894
      %v7262 = vpop.f32.mrb[0].mxu0
      %v7263 = vadd.f32 %v6999, %v7262
      %v7264 = vpop.f32.mrb[0].mxu0
      %7265 = vmatprep.mubr.f32.mxu0 %v6991
      %7266 = vmatmul.mubr.f32.gmra.mrb[0].mxu0 %v6895
      %v7267 = vpop.f32.mrb[0].mxu0
      %v7268 = vadd.f32 %v6999, %v7267
      %v7269 = vpop.f32.mrb[0].mxu0
      %7270 = vmatprep.mubr.f32.mxu0 %v6992
      %7271 = vmatmul.mubr.f32.gmra.mrb[0].mxu0 %v6896
      %v7272 = vpop.f32.mrb[0].mxu0
      %v7273 = vadd.f32 %v6999, %v7272
      %v7274 = vpop.f32.mrb[0].mxu0
      %7275 = vmatprep.mubr.f32.mxu0 %v6993
      %7276 = vmatmul.mubr.f32.gmra.mrb[0].mxu0 %v6897
      %v7277 = vpop.f32.mrb[0].mxu0
      %v7278 = vadd.f32 %v6999, %v7277
      %v7279 = vpop.f32.mrb[0].mxu0
      %7280 = vmatprep.mubr.f32.mxu0 %v6994
      %7281 = vmatmul.mubr.f32.gmra.mrb[0].mxu0 %v6898
      %v7282 = vpop.f32.mrb[0].mxu0
      %v7283 = vadd.f32 %v6999, %v7282
      %v7284 = vpop.f32.mrb[0].mxu0
      %7285 = vdwg.mxu0
      %7286 = vmatprep.subr.mxu0 0.0
      %7287 = vmatpush1.msra.mxu0 %v5803
      %7288 = vmatprep.subr.mxu0 0.0
      %7289 = vmatpush1.msra.mxu0 %v5804
      %7290 = vmatprep.subr.mxu0 0.0
      %7291 = vmatpush1.msra.mxu0 %v5805
      %7292 = vmatprep.subr.mxu0 0.0
      %7293 = vmatpush1.msra.mxu0 %v5806
      %7294 = vmatprep.subr.mxu0 0.0
      %7295 = vmatpush1.msra.mxu0 0.0
      %7296 = vmatprep.subr.mxu0 0.0
      %7297 = vmatpush1.msra.mxu0 0.0
      %7298 = vmatprep.subr.mxu0 0.0
      %7299 = vmatpush1.msra.mxu0 0.0
      %7300 = vmatprep.subr.mxu0 0.0
      %7301 = vmatpush1.msra.mxu0 0.0
      %7302 = vmatprep.subr.mxu0 0.0
      %7303 = vmatpush1.msra.mxu0 0.0
      %7304 = vmatprep.subr.mxu0 0.0
      %7305 = vmatpush1.msra.mxu0 0.0
      %7306 = vmatprep.subr.mxu0 0.0
      %7307 = vmatpush1.msra.mxu0 0.0
      %7308 = vmatprep.subr.mxu0 0.0
      %7309 = vmatpush1.msra.mxu0 0.0
      %7310 = vmatprep.subr.mxu0 0.0
      %7311 = vmatpush1.msra.mxu0 0.0
      %7312 = vmatprep.subr.mxu0 0.0
      %7313 = vmatpush1.msra.mxu0 0.0
      %7314 = vmatprep.subr.mxu0 0.0
      %7315 = vmatpush1.msra.mxu0 0.0
      %7316 = vmatprep.subr.mxu0 0.0
      %7317 = vmatpush1.msra.mxu0 0.0
      %7318 = vmatprep.subr.mxu0 0.0
      %7319 = vmatpush1.msra.mxu0 0.0
      %7320 = vmatprep.subr.mxu0 0.0
      %7321 = vmatpush1.msra.mxu0 0.0
      %7322 = vmatprep.subr.mxu0 0.0
      %7323 = vmatpush1.msra.mxu0 0.0
      %7324 = vmatprep.subr.mxu0 0.0
      %7325 = vmatpush1.msra.mxu0 0.0
      %7326 = vmatprep.subr.mxu0 0.0
      %7327 = vmatpush1.msra.mxu0 0.0
      %7328 = vmatprep.subr.mxu0 0.0
      %7329 = vmatpush1.msra.mxu0 0.0
      %7330 = vmatprep.subr.mxu0 0.0
      %7331 = vmatpush1.msra.mxu0 0.0
      %7332 = vmatprep.subr.mxu0 0.0
      %7333 = vmatpush1.msra.mxu0 0.0
      %7334 = vmatprep.subr.mxu0 0.0
      %7335 = vmatpush1.msra.mxu0 0.0
      %7336 = vmatprep.subr.mxu0 0.0
      %7337 = vmatpush1.msra.mxu0 0.0
      %7338 = vmatprep.subr.mxu0 0.0
      %7339 = vmatpush1.msra.mxu0 0.0
      %7340 = vmatprep.subr.mxu0 0.0
      %7341 = vmatpush1.msra.mxu0 0.0
      %7342 = vmatprep.subr.mxu0 0.0
      %7343 = vmatpush1.msra.mxu0 0.0
      %7344 = vmatprep.subr.mxu0 0.0
      %7345 = vmatpush1.msra.mxu0 0.0
      %7346 = vmatprep.subr.mxu0 0.0
      %7347 = vmatpush1.msra.mxu0 0.0
      %7348 = vmatprep.subr.mxu0 0.0
      %7349 = vmatpush1.msra.mxu0 0.0
      %7350 = vmatprep.mubr.f32.mxu0 0.0
      %7351 = vmatmul.mubr.f32.gmra.mrb[0].mxu0 %v7001
      %v7352 = vpop.f32.mrb[0].mxu0
      %v7353 = vadd.f32 %v7128, %v7352
      %v7354 = vpop.f32.mrb[0].mxu0
      %7355 = vmatprep.mubr.f32.mxu0 0.0
      %7356 = vmatmul.mubr.f32.gmra.mrb[0].mxu0 %v7003
      %v7357 = vpop.f32.mrb[0].mxu0
      %v7358 = vadd.f32 %v7133, %v7357
      %v7359 = vpop.f32.mrb[0].mxu0
      %7360 = vmatprep.mubr.f32.mxu0 0.0
      %7361 = vmatmul.mubr.f32.gmra.mrb[0].mxu0 %v7005
      %v7362 = vpop.f32.mrb[0].mxu0
      %v7363 = vadd.f32 %v7138, %v7362
      %v7364 = vpop.f32.mrb[0].mxu0
      %7365 = vmatprep.mubr.f32.mxu0 0.0
      %7366 = vmatmul.mubr.f32.gmra.mrb[0].mxu0 %v7007
      %v7367 = vpop.f32.mrb[0].mxu0
      %v7368 = vadd.f32 %v7143, %v7367
      %v7369 = vpop.f32.mrb[0].mxu0
      %7370 = vmatprep.mubr.f32.mxu0 0.0
      %7371 = vmatmul.mubr.f32.gmra.mrb[0].mxu0 %v7009
      %v7372 = vpop.f32.mrb[0].mxu0
      %v7373 = vadd.f32 %v7148, %v7372
      %v7374 = vpop.f32.mrb[0].mxu0
      %7375 = vmatprep.mubr.f32.mxu0 0.0
      %7376 = vmatmul.mubr.f32.gmra.mrb[0].mxu0 %v7011
      %v7377 = vpop.f32.mrb[0].mxu0
      %v7378 = vadd.f32 %v7153, %v7377
      %v7379 = vpop.f32.mrb[0].mxu0
      %7380 = vmatprep.mubr.f32.mxu0 0.0
      %7381 = vmatmul.mubr.f32.gmra.mrb[0].mxu0 %v7013
      %v7382 = vpop.f32.mrb[0].mxu0
      %v7383 = vadd.f32 %v7158, %v7382
      %v7384 = vpop.f32.mrb[0].mxu0
      %7385 = vmatprep.mubr.f32.mxu0 0.0
      %7386 = vmatmul.mubr.f32.gmra.mrb[0].mxu0 %v7015
      %v7387 = vpop.f32.mrb[0].mxu0
      %v7388 = vadd.f32 %v7163, %v7387
      %v7389 = vpop.f32.mrb[0].mxu0
      %7390 = vmatprep.mubr.f32.mxu0 0.0
      %7391 = vmatmul.mubr.f32.gmra.mrb[0].mxu0 %v7017
      %v7392 = vpop.f32.mrb[0].mxu0
      %v7393 = vadd.f32 %v7168, %v7392
      %v7394 = vpop.f32.mrb[0].mxu0
      %7395 = vmatprep.mubr.f32.mxu0 0.0
      %7396 = vmatmul.mubr.f32.gmra.mrb[0].mxu0 %v7019
      %v7397 = vpop.f32.mrb[0].mxu0
      %v7398 = vadd.f32 %v7173, %v7397
      %v7399 = vpop.f32.mrb[0].mxu0
      %7400 = vmatprep.mubr.f32.mxu0 0.0
      %7401 = vmatmul.mubr.f32.gmra.mrb[0].mxu0 %v7021
      %v7402 = vpop.f32.mrb[0].mxu0
      %v7403 = vadd.f32 %v7178, %v7402
      %v7404 = vpop.f32.mrb[0].mxu0
      %7405 = vmatprep.mubr.f32.mxu0 0.0
      %7406 = vmatmul.mubr.f32.gmra.mrb[0].mxu0 %v7023
      %v7407 = vpop.f32.mrb[0].mxu0
      %v7408 = vadd.f32 %v7183, %v7407
      %v7409 = vpop.f32.mrb[0].mxu0
      %7410 = vmatprep.mubr.f32.mxu0 0.0
      %7411 = vmatmul.mubr.f32.gmra.mrb[0].mxu0 %v7025
      %v7412 = vpop.f32.mrb[0].mxu0
      %v7413 = vadd.f32 %v7188, %v7412
      %v7414 = vpop.f32.mrb[0].mxu0
      %7415 = vmatprep.mubr.f32.mxu0 0.0
      %7416 = vmatmul.mubr.f32.gmra.mrb[0].mxu0 %v7027
      %v7417 = vpop.f32.mrb[0].mxu0
      %v7418 = vadd.f32 %v7193, %v7417
      %v7419 = vpop.f32.mrb[0].mxu0
      %7420 = vmatprep.mubr.f32.mxu0 0.0
      %7421 = vmatmul.mubr.f32.gmra.mrb[0].mxu0 %v7029
      %v7422 = vpop.f32.mrb[0].mxu0
      %v7423 = vadd.f32 %v7198, %v7422
      %v7424 = vpop.f32.mrb[0].mxu0
      %7425 = vmatprep.mubr.f32.mxu0 0.0
      %7426 = vmatmul.mubr.f32.gmra.mrb[0].mxu0 %v7031
      %v7427 = vpop.f32.mrb[0].mxu0
      %v7428 = vadd.f32 %v7203, %v7427
      %v7429 = vpop.f32.mrb[0].mxu0
      %7430 = vmatprep.mubr.f32.mxu0 0.0
      %7431 = vmatmul.mubr.f32.gmra.mrb[0].mxu0 %v7033
      %v7432 = vpop.f32.mrb[0].mxu0
      %v7433 = vadd.f32 %v7208, %v7432
      %v7434 = vpop.f32.mrb[0].mxu0
      %7435 = vmatprep.mubr.f32.mxu0 0.0
      %7436 = vmatmul.mubr.f32.gmra.mrb[0].mxu0 %v7035
      %v7437 = vpop.f32.mrb[0].mxu0
      %v7438 = vadd.f32 %v7213, %v7437
      %v7439 = vpop.f32.mrb[0].mxu0
      %7440 = vmatprep.mubr.f32.mxu0 0.0
      %7441 = vmatmul.mubr.f32.gmra.mrb[0].mxu0 %v7037
      %v7442 = vpop.f32.mrb[0].mxu0
      %v7443 = vadd.f32 %v7218, %v7442
      %v7444 = vpop.f32.mrb[0].mxu0
      %7445 = vmatprep.mubr.f32.mxu0 0.0
      %7446 = vmatmul.mubr.f32.gmra.mrb[0].mxu0 %v7039
      %v7447 = vpop.f32.mrb[0].mxu0
      %v7448 = vadd.f32 %v7223, %v7447
      %v7449 = vpop.f32.mrb[0].mxu0
      %7450 = vmatprep.mubr.f32.mxu0 0.0
      %7451 = vmatmul.mubr.f32.gmra.mrb[0].mxu0 %v7041
      %v7452 = vpop.f32.mrb[0].mxu0
      %v7453 = vadd.f32 %v7228, %v7452
      %v7454 = vpop.f32.mrb[0].mxu0
      %7455 = vmatprep.mubr.f32.mxu0 0.0
      %7456 = vmatmul.mubr.f32.gmra.mrb[0].mxu0 %v7043
      %v7457 = vpop.f32.mrb[0].mxu0
      %v7458 = vadd.f32 %v7233, %v7457
      %v7459 = vpop.f32.mrb[0].mxu0
      %7460 = vmatprep.mubr.f32.mxu0 0.0
      %7461 = vmatmul.mubr.f32.gmra.mrb[0].mxu0 %v7045
      %v7462 = vpop.f32.mrb[0].mxu0
      %v7463 = vadd.f32 %v7238, %v7462
      %v7464 = vpop.f32.mrb[0].mxu0
      %7465 = vmatprep.mubr.f32.mxu0 0.0
      %7466 = vmatmul.mubr.f32.gmra.mrb[0].mxu0 %v7047
      %v7467 = vpop.f32.mrb[0].mxu0
      %v7468 = vadd.f32 %v7243, %v7467
      %v7469 = vpop.f32.mrb[0].mxu0
      %7470 = vmatprep.mubr.f32.mxu0 0.0
      %7471 = vmatmul.mubr.f32.gmra.mrb[0].mxu0 %v7049
      %v7472 = vpop.f32.mrb[0].mxu0
      %v7473 = vadd.f32 %v7248, %v7472
      %v7474 = vpop.f32.mrb[0].mxu0
      %7475 = vmatprep.mubr.f32.mxu0 0.0
      %7476 = vmatmul.mubr.f32.gmra.mrb[0].mxu0 %v7051
      %v7477 = vpop.f32.mrb[0].mxu0
      %v7478 = vadd.f32 %v7253, %v7477
      %v7479 = vpop.f32.mrb[0].mxu0
      %7480 = vmatprep.mubr.f32.mxu0 0.0
      %7481 = vmatmul.mubr.f32.gmra.mrb[0].mxu0 %v7053
      %v7482 = vpop.f32.mrb[0].mxu0
      %v7483 = vadd.f32 %v7258, %v7482
      %v7484 = vpop.f32.mrb[0].mxu0
      %7485 = vmatprep.mubr.f32.mxu0 0.0
      %7486 = vmatmul.mubr.f32.gmra.mrb[0].mxu0 %v7055
      %v7487 = vpop.f32.mrb[0].mxu0
      %v7488 = vadd.f32 %v7263, %v7487
      %v7489 = vpop.f32.mrb[0].mxu0
      %7490 = vmatprep.mubr.f32.mxu0 0.0
      %7491 = vmatmul.mubr.f32.gmra.mrb[0].mxu0 %v7057
      %v7492 = vpop.f32.mrb[0].mxu0
      %v7493 = vadd.f32 %v7268, %v7492
      %v7494 = vpop.f32.mrb[0].mxu0
      %7495 = vmatprep.mubr.f32.mxu0 0.0
      %7496 = vmatmul.mubr.f32.gmra.mrb[0].mxu0 %v7059
      %v7497 = vpop.f32.mrb[0].mxu0
      %v7498 = vadd.f32 %v7273, %v7497
      %v7499 = vpop.f32.mrb[0].mxu0
      %7500 = vmatprep.mubr.f32.mxu0 0.0
      %7501 = vmatmul.mubr.f32.gmra.mrb[0].mxu0 %v7053
      %v7502 = vpop.f32.mrb[0].mxu0
      %v7503 = vadd.f32 %v7278, %v7502
      %v7504 = vpop.f32.mrb[0].mxu0
      %7505 = vmatprep.mubr.f32.mxu0 0.0
      %7506 = vmatmul.mubr.f32.gmra.mrb[0].mxu0 %v7055
      %v7507 = vpop.f32.mrb[0].mxu0
      %v7508 = vadd.f32 %v7283, %v7507
      %v7509 = vpop.f32.mrb[0].mxu0
      %7510 = vdwg.mxu0
      %v7511 = vsel %vm1876, %v7353, 0.0
      %v7512 = vsel %vm1876, %v7358, 0.0
      %v7513 = vadd.f32 %v7511, %v7512
      %v7514 = vsel %vm1876, %v7363, 0.0
      %v7515 = vadd.f32 %v7513, %v7514
      %v7516 = vsel %vm1876, %v7368, 0.0
      %v7517 = vadd.f32 %v7515, %v7516
      %v7518 = vsel %vm1876, %v7373, 0.0
      %v7519 = vadd.f32 %v7517, %v7518
      %v7520 = vsel %vm1876, %v7378, 0.0
      %v7521 = vadd.f32 %v7519, %v7520
      %v7522 = vsel %vm1876, %v7383, 0.0
      %v7523 = vadd.f32 %v7521, %v7522
      %v7524 = vsel %vm1876, %v7388, 0.0
      %v7525 = vadd.f32 %v7523, %v7524
      %v7526 = vsel %vm1876, %v7393, 0.0
      %v7527 = vadd.f32 %v7525, %v7526
      %v7528 = vsel %vm1876, %v7398, 0.0
      %v7529 = vadd.f32 %v7527, %v7528
      %v7530 = vsel %vm1876, %v7403, 0.0
      %v7531 = vadd.f32 %v7529, %v7530
      %v7532 = vsel %vm1876, %v7408, 0.0
      %v7533 = vadd.f32 %v7531, %v7532
      %v7534 = vsel %vm1876, %v7413, 0.0
      %v7535 = vadd.f32 %v7533, %v7534
      %v7536 = vsel %vm1876, %v7418, 0.0
      %v7537 = vadd.f32 %v7535, %v7536
      %v7538 = vsel %vm1876, %v7423, 0.0
      %v7539 = vadd.f32 %v7537, %v7538
      %v7540 = vsel %vm1876, %v7428, 0.0
      %v7541 = vadd.f32 %v7539, %v7540
      %v7542 = vsel %vm1876, %v7433, 0.0
      %v7543 = vadd.f32 %v7541, %v7542
      %v7544 = vsel %vm1876, %v7438, 0.0
      %v7545 = vadd.f32 %v7543, %v7544
      %v7546 = vsel %vm1876, %v7443, 0.0
      %v7547 = vadd.f32 %v7545, %v7546
      %v7548 = vsel %vm1876, %v7448, 0.0
      %v7549 = vadd.f32 %v7547, %v7548
      %v7550 = vsel %vm1876, %v7453, 0.0
      %v7551 = vadd.f32 %v7549, %v7550
      %v7552 = vsel %vm1876, %v7458, 0.0
      %v7553 = vadd.f32 %v7551, %v7552
      %v7554 = vsel %vm1876, %v7463, 0.0
      %v7555 = vadd.f32 %v7553, %v7554
      %v7556 = vsel %vm1876, %v7468, 0.0
      %v7557 = vadd.f32 %v7555, %v7556
      %v7558 = vsel %vm1876, %v7473, 0.0
      %v7559 = vadd.f32 %v7557, %v7558
      %v7560 = vsel %vm1876, %v7478, 0.0
      %v7561 = vadd.f32 %v7559, %v7560
      %v7562 = vsel %vm1876, %v7483, 0.0
      %v7563 = vadd.f32 %v7561, %v7562
      %v7564 = vsel %vm1876, %v7488, 0.0
      %v7565 = vadd.f32 %v7563, %v7564
      %v7566 = vsel %vm1876, %v7493, 0.0
      %v7567 = vadd.f32 %v7565, %v7566
      %v7568 = vsel %vm1876, %v7498, 0.0
      %v7569 = vadd.f32 %v7567, %v7568
      %v7570 = vsel %vm1876, %v7503, 0.0
      %v7571 = vadd.f32 %v7569, %v7570
      %v7572 = vsel %vm1876, %v7508, 0.0
      %v7573 = vadd.f32 %v7571, %v7572
      %v7574 = vrot.slane %v7573, 4
      %v7575 = vadd.f32 %v7573, %v7574
      %v7576 = vrot.slane %v7575, 2
      %v7577 = vadd.f32 %v7575, %v7576
      %v7578 = vrot.slane %v7577, 1
      %v7579 = vadd.f32 %v7577, %v7578
      %v7580 = vrcp.pop 256.0
      %v7581 = vmul.f32 %v7579, %v7580
      %v7582 = vld [vmem:[%s11] sm:$0xff]
      %v7583 = vld [vmem:[%s11 + $0x8] sm:$0xff]
      %v7584 = vld [vmem:[%s11 + $0x10] sm:$0xff]
      %v7585 = vld [vmem:[%s11 + $0x18] sm:$0xff]
      %v7586 = vld [vmem:[%s12] sm:$0x1]
      %v7588 = vsel %vm1876, %v7581, 0
      %7590 = vmatprep.subr.mxu0 0.0
      %7591 = vmatpush1.msra.mxu0 %v7582
      %7592 = vmatprep.subr.mxu0 0.0
      %7593 = vmatpush1.msra.mxu0 %v7583
      %7594 = vmatprep.subr.mxu0 0.0
      %7595 = vmatpush1.msra.mxu0 %v7584
      %7596 = vmatprep.subr.mxu0 0.0
      %7597 = vmatpush1.msra.mxu0 %v7585
      %7598 = vmatprep.subr.mxu0 0.0
      %7599 = vmatpush1.msra.mxu0 0.0
      %7600 = vmatprep.subr.mxu0 0.0
      %7601 = vmatpush1.msra.mxu0 0.0
      %7602 = vmatprep.subr.mxu0 0.0
      %7603 = vmatpush1.msra.mxu0 0.0
      %7604 = vmatprep.subr.mxu0 0.0
      %7605 = vmatpush1.msra.mxu0 0.0
      %7606 = vmatprep.subr.mxu0 0.0
      %7607 = vmatpush1.msra.mxu0 0.0
      %7608 = vmatprep.subr.mxu0 0.0
      %7609 = vmatpush1.msra.mxu0 0.0
      %7610 = vmatprep.subr.mxu0 0.0
      %7611 = vmatpush1.msra.mxu0 0.0
      %7612 = vmatprep.subr.mxu0 0.0
      %7613 = vmatpush1.msra.mxu0 0.0
      %7614 = vmatprep.subr.mxu0 0.0
      %7615 = vmatpush1.msra.mxu0 0.0
      %7616 = vmatprep.subr.mxu0 0.0
      %7617 = vmatpush1.msra.mxu0 0.0
      %7618 = vmatprep.subr.mxu0 0.0
      %7619 = vmatpush1.msra.mxu0 0.0
      %7620 = vmatprep.subr.mxu0 0.0
      %7621 = vmatpush1.msra.mxu0 0.0
      %7622 = vmatprep.subr.mxu0 0.0
      %7623 = vmatpush1.msra.mxu0 0.0
      %7624 = vmatprep.subr.mxu0 0.0
      %7625 = vmatpush1.msra.mxu0 0.0
      %7626 = vmatprep.subr.mxu0 0.0
      %7627 = vmatpush1.msra.mxu0 0.0
      %7628 = vmatprep.subr.mxu0 0.0
      %7629 = vmatpush1.msra.mxu0 0.0
      %7630 = vmatprep.subr.mxu0 0.0
      %7631 = vmatpush1.msra.mxu0 0.0
      %7632 = vmatprep.subr.mxu0 0.0
      %7633 = vmatpush1.msra.mxu0 0.0
      %7634 = vmatprep.subr.mxu0 0.0
      %7635 = vmatpush1.msra.mxu0 0.0
      %7636 = vmatprep.subr.mxu0 0.0
      %7637 = vmatpush1.msra.mxu0 0.0
      %7638 = vmatprep.subr.mxu0 0.0
      %7639 = vmatpush1.msra.mxu0 0.0
      %7640 = vmatprep.subr.mxu0 0.0
      %7641 = vmatpush1.msra.mxu0 0.0
      %7642 = vmatprep.subr.mxu0 0.0
      %7643 = vmatpush1.msra.mxu0 0.0
      %7644 = vmatprep.subr.mxu0 0.0
      %7645 = vmatpush1.msra.mxu0 0.0
      %7646 = vmatprep.subr.mxu0 0.0
      %7647 = vmatpush1.msra.mxu0 0.0
      %7648 = vmatprep.subr.mxu0 0.0
      %7649 = vmatpush1.msra.mxu0 0.0
      %7650 = vmatprep.subr.mxu0 0.0
      %7651 = vmatpush1.msra.mxu0 0.0
      %7652 = vmatprep.subr.mxu0 0.0
      %7653 = vmatpush1.msra.mxu0 0.0
      %7654 = vmatprep.mubr.f32.mxu0 0.0
      %7655 = vmatmul.mubr.f32.gmra.mrb[0].mxu0 %v7588
      %v7656 = vpop.f32.mrb[0].mxu0
      %v7657 = vadd.f32 %v7586, %v7656
      %v7658 = vpop.f32.mrb[0].mxu0
      %7659 = vdwg.mxu0
      %v7660 = vmax.f32 %v7657, 0.0
      %v7661 = vld [vmem:[%s13] sm:$0x3]
      %v7662 = vld [vmem:[%s14] sm:$0x1]
      %vm7663 = vcmask 15360
      %v7665 = vsel %vm7663, %v7660, 0
      %vm7667 = vcmask 1041408
      %v7669 = vsel %vm7667, %v7661, 0
      %7671 = vmatprep.subr.mxu0 0.0
      %7672 = vmatpush1.msra.mxu0 %v7669
      %7673 = vmatprep.subr.mxu0 0.0
      %7674 = vmatpush1.msra.mxu0 0.0
      %7675 = vmatprep.subr.mxu0 0.0
      %7676 = vmatpush1.msra.mxu0 0.0
      %7677 = vmatprep.subr.mxu0 0.0
      %7678 = vmatpush1.msra.mxu0 0.0
      %7679 = vmatprep.subr.mxu0 0.0
      %7680 = vmatpush1.msra.mxu0 0.0
      %7681 = vmatprep.subr.mxu0 0.0
      %7682 = vmatpush1.msra.mxu0 0.0
      %7683 = vmatprep.subr.mxu0 0.0
      %7684 = vmatpush1.msra.mxu0 0.0
      %7685 = vmatprep.subr.mxu0 0.0
      %7686 = vmatpush1.msra.mxu0 0.0
      %7687 = vmatprep.subr.mxu0 0.0
      %7688 = vmatpush1.msra.mxu0 0.0
      %7689 = vmatprep.subr.mxu0 0.0
      %7690 = vmatpush1.msra.mxu0 0.0
      %7691 = vmatprep.subr.mxu0 0.0
      %7692 = vmatpush1.msra.mxu0 0.0
      %7693 = vmatprep.subr.mxu0 0.0
      %7694 = vmatpush1.msra.mxu0 0.0
      %7695 = vmatprep.subr.mxu0 0.0
      %7696 = vmatpush1.msra.mxu0 0.0
      %7697 = vmatprep.subr.mxu0 0.0
      %7698 = vmatpush1.msra.mxu0 0.0
      %7699 = vmatprep.subr.mxu0 0.0
      %7700 = vmatpush1.msra.mxu0 0.0
      %7701 = vmatprep.subr.mxu0 0.0
      %7702 = vmatpush1.msra.mxu0 0.0
      %7703 = vmatprep.subr.mxu0 0.0
      %7704 = vmatpush1.msra.mxu0 0.0
      %7705 = vmatprep.subr.mxu0 0.0
      %7706 = vmatpush1.msra.mxu0 0.0
      %7707 = vmatprep.subr.mxu0 0.0
      %7708 = vmatpush1.msra.mxu0 0.0
      %7709 = vmatprep.subr.mxu0 0.0
      %7710 = vmatpush1.msra.mxu0 0.0
      %7711 = vmatprep.subr.mxu0 0.0
      %7712 = vmatpush1.msra.mxu0 0.0
      %7713 = vmatprep.subr.mxu0 0.0
      %7714 = vmatpush1.msra.mxu0 0.0
      %7715 = vmatprep.subr.mxu0 0.0
      %7716 = vmatpush1.msra.mxu0 0.0
      %7717 = vmatprep.subr.mxu0 0.0
      %7718 = vmatpush1.msra.mxu0 0.0
      %7719 = vmatprep.subr.mxu0 0.0
      %7720 = vmatpush1.msra.mxu0 0.0
      %7721 = vmatprep.subr.mxu0 0.0
      %7722 = vmatpush1.msra.mxu0 0.0
      %7723 = vmatprep.subr.mxu0 0.0
      %7724 = vmatpush1.msra.mxu0 0.0
      %7725 = vmatprep.subr.mxu0 0.0
      %7726 = vmatpush1.msra.mxu0 0.0
      %7727 = vmatprep.subr.mxu0 0.0
      %7728 = vmatpush1.msra.mxu0 0.0
      %7729 = vmatprep.subr.mxu0 0.0
      %7730 = vmatpush1.msra.mxu0 0.0
      %7731 = vmatprep.subr.mxu0 0.0
      %7732 = vmatpush1.msra.mxu0 0.0
      %7733 = vmatprep.subr.mxu0 0.0
      %7734 = vmatpush1.msra.mxu0 0.0
      %7735 = vmatprep.mubr.f32.mxu0 0.0
      %7736 = vmatmul.mubr.f32.gmra.mrb[0].mxu0 %v7665
      %v7737 = vpop.f32.mrb[0].mxu0
      %v7738 = vadd.f32 %v7662, %v7737
      %v7739 = vpop.f32.mrb[0].mxu0
      %7740 = vdwg.mxu0
      %v7741 = vsub.f32 0.0, %v7738
      %v7742 = vmul.f32 %v7741, 1.442695
      %v7743 = vpow.pop %v7742
      %v7744 = vadd.f32 %v7743, 1.0
      %v7745 = vrcp.pop %v7744
      %v7746 = vmul.f32 1.0, %v7745
      %v7747 = vlaneseq
      %v7748 = vshrl.u32 %v7747, 7
      %v7749 = vsub.s32 0, %v7748
      %v7750 = vrot.slane %v7746, %v7749
      %v7751 = vmul.f32 %v7353, %v7750
      %v7752 = vmul.f32 %v7358, %v7750
      %v7753 = vmul.f32 %v7363, %v7750
      %v7754 = vmul.f32 %v7368, %v7750
      %v7755 = vmul.f32 %v7373, %v7750
      %v7756 = vmul.f32 %v7378, %v7750
      %v7757 = vmul.f32 %v7383, %v7750
      %v7758 = vmul.f32 %v7388, %v7750
      %v7759 = vmul.f32 %v7393, %v7750
      %v7760 = vmul.f32 %v7398, %v7750
      %v7761 = vmul.f32 %v7403, %v7750
      %v7762 = vmul.f32 %v7408, %v7750
      %v7763 = vmul.f32 %v7413, %v7750
      %v7764 = vmul.f32 %v7418, %v7750
      %v7765 = vmul.f32 %v7423, %v7750
      %v7766 = vmul.f32 %v7428, %v7750
      %v7767 = vmul.f32 %v7433, %v7750
      %v7768 = vmul.f32 %v7438, %v7750
      %v7769 = vmul.f32 %v7443, %v7750
      %v7770 = vmul.f32 %v7448, %v7750
      %v7771 = vmul.f32 %v7453, %v7750
      %v7772 = vmul.f32 %v7458, %v7750
      %v7773 = vmul.f32 %v7463, %v7750
      %v7774 = vmul.f32 %v7468, %v7750
      %v7775 = vmul.f32 %v7473, %v7750
      %v7776 = vmul.f32 %v7478, %v7750
      %v7777 = vmul.f32 %v7483, %v7750
      %v7778 = vmul.f32 %v7488, %v7750
      %v7779 = vmul.f32 %v7493, %v7750
      %v7780 = vmul.f32 %v7498, %v7750
      %v7781 = vmul.f32 %v7503, %v7750
      %v7782 = vmul.f32 %v7508, %v7750
      %v7783 = vadd.f32 %v7751, %v3902
      %v7784 = vadd.f32 %v7752, %v3903
      %v7785 = vadd.f32 %v7753, %v3904
      %v7786 = vadd.f32 %v7754, %v3905
      %v7787 = vadd.f32 %v7755, %v3906
      %v7788 = vadd.f32 %v7756, %v3907
      %v7789 = vadd.f32 %v7757, %v3908
      %v7790 = vadd.f32 %v7758, %v3909
      %v7791 = vadd.f32 %v7759, %v3910
      %v7792 = vadd.f32 %v7760, %v3911
      %v7793 = vadd.f32 %v7761, %v3912
      %v7794 = vadd.f32 %v7762, %v3913
      %v7795 = vadd.f32 %v7763, %v3914
      %v7796 = vadd.f32 %v7764, %v3915
      %v7797 = vadd.f32 %v7765, %v3916
      %v7798 = vadd.f32 %v7766, %v3917
      %v7799 = vadd.f32 %v7767, %v3918
      %v7800 = vadd.f32 %v7768, %v3919
      %v7801 = vadd.f32 %v7769, %v3920
      %v7802 = vadd.f32 %v7770, %v3921
      %v7803 = vadd.f32 %v7771, %v3922
      %v7804 = vadd.f32 %v7772, %v3923
      %v7805 = vadd.f32 %v7773, %v3924
      %v7806 = vadd.f32 %v7774, %v3925
      %v7807 = vadd.f32 %v7775, %v3926
      %v7808 = vadd.f32 %v7776, %v3927
      %v7809 = vadd.f32 %v7777, %v3928
      %v7810 = vadd.f32 %v7778, %v3929
      %v7811 = vadd.f32 %v7779, %v3930
      %v7812 = vadd.f32 %v7780, %v3931
      %v7813 = vadd.f32 %v7781, %v3932
      %v7814 = vadd.f32 %v7782, %v3933
      %v7815 = vld [vmem:[%s15] sm:$0xff]
      %v7816 = vld [vmem:[%s15 + $0x8] sm:$0xff]
      %v7817 = vld [vmem:[%s15 + $0x10] sm:$0xff]
      %v7818 = vld [vmem:[%s15 + $0x18] sm:$0xff]
      %v7819 = vld [vmem:[%s15 + $0x20] sm:$0xff]
      %v7820 = vld [vmem:[%s15 + $0x28] sm:$0xff]
      %v7821 = vld [vmem:[%s15 + $0x30] sm:$0xff]
      %v7822 = vld [vmem:[%s15 + $0x38] sm:$0xff]
      %v7823 = vld [vmem:[%s15 + $0x40] sm:$0xff]
      %v7824 = vld [vmem:[%s15 + $0x48] sm:$0xff]
      %v7825 = vld [vmem:[%s15 + $0x50] sm:$0xff]
      %v7826 = vld [vmem:[%s15 + $0x58] sm:$0xff]
      %v7827 = vld [vmem:[%s15 + $0x60] sm:$0xff]
      %v7828 = vld [vmem:[%s15 + $0x68] sm:$0xff]
      %v7829 = vld [vmem:[%s15 + $0x70] sm:$0xff]
      %v7830 = vld [vmem:[%s15 + $0x78] sm:$0xff]
      %v7831 = vld [vmem:[%s15 + $0x80] sm:$0xff]
      %v7832 = vld [vmem:[%s15 + $0x88] sm:$0xff]
      %v7833 = vld [vmem:[%s15 + $0x90] sm:$0xff]
      %v7834 = vld [vmem:[%s15 + $0x98] sm:$0xff]
      %v7835 = vld [vmem:[%s15 + $0xa0] sm:$0xff]
      %v7836 = vld [vmem:[%s15 + $0xa8] sm:$0xff]
      %v7837 = vld [vmem:[%s15 + $0xb0] sm:$0xff]
      %v7838 = vld [vmem:[%s15 + $0xb8] sm:$0xff]
      %v7839 = vld [vmem:[%s15 + $0xc0] sm:$0xff]
      %v7840 = vld [vmem:[%s15 + $0xc8] sm:$0xff]
      %v7841 = vld [vmem:[%s15 + $0xd0] sm:$0xff]
      %v7842 = vld [vmem:[%s15 + $0xd8] sm:$0xff]
      %v7843 = vld [vmem:[%s15 + $0xe0] sm:$0xff]
      %v7844 = vld [vmem:[%s15 + $0xe8] sm:$0xff]
      %v7845 = vld [vmem:[%s15 + $0xf0] sm:$0xff]
      %v7846 = vld [vmem:[%s15 + $0xf8] sm:$0xff]
      %v7847 = vld [vmem:[%s15 + $0x100] sm:$0xff]
      %v7848 = vld [vmem:[%s15 + $0x108] sm:$0xff]
      %v7849 = vld [vmem:[%s15 + $0x110] sm:$0xff]
      %v7850 = vld [vmem:[%s15 + $0x118] sm:$0xff]
      %v7851 = vld [vmem:[%s16] sm:$0x1]
      %v7868 = vrot.slane %v7785, 1
      %v7869 = vrot.slane %v7783, 1
      %v7870 = vrot.slane %v7787, 1
      %v7871 = vrot.slane %v7789, 1
      %v7872 = vrot.slane %v7791, 1
      %v7873 = vrot.slane %v7793, 1
      %v7874 = vrot.slane %v7795, 1
      %v7875 = vrot.slane %v7797, 1
      %v7876 = vrot.slane %v7799, 1
      %v7877 = vrot.slane %v7801, 1
      %v7878 = vrot.slane %v7803, 1
      %v7879 = vrot.slane %v7805, 1
      %v7880 = vrot.slane %v7807, 1
      %v7881 = vrot.slane %v7809, 1
      %v7882 = vrot.slane %v7811, 1
      %v7883 = vrot.slane %v7813, 1
      %v7916 = vrot.slane %v7785, 7
      %v7917 = vrot.slane %v7786, 7
      %v7918 = vsel %vm689, %v7916, %v7917
      %v7919 = vrot.slane %v7783, 7
      %v7920 = vrot.slane %v7784, 7
      %v7921 = vsel %vm689, %v7919, %v7920
      %v7922 = vrot.slane %v7787, 7
      %v7923 = vrot.slane %v7788, 7
      %v7924 = vsel %vm689, %v7922, %v7923
      %v7925 = vrot.slane %v7789, 7
      %v7926 = vrot.slane %v7790, 7
      %v7927 = vsel %vm689, %v7925, %v7926
      %v7928 = vrot.slane %v7791, 7
      %v7929 = vrot.slane %v7792, 7
      %v7930 = vsel %vm689, %v7928, %v7929
      %v7931 = vrot.slane %v7793, 7
      %v7932 = vrot.slane %v7794, 7
      %v7933 = vsel %vm689, %v7931, %v7932
      %v7934 = vrot.slane %v7795, 7
      %v7935 = vrot.slane %v7796, 7
      %v7936 = vsel %vm689, %v7934, %v7935
      %v7937 = vrot.slane %v7797, 7
      %v7938 = vrot.slane %v7798, 7
      %v7939 = vsel %vm689, %v7937, %v7938
      %v7940 = vrot.slane %v7799, 7
      %v7941 = vrot.slane %v7800, 7
      %v7942 = vsel %vm689, %v7940, %v7941
      %v7943 = vrot.slane %v7801, 7
      %v7944 = vrot.slane %v7802, 7
      %v7945 = vsel %vm689, %v7943, %v7944
      %v7946 = vrot.slane %v7803, 7
      %v7947 = vrot.slane %v7804, 7
      %v7948 = vsel %vm689, %v7946, %v7947
      %v7949 = vrot.slane %v7805, 7
      %v7950 = vrot.slane %v7806, 7
      %v7951 = vsel %vm689, %v7949, %v7950
      %v7952 = vrot.slane %v7807, 7
      %v7953 = vrot.slane %v7808, 7
      %v7954 = vsel %vm689, %v7952, %v7953
      %v7955 = vrot.slane %v7809, 7
      %v7956 = vrot.slane %v7810, 7
      %v7957 = vsel %vm689, %v7955, %v7956
      %v7958 = vrot.slane %v7811, 7
      %v7959 = vrot.slane %v7812, 7
      %v7960 = vsel %vm689, %v7958, %v7959
      %v7961 = vrot.slane %v7813, 7
      %v7962 = vrot.slane %v7814, 7
      %v7963 = vsel %vm689, %v7961, %v7962
      %v8011 = vrot.slane %v7786, 5
      %v8012 = vrot.slane %v7784, 5
      %v8013 = vrot.slane %v7788, 5
      %v8014 = vrot.slane %v7790, 5
      %v8015 = vrot.slane %v7792, 5
      %v8016 = vrot.slane %v7794, 5
      %v8017 = vrot.slane %v7796, 5
      %v8018 = vrot.slane %v7798, 5
      %v8019 = vrot.slane %v7800, 5
      %v8020 = vrot.slane %v7802, 5
      %v8021 = vrot.slane %v7804, 5
      %v8022 = vrot.slane %v7806, 5
      %v8023 = vrot.slane %v7808, 5
      %v8024 = vrot.slane %v7810, 5
      %v8025 = vrot.slane %v7812, 5
      %v8026 = vrot.slane %v7814, 5
      %v8043 = vsel %vm689, %v7868, %v7916
      %v8044 = vsel %vm689, %v7869, %v7919
      %v8045 = vsel %vm689, %v7870, %v7922
      %v8046 = vsel %vm689, %v7871, %v7925
      %v8047 = vsel %vm689, %v7872, %v7928
      %v8048 = vsel %vm689, %v7873, %v7931
      %v8049 = vsel %vm689, %v7874, %v7934
      %v8050 = vsel %vm689, %v7875, %v7937
      %v8051 = vsel %vm689, %v7876, %v7940
      %v8052 = vsel %vm689, %v7877, %v7943
      %v8053 = vsel %vm689, %v7878, %v7946
      %v8054 = vsel %vm689, %v7879, %v7949
      %v8055 = vsel %vm689, %v7880, %v7952
      %v8056 = vsel %vm689, %v7881, %v7955
      %v8057 = vsel %vm689, %v7882, %v7958
      %v8058 = vsel %vm689, %v7883, %v7961
      %v8059 = vsel %vm689, %v7917, %v8011
      %v8060 = vsel %vm689, %v7920, %v8012
      %v8061 = vsel %vm689, %v7923, %v8013
      %v8062 = vsel %vm689, %v7926, %v8014
      %v8063 = vsel %vm689, %v7929, %v8015
      %v8064 = vsel %vm689, %v7932, %v8016
      %v8065 = vsel %vm689, %v7935, %v8017
      %v8066 = vsel %vm689, %v7938, %v8018
      %v8067 = vsel %vm689, %v7941, %v8019
      %v8068 = vsel %vm689, %v7944, %v8020
      %v8069 = vsel %vm689, %v7947, %v8021
      %v8070 = vsel %vm689, %v7950, %v8022
      %v8071 = vsel %vm689, %v7953, %v8023
      %v8072 = vsel %vm689, %v7956, %v8024
      %v8073 = vsel %vm689, %v7959, %v8025
      %v8074 = vsel %vm689, %v7962, %v8026
      %v8105 = vrot.slane %v8043, 1
      %v8106 = vrot.slane %v7918, 1
      %v8107 = vsel %vm879, %v8105, %v8106
      %v8108 = vrot.slane %v8059, 1
      %v8109 = vsel %vm879, %v8106, %v8108
      %v8110 = vrot.slane %v8044, 1
      %v8111 = vrot.slane %v7921, 1
      %v8112 = vsel %vm879, %v8110, %v8111
      %v8113 = vrot.slane %v8060, 1
      %v8114 = vsel %vm879, %v8111, %v8113
      %v8115 = vrot.slane %v8045, 1
      %v8116 = vrot.slane %v7924, 1
      %v8117 = vsel %vm879, %v8115, %v8116
      %v8118 = vrot.slane %v8061, 1
      %v8119 = vsel %vm879, %v8116, %v8118
      %v8120 = vrot.slane %v8046, 1
      %v8121 = vrot.slane %v7927, 1
      %v8122 = vsel %vm879, %v8120, %v8121
      %v8123 = vrot.slane %v8062, 1
      %v8124 = vsel %vm879, %v8121, %v8123
      %v8125 = vrot.slane %v8047, 1
      %v8126 = vrot.slane %v7930, 1
      %v8127 = vsel %vm879, %v8125, %v8126
      %v8128 = vrot.slane %v8063, 1
      %v8129 = vsel %vm879, %v8126, %v8128
      %v8130 = vrot.slane %v8048, 1
      %v8131 = vrot.slane %v7933, 1
      %v8132 = vsel %vm879, %v8130, %v8131
      %v8133 = vrot.slane %v8064, 1
      %v8134 = vsel %vm879, %v8131, %v8133
      %v8135 = vrot.slane %v8049, 1
      %v8136 = vrot.slane %v7936, 1
      %v8137 = vsel %vm879, %v8135, %v8136
      %v8138 = vrot.slane %v8065, 1
      %v8139 = vsel %vm879, %v8136, %v8138
      %v8140 = vrot.slane %v8050, 1
      %v8141 = vrot.slane %v7939, 1
      %v8142 = vsel %vm879, %v8140, %v8141
      %v8143 = vrot.slane %v8066, 1
      %v8144 = vsel %vm879, %v8141, %v8143
      %v8145 = vrot.slane %v8051, 1
      %v8146 = vrot.slane %v7942, 1
      %v8147 = vsel %vm879, %v8145, %v8146
      %v8148 = vrot.slane %v8067, 1
      %v8149 = vsel %vm879, %v8146, %v8148
      %v8150 = vrot.slane %v8052, 1
      %v8151 = vrot.slane %v7945, 1
      %v8152 = vsel %vm879, %v8150, %v8151
      %v8153 = vrot.slane %v8068, 1
      %v8154 = vsel %vm879, %v8151, %v8153
      %v8155 = vrot.slane %v8053, 1
      %v8156 = vrot.slane %v7948, 1
      %v8157 = vsel %vm879, %v8155, %v8156
      %v8158 = vrot.slane %v8069, 1
      %v8159 = vsel %vm879, %v8156, %v8158
      %v8160 = vrot.slane %v8054, 1
      %v8161 = vrot.slane %v7951, 1
      %v8162 = vsel %vm879, %v8160, %v8161
      %v8163 = vrot.slane %v8070, 1
      %v8164 = vsel %vm879, %v8161, %v8163
      %v8165 = vrot.slane %v8055, 1
      %v8166 = vrot.slane %v7954, 1
      %v8167 = vsel %vm879, %v8165, %v8166
      %v8168 = vrot.slane %v8071, 1
      %v8169 = vsel %vm879, %v8166, %v8168
      %v8170 = vrot.slane %v8056, 1
      %v8171 = vrot.slane %v7957, 1
      %v8172 = vsel %vm879, %v8170, %v8171
      %v8173 = vrot.slane %v8072, 1
      %v8174 = vsel %vm879, %v8171, %v8173
      %v8175 = vrot.slane %v8057, 1
      %v8176 = vrot.slane %v7960, 1
      %v8177 = vsel %vm879, %v8175, %v8176
      %v8178 = vrot.slane %v8073, 1
      %v8179 = vsel %vm879, %v8176, %v8178
      %v8180 = vrot.slane %v8043, 2
      %v8181 = vrot.slane %v7918, 2
      %v8182 = vsel %vm955, %v8180, %v8181
      %v8183 = vrot.slane %v8059, 2
      %v8184 = vsel %vm955, %v8181, %v8183
      %v8185 = vrot.slane %v8044, 2
      %v8186 = vrot.slane %v7921, 2
      %v8187 = vsel %vm955, %v8185, %v8186
      %v8188 = vrot.slane %v8060, 2
      %v8189 = vsel %vm955, %v8186, %v8188
      %v8190 = vrot.slane %v8045, 2
      %v8191 = vrot.slane %v7924, 2
      %v8192 = vsel %vm955, %v8190, %v8191
      %v8193 = vrot.slane %v8061, 2
      %v8194 = vsel %vm955, %v8191, %v8193
      %v8195 = vrot.slane %v8046, 2
      %v8196 = vrot.slane %v7927, 2
      %v8197 = vsel %vm955, %v8195, %v8196
      %v8198 = vrot.slane %v8062, 2
      %v8199 = vsel %vm955, %v8196, %v8198
      %v8200 = vrot.slane %v8047, 2
      %v8201 = vrot.slane %v7930, 2
      %v8202 = vsel %vm955, %v8200, %v8201
      %v8203 = vrot.slane %v8063, 2
      %v8204 = vsel %vm955, %v8201, %v8203
      %v8205 = vrot.slane %v8048, 2
      %v8206 = vrot.slane %v7933, 2
      %v8207 = vsel %vm955, %v8205, %v8206
      %v8208 = vrot.slane %v8064, 2
      %v8209 = vsel %vm955, %v8206, %v8208
      %v8210 = vrot.slane %v8049, 2
      %v8211 = vrot.slane %v7936, 2
      %v8212 = vsel %vm955, %v8210, %v8211
      %v8213 = vrot.slane %v8065, 2
      %v8214 = vsel %vm955, %v8211, %v8213
      %v8215 = vrot.slane %v8050, 2
      %v8216 = vrot.slane %v7939, 2
      %v8217 = vsel %vm955, %v8215, %v8216
      %v8218 = vrot.slane %v8066, 2
      %v8219 = vsel %vm955, %v8216, %v8218
      %v8220 = vrot.slane %v8051, 2
      %v8221 = vrot.slane %v7942, 2
      %v8222 = vsel %vm955, %v8220, %v8221
      %v8223 = vrot.slane %v8067, 2
      %v8224 = vsel %vm955, %v8221, %v8223
      %v8225 = vrot.slane %v8052, 2
      %v8226 = vrot.slane %v7945, 2
      %v8227 = vsel %vm955, %v8225, %v8226
      %v8228 = vrot.slane %v8068, 2
      %v8229 = vsel %vm955, %v8226, %v8228
      %v8230 = vrot.slane %v8053, 2
      %v8231 = vrot.slane %v7948, 2
      %v8232 = vsel %vm955, %v8230, %v8231
      %v8233 = vrot.slane %v8069, 2
      %v8234 = vsel %vm955, %v8231, %v8233
      %v8235 = vrot.slane %v8054, 2
      %v8236 = vrot.slane %v7951, 2
      %v8237 = vsel %vm955, %v8235, %v8236
      %v8238 = vrot.slane %v8070, 2
      %v8239 = vsel %vm955, %v8236, %v8238
      %v8240 = vrot.slane %v8055, 2
      %v8241 = vrot.slane %v7954, 2
      %v8242 = vsel %vm955, %v8240, %v8241
      %v8243 = vrot.slane %v8071, 2
      %v8244 = vsel %vm955, %v8241, %v8243
      %v8245 = vrot.slane %v8056, 2
      %v8246 = vrot.slane %v7957, 2
      %v8247 = vsel %vm955, %v8245, %v8246
      %v8248 = vrot.slane %v8072, 2
      %v8249 = vsel %vm955, %v8246, %v8248
      %v8250 = vrot.slane %v8057, 2
      %v8251 = vrot.slane %v7960, 2
      %v8252 = vsel %vm955, %v8250, %v8251
      %v8253 = vrot.slane %v8073, 2
      %v8254 = vsel %vm955, %v8251, %v8253
      %v8257 = vrot.slane %v8058, 1
      %v8258 = vrot.slane %v7963, 1
      %v8259 = vsel %vm879, %v8257, %v8258
      %v8260 = vrot.slane %v8074, 1
      %v8261 = vsel %vm879, %v8258, %v8260
      %v8294 = vrot.slane %v8058, 2
      %v8295 = vrot.slane %v7963, 2
      %v8296 = vsel %vm955, %v8294, %v8295
      %v8297 = vrot.slane %v8074, 2
      %v8298 = vsel %vm955, %v8295, %v8297
      %8299 = vrot.lane.b32.xlu0 %v8107, 32
      %v8300 = vpop.permute.xlu0 %8299
      %8301 = vrot.lane.b32.xlu0 %v8109, 32
      %v8302 = vpop.permute.xlu0 %8301
      %8303 = vrot.lane.b32.xlu0 %v8112, 32
      %v8304 = vpop.permute.xlu0 %8303
      %8305 = vrot.lane.b32.xlu0 %v8114, 32
      %v8306 = vpop.permute.xlu0 %8305
      %8307 = vrot.lane.b32.xlu0 %v8117, 32
      %v8308 = vpop.permute.xlu0 %8307
      %8309 = vrot.lane.b32.xlu0 %v8119, 32
      %v8310 = vpop.permute.xlu0 %8309
      %8311 = vrot.lane.b32.xlu0 %v8122, 32
      %v8312 = vpop.permute.xlu0 %8311
      %8313 = vrot.lane.b32.xlu0 %v8124, 32
      %v8314 = vpop.permute.xlu0 %8313
      %8315 = vrot.lane.b32.xlu0 %v8127, 32
      %v8316 = vpop.permute.xlu0 %8315
      %8317 = vrot.lane.b32.xlu0 %v8129, 32
      %v8318 = vpop.permute.xlu0 %8317
      %8319 = vrot.lane.b32.xlu0 %v8132, 32
      %v8320 = vpop.permute.xlu0 %8319
      %8321 = vrot.lane.b32.xlu0 %v8134, 32
      %v8322 = vpop.permute.xlu0 %8321
      %8323 = vrot.lane.b32.xlu0 %v8137, 32
      %v8324 = vpop.permute.xlu0 %8323
      %8325 = vrot.lane.b32.xlu0 %v8139, 32
      %v8326 = vpop.permute.xlu0 %8325
      %8327 = vrot.lane.b32.xlu0 %v8142, 32
      %v8328 = vpop.permute.xlu0 %8327
      %8329 = vrot.lane.b32.xlu0 %v8144, 32
      %v8330 = vpop.permute.xlu0 %8329
      %8331 = vrot.lane.b32.xlu0 %v8147, 32
      %v8332 = vpop.permute.xlu0 %8331
      %8333 = vrot.lane.b32.xlu0 %v8149, 32
      %v8334 = vpop.permute.xlu0 %8333
      %8335 = vrot.lane.b32.xlu0 %v8152, 32
      %v8336 = vpop.permute.xlu0 %8335
      %8337 = vrot.lane.b32.xlu0 %v8154, 32
      %v8338 = vpop.permute.xlu0 %8337
      %8339 = vrot.lane.b32.xlu0 %v8157, 32
      %v8340 = vpop.permute.xlu0 %8339
      %8341 = vrot.lane.b32.xlu0 %v8159, 32
      %v8342 = vpop.permute.xlu0 %8341
      %8343 = vrot.lane.b32.xlu0 %v8162, 32
      %v8344 = vpop.permute.xlu0 %8343
      %8345 = vrot.lane.b32.xlu0 %v8164, 32
      %v8346 = vpop.permute.xlu0 %8345
      %8347 = vrot.lane.b32.xlu0 %v8167, 32
      %v8348 = vpop.permute.xlu0 %8347
      %8349 = vrot.lane.b32.xlu0 %v8169, 32
      %v8350 = vpop.permute.xlu0 %8349
      %8351 = vrot.lane.b32.xlu0 %v8172, 32
      %v8352 = vpop.permute.xlu0 %8351
      %8353 = vrot.lane.b32.xlu0 %v8174, 32
      %v8354 = vpop.permute.xlu0 %8353
      %8355 = vrot.lane.b32.xlu0 %v8177, 32
      %v8356 = vpop.permute.xlu0 %8355
      %8357 = vrot.lane.b32.xlu0 %v8179, 32
      %v8358 = vpop.permute.xlu0 %8357
      %8389 = vrot.lane.b32.xlu0 %v8182, 64
      %v8390 = vpop.permute.xlu0 %8389
      %8391 = vrot.lane.b32.xlu0 %v8184, 64
      %v8392 = vpop.permute.xlu0 %8391
      %8393 = vrot.lane.b32.xlu0 %v8187, 64
      %v8394 = vpop.permute.xlu0 %8393
      %8395 = vrot.lane.b32.xlu0 %v8189, 64
      %v8396 = vpop.permute.xlu0 %8395
      %8397 = vrot.lane.b32.xlu0 %v8192, 64
      %v8398 = vpop.permute.xlu0 %8397
      %8399 = vrot.lane.b32.xlu0 %v8194, 64
      %v8400 = vpop.permute.xlu0 %8399
      %8401 = vrot.lane.b32.xlu0 %v8197, 64
      %v8402 = vpop.permute.xlu0 %8401
      %8403 = vrot.lane.b32.xlu0 %v8199, 64
      %v8404 = vpop.permute.xlu0 %8403
      %8405 = vrot.lane.b32.xlu0 %v8202, 64
      %v8406 = vpop.permute.xlu0 %8405
      %8407 = vrot.lane.b32.xlu0 %v8204, 64
      %v8408 = vpop.permute.xlu0 %8407
      %8409 = vrot.lane.b32.xlu0 %v8207, 64
      %v8410 = vpop.permute.xlu0 %8409
      %8411 = vrot.lane.b32.xlu0 %v8209, 64
      %v8412 = vpop.permute.xlu0 %8411
      %8413 = vrot.lane.b32.xlu0 %v8212, 64
      %v8414 = vpop.permute.xlu0 %8413
      %8415 = vrot.lane.b32.xlu0 %v8214, 64
      %v8416 = vpop.permute.xlu0 %8415
      %8417 = vrot.lane.b32.xlu0 %v8217, 64
      %v8418 = vpop.permute.xlu0 %8417
      %8419 = vrot.lane.b32.xlu0 %v8219, 64
      %v8420 = vpop.permute.xlu0 %8419
      %8421 = vrot.lane.b32.xlu0 %v8222, 64
      %v8422 = vpop.permute.xlu0 %8421
      %8423 = vrot.lane.b32.xlu0 %v8224, 64
      %v8424 = vpop.permute.xlu0 %8423
      %8425 = vrot.lane.b32.xlu0 %v8227, 64
      %v8426 = vpop.permute.xlu0 %8425
      %8427 = vrot.lane.b32.xlu0 %v8229, 64
      %v8428 = vpop.permute.xlu0 %8427
      %8429 = vrot.lane.b32.xlu0 %v8232, 64
      %v8430 = vpop.permute.xlu0 %8429
      %8431 = vrot.lane.b32.xlu0 %v8234, 64
      %v8432 = vpop.permute.xlu0 %8431
      %8433 = vrot.lane.b32.xlu0 %v8237, 64
      %v8434 = vpop.permute.xlu0 %8433
      %8435 = vrot.lane.b32.xlu0 %v8239, 64
      %v8436 = vpop.permute.xlu0 %8435
      %8437 = vrot.lane.b32.xlu0 %v8242, 64
      %v8438 = vpop.permute.xlu0 %8437
      %8439 = vrot.lane.b32.xlu0 %v8244, 64
      %v8440 = vpop.permute.xlu0 %8439
      %8441 = vrot.lane.b32.xlu0 %v8247, 64
      %v8442 = vpop.permute.xlu0 %8441
      %8443 = vrot.lane.b32.xlu0 %v8249, 64
      %v8444 = vpop.permute.xlu0 %8443
      %8445 = vrot.lane.b32.xlu0 %v8252, 64
      %v8446 = vpop.permute.xlu0 %8445
      %8447 = vrot.lane.b32.xlu0 %v8254, 64
      %v8448 = vpop.permute.xlu0 %8447
      %8479 = vrot.lane.b32.xlu0 %v8044, 96
      %v8480 = vpop.permute.xlu0 %8479
      %8481 = vrot.lane.b32.xlu0 %v7921, 96
      %v8482 = vpop.permute.xlu0 %8481
      %8483 = vrot.lane.b32.xlu0 %v8043, 96
      %v8484 = vpop.permute.xlu0 %8483
      %8485 = vrot.lane.b32.xlu0 %v7918, 96
      %v8486 = vpop.permute.xlu0 %8485
      %8487 = vrot.lane.b32.xlu0 %v8045, 96
      %v8488 = vpop.permute.xlu0 %8487
      %8489 = vrot.lane.b32.xlu0 %v7924, 96
      %v8490 = vpop.permute.xlu0 %8489
      %8491 = vrot.lane.b32.xlu0 %v8046, 96
      %v8492 = vpop.permute.xlu0 %8491
      %8493 = vrot.lane.b32.xlu0 %v7927, 96
      %v8494 = vpop.permute.xlu0 %8493
      %8495 = vrot.lane.b32.xlu0 %v8047, 96
      %v8496 = vpop.permute.xlu0 %8495
      %8497 = vrot.lane.b32.xlu0 %v7930, 96
      %v8498 = vpop.permute.xlu0 %8497
      %8499 = vrot.lane.b32.xlu0 %v8048, 96
      %v8500 = vpop.permute.xlu0 %8499
      %8501 = vrot.lane.b32.xlu0 %v7933, 96
      %v8502 = vpop.permute.xlu0 %8501
      %8503 = vrot.lane.b32.xlu0 %v8049, 96
      %v8504 = vpop.permute.xlu0 %8503
      %8505 = vrot.lane.b32.xlu0 %v7936, 96
      %v8506 = vpop.permute.xlu0 %8505
      %8507 = vrot.lane.b32.xlu0 %v8050, 96
      %v8508 = vpop.permute.xlu0 %8507
      %8509 = vrot.lane.b32.xlu0 %v7939, 96
      %v8510 = vpop.permute.xlu0 %8509
      %8511 = vrot.lane.b32.xlu0 %v8051, 96
      %v8512 = vpop.permute.xlu0 %8511
      %8513 = vrot.lane.b32.xlu0 %v7942, 96
      %v8514 = vpop.permute.xlu0 %8513
      %8515 = vrot.lane.b32.xlu0 %v8052, 96
      %v8516 = vpop.permute.xlu0 %8515
      %8517 = vrot.lane.b32.xlu0 %v7945, 96
      %v8518 = vpop.permute.xlu0 %8517
      %8519 = vrot.lane.b32.xlu0 %v8053, 96
      %v8520 = vpop.permute.xlu0 %8519
      %8521 = vrot.lane.b32.xlu0 %v7948, 96
      %v8522 = vpop.permute.xlu0 %8521
      %8523 = vrot.lane.b32.xlu0 %v8054, 96
      %v8524 = vpop.permute.xlu0 %8523
      %8525 = vrot.lane.b32.xlu0 %v7951, 96
      %v8526 = vpop.permute.xlu0 %8525
      %8527 = vrot.lane.b32.xlu0 %v8055, 96
      %v8528 = vpop.permute.xlu0 %8527
      %8529 = vrot.lane.b32.xlu0 %v7954, 96
      %v8530 = vpop.permute.xlu0 %8529
      %8531 = vrot.lane.b32.xlu0 %v8056, 96
      %v8532 = vpop.permute.xlu0 %8531
      %8533 = vrot.lane.b32.xlu0 %v7957, 96
      %v8534 = vpop.permute.xlu0 %8533
      %8535 = vrot.lane.b32.xlu0 %v8057, 96
      %v8536 = vpop.permute.xlu0 %8535
      %8537 = vrot.lane.b32.xlu0 %v7960, 96
      %v8538 = vpop.permute.xlu0 %8537
      %8539 = vrot.lane.b32.xlu0 %v8058, 96
      %v8540 = vpop.permute.xlu0 %8539
      %8541 = vrot.lane.b32.xlu0 %v7963, 96
      %v8542 = vpop.permute.xlu0 %8541
      %8575 = vrot.lane.b32.xlu0 %v8187, 32
      %v8576 = vpop.permute.xlu0 %8575
      %8577 = vrot.lane.b32.xlu0 %v8189, 32
      %v8578 = vpop.permute.xlu0 %8577
      %8579 = vrot.lane.b32.xlu0 %v8182, 32
      %v8580 = vpop.permute.xlu0 %8579
      %8581 = vrot.lane.b32.xlu0 %v8184, 32
      %v8582 = vpop.permute.xlu0 %8581
      %8583 = vrot.lane.b32.xlu0 %v8192, 32
      %v8584 = vpop.permute.xlu0 %8583
      %8585 = vrot.lane.b32.xlu0 %v8194, 32
      %v8586 = vpop.permute.xlu0 %8585
      %8587 = vrot.lane.b32.xlu0 %v8197, 32
      %v8588 = vpop.permute.xlu0 %8587
      %8589 = vrot.lane.b32.xlu0 %v8199, 32
      %v8590 = vpop.permute.xlu0 %8589
      %8591 = vrot.lane.b32.xlu0 %v8202, 32
      %v8592 = vpop.permute.xlu0 %8591
      %8593 = vrot.lane.b32.xlu0 %v8204, 32
      %v8594 = vpop.permute.xlu0 %8593
      %8595 = vrot.lane.b32.xlu0 %v8207, 32
      %v8596 = vpop.permute.xlu0 %8595
      %8597 = vrot.lane.b32.xlu0 %v8209, 32
      %v8598 = vpop.permute.xlu0 %8597
      %8599 = vrot.lane.b32.xlu0 %v8212, 32
      %v8600 = vpop.permute.xlu0 %8599
      %8601 = vrot.lane.b32.xlu0 %v8214, 32
      %v8602 = vpop.permute.xlu0 %8601
      %8603 = vrot.lane.b32.xlu0 %v8217, 32
      %v8604 = vpop.permute.xlu0 %8603
      %8605 = vrot.lane.b32.xlu0 %v8219, 32
      %v8606 = vpop.permute.xlu0 %8605
      %8607 = vrot.lane.b32.xlu0 %v8222, 32
      %v8608 = vpop.permute.xlu0 %8607
      %8609 = vrot.lane.b32.xlu0 %v8224, 32
      %v8610 = vpop.permute.xlu0 %8609
      %8611 = vrot.lane.b32.xlu0 %v8227, 32
      %v8612 = vpop.permute.xlu0 %8611
      %8613 = vrot.lane.b32.xlu0 %v8229, 32
      %v8614 = vpop.permute.xlu0 %8613
      %8615 = vrot.lane.b32.xlu0 %v8232, 32
      %v8616 = vpop.permute.xlu0 %8615
      %8617 = vrot.lane.b32.xlu0 %v8234, 32
      %v8618 = vpop.permute.xlu0 %8617
      %8619 = vrot.lane.b32.xlu0 %v8237, 32
      %v8620 = vpop.permute.xlu0 %8619
      %8621 = vrot.lane.b32.xlu0 %v8239, 32
      %v8622 = vpop.permute.xlu0 %8621
      %8623 = vrot.lane.b32.xlu0 %v8242, 32
      %v8624 = vpop.permute.xlu0 %8623
      %8625 = vrot.lane.b32.xlu0 %v8244, 32
      %v8626 = vpop.permute.xlu0 %8625
      %8627 = vrot.lane.b32.xlu0 %v8247, 32
      %v8628 = vpop.permute.xlu0 %8627
      %8629 = vrot.lane.b32.xlu0 %v8249, 32
      %v8630 = vpop.permute.xlu0 %8629
      %8631 = vrot.lane.b32.xlu0 %v8252, 32
      %v8632 = vpop.permute.xlu0 %8631
      %8633 = vrot.lane.b32.xlu0 %v8254, 32
      %v8634 = vpop.permute.xlu0 %8633
      %8635 = vrot.lane.b32.xlu0 %v8296, 32
      %v8636 = vpop.permute.xlu0 %8635
      %8637 = vrot.lane.b32.xlu0 %v8298, 32
      %v8638 = vpop.permute.xlu0 %8637
      %8671 = vrot.lane.b32.xlu0 %v8043, 64
      %v8672 = vpop.permute.xlu0 %8671
      %8673 = vrot.lane.b32.xlu0 %v7918, 64
      %v8674 = vpop.permute.xlu0 %8673
      %8675 = vrot.lane.b32.xlu0 %v8045, 64
      %v8676 = vpop.permute.xlu0 %8675
      %8677 = vrot.lane.b32.xlu0 %v7924, 64
      %v8678 = vpop.permute.xlu0 %8677
      %8679 = vrot.lane.b32.xlu0 %v8046, 64
      %v8680 = vpop.permute.xlu0 %8679
      %8681 = vrot.lane.b32.xlu0 %v7927, 64
      %v8682 = vpop.permute.xlu0 %8681
      %8683 = vrot.lane.b32.xlu0 %v8047, 64
      %v8684 = vpop.permute.xlu0 %8683
      %8685 = vrot.lane.b32.xlu0 %v7930, 64
      %v8686 = vpop.permute.xlu0 %8685
      %8687 = vrot.lane.b32.xlu0 %v8048, 64
      %v8688 = vpop.permute.xlu0 %8687
      %8689 = vrot.lane.b32.xlu0 %v7933, 64
      %v8690 = vpop.permute.xlu0 %8689
      %8691 = vrot.lane.b32.xlu0 %v8049, 64
      %v8692 = vpop.permute.xlu0 %8691
      %8693 = vrot.lane.b32.xlu0 %v7936, 64
      %v8694 = vpop.permute.xlu0 %8693
      %8695 = vrot.lane.b32.xlu0 %v8050, 64
      %v8696 = vpop.permute.xlu0 %8695
      %8697 = vrot.lane.b32.xlu0 %v7939, 64
      %v8698 = vpop.permute.xlu0 %8697
      %8699 = vrot.lane.b32.xlu0 %v8051, 64
      %v8700 = vpop.permute.xlu0 %8699
      %8701 = vrot.lane.b32.xlu0 %v7942, 64
      %v8702 = vpop.permute.xlu0 %8701
      %8703 = vrot.lane.b32.xlu0 %v8052, 64
      %v8704 = vpop.permute.xlu0 %8703
      %8705 = vrot.lane.b32.xlu0 %v7945, 64
      %v8706 = vpop.permute.xlu0 %8705
      %8707 = vrot.lane.b32.xlu0 %v8053, 64
      %v8708 = vpop.permute.xlu0 %8707
      %8709 = vrot.lane.b32.xlu0 %v7948, 64
      %v8710 = vpop.permute.xlu0 %8709
      %8711 = vrot.lane.b32.xlu0 %v8054, 64
      %v8712 = vpop.permute.xlu0 %8711
      %8713 = vrot.lane.b32.xlu0 %v7951, 64
      %v8714 = vpop.permute.xlu0 %8713
      %8715 = vrot.lane.b32.xlu0 %v8055, 64
      %v8716 = vpop.permute.xlu0 %8715
      %8717 = vrot.lane.b32.xlu0 %v7954, 64
      %v8718 = vpop.permute.xlu0 %8717
      %8719 = vrot.lane.b32.xlu0 %v8056, 64
      %v8720 = vpop.permute.xlu0 %8719
      %8721 = vrot.lane.b32.xlu0 %v7957, 64
      %v8722 = vpop.permute.xlu0 %8721
      %8723 = vrot.lane.b32.xlu0 %v8057, 64
      %v8724 = vpop.permute.xlu0 %8723
      %8725 = vrot.lane.b32.xlu0 %v7960, 64
      %v8726 = vpop.permute.xlu0 %8725
      %8727 = vrot.lane.b32.xlu0 %v8058, 64
      %v8728 = vpop.permute.xlu0 %8727
      %8729 = vrot.lane.b32.xlu0 %v7963, 64
      %v8730 = vpop.permute.xlu0 %8729
      %8761 = vrot.lane.b32.xlu0 %v8107, 96
      %v8762 = vpop.permute.xlu0 %8761
      %8763 = vrot.lane.b32.xlu0 %v8109, 96
      %v8764 = vpop.permute.xlu0 %8763
      %8765 = vrot.lane.b32.xlu0 %v8117, 96
      %v8766 = vpop.permute.xlu0 %8765
      %8767 = vrot.lane.b32.xlu0 %v8119, 96
      %v8768 = vpop.permute.xlu0 %8767
      %8769 = vrot.lane.b32.xlu0 %v8122, 96
      %v8770 = vpop.permute.xlu0 %8769
      %8771 = vrot.lane.b32.xlu0 %v8124, 96
      %v8772 = vpop.permute.xlu0 %8771
      %8773 = vrot.lane.b32.xlu0 %v8127, 96
      %v8774 = vpop.permute.xlu0 %8773
      %8775 = vrot.lane.b32.xlu0 %v8129, 96
      %v8776 = vpop.permute.xlu0 %8775
      %8777 = vrot.lane.b32.xlu0 %v8132, 96
      %v8778 = vpop.permute.xlu0 %8777
      %8779 = vrot.lane.b32.xlu0 %v8134, 96
      %v8780 = vpop.permute.xlu0 %8779
      %8781 = vrot.lane.b32.xlu0 %v8137, 96
      %v8782 = vpop.permute.xlu0 %8781
      %8783 = vrot.lane.b32.xlu0 %v8139, 96
      %v8784 = vpop.permute.xlu0 %8783
      %8785 = vrot.lane.b32.xlu0 %v8142, 96
      %v8786 = vpop.permute.xlu0 %8785
      %8787 = vrot.lane.b32.xlu0 %v8144, 96
      %v8788 = vpop.permute.xlu0 %8787
      %8789 = vrot.lane.b32.xlu0 %v8147, 96
      %v8790 = vpop.permute.xlu0 %8789
      %8791 = vrot.lane.b32.xlu0 %v8149, 96
      %v8792 = vpop.permute.xlu0 %8791
      %8793 = vrot.lane.b32.xlu0 %v8152, 96
      %v8794 = vpop.permute.xlu0 %8793
      %8795 = vrot.lane.b32.xlu0 %v8154, 96
      %v8796 = vpop.permute.xlu0 %8795
      %8797 = vrot.lane.b32.xlu0 %v8157, 96
      %v8798 = vpop.permute.xlu0 %8797
      %8799 = vrot.lane.b32.xlu0 %v8159, 96
      %v8800 = vpop.permute.xlu0 %8799
      %8801 = vrot.lane.b32.xlu0 %v8162, 96
      %v8802 = vpop.permute.xlu0 %8801
      %8803 = vrot.lane.b32.xlu0 %v8164, 96
      %v8804 = vpop.permute.xlu0 %8803
      %8805 = vrot.lane.b32.xlu0 %v8167, 96
      %v8806 = vpop.permute.xlu0 %8805
      %8807 = vrot.lane.b32.xlu0 %v8169, 96
      %v8808 = vpop.permute.xlu0 %8807
      %8809 = vrot.lane.b32.xlu0 %v8172, 96
      %v8810 = vpop.permute.xlu0 %8809
      %8811 = vrot.lane.b32.xlu0 %v8174, 96
      %v8812 = vpop.permute.xlu0 %8811
      %8813 = vrot.lane.b32.xlu0 %v8177, 96
      %v8814 = vpop.permute.xlu0 %8813
      %8815 = vrot.lane.b32.xlu0 %v8179, 96
      %v8816 = vpop.permute.xlu0 %8815
      %8817 = vrot.lane.b32.xlu0 %v8259, 96
      %v8818 = vpop.permute.xlu0 %8817
      %8819 = vrot.lane.b32.xlu0 %v8261, 96
      %v8820 = vpop.permute.xlu0 %8819
      %v8851 = vsel %vm1876, %v8043, %v8300
      %v8852 = vsel %vm1876, %v7918, %v8302
      %v8853 = vsel %vm1876, %v8044, %v8304
      %v8854 = vsel %vm1876, %v7921, %v8306
      %v8855 = vsel %vm1876, %v8045, %v8308
      %v8856 = vsel %vm1876, %v7924, %v8310
      %v8857 = vsel %vm1876, %v8046, %v8312
      %v8858 = vsel %vm1876, %v7927, %v8314
      %v8859 = vsel %vm1876, %v8047, %v8316
      %v8860 = vsel %vm1876, %v7930, %v8318
      %v8861 = vsel %vm1876, %v8048, %v8320
      %v8862 = vsel %vm1876, %v7933, %v8322
      %v8863 = vsel %vm1876, %v8049, %v8324
      %v8864 = vsel %vm1876, %v7936, %v8326
      %v8865 = vsel %vm1876, %v8050, %v8328
      %v8866 = vsel %vm1876, %v7939, %v8330
      %v8867 = vsel %vm1876, %v8051, %v8332
      %v8868 = vsel %vm1876, %v7942, %v8334
      %v8869 = vsel %vm1876, %v8052, %v8336
      %v8870 = vsel %vm1876, %v7945, %v8338
      %v8871 = vsel %vm1876, %v8053, %v8340
      %v8872 = vsel %vm1876, %v7948, %v8342
      %v8873 = vsel %vm1876, %v8054, %v8344
      %v8874 = vsel %vm1876, %v7951, %v8346
      %v8875 = vsel %vm1876, %v8055, %v8348
      %v8876 = vsel %vm1876, %v7954, %v8350
      %v8877 = vsel %vm1876, %v8056, %v8352
      %v8878 = vsel %vm1876, %v7957, %v8354
      %v8879 = vsel %vm1876, %v8057, %v8356
      %v8880 = vsel %vm1876, %v7960, %v8358
      %v8881 = vsel %vm2008, %v8851, %v8390
      %v8882 = vsel %vm2008, %v8852, %v8392
      %v8883 = vsel %vm2008, %v8853, %v8394
      %v8884 = vsel %vm2008, %v8854, %v8396
      %v8885 = vsel %vm2008, %v8855, %v8398
      %v8886 = vsel %vm2008, %v8856, %v8400
      %v8887 = vsel %vm2008, %v8857, %v8402
      %v8888 = vsel %vm2008, %v8858, %v8404
      %v8889 = vsel %vm2008, %v8859, %v8406
      %v8890 = vsel %vm2008, %v8860, %v8408
      %v8891 = vsel %vm2008, %v8861, %v8410
      %v8892 = vsel %vm2008, %v8862, %v8412
      %v8893 = vsel %vm2008, %v8863, %v8414
      %v8894 = vsel %vm2008, %v8864, %v8416
      %v8895 = vsel %vm2008, %v8865, %v8418
      %v8896 = vsel %vm2008, %v8866, %v8420
      %v8897 = vsel %vm2008, %v8867, %v8422
      %v8898 = vsel %vm2008, %v8868, %v8424
      %v8899 = vsel %vm2008, %v8869, %v8426
      %v8900 = vsel %vm2008, %v8870, %v8428
      %v8901 = vsel %vm2008, %v8871, %v8430
      %v8902 = vsel %vm2008, %v8872, %v8432
      %v8903 = vsel %vm2008, %v8873, %v8434
      %v8904 = vsel %vm2008, %v8874, %v8436
      %v8905 = vsel %vm2008, %v8875, %v8438
      %v8906 = vsel %vm2008, %v8876, %v8440
      %v8907 = vsel %vm2008, %v8877, %v8442
      %v8908 = vsel %vm2008, %v8878, %v8444
      %v8909 = vsel %vm2008, %v8879, %v8446
      %v8910 = vsel %vm2008, %v8880, %v8448
      %v8911 = vsel %vm5030, %v8881, %v8480
      %v8912 = vsel %vm5030, %v8882, %v8482
      %v8913 = vsel %vm5030, %v8883, %v8484
      %v8914 = vsel %vm5030, %v8884, %v8486
      %v8915 = vsel %vm5030, %v8881, %v8488
      %v8916 = vsel %vm5030, %v8882, %v8490
      %v8917 = vsel %vm5030, %v8885, %v8492
      %v8918 = vsel %vm5030, %v8886, %v8494
      %v8919 = vsel %vm5030, %v8887, %v8496
      %v8920 = vsel %vm5030, %v8888, %v8498
      %v8921 = vsel %vm5030, %v8889, %v8500
      %v8922 = vsel %vm5030, %v8890, %v8502
      %v8923 = vsel %vm5030, %v8891, %v8504
      %v8924 = vsel %vm5030, %v8892, %v8506
      %v8925 = vsel %vm5030, %v8893, %v8508
      %v8926 = vsel %vm5030, %v8894, %v8510
      %v8927 = vsel %vm5030, %v8895, %v8512
      %v8928 = vsel %vm5030, %v8896, %v8514
      %v8929 = vsel %vm5030, %v8897, %v8516
      %v8930 = vsel %vm5030, %v8898, %v8518
      %v8931 = vsel %vm5030, %v8899, %v8520
      %v8932 = vsel %vm5030, %v8900, %v8522
      %v8933 = vsel %vm5030, %v8901, %v8524
      %v8934 = vsel %vm5030, %v8902, %v8526
      %v8935 = vsel %vm5030, %v8903, %v8528
      %v8936 = vsel %vm5030, %v8904, %v8530
      %v8937 = vsel %vm5030, %v8905, %v8532
      %v8938 = vsel %vm5030, %v8906, %v8534
      %v8939 = vsel %vm5030, %v8907, %v8536
      %v8940 = vsel %vm5030, %v8908, %v8538
      %v8941 = vsel %vm5030, %v8909, %v8540
      %v8942 = vsel %vm5030, %v8910, %v8542
      %v8943 = vsel %vm1876, %v8112, %v8576
      %v8944 = vsel %vm1876, %v8114, %v8578
      %v8945 = vsel %vm1876, %v8107, %v8580
      %v8946 = vsel %vm1876, %v8109, %v8582
      %v8947 = vsel %vm1876, %v8117, %v8584
      %v8948 = vsel %vm1876, %v8119, %v8586
      %v8949 = vsel %vm1876, %v8122, %v8588
      %v8950 = vsel %vm1876, %v8124, %v8590
      %v8951 = vsel %vm1876, %v8127, %v8592
      %v8952 = vsel %vm1876, %v8129, %v8594
      %v8953 = vsel %vm1876, %v8132, %v8596
      %v8954 = vsel %vm1876, %v8134, %v8598
      %v8955 = vsel %vm1876, %v8137, %v8600
      %v8956 = vsel %vm1876, %v8139, %v8602
      %v8957 = vsel %vm1876, %v8142, %v8604
      %v8958 = vsel %vm1876, %v8144, %v8606
      %v8959 = vsel %vm1876, %v8147, %v8608
      %v8960 = vsel %vm1876, %v8149, %v8610
      %v8961 = vsel %vm1876, %v8152, %v8612
      %v8962 = vsel %vm1876, %v8154, %v8614
      %v8963 = vsel %vm1876, %v8157, %v8616
      %v8964 = vsel %vm1876, %v8159, %v8618
      %v8965 = vsel %vm1876, %v8162, %v8620
      %v8966 = vsel %vm1876, %v8164, %v8622
      %v8967 = vsel %vm1876, %v8167, %v8624
      %v8968 = vsel %vm1876, %v8169, %v8626
      %v8969 = vsel %vm1876, %v8172, %v8628
      %v8970 = vsel %vm1876, %v8174, %v8630
      %v8971 = vsel %vm1876, %v8177, %v8632
      %v8972 = vsel %vm1876, %v8179, %v8634
      %v8973 = vsel %vm1876, %v8259, %v8636
      %v8974 = vsel %vm1876, %v8261, %v8638
      %v8975 = vsel %vm2008, %v8943, %v8672
      %v8976 = vsel %vm2008, %v8944, %v8674
      %v8977 = vsel %vm2008, %v8945, %v8676
      %v8978 = vsel %vm2008, %v8946, %v8678
      %v8979 = vsel %vm2008, %v8947, %v8680
      %v8980 = vsel %vm2008, %v8948, %v8682
      %v8981 = vsel %vm2008, %v8949, %v8684
      %v8982 = vsel %vm2008, %v8950, %v8686
      %v8983 = vsel %vm2008, %v8951, %v8688
      %v8984 = vsel %vm2008, %v8952, %v8690
      %v8985 = vsel %vm2008, %v8953, %v8692
      %v8986 = vsel %vm2008, %v8954, %v8694
      %v8987 = vsel %vm2008, %v8955, %v8696
      %v8988 = vsel %vm2008, %v8956, %v8698
      %v8989 = vsel %vm2008, %v8957, %v8700
      %v8990 = vsel %vm2008, %v8958, %v8702
      %v8991 = vsel %vm2008, %v8959, %v8704
      %v8992 = vsel %vm2008, %v8960, %v8706
      %v8993 = vsel %vm2008, %v8961, %v8708
      %v8994 = vsel %vm2008, %v8962, %v8710
      %v8995 = vsel %vm2008, %v8963, %v8712
      %v8996 = vsel %vm2008, %v8964, %v8714
      %v8997 = vsel %vm2008, %v8965, %v8716
      %v8998 = vsel %vm2008, %v8966, %v8718
      %v8999 = vsel %vm2008, %v8967, %v8720
      %v9000 = vsel %vm2008, %v8968, %v8722
      %v9001 = vsel %vm2008, %v8969, %v8724
      %v9002 = vsel %vm2008, %v8970, %v8726
      %v9003 = vsel %vm2008, %v8971, %v8728
      %v9004 = vsel %vm2008, %v8972, %v8730
      %v9005 = vsel %vm2008, %v8973, %v8724
      %v9006 = vsel %vm2008, %v8974, %v8726
      %v9007 = vsel %vm5030, %v8975, %v8762
      %v9008 = vsel %vm5030, %v8976, %v8764
      %v9009 = vsel %vm5030, %v8977, %v8766
      %v9010 = vsel %vm5030, %v8978, %v8768
      %v9011 = vsel %vm5030, %v8979, %v8770
      %v9012 = vsel %vm5030, %v8980, %v8772
      %v9013 = vsel %vm5030, %v8981, %v8774
      %v9014 = vsel %vm5030, %v8982, %v8776
      %v9015 = vsel %vm5030, %v8983, %v8778
      %v9016 = vsel %vm5030, %v8984, %v8780
      %v9017 = vsel %vm5030, %v8985, %v8782
      %v9018 = vsel %vm5030, %v8986, %v8784
      %v9019 = vsel %vm5030, %v8987, %v8786
      %v9020 = vsel %vm5030, %v8988, %v8788
      %v9021 = vsel %vm5030, %v8989, %v8790
      %v9022 = vsel %vm5030, %v8990, %v8792
      %v9023 = vsel %vm5030, %v8991, %v8794
      %v9024 = vsel %vm5030, %v8992, %v8796
      %v9025 = vsel %vm5030, %v8993, %v8798
      %v9026 = vsel %vm5030, %v8994, %v8800
      %v9027 = vsel %vm5030, %v8995, %v8802
      %v9028 = vsel %vm5030, %v8996, %v8804
      %v9029 = vsel %vm5030, %v8997, %v8806
      %v9030 = vsel %vm5030, %v8998, %v8808
      %v9031 = vsel %vm5030, %v8999, %v8810
      %v9032 = vsel %vm5030, %v9000, %v8812
      %v9033 = vsel %vm5030, %v9001, %v8814
      %v9034 = vsel %vm5030, %v9002, %v8816
      %v9035 = vsel %vm5030, %v9003, %v8818
      %v9036 = vsel %vm5030, %v9004, %v8820
      %v9037 = vsel %vm5030, %v9005, %v8814
      %v9038 = vsel %vm5030, %v9006, %v8816
      %v9040 = vlaneseq
      %v9041 = vshrl.u32 %v9040, 7
      %v9042 = vsub.s32 0, %v9041
      %v9043 = vrot.slane %v7851, %v9042
      %v9045 = vsel %vm1876, %v8182, 0
      %v9047 = vsel %vm1876, %v8184, 0
      %v9049 = vsel %vm1876, %v8192, 0
      %v9051 = vsel %vm1876, %v8194, 0
      %v9053 = vsel %vm1876, %v8197, 0
      %v9055 = vsel %vm1876, %v8199, 0
      %v9057 = vsel %vm1876, %v8202, 0
      %v9059 = vsel %vm1876, %v8204, 0
      %v9061 = vsel %vm1876, %v8207, 0
      %v9063 = vsel %vm1876, %v8209, 0
      %v9065 = vsel %vm1876, %v8212, 0
      %v9067 = vsel %vm1876, %v8214, 0
      %v9069 = vsel %vm1876, %v8217, 0
      %v9071 = vsel %vm1876, %v8219, 0
      %v9073 = vsel %vm1876, %v8222, 0
      %v9075 = vsel %vm1876, %v8224, 0
      %v9077 = vsel %vm1876, %v8227, 0
      %v9079 = vsel %vm1876, %v8229, 0
      %v9081 = vsel %vm1876, %v8232, 0
      %v9083 = vsel %vm1876, %v8234, 0
      %v9085 = vsel %vm1876, %v8237, 0
      %v9087 = vsel %vm1876, %v8239, 0
      %v9089 = vsel %vm1876, %v8242, 0
      %v9091 = vsel %vm1876, %v8244, 0
      %v9093 = vsel %vm1876, %v8247, 0
      %v9095 = vsel %vm1876, %v8249, 0
      %v9097 = vsel %vm1876, %v8252, 0
      %v9099 = vsel %vm1876, %v8254, 0
      %v9101 = vsel %vm1876, %v8296, 0
      %v9103 = vsel %vm1876, %v8298, 0
      %9105 = vmatprep.subr.mxu0 0.0
      %9106 = vmatpush1.msra.mxu0 %v7815
      %9107 = vmatprep.subr.mxu0 0.0
      %9108 = vmatpush1.msra.mxu0 %v7816
      %9109 = vmatprep.subr.mxu0 0.0
      %9110 = vmatpush1.msra.mxu0 %v7817
      %9111 = vmatprep.subr.mxu0 0.0
      %9112 = vmatpush1.msra.mxu0 %v7818
      %9113 = vmatprep.subr.mxu0 0.0
      %9114 = vmatpush1.msra.mxu0 %v7819
      %9115 = vmatprep.subr.mxu0 0.0
      %9116 = vmatpush1.msra.mxu0 %v7820
      %9117 = vmatprep.subr.mxu0 0.0
      %9118 = vmatpush1.msra.mxu0 %v7821
      %9119 = vmatprep.subr.mxu0 0.0
      %9120 = vmatpush1.msra.mxu0 %v7822
      %9121 = vmatprep.subr.mxu0 0.0
      %9122 = vmatpush1.msra.mxu0 %v7823
      %9123 = vmatprep.subr.mxu0 0.0
      %9124 = vmatpush1.msra.mxu0 %v7824
      %9125 = vmatprep.subr.mxu0 0.0
      %9126 = vmatpush1.msra.mxu0 %v7825
      %9127 = vmatprep.subr.mxu0 0.0
      %9128 = vmatpush1.msra.mxu0 %v7826
      %9129 = vmatprep.subr.mxu0 0.0
      %9130 = vmatpush1.msra.mxu0 %v7827
      %9131 = vmatprep.subr.mxu0 0.0
      %9132 = vmatpush1.msra.mxu0 %v7828
      %9133 = vmatprep.subr.mxu0 0.0
      %9134 = vmatpush1.msra.mxu0 %v7829
      %9135 = vmatprep.subr.mxu0 0.0
      %9136 = vmatpush1.msra.mxu0 %v7830
      %9137 = vmatprep.subr.mxu0 0.0
      %9138 = vmatpush1.msra.mxu0 %v7831
      %9139 = vmatprep.subr.mxu0 0.0
      %9140 = vmatpush1.msra.mxu0 %v7832
      %9141 = vmatprep.subr.mxu0 0.0
      %9142 = vmatpush1.msra.mxu0 %v7833
      %9143 = vmatprep.subr.mxu0 0.0
      %9144 = vmatpush1.msra.mxu0 %v7834
      %9145 = vmatprep.subr.mxu0 0.0
      %9146 = vmatpush1.msra.mxu0 %v7835
      %9147 = vmatprep.subr.mxu0 0.0
      %9148 = vmatpush1.msra.mxu0 %v7836
      %9149 = vmatprep.subr.mxu0 0.0
      %9150 = vmatpush1.msra.mxu0 %v7837
      %9151 = vmatprep.subr.mxu0 0.0
      %9152 = vmatpush1.msra.mxu0 %v7838
      %9153 = vmatprep.subr.mxu0 0.0
      %9154 = vmatpush1.msra.mxu0 %v7839
      %9155 = vmatprep.subr.mxu0 0.0
      %9156 = vmatpush1.msra.mxu0 %v7840
      %9157 = vmatprep.subr.mxu0 0.0
      %9158 = vmatpush1.msra.mxu0 %v7841
      %9159 = vmatprep.subr.mxu0 0.0
      %9160 = vmatpush1.msra.mxu0 %v7842
      %9161 = vmatprep.subr.mxu0 0.0
      %9162 = vmatpush1.msra.mxu0 %v7843
      %9163 = vmatprep.subr.mxu0 0.0
      %9164 = vmatpush1.msra.mxu0 %v7844
      %9165 = vmatprep.subr.mxu0 0.0
      %9166 = vmatpush1.msra.mxu0 %v7845
      %9167 = vmatprep.subr.mxu0 0.0
      %9168 = vmatpush1.msra.mxu0 %v7846
      %9169 = vmatprep.mubr.f32.mxu0 %v9007
      %9170 = vmatmul.mubr.f32.gmra.mrb[0].mxu0 %v8911
      %v9171 = vpop.f32.mrb[0].mxu0
      %v9172 = vadd.f32 %v9043, %v9171
      %v9173 = vpop.f32.mrb[0].mxu0
      %9174 = vmatprep.mubr.f32.mxu0 %v9008
      %9175 = vmatmul.mubr.f32.gmra.mrb[0].mxu0 %v8912
      %v9176 = vpop.f32.mrb[0].mxu0
      %v9177 = vadd.f32 %v9043, %v9176
      %v9178 = vpop.f32.mrb[0].mxu0
      %9179 = vmatprep.mubr.f32.mxu0 %v9009
      %9180 = vmatmul.mubr.f32.gmra.mrb[0].mxu0 %v8913
      %v9181 = vpop.f32.mrb[0].mxu0
      %v9182 = vadd.f32 %v9043, %v9181
      %v9183 = vpop.f32.mrb[0].mxu0
      %9184 = vmatprep.mubr.f32.mxu0 %v9010
      %9185 = vmatmul.mubr.f32.gmra.mrb[0].mxu0 %v8914
      %v9186 = vpop.f32.mrb[0].mxu0
      %v9187 = vadd.f32 %v9043, %v9186
      %v9188 = vpop.f32.mrb[0].mxu0
      %9189 = vmatprep.mubr.f32.mxu0 %v9011
      %9190 = vmatmul.mubr.f32.gmra.mrb[0].mxu0 %v8915
      %v9191 = vpop.f32.mrb[0].mxu0
      %v9192 = vadd.f32 %v9043, %v9191
      %v9193 = vpop.f32.mrb[0].mxu0
      %9194 = vmatprep.mubr.f32.mxu0 %v9012
      %9195 = vmatmul.mubr.f32.gmra.mrb[0].mxu0 %v8916
      %v9196 = vpop.f32.mrb[0].mxu0
      %v9197 = vadd.f32 %v9043, %v9196
      %v9198 = vpop.f32.mrb[0].mxu0
      %9199 = vmatprep.mubr.f32.mxu0 %v9013
      %9200 = vmatmul.mubr.f32.gmra.mrb[0].mxu0 %v8917
      %v9201 = vpop.f32.mrb[0].mxu0
      %v9202 = vadd.f32 %v9043, %v9201
      %v9203 = vpop.f32.mrb[0].mxu0
      %9204 = vmatprep.mubr.f32.mxu0 %v9014
      %9205 = vmatmul.mubr.f32.gmra.mrb[0].mxu0 %v8918
      %v9206 = vpop.f32.mrb[0].mxu0
      %v9207 = vadd.f32 %v9043, %v9206
      %v9208 = vpop.f32.mrb[0].mxu0
      %9209 = vmatprep.mubr.f32.mxu0 %v9015
      %9210 = vmatmul.mubr.f32.gmra.mrb[0].mxu0 %v8919
      %v9211 = vpop.f32.mrb[0].mxu0
      %v9212 = vadd.f32 %v9043, %v9211
      %v9213 = vpop.f32.mrb[0].mxu0
      %9214 = vmatprep.mubr.f32.mxu0 %v9016
      %9215 = vmatmul.mubr.f32.gmra.mrb[0].mxu0 %v8920
      %v9216 = vpop.f32.mrb[0].mxu0
      %v9217 = vadd.f32 %v9043, %v9216
      %v9218 = vpop.f32.mrb[0].mxu0
      %9219 = vmatprep.mubr.f32.mxu0 %v9017
      %9220 = vmatmul.mubr.f32.gmra.mrb[0].mxu0 %v8921
      %v9221 = vpop.f32.mrb[0].mxu0
      %v9222 = vadd.f32 %v9043, %v9221
      %v9223 = vpop.f32.mrb[0].mxu0
      %9224 = vmatprep.mubr.f32.mxu0 %v9018
      %9225 = vmatmul.mubr.f32.gmra.mrb[0].mxu0 %v8922
      %v9226 = vpop.f32.mrb[0].mxu0
      %v9227 = vadd.f32 %v9043, %v9226
      %v9228 = vpop.f32.mrb[0].mxu0
      %9229 = vmatprep.mubr.f32.mxu0 %v9019
      %9230 = vmatmul.mubr.f32.gmra.mrb[0].mxu0 %v8923
      %v9231 = vpop.f32.mrb[0].mxu0
      %v9232 = vadd.f32 %v9043, %v9231
      %v9233 = vpop.f32.mrb[0].mxu0
      %9234 = vmatprep.mubr.f32.mxu0 %v9020
      %9235 = vmatmul.mubr.f32.gmra.mrb[0].mxu0 %v8924
      %v9236 = vpop.f32.mrb[0].mxu0
      %v9237 = vadd.f32 %v9043, %v9236
      %v9238 = vpop.f32.mrb[0].mxu0
      %9239 = vmatprep.mubr.f32.mxu0 %v9021
      %9240 = vmatmul.mubr.f32.gmra.mrb[0].mxu0 %v8925
      %v9241 = vpop.f32.mrb[0].mxu0
      %v9242 = vadd.f32 %v9043, %v9241
      %v9243 = vpop.f32.mrb[0].mxu0
      %9244 = vmatprep.mubr.f32.mxu0 %v9022
      %9245 = vmatmul.mubr.f32.gmra.mrb[0].mxu0 %v8926
      %v9246 = vpop.f32.mrb[0].mxu0
      %v9247 = vadd.f32 %v9043, %v9246
      %v9248 = vpop.f32.mrb[0].mxu0
      %9249 = vmatprep.mubr.f32.mxu0 %v9023
      %9250 = vmatmul.mubr.f32.gmra.mrb[0].mxu0 %v8927
      %v9251 = vpop.f32.mrb[0].mxu0
      %v9252 = vadd.f32 %v9043, %v9251
      %v9253 = vpop.f32.mrb[0].mxu0
      %9254 = vmatprep.mubr.f32.mxu0 %v9024
      %9255 = vmatmul.mubr.f32.gmra.mrb[0].mxu0 %v8928
      %v9256 = vpop.f32.mrb[0].mxu0
      %v9257 = vadd.f32 %v9043, %v9256
      %v9258 = vpop.f32.mrb[0].mxu0
      %9259 = vmatprep.mubr.f32.mxu0 %v9025
      %9260 = vmatmul.mubr.f32.gmra.mrb[0].mxu0 %v8929
      %v9261 = vpop.f32.mrb[0].mxu0
      %v9262 = vadd.f32 %v9043, %v9261
      %v9263 = vpop.f32.mrb[0].mxu0
      %9264 = vmatprep.mubr.f32.mxu0 %v9026
      %9265 = vmatmul.mubr.f32.gmra.mrb[0].mxu0 %v8930
      %v9266 = vpop.f32.mrb[0].mxu0
      %v9267 = vadd.f32 %v9043, %v9266
      %v9268 = vpop.f32.mrb[0].mxu0
      %9269 = vmatprep.mubr.f32.mxu0 %v9027
      %9270 = vmatmul.mubr.f32.gmra.mrb[0].mxu0 %v8931
      %v9271 = vpop.f32.mrb[0].mxu0
      %v9272 = vadd.f32 %v9043, %v9271
      %v9273 = vpop.f32.mrb[0].mxu0
      %9274 = vmatprep.mubr.f32.mxu0 %v9028
      %9275 = vmatmul.mubr.f32.gmra.mrb[0].mxu0 %v8932
      %v9276 = vpop.f32.mrb[0].mxu0
      %v9277 = vadd.f32 %v9043, %v9276
      %v9278 = vpop.f32.mrb[0].mxu0
      %9279 = vmatprep.mubr.f32.mxu0 %v9029
      %9280 = vmatmul.mubr.f32.gmra.mrb[0].mxu0 %v8933
      %v9281 = vpop.f32.mrb[0].mxu0
      %v9282 = vadd.f32 %v9043, %v9281
      %v9283 = vpop.f32.mrb[0].mxu0
      %9284 = vmatprep.mubr.f32.mxu0 %v9030
      %9285 = vmatmul.mubr.f32.gmra.mrb[0].mxu0 %v8934
      %v9286 = vpop.f32.mrb[0].mxu0
      %v9287 = vadd.f32 %v9043, %v9286
      %v9288 = vpop.f32.mrb[0].mxu0
      %9289 = vmatprep.mubr.f32.mxu0 %v9031
      %9290 = vmatmul.mubr.f32.gmra.mrb[0].mxu0 %v8935
      %v9291 = vpop.f32.mrb[0].mxu0
      %v9292 = vadd.f32 %v9043, %v9291
      %v9293 = vpop.f32.mrb[0].mxu0
      %9294 = vmatprep.mubr.f32.mxu0 %v9032
      %9295 = vmatmul.mubr.f32.gmra.mrb[0].mxu0 %v8936
      %v9296 = vpop.f32.mrb[0].mxu0
      %v9297 = vadd.f32 %v9043, %v9296
      %v9298 = vpop.f32.mrb[0].mxu0
      %9299 = vmatprep.mubr.f32.mxu0 %v9033
      %9300 = vmatmul.mubr.f32.gmra.mrb[0].mxu0 %v8937
      %v9301 = vpop.f32.mrb[0].mxu0
      %v9302 = vadd.f32 %v9043, %v9301
      %v9303 = vpop.f32.mrb[0].mxu0
      %9304 = vmatprep.mubr.f32.mxu0 %v9034
      %9305 = vmatmul.mubr.f32.gmra.mrb[0].mxu0 %v8938
      %v9306 = vpop.f32.mrb[0].mxu0
      %v9307 = vadd.f32 %v9043, %v9306
      %v9308 = vpop.f32.mrb[0].mxu0
      %9309 = vmatprep.mubr.f32.mxu0 %v9035
      %9310 = vmatmul.mubr.f32.gmra.mrb[0].mxu0 %v8939
      %v9311 = vpop.f32.mrb[0].mxu0
      %v9312 = vadd.f32 %v9043, %v9311
      %v9313 = vpop.f32.mrb[0].mxu0
      %9314 = vmatprep.mubr.f32.mxu0 %v9036
      %9315 = vmatmul.mubr.f32.gmra.mrb[0].mxu0 %v8940
      %v9316 = vpop.f32.mrb[0].mxu0
      %v9317 = vadd.f32 %v9043, %v9316
      %v9318 = vpop.f32.mrb[0].mxu0
      %9319 = vmatprep.mubr.f32.mxu0 %v9037
      %9320 = vmatmul.mubr.f32.gmra.mrb[0].mxu0 %v8941
      %v9321 = vpop.f32.mrb[0].mxu0
      %v9322 = vadd.f32 %v9043, %v9321
      %v9323 = vpop.f32.mrb[0].mxu0
      %9324 = vmatprep.mubr.f32.mxu0 %v9038
      %9325 = vmatmul.mubr.f32.gmra.mrb[0].mxu0 %v8942
      %v9326 = vpop.f32.mrb[0].mxu0
      %v9327 = vadd.f32 %v9043, %v9326
      %v9328 = vpop.f32.mrb[0].mxu0
      %9329 = vdwg.mxu0
      %9330 = vmatprep.subr.mxu0 0.0
      %9331 = vmatpush1.msra.mxu0 %v7847
      %9332 = vmatprep.subr.mxu0 0.0
      %9333 = vmatpush1.msra.mxu0 %v7848
      %9334 = vmatprep.subr.mxu0 0.0
      %9335 = vmatpush1.msra.mxu0 %v7849
      %9336 = vmatprep.subr.mxu0 0.0
      %9337 = vmatpush1.msra.mxu0 %v7850
      %9338 = vmatprep.subr.mxu0 0.0
      %9339 = vmatpush1.msra.mxu0 0.0
      %9340 = vmatprep.subr.mxu0 0.0
      %9341 = vmatpush1.msra.mxu0 0.0
      %9342 = vmatprep.subr.mxu0 0.0
      %9343 = vmatpush1.msra.mxu0 0.0
      %9344 = vmatprep.subr.mxu0 0.0
      %9345 = vmatpush1.msra.mxu0 0.0
      %9346 = vmatprep.subr.mxu0 0.0
      %9347 = vmatpush1.msra.mxu0 0.0
      %9348 = vmatprep.subr.mxu0 0.0
      %9349 = vmatpush1.msra.mxu0 0.0
      %9350 = vmatprep.subr.mxu0 0.0
      %9351 = vmatpush1.msra.mxu0 0.0
      %9352 = vmatprep.subr.mxu0 0.0
      %9353 = vmatpush1.msra.mxu0 0.0
      %9354 = vmatprep.subr.mxu0 0.0
      %9355 = vmatpush1.msra.mxu0 0.0
      %9356 = vmatprep.subr.mxu0 0.0
      %9357 = vmatpush1.msra.mxu0 0.0
      %9358 = vmatprep.subr.mxu0 0.0
      %9359 = vmatpush1.msra.mxu0 0.0
      %9360 = vmatprep.subr.mxu0 0.0
      %9361 = vmatpush1.msra.mxu0 0.0
      %9362 = vmatprep.subr.mxu0 0.0
      %9363 = vmatpush1.msra.mxu0 0.0
      %9364 = vmatprep.subr.mxu0 0.0
      %9365 = vmatpush1.msra.mxu0 0.0
      %9366 = vmatprep.subr.mxu0 0.0
      %9367 = vmatpush1.msra.mxu0 0.0
      %9368 = vmatprep.subr.mxu0 0.0
      %9369 = vmatpush1.msra.mxu0 0.0
      %9370 = vmatprep.subr.mxu0 0.0
      %9371 = vmatpush1.msra.mxu0 0.0
      %9372 = vmatprep.subr.mxu0 0.0
      %9373 = vmatpush1.msra.mxu0 0.0
      %9374 = vmatprep.subr.mxu0 0.0
      %9375 = vmatpush1.msra.mxu0 0.0
      %9376 = vmatprep.subr.mxu0 0.0
      %9377 = vmatpush1.msra.mxu0 0.0
      %9378 = vmatprep.subr.mxu0 0.0
      %9379 = vmatpush1.msra.mxu0 0.0
      %9380 = vmatprep.subr.mxu0 0.0
      %9381 = vmatpush1.msra.mxu0 0.0
      %9382 = vmatprep.subr.mxu0 0.0
      %9383 = vmatpush1.msra.mxu0 0.0
      %9384 = vmatprep.subr.mxu0 0.0
      %9385 = vmatpush1.msra.mxu0 0.0
      %9386 = vmatprep.subr.mxu0 0.0
      %9387 = vmatpush1.msra.mxu0 0.0
      %9388 = vmatprep.subr.mxu0 0.0
      %9389 = vmatpush1.msra.mxu0 0.0
      %9390 = vmatprep.subr.mxu0 0.0
      %9391 = vmatpush1.msra.mxu0 0.0
      %9392 = vmatprep.subr.mxu0 0.0
      %9393 = vmatpush1.msra.mxu0 0.0
      %9394 = vmatprep.mubr.f32.mxu0 0.0
      %9395 = vmatmul.mubr.f32.gmra.mrb[0].mxu0 %v9045
      %v9396 = vpop.f32.mrb[0].mxu0
      %v9397 = vadd.f32 %v9172, %v9396
      %v9398 = vpop.f32.mrb[0].mxu0
      %9399 = vmatprep.mubr.f32.mxu0 0.0
      %9400 = vmatmul.mubr.f32.gmra.mrb[0].mxu0 %v9047
      %v9401 = vpop.f32.mrb[0].mxu0
      %v9402 = vadd.f32 %v9177, %v9401
      %v9403 = vpop.f32.mrb[0].mxu0
      %9404 = vmatprep.mubr.f32.mxu0 0.0
      %9405 = vmatmul.mubr.f32.gmra.mrb[0].mxu0 %v9049
      %v9406 = vpop.f32.mrb[0].mxu0
      %v9407 = vadd.f32 %v9182, %v9406
      %v9408 = vpop.f32.mrb[0].mxu0
      %9409 = vmatprep.mubr.f32.mxu0 0.0
      %9410 = vmatmul.mubr.f32.gmra.mrb[0].mxu0 %v9051
      %v9411 = vpop.f32.mrb[0].mxu0
      %v9412 = vadd.f32 %v9187, %v9411
      %v9413 = vpop.f32.mrb[0].mxu0
      %9414 = vmatprep.mubr.f32.mxu0 0.0
      %9415 = vmatmul.mubr.f32.gmra.mrb[0].mxu0 %v9053
      %v9416 = vpop.f32.mrb[0].mxu0
      %v9417 = vadd.f32 %v9192, %v9416
      %v9418 = vpop.f32.mrb[0].mxu0
      %9419 = vmatprep.mubr.f32.mxu0 0.0
      %9420 = vmatmul.mubr.f32.gmra.mrb[0].mxu0 %v9055
      %v9421 = vpop.f32.mrb[0].mxu0
      %v9422 = vadd.f32 %v9197, %v9421
      %v9423 = vpop.f32.mrb[0].mxu0
      %9424 = vmatprep.mubr.f32.mxu0 0.0
      %9425 = vmatmul.mubr.f32.gmra.mrb[0].mxu0 %v9057
      %v9426 = vpop.f32.mrb[0].mxu0
      %v9427 = vadd.f32 %v9202, %v9426
      %v9428 = vpop.f32.mrb[0].mxu0
      %9429 = vmatprep.mubr.f32.mxu0 0.0
      %9430 = vmatmul.mubr.f32.gmra.mrb[0].mxu0 %v9059
      %v9431 = vpop.f32.mrb[0].mxu0
      %v9432 = vadd.f32 %v9207, %v9431
      %v9433 = vpop.f32.mrb[0].mxu0
      %9434 = vmatprep.mubr.f32.mxu0 0.0
      %9435 = vmatmul.mubr.f32.gmra.mrb[0].mxu0 %v9061
      %v9436 = vpop.f32.mrb[0].mxu0
      %v9437 = vadd.f32 %v9212, %v9436
      %v9438 = vpop.f32.mrb[0].mxu0
      %9439 = vmatprep.mubr.f32.mxu0 0.0
      %9440 = vmatmul.mubr.f32.gmra.mrb[0].mxu0 %v9063
      %v9441 = vpop.f32.mrb[0].mxu0
      %v9442 = vadd.f32 %v9217, %v9441
      %v9443 = vpop.f32.mrb[0].mxu0
      %9444 = vmatprep.mubr.f32.mxu0 0.0
      %9445 = vmatmul.mubr.f32.gmra.mrb[0].mxu0 %v9065
      %v9446 = vpop.f32.mrb[0].mxu0
      %v9447 = vadd.f32 %v9222, %v9446
      %v9448 = vpop.f32.mrb[0].mxu0
      %9449 = vmatprep.mubr.f32.mxu0 0.0
      %9450 = vmatmul.mubr.f32.gmra.mrb[0].mxu0 %v9067
      %v9451 = vpop.f32.mrb[0].mxu0
      %v9452 = vadd.f32 %v9227, %v9451
      %v9453 = vpop.f32.mrb[0].mxu0
      %9454 = vmatprep.mubr.f32.mxu0 0.0
      %9455 = vmatmul.mubr.f32.gmra.mrb[0].mxu0 %v9069
      %v9456 = vpop.f32.mrb[0].mxu0
      %v9457 = vadd.f32 %v9232, %v9456
      %v9458 = vpop.f32.mrb[0].mxu0
      %9459 = vmatprep.mubr.f32.mxu0 0.0
      %9460 = vmatmul.mubr.f32.gmra.mrb[0].mxu0 %v9071
      %v9461 = vpop.f32.mrb[0].mxu0
      %v9462 = vadd.f32 %v9237, %v9461
      %v9463 = vpop.f32.mrb[0].mxu0
      %9464 = vmatprep.mubr.f32.mxu0 0.0
      %9465 = vmatmul.mubr.f32.gmra.mrb[0].mxu0 %v9073
      %v9466 = vpop.f32.mrb[0].mxu0
      %v9467 = vadd.f32 %v9242, %v9466
      %v9468 = vpop.f32.mrb[0].mxu0
      %9469 = vmatprep.mubr.f32.mxu0 0.0
      %9470 = vmatmul.mubr.f32.gmra.mrb[0].mxu0 %v9075
      %v9471 = vpop.f32.mrb[0].mxu0
      %v9472 = vadd.f32 %v9247, %v9471
      %v9473 = vpop.f32.mrb[0].mxu0
      %9474 = vmatprep.mubr.f32.mxu0 0.0
      %9475 = vmatmul.mubr.f32.gmra.mrb[0].mxu0 %v9077
      %v9476 = vpop.f32.mrb[0].mxu0
      %v9477 = vadd.f32 %v9252, %v9476
      %v9478 = vpop.f32.mrb[0].mxu0
      %9479 = vmatprep.mubr.f32.mxu0 0.0
      %9480 = vmatmul.mubr.f32.gmra.mrb[0].mxu0 %v9079
      %v9481 = vpop.f32.mrb[0].mxu0
      %v9482 = vadd.f32 %v9257, %v9481
      %v9483 = vpop.f32.mrb[0].mxu0
      %9484 = vmatprep.mubr.f32.mxu0 0.0
      %9485 = vmatmul.mubr.f32.gmra.mrb[0].mxu0 %v9081
      %v9486 = vpop.f32.mrb[0].mxu0
      %v9487 = vadd.f32 %v9262, %v9486
      %v9488 = vpop.f32.mrb[0].mxu0
      %9489 = vmatprep.mubr.f32.mxu0 0.0
      %9490 = vmatmul.mubr.f32.gmra.mrb[0].mxu0 %v9083
      %v9491 = vpop.f32.mrb[0].mxu0
      %v9492 = vadd.f32 %v9267, %v9491
      %v9493 = vpop.f32.mrb[0].mxu0
      %9494 = vmatprep.mubr.f32.mxu0 0.0
      %9495 = vmatmul.mubr.f32.gmra.mrb[0].mxu0 %v9085
      %v9496 = vpop.f32.mrb[0].mxu0
      %v9497 = vadd.f32 %v9272, %v9496
      %v9498 = vpop.f32.mrb[0].mxu0
      %9499 = vmatprep.mubr.f32.mxu0 0.0
      %9500 = vmatmul.mubr.f32.gmra.mrb[0].mxu0 %v9087
      %v9501 = vpop.f32.mrb[0].mxu0
      %v9502 = vadd.f32 %v9277, %v9501
      %v9503 = vpop.f32.mrb[0].mxu0
      %9504 = vmatprep.mubr.f32.mxu0 0.0
      %9505 = vmatmul.mubr.f32.gmra.mrb[0].mxu0 %v9089
      %v9506 = vpop.f32.mrb[0].mxu0
      %v9507 = vadd.f32 %v9282, %v9506
      %v9508 = vpop.f32.mrb[0].mxu0
      %9509 = vmatprep.mubr.f32.mxu0 0.0
      %9510 = vmatmul.mubr.f32.gmra.mrb[0].mxu0 %v9091
      %v9511 = vpop.f32.mrb[0].mxu0
      %v9512 = vadd.f32 %v9287, %v9511
      %v9513 = vpop.f32.mrb[0].mxu0
      %9514 = vmatprep.mubr.f32.mxu0 0.0
      %9515 = vmatmul.mubr.f32.gmra.mrb[0].mxu0 %v9093
      %v9516 = vpop.f32.mrb[0].mxu0
      %v9517 = vadd.f32 %v9292, %v9516
      %v9518 = vpop.f32.mrb[0].mxu0
      %9519 = vmatprep.mubr.f32.mxu0 0.0
      %9520 = vmatmul.mubr.f32.gmra.mrb[0].mxu0 %v9095
      %v9521 = vpop.f32.mrb[0].mxu0
      %v9522 = vadd.f32 %v9297, %v9521
      %v9523 = vpop.f32.mrb[0].mxu0
      %9524 = vmatprep.mubr.f32.mxu0 0.0
      %9525 = vmatmul.mubr.f32.gmra.mrb[0].mxu0 %v9097
      %v9526 = vpop.f32.mrb[0].mxu0
      %v9527 = vadd.f32 %v9302, %v9526
      %v9528 = vpop.f32.mrb[0].mxu0
      %9529 = vmatprep.mubr.f32.mxu0 0.0
      %9530 = vmatmul.mubr.f32.gmra.mrb[0].mxu0 %v9099
      %v9531 = vpop.f32.mrb[0].mxu0
      %v9532 = vadd.f32 %v9307, %v9531
      %v9533 = vpop.f32.mrb[0].mxu0
      %9534 = vmatprep.mubr.f32.mxu0 0.0
      %9535 = vmatmul.mubr.f32.gmra.mrb[0].mxu0 %v9101
      %v9536 = vpop.f32.mrb[0].mxu0
      %v9537 = vadd.f32 %v9312, %v9536
      %v9538 = vpop.f32.mrb[0].mxu0
      %9539 = vmatprep.mubr.f32.mxu0 0.0
      %9540 = vmatmul.mubr.f32.gmra.mrb[0].mxu0 %v9103
      %v9541 = vpop.f32.mrb[0].mxu0
      %v9542 = vadd.f32 %v9317, %v9541
      %v9543 = vpop.f32.mrb[0].mxu0
      %9544 = vmatprep.mubr.f32.mxu0 0.0
      %9545 = vmatmul.mubr.f32.gmra.mrb[0].mxu0 %v9097
      %v9546 = vpop.f32.mrb[0].mxu0
      %v9547 = vadd.f32 %v9322, %v9546
      %v9548 = vpop.f32.mrb[0].mxu0
      %9549 = vmatprep.mubr.f32.mxu0 0.0
      %9550 = vmatmul.mubr.f32.gmra.mrb[0].mxu0 %v9099
      %v9551 = vpop.f32.mrb[0].mxu0
      %v9552 = vadd.f32 %v9327, %v9551
      %v9553 = vpop.f32.mrb[0].mxu0
      %9554 = vdwg.mxu0
      %9555 = vxpose.xlu0.b32.start [1/16] %v9397, 128
      %9556 = vxpose.xlu0.b32.cont [2/16] %v9402, 128
      %9557 = vxpose.xlu0.b32.cont [3/16] %v9407, 128
      %9558 = vxpose.xlu0.b32.cont [4/16] %v9412, 128
      %9559 = vxpose.xlu0.b32.cont [5/16] %v9417, 128
      %9560 = vxpose.xlu0.b32.cont [6/16] %v9422, 128
      %9561 = vxpose.xlu0.b32.cont [7/16] %v9427, 128
      %9562 = vxpose.xlu0.b32.cont [8/16] %v9432, 128
      %9563 = vxpose.xlu0.b32.cont [9/16] %v9437, 128
      %9564 = vxpose.xlu0.b32.cont [10/16] %v9442, 128
      %9565 = vxpose.xlu0.b32.cont [11/16] %v9447, 128
      %9566 = vxpose.xlu0.b32.cont [12/16] %v9452, 128
      %9567 = vxpose.xlu0.b32.cont [13/16] %v9457, 128
      %9568 = vxpose.xlu0.b32.cont [14/16] %v9462, 128
      %9569 = vxpose.xlu0.b32.cont [15/16] %v9467, 128
      %9570 = vxpose.xlu0.b32.end [16/16] %v9472, 128
      %v9571 = vpop.trf.xlu0
      %v9572 = vpop.trf.xlu0
      %v9573 = vpop.trf.xlu0
      %v9574 = vpop.trf.xlu0
      %v9575 = vpop.trf.xlu0
      %v9576 = vpop.trf.xlu0
      %v9577 = vpop.trf.xlu0
      %v9578 = vpop.trf.xlu0
      %v9579 = vpop.trf.xlu0
      %v9580 = vpop.trf.xlu0
      %v9581 = vpop.trf.xlu0
      %v9582 = vpop.trf.xlu0
      %v9583 = vpop.trf.xlu0
      %v9584 = vpop.trf.xlu0
      %v9585 = vpop.trf.xlu0
      %v9586 = vpop.trf.xlu0
      %9587 = vxpose.xlu0.b32.start [1/16] %v9477, 128
      %9588 = vxpose.xlu0.b32.cont [2/16] %v9482, 128
      %9589 = vxpose.xlu0.b32.cont [3/16] %v9487, 128
      %9590 = vxpose.xlu0.b32.cont [4/16] %v9492, 128
      %9591 = vxpose.xlu0.b32.cont [5/16] %v9497, 128
      %9592 = vxpose.xlu0.b32.cont [6/16] %v9502, 128
      %9593 = vxpose.xlu0.b32.cont [7/16] %v9507, 128
      %9594 = vxpose.xlu0.b32.cont [8/16] %v9512, 128
      %9595 = vxpose.xlu0.b32.cont [9/16] %v9517, 128
      %9596 = vxpose.xlu0.b32.cont [10/16] %v9522, 128
      %9597 = vxpose.xlu0.b32.cont [11/16] %v9527, 128
      %9598 = vxpose.xlu0.b32.cont [12/16] %v9532, 128
      %9599 = vxpose.xlu0.b32.cont [13/16] %v9537, 128
      %9600 = vxpose.xlu0.b32.cont [14/16] %v9542, 128
      %9601 = vxpose.xlu0.b32.cont [15/16] %v9547, 128
      %9602 = vxpose.xlu0.b32.end [16/16] %v9552, 128
      %v9603 = vpop.trf.xlu0
      %v9604 = vpop.trf.xlu0
      %v9605 = vpop.trf.xlu0
      %v9606 = vpop.trf.xlu0
      %v9607 = vpop.trf.xlu0
      %v9608 = vpop.trf.xlu0
      %v9609 = vpop.trf.xlu0
      %v9610 = vpop.trf.xlu0
      %v9611 = vpop.trf.xlu0
      %v9612 = vpop.trf.xlu0
      %v9613 = vpop.trf.xlu0
      %v9614 = vpop.trf.xlu0
      %v9615 = vpop.trf.xlu0
      %v9616 = vpop.trf.xlu0
      %v9617 = vpop.trf.xlu0
      %v9618 = vpop.trf.xlu0
      %v9621 = vcombine.low %v9571, %v9603
      %9623 = vst [vmem:[%s548] sm:$0xff] %v9621
      %p9624 = scmp.lt.s32.totalorder %s28, 1
      %s9625 = scalar_select %p9624, %s28, 1
      %s9626 = smul.addr %s9625, 2
      %s9627 = smul.addr %s9626, 4
      %s9628 = scalar_lea.vmem %s17, %s9627
      // Predicated region
      $region89: #{myblock_forward.1} parent=87 // pred_check
        %p9629 = pneg %p408
      $region90: #{myblock_forward.1} parent=87 // pred_check_branch
        %9631 = sbr.rel (%p9629) target = $region92
      $region91: #{myblock_forward.1} parent=87 // pred_region
        _
      $region92: #{myblock_forward.1} parent=87 // pred_fallthru
        _
    $region88: #{myblock_forward.1} parent=5 // pred_fallthru
      _
    %p9632 = scmp.le.s32.totalorder 2, %s23
    // Predicated region
    $region93: #{myblock_forward.1} parent=5 // pred_check
      %p9633 = pneg %p9632
    $region94: #{myblock_forward.1} parent=5 // pred_check_branch
      %9635 = sbr.rel (%p9633) target = $region96
    $region95: #{myblock_forward.1} parent=5 // pred_region
      %s9636 = ssub.s32 %s23, 2
      // Predicated region
      $region97: #{myblock_forward.1} parent=95 // pred_check
        %p9637 = pneg %p414
      $region98: #{myblock_forward.1} parent=95 // pred_check_branch
        %9639 = sbr.rel (%p9637) target = $region100
      $region99: #{myblock_forward.1} parent=95 // pred_region
        %p9640 = scmp.lt.s32.totalorder %s29, 1
        %s9641 = scalar_select %p9640, %s29, 1
        %s9642 = smul.addr %s9641, 2
        %s9643 = smul.addr %s9642, 4
        %s9644 = scalar_lea.vmem %s17, %s9643
      $region100: #{myblock_forward.1} parent=95 // pred_fallthru
        _
    $region96: #{myblock_forward.1} parent=5 // pred_fallthru
      _
  $region6: #{myblock_forward.1} parent=0 // loop_footer
    %s27 = sadd.s32 1, %s23
  $region7: #{myblock_forward.1} parent=0 // loop_footer_branch
    %22 = sbr.rel target = $region3
  $region8: #{myblock_forward.1} parent=0 // loop_exit
    _

</llo_original>
